<compile_context>
chip_gen: v6e
topology: v6e:2x2x1
jax: 0.10.0
libtpu: 0.0.40
codegen_flags: <defaults>
</compile_context>

<pallas_src>
import functools

import jax
import jax.numpy as jnp
from jax.experimental import pallas as pl
from jax.experimental.pallas import tpu as pltpu


FC_DIMS = [1280, 896, 512, 384, 256, 128, 64, 32]


def _round_up(n, m):
    return ((n + m - 1) // m) * m


# ----------------------------------------------------------------------------
# Fused kernel: 8x (Linear + PReLU)  ->  single folded head matmul
# ----------------------------------------------------------------------------
def _fused_mlp_kernel(*refs, num_layers):
    # refs layout:
    #   [0]                   x block          (TB, in)       f32
    #   [1 + 2i], [2 + 2i]    w_i (bf16), b_i (1, dout) f32   i in [0, L)
    #   [1 + 2L]              alphas           (L,)  f32  (SMEM)
    #   [2 + 2L], [3 + 2L]    head_w (32, pad_out) bf16, head_b (1, pad_out) f32
    #   [-1]                  o block          (TB, pad_out)  f32
    x_ref = refs[0]
    alphas_ref = refs[1 + 2 * num_layers]
    hw_ref = refs[2 + 2 * num_layers]
    hb_ref = refs[3 + 2 * num_layers]
    o_ref = refs[-1]

    h = x_ref[...].astype(jnp.bfloat16)                       # (TB, in)
    for i in range(num_layers):                               # statically unrolled
        w_ref = refs[1 + 2 * i]
        b_ref = refs[2 + 2 * i]
        y = jnp.dot(h, w_ref[...],
                    preferred_element_type=jnp.float32) + b_ref[...]
        a = alphas_ref[i]                                     # scalar PReLU slope
        y = jnp.where(y >= 0.0, y, a * y)
        h = y.astype(jnp.bfloat16)

    # folded heads: single (TB,32) @ (32, pad_out) matmul, lane-dense store
    o_ref[...] = (jnp.dot(h, hw_ref[...],
                          preferred_element_type=jnp.float32) + hb_ref[...])


def _resident_spec(shape):
    # Weight/bias block: full array, same block every grid step -> DMA'd once and
    # kept VMEM-resident; single buffer (never streamed, so no need to double-buffer).
    nd = len(shape)
    return pl.BlockSpec(shape, lambda i: (0,) * nd, pipeline_mode=pl.Buffered(1))


def _fused_forward_call(x, tb, fc_w, fc_b, alphas, head_w, head_b):
    b_pad, d_in = x.shape
    pad_out = head_w.shape[1]
    num_layers = len(fc_w)
    grid = (b_pad // tb,)

    inputs = [x]
    in_specs = [pl.BlockSpec((tb, d_in), lambda i: (i, 0))]
    for w, b in zip(fc_w, fc_b):
        inputs += [w, b]
        in_specs += [_resident_spec(w.shape), _resident_spec(b.shape)]
    inputs.append(alphas)
    in_specs.append(pl.BlockSpec(memory_space=pltpu.SMEM))    # 1-D scalar slopes
    inputs += [head_w, head_b]
    in_specs += [_resident_spec(head_w.shape), _resident_spec(head_b.shape)]

    kern = functools.partial(_fused_mlp_kernel, num_layers=num_layers)
    return pl.pallas_call(
        kern,
        out_shape=jax.ShapeDtypeStruct((b_pad, pad_out), jnp.float32),
        grid=grid,
        in_specs=in_specs,
        out_specs=pl.BlockSpec((tb, pad_out), lambda i: (i, 0)),
        compiler_params=pltpu.CompilerParams(
            # batch tiles are independent -> shard across TCs on v7x (no-op elsewhere)
            dimension_semantics=("parallel",),
            # resident footprint ~5-7 MiB with TB=128: fits every generation's
            # default scoped VMEM limit, so do not override vmem_limit_bytes.
        ),
    )(*inputs)


# ----------------------------------------------------------------------------
# Parameter construction (deterministic, synthetic) + forward wrapper
# ----------------------------------------------------------------------------
def init_params(key, input_size, output_size, num_bits=40):
    dims = [input_size] + FC_DIMS
    num_layers = len(FC_DIMS)
    J = output_size

    keys = jax.random.split(key, 2 * num_layers + 4)
    k = 0

    fc_w, fc_b = [], []
    for din, dout in zip(dims[:-1], dims[1:]):
        w = jax.random.normal(keys[k], (din, dout), jnp.float32) * (1.0 / jnp.sqrt(din))
        b = jax.random.normal(keys[k + 1], (dout,), jnp.float32) * 0.01
        k += 2
        fc_w.append(w.astype(jnp.bfloat16))            # bf16 weight stream
        fc_b.append(b.reshape(1, dout))                # bias stays f32
    alphas = jnp.full((num_layers,), 0.25, jnp.float32)    # PReLU default slope

    # per-joint heads: Linear(32,20) -> Linear(20,num_bits), no activation between
    w1 = jax.random.normal(keys[k], (J, 32, 20), jnp.float32) * (1.0 / jnp.sqrt(32.0))
    b1 = jax.random.normal(keys[k + 1], (J, 20), jnp.float32) * 0.01
    w2 = jax.random.normal(keys[k + 2], (J, 20, num_bits), jnp.float32) * (1.0 / jnp.sqrt(20.0))
    b2 = jax.random.normal(keys[k + 3], (J, num_bits), jnp.float32) * 0.01

    # Fold the two affine head layers into one:
    #   y_j = (h @ w1_j + b1_j) @ w2_j + b2_j = h @ (w1_j @ w2_j) + (b1_j @ w2_j + b2_j)
    wh = jnp.einsum("jik,jko->jio", w1, w2)                 # (J, 32, nb)
    bh = jnp.einsum("jk,jko->jo", b1, w2) + b2               # (J, nb)
    out_dim = J * num_bits
    pad_out = _round_up(out_dim, 128)                        # lane-dense output
    head_w = jnp.transpose(wh, (1, 0, 2)).reshape(32, out_dim)   # concat over joints (dim=1)
    head_b = bh.reshape(1, out_dim)
    head_w = jnp.pad(head_w, ((0, 0), (0, pad_out - out_dim)))
    head_b = jnp.pad(head_b, ((0, 0), (0, pad_out - out_dim)))

    params = {
        "fc_w": fc_w,                        # list of bf16 (din, dout)
        "fc_b": fc_b,                        # list of f32  (1, dout)
        "alphas": alphas,                    # f32 (num_layers,)
        "head_w": head_w.astype(jnp.bfloat16),   # (32, pad_out) bf16
        "head_b": head_b,                        # (1, pad_out)  f32
    }
    raw_heads = {"w1": w1, "b1": b1, "w2": w2, "b2": b2}     # for reference check
    return params, raw_heads


@functools.partial(jax.jit, static_argnames=("out_dim",))
def mlp_bel_med_forward(params, x, *, out_dim):
    if x.ndim == 1:                          # mirrors x.unsqueeze(0)
        x = x[None, :]
    x = x.astype(jnp.float32)
    B = x.shape[0]
    tb = min(128, _round_up(B, 8))           # row tile (sublane-aligned)
    b_pad = _round_up(B, tb)
    if b_pad != B:
        x = jnp.pad(x, ((0, b_pad - B), (0, 0)))
    y = _fused_forward_call(
        x, tb, params["fc_w"], params["fc_b"], params["alphas"],
        params["head_w"], params["head_b"])
    return y[:B, :out_dim]                   # strip row + lane padding


# ----------------------------------------------------------------------------
if __name__ == "__main__":
    INPUT_SIZE = 64
    OUTPUT_SIZE = 3      # num_joints
    NUM_BITS = 40
    BATCH = 2

    key = jax.random.PRNGKey(0)
    pkey, xkey = jax.random.split(key)
    params, raw_heads = init_params(pkey, INPUT_SIZE, OUTPUT_SIZE, NUM_BITS)
    x = jax.random.normal(xkey, (BATCH, INPUT_SIZE), jnp.float32)

    out_dim = OUTPUT_SIZE * NUM_BITS
    y = mlp_bel_med_forward(params, x, out_dim=out_dim)
    y = jax.block_until_ready(y)

    assert y.shape == (BATCH, out_dim), y.shape
    assert y.dtype == jnp.float32

    # Reference 1: identical math in plain JAX (same bf16 weights, folded head) --
    # isolates Pallas-kernel correctness from bf16 quantization.
    h = x
    for i, (w, b) in enumerate(zip(params["fc_w"], params["fc_b"])):
        z = jnp.dot(h.astype(jnp.bfloat16), w,
                    preferred_element_type=jnp.float32) + b
        a = params["alphas"][i]
        h = jnp.where(z >= 0.0, z, a * z)
    ref1 = (jnp.dot(h.astype(jnp.bfloat16), params["head_w"],
                    preferred_element_type=jnp.float32) + params["head_b"])[:, :out_dim]
    assert jnp.allclose(y, ref1, atol=1e-2, rtol=1e-2), (
        float(jnp.max(jnp.abs(y - ref1))))

    # Reference 2: original per-joint (unfolded, f32) head structure on the same
    # trunk output -- verifies the head fold matches the PyTorch module layout.
    outs = []
    for j in range(OUTPUT_SIZE):
        t = h @ raw_heads["w1"][j] + raw_heads["b1"][j]
        outs.append(t @ raw_heads["w2"][j] + raw_heads["b2"][j])
    ref2 = jnp.concatenate(outs, axis=1)
    assert jnp.allclose(y, ref2, atol=5e-2, rtol=5e-2), (
        float(jnp.max(jnp.abs(y - ref2))))

    print("KERNEL_OK")
</pallas_src>

<mosaic_0001>
module attributes {stable_mosaic.version = 11 : i64} {
  func.func @_fused_mlp_kernel(%arg0: i32, %arg1: memref<8x64xf32, #tpu.memory_space<vmem>>, %arg2: memref<64x1280xbf16, #tpu.memory_space<vmem>>, %arg3: memref<1x1280xf32, #tpu.memory_space<vmem>>, %arg4: memref<1280x896xbf16, #tpu.memory_space<vmem>>, %arg5: memref<1x896xf32, #tpu.memory_space<vmem>>, %arg6: memref<896x512xbf16, #tpu.memory_space<vmem>>, %arg7: memref<1x512xf32, #tpu.memory_space<vmem>>, %arg8: memref<512x384xbf16, #tpu.memory_space<vmem>>, %arg9: memref<1x384xf32, #tpu.memory_space<vmem>>, %arg10: memref<384x256xbf16, #tpu.memory_space<vmem>>, %arg11: memref<1x256xf32, #tpu.memory_space<vmem>>, %arg12: memref<256x128xbf16, #tpu.memory_space<vmem>>, %arg13: memref<1x128xf32, #tpu.memory_space<vmem>>, %arg14: memref<128x64xbf16, #tpu.memory_space<vmem>>, %arg15: memref<1x64xf32, #tpu.memory_space<vmem>>, %arg16: memref<64x32xbf16, #tpu.memory_space<vmem>>, %arg17: memref<1x32xf32, #tpu.memory_space<vmem>>, %arg18: memref<8xf32, #tpu.memory_space<smem>>, %arg19: memref<32x128xbf16, #tpu.memory_space<vmem>>, %arg20: memref<1x128xf32, #tpu.memory_space<vmem>>, %arg21: memref<8x128xf32, #tpu.memory_space<vmem>>) attributes {dimension_semantics = [#tpu.dimension_semantics<parallel>], iteration_bounds = array<i64: 1>, scalar_prefetch = 0 : i64, scratch_operands = 0 : i64, tpu.core_type = #tpu.core_type<tc>, window_params = [{transform_indices = @transform_0, window_bounds = array<i64: 8, 64>}, {pipeline_mode = #tpu.pipeline_mode<synchronous>, transform_indices = @transform_1, window_bounds = array<i64: 64, 1280>}, {pipeline_mode = #tpu.pipeline_mode<synchronous>, transform_indices = @transform_2, window_bounds = array<i64: 1, 1280>}, {pipeline_mode = #tpu.pipeline_mode<synchronous>, transform_indices = @transform_3, window_bounds = array<i64: 1280, 896>}, {pipeline_mode = #tpu.pipeline_mode<synchronous>, transform_indices = @transform_4, window_bounds = array<i64: 1, 896>}, {pipeline_mode = #tpu.pipeline_mode<synchronous>, transform_indices = @transform_5, window_bounds = array<i64: 896, 512>}, {pipeline_mode = #tpu.pipeline_mode<synchronous>, transform_indices = @transform_6, window_bounds = array<i64: 1, 512>}, {pipeline_mode = #tpu.pipeline_mode<synchronous>, transform_indices = @transform_7, window_bounds = array<i64: 512, 384>}, {pipeline_mode = #tpu.pipeline_mode<synchronous>, transform_indices = @transform_8, window_bounds = array<i64: 1, 384>}, {pipeline_mode = #tpu.pipeline_mode<synchronous>, transform_indices = @transform_9, window_bounds = array<i64: 384, 256>}, {pipeline_mode = #tpu.pipeline_mode<synchronous>, transform_indices = @transform_10, window_bounds = array<i64: 1, 256>}, {pipeline_mode = #tpu.pipeline_mode<synchronous>, transform_indices = @transform_11, window_bounds = array<i64: 256, 128>}, {pipeline_mode = #tpu.pipeline_mode<synchronous>, transform_indices = @transform_12, window_bounds = array<i64: 1, 128>}, {pipeline_mode = #tpu.pipeline_mode<synchronous>, transform_indices = @transform_13, window_bounds = array<i64: 128, 64>}, {pipeline_mode = #tpu.pipeline_mode<synchronous>, transform_indices = @transform_14, window_bounds = array<i64: 1, 64>}, {pipeline_mode = #tpu.pipeline_mode<synchronous>, transform_indices = @transform_15, window_bounds = array<i64: 64, 32>}, {pipeline_mode = #tpu.pipeline_mode<synchronous>, transform_indices = @transform_16, window_bounds = array<i64: 1, 32>}, {transform_indices = @transform_17, window_bounds = array<i64: 8>}, {pipeline_mode = #tpu.pipeline_mode<synchronous>, transform_indices = @transform_18, window_bounds = array<i64: 32, 128>}, {pipeline_mode = #tpu.pipeline_mode<synchronous>, transform_indices = @transform_19, window_bounds = array<i64: 1, 128>}, {transform_indices = @transform_20, window_bounds = array<i64: 8, 128>}]} {
    %c0 = arith.constant 0 : index
    %c0_0 = arith.constant 0 : index
    %0 = vector.load %arg1[%c0, %c0_0] : memref<8x64xf32, #tpu.memory_space<vmem>>, vector<8x64xf32>
    %1 = arith.truncf %0 : vector<8x64xf32> to vector<8x64xbf16>
    %c0_1 = arith.constant 0 : index
    %c0_2 = arith.constant 0 : index
    %2 = vector.load %arg2[%c0_1, %c0_2] : memref<64x1280xbf16, #tpu.memory_space<vmem>>, vector<64x1280xbf16>
    %cst = arith.constant dense<0.000000e+00> : vector<8x1280xf32>
    %3 = tpu.matmul %1, %2, %cst {dimension_numbers = #tpu.dot_dimension_numbers<[1], [0], [0], [1], [0, 0, 1, 1], [], []>} : vector<8x64xbf16>, vector<64x1280xbf16>, vector<8x1280xf32> -> vector<8x1280xf32>
    %c0_3 = arith.constant 0 : index
    %c0_4 = arith.constant 0 : index
    %4 = vector.load %arg3[%c0_3, %c0_4] : memref<1x1280xf32, #tpu.memory_space<vmem>>, vector<1x1280xf32>
    %5 = vector.broadcast %4 : vector<1x1280xf32> to vector<8x1280xf32>
    %6 = arith.addf %3, %5 : vector<8x1280xf32>
    %c0_5 = arith.constant 0 : index
    %7 = memref.load %arg18[%c0_5] : memref<8xf32, #tpu.memory_space<smem>>
    %cst_6 = arith.constant 0.000000e+00 : f32
    %8 = vector.broadcast %cst_6 : f32 to vector<8x1280xf32>
    %9 = arith.cmpf oge, %6, %8 : vector<8x1280xf32>
    %10 = vector.broadcast %7 : f32 to vector<8x1280xf32>
    %11 = arith.mulf %10, %6 : vector<8x1280xf32>
    %12 = arith.select %9, %6, %11 : vector<8x1280xi1>, vector<8x1280xf32>
    %13 = arith.truncf %12 : vector<8x1280xf32> to vector<8x1280xbf16>
    %c0_7 = arith.constant 0 : index
    %c0_8 = arith.constant 0 : index
    %14 = vector.load %arg4[%c0_7, %c0_8] : memref<1280x896xbf16, #tpu.memory_space<vmem>>, vector<1280x896xbf16>
    %cst_9 = arith.constant dense<0.000000e+00> : vector<8x896xf32>
    %15 = tpu.matmul %13, %14, %cst_9 {dimension_numbers = #tpu.dot_dimension_numbers<[1], [0], [0], [1], [0, 0, 1, 1], [], []>} : vector<8x1280xbf16>, vector<1280x896xbf16>, vector<8x896xf32> -> vector<8x896xf32>
    %c0_10 = arith.constant 0 : index
    %c0_11 = arith.constant 0 : index
    %16 = vector.load %arg5[%c0_10, %c0_11] : memref<1x896xf32, #tpu.memory_space<vmem>>, vector<1x896xf32>
    %17 = vector.broadcast %16 : vector<1x896xf32> to vector<8x896xf32>
    %18 = arith.addf %15, %17 : vector<8x896xf32>
    %c1 = arith.constant 1 : index
    %19 = memref.load %arg18[%c1] : memref<8xf32, #tpu.memory_space<smem>>
    %cst_12 = arith.constant 0.000000e+00 : f32
    %20 = vector.broadcast %cst_12 : f32 to vector<8x896xf32>
    %21 = arith.cmpf oge, %18, %20 : vector<8x896xf32>
    %22 = vector.broadcast %19 : f32 to vector<8x896xf32>
    %23 = arith.mulf %22, %18 : vector<8x896xf32>
    %24 = arith.select %21, %18, %23 : vector<8x896xi1>, vector<8x896xf32>
    %25 = arith.truncf %24 : vector<8x896xf32> to vector<8x896xbf16>
    %c0_13 = arith.constant 0 : index
    %c0_14 = arith.constant 0 : index
    %26 = vector.load %arg6[%c0_13, %c0_14] : memref<896x512xbf16, #tpu.memory_space<vmem>>, vector<896x512xbf16>
    %cst_15 = arith.constant dense<0.000000e+00> : vector<8x512xf32>
    %27 = tpu.matmul %25, %26, %cst_15 {dimension_numbers = #tpu.dot_dimension_numbers<[1], [0], [0], [1], [0, 0, 1, 1], [], []>} : vector<8x896xbf16>, vector<896x512xbf16>, vector<8x512xf32> -> vector<8x512xf32>
    %c0_16 = arith.constant 0 : index
    %c0_17 = arith.constant 0 : index
    %28 = vector.load %arg7[%c0_16, %c0_17] : memref<1x512xf32, #tpu.memory_space<vmem>>, vector<1x512xf32>
    %29 = vector.broadcast %28 : vector<1x512xf32> to vector<8x512xf32>
    %30 = arith.addf %27, %29 : vector<8x512xf32>
    %c2 = arith.constant 2 : index
    %31 = memref.load %arg18[%c2] : memref<8xf32, #tpu.memory_space<smem>>
    %cst_18 = arith.constant 0.000000e+00 : f32
    %32 = vector.broadcast %cst_18 : f32 to vector<8x512xf32>
    %33 = arith.cmpf oge, %30, %32 : vector<8x512xf32>
    %34 = vector.broadcast %31 : f32 to vector<8x512xf32>
    %35 = arith.mulf %34, %30 : vector<8x512xf32>
    %36 = arith.select %33, %30, %35 : vector<8x512xi1>, vector<8x512xf32>
    %37 = arith.truncf %36 : vector<8x512xf32> to vector<8x512xbf16>
    %c0_19 = arith.constant 0 : index
    %c0_20 = arith.constant 0 : index
    %38 = vector.load %arg8[%c0_19, %c0_20] : memref<512x384xbf16, #tpu.memory_space<vmem>>, vector<512x384xbf16>
    %cst_21 = arith.constant dense<0.000000e+00> : vector<8x384xf32>
    %39 = tpu.matmul %37, %38, %cst_21 {dimension_numbers = #tpu.dot_dimension_numbers<[1], [0], [0], [1], [0, 0, 1, 1], [], []>} : vector<8x512xbf16>, vector<512x384xbf16>, vector<8x384xf32> -> vector<8x384xf32>
    %c0_22 = arith.constant 0 : index
    %c0_23 = arith.constant 0 : index
    %40 = vector.load %arg9[%c0_22, %c0_23] : memref<1x384xf32, #tpu.memory_space<vmem>>, vector<1x384xf32>
    %41 = vector.broadcast %40 : vector<1x384xf32> to vector<8x384xf32>
    %42 = arith.addf %39, %41 : vector<8x384xf32>
    %c3 = arith.constant 3 : index
    %43 = memref.load %arg18[%c3] : memref<8xf32, #tpu.memory_space<smem>>
    %cst_24 = arith.constant 0.000000e+00 : f32
    %44 = vector.broadcast %cst_24 : f32 to vector<8x384xf32>
    %45 = arith.cmpf oge, %42, %44 : vector<8x384xf32>
    %46 = vector.broadcast %43 : f32 to vector<8x384xf32>
    %47 = arith.mulf %46, %42 : vector<8x384xf32>
    %48 = arith.select %45, %42, %47 : vector<8x384xi1>, vector<8x384xf32>
    %49 = arith.truncf %48 : vector<8x384xf32> to vector<8x384xbf16>
    %c0_25 = arith.constant 0 : index
    %c0_26 = arith.constant 0 : index
    %50 = vector.load %arg10[%c0_25, %c0_26] : memref<384x256xbf16, #tpu.memory_space<vmem>>, vector<384x256xbf16>
    %cst_27 = arith.constant dense<0.000000e+00> : vector<8x256xf32>
    %51 = tpu.matmul %49, %50, %cst_27 {dimension_numbers = #tpu.dot_dimension_numbers<[1], [0], [0], [1], [0, 0, 1, 1], [], []>} : vector<8x384xbf16>, vector<384x256xbf16>, vector<8x256xf32> -> vector<8x256xf32>
    %c0_28 = arith.constant 0 : index
    %c0_29 = arith.constant 0 : index
    %52 = vector.load %arg11[%c0_28, %c0_29] : memref<1x256xf32, #tpu.memory_space<vmem>>, vector<1x256xf32>
    %53 = vector.broadcast %52 : vector<1x256xf32> to vector<8x256xf32>
    %54 = arith.addf %51, %53 : vector<8x256xf32>
    %c4 = arith.constant 4 : index
    %55 = memref.load %arg18[%c4] : memref<8xf32, #tpu.memory_space<smem>>
    %cst_30 = arith.constant 0.000000e+00 : f32
    %56 = vector.broadcast %cst_30 : f32 to vector<8x256xf32>
    %57 = arith.cmpf oge, %54, %56 : vector<8x256xf32>
    %58 = vector.broadcast %55 : f32 to vector<8x256xf32>
    %59 = arith.mulf %58, %54 : vector<8x256xf32>
    %60 = arith.select %57, %54, %59 : vector<8x256xi1>, vector<8x256xf32>
    %61 = arith.truncf %60 : vector<8x256xf32> to vector<8x256xbf16>
    %c0_31 = arith.constant 0 : index
    %c0_32 = arith.constant 0 : index
    %62 = vector.load %arg12[%c0_31, %c0_32] : memref<256x128xbf16, #tpu.memory_space<vmem>>, vector<256x128xbf16>
    %cst_33 = arith.constant dense<0.000000e+00> : vector<8x128xf32>
    %63 = tpu.matmul %61, %62, %cst_33 {dimension_numbers = #tpu.dot_dimension_numbers<[1], [0], [0], [1], [0, 0, 1, 1], [], []>} : vector<8x256xbf16>, vector<256x128xbf16>, vector<8x128xf32> -> vector<8x128xf32>
    %c0_34 = arith.constant 0 : index
    %c0_35 = arith.constant 0 : index
    %64 = vector.load %arg13[%c0_34, %c0_35] : memref<1x128xf32, #tpu.memory_space<vmem>>, vector<1x128xf32>
    %65 = vector.broadcast %64 : vector<1x128xf32> to vector<8x128xf32>
    %66 = arith.addf %63, %65 : vector<8x128xf32>
    %c5 = arith.constant 5 : index
    %67 = memref.load %arg18[%c5] : memref<8xf32, #tpu.memory_space<smem>>
    %cst_36 = arith.constant 0.000000e+00 : f32
    %68 = vector.broadcast %cst_36 : f32 to vector<8x128xf32>
    %69 = arith.cmpf oge, %66, %68 : vector<8x128xf32>
    %70 = vector.broadcast %67 : f32 to vector<8x128xf32>
    %71 = arith.mulf %70, %66 : vector<8x128xf32>
    %72 = arith.select %69, %66, %71 : vector<8x128xi1>, vector<8x128xf32>
    %73 = arith.truncf %72 : vector<8x128xf32> to vector<8x128xbf16>
    %c0_37 = arith.constant 0 : index
    %c0_38 = arith.constant 0 : index
    %74 = vector.load %arg14[%c0_37, %c0_38] : memref<128x64xbf16, #tpu.memory_space<vmem>>, vector<128x64xbf16>
    %cst_39 = arith.constant dense<0.000000e+00> : vector<8x64xf32>
    %75 = tpu.matmul %73, %74, %cst_39 {dimension_numbers = #tpu.dot_dimension_numbers<[1], [0], [0], [1], [0, 0, 1, 1], [], []>} : vector<8x128xbf16>, vector<128x64xbf16>, vector<8x64xf32> -> vector<8x64xf32>
    %c0_40 = arith.constant 0 : index
    %c0_41 = arith.constant 0 : index
    %76 = vector.load %arg15[%c0_40, %c0_41] : memref<1x64xf32, #tpu.memory_space<vmem>>, vector<1x64xf32>
    %77 = vector.broadcast %76 : vector<1x64xf32> to vector<8x64xf32>
    %78 = arith.addf %75, %77 : vector<8x64xf32>
    %c6 = arith.constant 6 : index
    %79 = memref.load %arg18[%c6] : memref<8xf32, #tpu.memory_space<smem>>
    %cst_42 = arith.constant 0.000000e+00 : f32
    %80 = vector.broadcast %cst_42 : f32 to vector<8x64xf32>
    %81 = arith.cmpf oge, %78, %80 : vector<8x64xf32>
    %82 = vector.broadcast %79 : f32 to vector<8x64xf32>
    %83 = arith.mulf %82, %78 : vector<8x64xf32>
    %84 = arith.select %81, %78, %83 : vector<8x64xi1>, vector<8x64xf32>
    %85 = arith.truncf %84 : vector<8x64xf32> to vector<8x64xbf16>
    %c0_43 = arith.constant 0 : index
    %c0_44 = arith.constant 0 : index
    %86 = vector.load %arg16[%c0_43, %c0_44] : memref<64x32xbf16, #tpu.memory_space<vmem>>, vector<64x32xbf16>
    %cst_45 = arith.constant dense<0.000000e+00> : vector<8x32xf32>
    %87 = tpu.matmul %85, %86, %cst_45 {dimension_numbers = #tpu.dot_dimension_numbers<[1], [0], [0], [1], [0, 0, 1, 1], [], []>} : vector<8x64xbf16>, vector<64x32xbf16>, vector<8x32xf32> -> vector<8x32xf32>
    %c0_46 = arith.constant 0 : index
    %c0_47 = arith.constant 0 : index
    %88 = vector.load %arg17[%c0_46, %c0_47] : memref<1x32xf32, #tpu.memory_space<vmem>>, vector<1x32xf32>
    %89 = vector.broadcast %88 : vector<1x32xf32> to vector<8x32xf32>
    %90 = arith.addf %87, %89 : vector<8x32xf32>
    %c7 = arith.constant 7 : index
    %91 = memref.load %arg18[%c7] : memref<8xf32, #tpu.memory_space<smem>>
    %cst_48 = arith.constant 0.000000e+00 : f32
    %92 = vector.broadcast %cst_48 : f32 to vector<8x32xf32>
    %93 = arith.cmpf oge, %90, %92 : vector<8x32xf32>
    %94 = vector.broadcast %91 : f32 to vector<8x32xf32>
    %95 = arith.mulf %94, %90 : vector<8x32xf32>
    %96 = arith.select %93, %90, %95 : vector<8x32xi1>, vector<8x32xf32>
    %97 = arith.truncf %96 : vector<8x32xf32> to vector<8x32xbf16>
    %c0_49 = arith.constant 0 : index
    %c0_50 = arith.constant 0 : index
    %98 = vector.load %arg19[%c0_49, %c0_50] : memref<32x128xbf16, #tpu.memory_space<vmem>>, vector<32x128xbf16>
    %cst_51 = arith.constant dense<0.000000e+00> : vector<8x128xf32>
    %99 = tpu.matmul %97, %98, %cst_51 {dimension_numbers = #tpu.dot_dimension_numbers<[1], [0], [0], [1], [0, 0, 1, 1], [], []>} : vector<8x32xbf16>, vector<32x128xbf16>, vector<8x128xf32> -> vector<8x128xf32>
    %c0_52 = arith.constant 0 : index
    %c0_53 = arith.constant 0 : index
    %100 = vector.load %arg20[%c0_52, %c0_53] : memref<1x128xf32, #tpu.memory_space<vmem>>, vector<1x128xf32>
    %101 = vector.broadcast %100 : vector<1x128xf32> to vector<8x128xf32>
    %102 = arith.addf %99, %101 : vector<8x128xf32>
    %c0_54 = arith.constant 0 : index
    %c0_55 = arith.constant 0 : index
    %103 = vector.load %arg21[%c0_54, %c0_55] : memref<8x128xf32, #tpu.memory_space<vmem>>, vector<8x128xf32>
    tpu.vector_store %arg21[%c0_54, %c0_55], %102 {strides = array<i32>} : memref<8x128xf32, #tpu.memory_space<vmem>>, vector<8x128xf32>,
    return
  }
  func.func @transform_0(%arg0: i32) -> (i32, i32) {
    %c0_i32 = arith.constant 0 : i32
    %c0_i32_0 = arith.constant 0 : i32
    return %arg0, %c0_i32 : i32, i32
  }
  func.func @transform_1(%arg0: i32) -> (i32, i32) {
    %c0_i32 = arith.constant 0 : i32
    %c0_i32_0 = arith.constant 0 : i32
    %c0_i32_1 = arith.constant 0 : i32
    return %c0_i32, %c0_i32_0 : i32, i32
  }
  func.func @transform_2(%arg0: i32) -> (i32, i32) {
    %c0_i32 = arith.constant 0 : i32
    %c0_i32_0 = arith.constant 0 : i32
    %c0_i32_1 = arith.constant 0 : i32
    return %c0_i32, %c0_i32_0 : i32, i32
  }
  func.func @transform_3(%arg0: i32) -> (i32, i32) {
    %c0_i32 = arith.constant 0 : i32
    %c0_i32_0 = arith.constant 0 : i32
    %c0_i32_1 = arith.constant 0 : i32
    return %c0_i32, %c0_i32_0 : i32, i32
  }
  func.func @transform_4(%arg0: i32) -> (i32, i32) {
    %c0_i32 = arith.constant 0 : i32
    %c0_i32_0 = arith.constant 0 : i32
    %c0_i32_1 = arith.constant 0 : i32
    return %c0_i32, %c0_i32_0 : i32, i32
  }
  func.func @transform_5(%arg0: i32) -> (i32, i32) {
    %c0_i32 = arith.constant 0 : i32
    %c0_i32_0 = arith.constant 0 : i32
    %c0_i32_1 = arith.constant 0 : i32
    return %c0_i32, %c0_i32_0 : i32, i32
  }
  func.func @transform_6(%arg0: i32) -> (i32, i32) {
    %c0_i32 = arith.constant 0 : i32
    %c0_i32_0 = arith.constant 0 : i32
    %c0_i32_1 = arith.constant 0 : i32
    return %c0_i32, %c0_i32_0 : i32, i32
  }
  func.func @transform_7(%arg0: i32) -> (i32, i32) {
    %c0_i32 = arith.constant 0 : i32
    %c0_i32_0 = arith.constant 0 : i32
    %c0_i32_1 = arith.constant 0 : i32
    return %c0_i32, %c0_i32_0 : i32, i32
  }
  func.func @transform_8(%arg0: i32) -> (i32, i32) {
    %c0_i32 = arith.constant 0 : i32
    %c0_i32_0 = arith.constant 0 : i32
    %c0_i32_1 = arith.constant 0 : i32
    return %c0_i32, %c0_i32_0 : i32, i32
  }
  func.func @transform_9(%arg0: i32) -> (i32, i32) {
    %c0_i32 = arith.constant 0 : i32
    %c0_i32_0 = arith.constant 0 : i32
    %c0_i32_1 = arith.constant 0 : i32
    return %c0_i32, %c0_i32_0 : i32, i32
  }
  func.func @transform_10(%arg0: i32) -> (i32, i32) {
    %c0_i32 = arith.constant 0 : i32
    %c0_i32_0 = arith.constant 0 : i32
    %c0_i32_1 = arith.constant 0 : i32
    return %c0_i32, %c0_i32_0 : i32, i32
  }
  func.func @transform_11(%arg0: i32) -> (i32, i32) {
    %c0_i32 = arith.constant 0 : i32
    %c0_i32_0 = arith.constant 0 : i32
    %c0_i32_1 = arith.constant 0 : i32
    return %c0_i32, %c0_i32_0 : i32, i32
  }
  func.func @transform_12(%arg0: i32) -> (i32, i32) {
    %c0_i32 = arith.constant 0 : i32
    %c0_i32_0 = arith.constant 0 : i32
    %c0_i32_1 = arith.constant 0 : i32
    return %c0_i32, %c0_i32_0 : i32, i32
  }
  func.func @transform_13(%arg0: i32) -> (i32, i32) {
    %c0_i32 = arith.constant 0 : i32
    %c0_i32_0 = arith.constant 0 : i32
    %c0_i32_1 = arith.constant 0 : i32
    return %c0_i32, %c0_i32_0 : i32, i32
  }
  func.func @transform_14(%arg0: i32) -> (i32, i32) {
    %c0_i32 = arith.constant 0 : i32
    %c0_i32_0 = arith.constant 0 : i32
    %c0_i32_1 = arith.constant 0 : i32
    return %c0_i32, %c0_i32_0 : i32, i32
  }
  func.func @transform_15(%arg0: i32) -> (i32, i32) {
    %c0_i32 = arith.constant 0 : i32
    %c0_i32_0 = arith.constant 0 : i32
    %c0_i32_1 = arith.constant 0 : i32
    return %c0_i32, %c0_i32_0 : i32, i32
  }
  func.func @transform_16(%arg0: i32) -> (i32, i32) {
    %c0_i32 = arith.constant 0 : i32
    %c0_i32_0 = arith.constant 0 : i32
    %c0_i32_1 = arith.constant 0 : i32
    return %c0_i32, %c0_i32_0 : i32, i32
  }
  func.func @transform_17(%arg0: i32) -> i32 {
    %c0_i32 = arith.constant 0 : i32
    %c0_i32_0 = arith.constant 0 : i32
    return %c0_i32 : i32
  }
  func.func @transform_18(%arg0: i32) -> (i32, i32) {
    %c0_i32 = arith.constant 0 : i32
    %c0_i32_0 = arith.constant 0 : i32
    %c0_i32_1 = arith.constant 0 : i32
    return %c0_i32, %c0_i32_0 : i32, i32
  }
  func.func @transform_19(%arg0: i32) -> (i32, i32) {
    %c0_i32 = arith.constant 0 : i32
    %c0_i32_0 = arith.constant 0 : i32
    %c0_i32_1 = arith.constant 0 : i32
    return %c0_i32, %c0_i32_0 : i32, i32
  }
  func.func @transform_20(%arg0: i32) -> (i32, i32) {
    %c0_i32 = arith.constant 0 : i32
    %c0_i32_0 = arith.constant 0 : i32
    return %arg0, %c0_i32 : i32, i32
  }
}

</mosaic_0001>

<llo_original>
// kernel: mlp_bel_med_forward.1
$region0: #{mlp_bel_med_forward.1}
  #allocation0 [shape = 'u32[]', space=smem, size = 0x4, offset = 0x4, fixed_abs, tag = 'smem constant byte address 0x4 - core index']
  #allocation1 [shape = 'u32[144,128]{1,0:T(1,128)}', space=vmem, size = 0x12000, scoped, tag = 'internal scratch']
  %s0 = inlined_call_operand.vmem [shape: f32[8,64], index: 0, kind: input, shape index: {}]
  %s1 = inlined_call_operand.hbm [shape: bf16[64,1280], index: 1, kind: input, shape index: {}]
  %s2 = inlined_call_operand.hbm [shape: f32[1,1280], index: 2, kind: input, shape index: {}]
  %s3 = inlined_call_operand.hbm [shape: bf16[1280,896], index: 3, kind: input, shape index: {}]
  %s4 = inlined_call_operand.hbm [shape: f32[1,896], index: 4, kind: input, shape index: {}]
  %s5 = inlined_call_operand.hbm [shape: bf16[896,512], index: 5, kind: input, shape index: {}]
  %s6 = inlined_call_operand.hbm [shape: f32[1,512], index: 6, kind: input, shape index: {}]
  %s7 = inlined_call_operand.hbm [shape: bf16[512,384], index: 7, kind: input, shape index: {}]
  %s8 = inlined_call_operand.hbm [shape: f32[1,384], index: 8, kind: input, shape index: {}]
  %s9 = inlined_call_operand.hbm [shape: bf16[384,256], index: 9, kind: input, shape index: {}]
  %s10 = inlined_call_operand.hbm [shape: f32[1,256], index: 10, kind: input, shape index: {}]
  %s11 = inlined_call_operand.hbm [shape: bf16[256,128], index: 11, kind: input, shape index: {}]
  %s12 = inlined_call_operand.hbm [shape: f32[1,128], index: 12, kind: input, shape index: {}]
  %s13 = inlined_call_operand.vmem [shape: bf16[128,64], index: 13, kind: input, shape index: {}]
  %s14 = inlined_call_operand.hbm [shape: f32[1,64], index: 14, kind: input, shape index: {}]
  %s15 = inlined_call_operand.vmem [shape: bf16[64,32], index: 15, kind: input, shape index: {}]
  %s16 = inlined_call_operand.hbm [shape: f32[1,32], index: 16, kind: input, shape index: {}]
  %s17 = inlined_call_operand.hbm [shape: f32[8], index: 17, kind: input, shape index: {}]
  %s18 = inlined_call_operand.hbm [shape: bf16[32,128], index: 18, kind: input, shape index: {}]
  %s19 = inlined_call_operand.hbm [shape: f32[1,128], index: 19, kind: input, shape index: {}]
  %s20 = inlined_call_operand.vmem [shape: f32[8,128], index: 20, kind: output, shape index: {}]
  %s21 = sld [smem:[#allocation0]]
  $region158: #{mlp_bel_med_forward.1} parent=0
    _
  %s23 = ssub.s32 1, %s21
  %s24 = scalar_select 0, %s23, %s21
  $region1: #{mlp_bel_med_forward.1} parent=0
    #allocation2 [shape = 'u8[163840]{0}', space=vmem, size = 0x28000, scoped, tag = 'input window, operand 1, single buffered']
    #allocation3 [shape = 's32[1]{0}', space=sflag, size = 0x4, scoped, tag = 'scoped memory for mlp_bel_med_forward.1']
    #allocation4 [shape = 's32[1]{0}', space=sflag, size = 0x4, scoped, tag = 'scoped memory for mlp_bel_med_forward.1']
    #allocation5 [shape = 'u8[5120]{0}', space=vmem, size = 0x1400, scoped, tag = 'input window, operand 2, single buffered']
    #allocation6 [shape = 's32[1]{0}', space=sflag, size = 0x4, scoped, tag = 'scoped memory for mlp_bel_med_forward.1']
    #allocation7 [shape = 'u8[2293760]{0}', space=vmem, size = 0x230000, scoped, tag = 'input window, operand 3, single buffered']
    #allocation8 [shape = 'u8[3584]{0}', space=vmem, size = 0x1000, scoped, tag = 'input window, operand 4, single buffered']
    #allocation9 [shape = 's32[1]{0}', space=sflag, size = 0x4, scoped, tag = 'scoped memory for mlp_bel_med_forward.1']
    #allocation10 [shape = 'u8[917504]{0}', space=vmem, size = 0xe0000, scoped, tag = 'input window, operand 5, single buffered']
    #allocation11 [shape = 'u8[2048]{0}', space=vmem, size = 0x800, scoped, tag = 'input window, operand 6, single buffered']
    #allocation12 [shape = 's32[1]{0}', space=sflag, size = 0x4, scoped, tag = 'scoped memory for mlp_bel_med_forward.1']
    #allocation13 [shape = 'u8[393216]{0}', space=vmem, size = 0x60000, scoped, tag = 'input window, operand 7, single buffered']
    #allocation14 [shape = 'u8[1536]{0}', space=vmem, size = 0x800, scoped, tag = 'input window, operand 8, single buffered']
    #allocation15 [shape = 's32[1]{0}', space=sflag, size = 0x4, scoped, tag = 'scoped memory for mlp_bel_med_forward.1']
    #allocation16 [shape = 'u8[196608]{0}', space=vmem, size = 0x30000, scoped, tag = 'input window, operand 9, single buffered']
    #allocation17 [shape = 'u8[1024]{0}', space=vmem, size = 0x400, scoped, tag = 'input window, operand 10, single buffered']
    #allocation18 [shape = 's32[1]{0}', space=sflag, size = 0x4, scoped, tag = 'scoped memory for mlp_bel_med_forward.1']
    #allocation19 [shape = 'u8[65536]{0}', space=vmem, size = 0x10000, scoped, tag = 'input window, operand 11, single buffered']
    #allocation20 [shape = 'u8[512]{0}', space=vmem, size = 0x400, scoped, tag = 'input window, operand 12, single buffered']
    #allocation21 [shape = 's32[1]{0}', space=sflag, size = 0x4, scoped, tag = 'scoped memory for mlp_bel_med_forward.1']
    #allocation22 [shape = 'u8[512]{0}', space=vmem, size = 0x400, scoped, tag = 'input window, operand 14, single buffered']
    #allocation23 [shape = 'u8[512]{0}', space=vmem, size = 0x400, scoped, tag = 'input window, operand 16, single buffered']
    #allocation24 [shape = 's32[1]{0}', space=sflag, size = 0x4, scoped, tag = 'scoped memory for mlp_bel_med_forward.1']
    #allocation25 [shape = 'u8[512]{0}', space=smem, size = 0x200, scoped, tag = 'input window, operand 17, single buffered']
    #allocation26 [shape = 'u8[8192]{0}', space=vmem, size = 0x2000, scoped, tag = 'input window, operand 18, single buffered']
    #allocation27 [shape = 'u8[512]{0}', space=vmem, size = 0x400, scoped, tag = 'input window, operand 19, single buffered']
    #allocation28 [shape = 's32[1]{0}', space=sflag, size = 0x4, scoped, tag = 'scoped memory for mlp_bel_med_forward.1']
    %25 = vsyncpa [#allocation3], 0
    %26 = vsyncpa [#allocation6], 0
    %27 = vsyncpa [#allocation9], 0
    %28 = vsyncpa [#allocation12], 0
    %29 = vsyncpa [#allocation15], 0
    %30 = vsyncpa [#allocation18], 0
    %31 = vsyncpa [#allocation21], 0
    %32 = vsyncpa [#allocation24], 0
    %33 = vsyncpa [#allocation4], 0
    %34 = vsyncpa [#allocation28], 0
    // Predicated region
    $region2: #{mlp_bel_med_forward.1} parent=1 // pred_check
      _
    $region3: #{mlp_bel_med_forward.1} parent=1 // pred_check_branch
      %36 = sbr.rel (0) target = $region5
    $region4: #{mlp_bel_med_forward.1} parent=1 // pred_region
      _
    $region5: #{mlp_bel_med_forward.1} parent=1 // pred_fallthru
      _
    // Predicated region
    $region6: #{mlp_bel_med_forward.1} parent=1 // pred_check
      _
    $region7: #{mlp_bel_med_forward.1} parent=1 // pred_check_branch
      %38 = sbr.rel (0) target = $region9
    $region8: #{mlp_bel_med_forward.1} parent=1 // pred_region
      %s40 = ssub.s32 5120, 5120
      %41 = vsyncadd [#allocation3], %s40
      %s42 = sshll.u32 [#allocation2], 4
      %s43 = int_to_ptr.vmem [resolvable:$true] %s42
      %48 = dma.hbm_to_vmem [thread:$0]  %s1, 5120, %s43, [#allocation3], 640, 640, 40
    $region9: #{mlp_bel_med_forward.1} parent=1 // pred_fallthru
      _
    // Predicated region
    $region10: #{mlp_bel_med_forward.1} parent=1 // pred_check
      _
    $region11: #{mlp_bel_med_forward.1} parent=1 // pred_check_branch
      %50 = sbr.rel (0) target = $region13
    $region12: #{mlp_bel_med_forward.1} parent=1 // pred_region
      %s52 = ssub.s32 160, 160
      %53 = vsyncadd [#allocation6], %s52
      %s55 = sshll.u32 [#allocation5], 4
      %s56 = int_to_ptr.vmem [resolvable:$true] %s55
      %58 = dma.hbm_to_vmem [thread:$0]  %s2, 160, %s56, [#allocation6]
    $region13: #{mlp_bel_med_forward.1} parent=1 // pred_fallthru
      _
    // Predicated region
    $region14: #{mlp_bel_med_forward.1} parent=1 // pred_check
      _
    $region15: #{mlp_bel_med_forward.1} parent=1 // pred_check_branch
      %60 = sbr.rel (0) target = $region17
    $region16: #{mlp_bel_med_forward.1} parent=1 // pred_region
      %s62 = ssub.s32 71680, 71680
      %63 = vsyncadd [#allocation6], %s62
      %s64 = sshll.u32 [#allocation7], 4
      %s65 = int_to_ptr.vmem [resolvable:$true] %s64
      %70 = dma.hbm_to_vmem [thread:$0]  %s3, 71680, %s65, [#allocation6], 448, 448, 28
    $region17: #{mlp_bel_med_forward.1} parent=1 // pred_fallthru
      _
    // Predicated region
    $region18: #{mlp_bel_med_forward.1} parent=1 // pred_check
      _
    $region19: #{mlp_bel_med_forward.1} parent=1 // pred_check_branch
      %72 = sbr.rel (0) target = $region21
    $region20: #{mlp_bel_med_forward.1} parent=1 // pred_region
      %s74 = ssub.s32 112, 112
      %75 = vsyncadd [#allocation9], %s74
      %s77 = sshll.u32 [#allocation8], 4
      %s78 = int_to_ptr.vmem [resolvable:$true] %s77
      %80 = dma.hbm_to_vmem [thread:$0]  %s4, 112, %s78, [#allocation9]
    $region21: #{mlp_bel_med_forward.1} parent=1 // pred_fallthru
      _
    // Predicated region
    $region22: #{mlp_bel_med_forward.1} parent=1 // pred_check
      _
    $region23: #{mlp_bel_med_forward.1} parent=1 // pred_check_branch
      %82 = sbr.rel (0) target = $region25
    $region24: #{mlp_bel_med_forward.1} parent=1 // pred_region
      %s84 = ssub.s32 28672, 28672
      %85 = vsyncadd [#allocation9], %s84
      %s86 = sshll.u32 [#allocation10], 4
      %s87 = int_to_ptr.vmem [resolvable:$true] %s86
      %92 = dma.hbm_to_vmem [thread:$0]  %s5, 28672, %s87, [#allocation9], 256, 256, 16
    $region25: #{mlp_bel_med_forward.1} parent=1 // pred_fallthru
      _
    // Predicated region
    $region26: #{mlp_bel_med_forward.1} parent=1 // pred_check
      _
    $region27: #{mlp_bel_med_forward.1} parent=1 // pred_check_branch
      %94 = sbr.rel (0) target = $region29
    $region28: #{mlp_bel_med_forward.1} parent=1 // pred_region
      %s96 = ssub.s32 64, 64
      %97 = vsyncadd [#allocation12], %s96
      %s99 = sshll.u32 [#allocation11], 4
      %s100 = int_to_ptr.vmem [resolvable:$true] %s99
      %102 = dma.hbm_to_vmem [thread:$0]  %s6, 64, %s100, [#allocation12]
    $region29: #{mlp_bel_med_forward.1} parent=1 // pred_fallthru
      _
    // Predicated region
    $region30: #{mlp_bel_med_forward.1} parent=1 // pred_check
      _
    $region31: #{mlp_bel_med_forward.1} parent=1 // pred_check_branch
      %104 = sbr.rel (0) target = $region33
    $region32: #{mlp_bel_med_forward.1} parent=1 // pred_region
      %s106 = ssub.s32 12288, 12288
      %107 = vsyncadd [#allocation12], %s106
      %s108 = sshll.u32 [#allocation13], 4
      %s109 = int_to_ptr.vmem [resolvable:$true] %s108
      %114 = dma.hbm_to_vmem [thread:$0]  %s7, 12288, %s109, [#allocation12], 192, 192, 12
    $region33: #{mlp_bel_med_forward.1} parent=1 // pred_fallthru
      _
    // Predicated region
    $region34: #{mlp_bel_med_forward.1} parent=1 // pred_check
      _
    $region35: #{mlp_bel_med_forward.1} parent=1 // pred_check_branch
      %116 = sbr.rel (0) target = $region37
    $region36: #{mlp_bel_med_forward.1} parent=1 // pred_region
      %s118 = ssub.s32 48, 48
      %119 = vsyncadd [#allocation15], %s118
      %s121 = sshll.u32 [#allocation14], 4
      %s122 = int_to_ptr.vmem [resolvable:$true] %s121
      %124 = dma.hbm_to_vmem [thread:$0]  %s8, 48, %s122, [#allocation15]
    $region37: #{mlp_bel_med_forward.1} parent=1 // pred_fallthru
      _
    // Predicated region
    $region38: #{mlp_bel_med_forward.1} parent=1 // pred_check
      _
    $region39: #{mlp_bel_med_forward.1} parent=1 // pred_check_branch
      %126 = sbr.rel (0) target = $region41
    $region40: #{mlp_bel_med_forward.1} parent=1 // pred_region
      %s128 = ssub.s32 6144, 6144
      %129 = vsyncadd [#allocation15], %s128
      %s130 = sshll.u32 [#allocation16], 4
      %s131 = int_to_ptr.vmem [resolvable:$true] %s130
      %136 = dma.hbm_to_vmem [thread:$0]  %s9, 6144, %s131, [#allocation15], 128, 128, 8
    $region41: #{mlp_bel_med_forward.1} parent=1 // pred_fallthru
      _
    // Predicated region
    $region42: #{mlp_bel_med_forward.1} parent=1 // pred_check
      _
    $region43: #{mlp_bel_med_forward.1} parent=1 // pred_check_branch
      %138 = sbr.rel (0) target = $region45
    $region44: #{mlp_bel_med_forward.1} parent=1 // pred_region
      %s140 = ssub.s32 32, 32
      %141 = vsyncadd [#allocation18], %s140
      %s143 = sshll.u32 [#allocation17], 4
      %s144 = int_to_ptr.vmem [resolvable:$true] %s143
      %146 = dma.hbm_to_vmem [thread:$0]  %s10, 32, %s144, [#allocation18]
    $region45: #{mlp_bel_med_forward.1} parent=1 // pred_fallthru
      _
    // Predicated region
    $region46: #{mlp_bel_med_forward.1} parent=1 // pred_check
      _
    $region47: #{mlp_bel_med_forward.1} parent=1 // pred_check_branch
      %148 = sbr.rel (0) target = $region49
    $region48: #{mlp_bel_med_forward.1} parent=1 // pred_region
      %s150 = ssub.s32 2048, 2048
      %151 = vsyncadd [#allocation18], %s150
      %s152 = sshll.u32 [#allocation19], 4
      %s153 = int_to_ptr.vmem [resolvable:$true] %s152
      %158 = dma.hbm_to_vmem [thread:$0]  %s11, 2048, %s153, [#allocation18], 64, 64, 4
    $region49: #{mlp_bel_med_forward.1} parent=1 // pred_fallthru
      _
    // Predicated region
    $region50: #{mlp_bel_med_forward.1} parent=1 // pred_check
      _
    $region51: #{mlp_bel_med_forward.1} parent=1 // pred_check_branch
      %160 = sbr.rel (0) target = $region53
    $region52: #{mlp_bel_med_forward.1} parent=1 // pred_region
      %s162 = ssub.s32 16, 16
      %163 = vsyncadd [#allocation21], %s162
      %s165 = sshll.u32 [#allocation20], 4
      %s166 = int_to_ptr.vmem [resolvable:$true] %s165
      %168 = dma.hbm_to_vmem [thread:$0]  %s12, 16, %s166, [#allocation21]
    $region53: #{mlp_bel_med_forward.1} parent=1 // pred_fallthru
      _
    // Predicated region
    $region54: #{mlp_bel_med_forward.1} parent=1 // pred_check
      _
    $region55: #{mlp_bel_med_forward.1} parent=1 // pred_check_branch
      %170 = sbr.rel (0) target = $region57
    $region56: #{mlp_bel_med_forward.1} parent=1 // pred_region
      _
    $region57: #{mlp_bel_med_forward.1} parent=1 // pred_fallthru
      _
    // Predicated region
    $region58: #{mlp_bel_med_forward.1} parent=1 // pred_check
      _
    $region59: #{mlp_bel_med_forward.1} parent=1 // pred_check_branch
      %172 = sbr.rel (0) target = $region61
    $region60: #{mlp_bel_med_forward.1} parent=1 // pred_region
      %s174 = ssub.s32 16, 16
      %175 = vsyncadd [#allocation21], %s174
      %s177 = sshll.u32 [#allocation22], 4
      %s178 = int_to_ptr.vmem [resolvable:$true] %s177
      %180 = dma.hbm_to_vmem [thread:$0]  %s14, 16, %s178, [#allocation21]
    $region61: #{mlp_bel_med_forward.1} parent=1 // pred_fallthru
      _
    // Predicated region
    $region62: #{mlp_bel_med_forward.1} parent=1 // pred_check
      _
    $region63: #{mlp_bel_med_forward.1} parent=1 // pred_check_branch
      %182 = sbr.rel (0) target = $region65
    $region64: #{mlp_bel_med_forward.1} parent=1 // pred_region
      _
    $region65: #{mlp_bel_med_forward.1} parent=1 // pred_fallthru
      _
    // Predicated region
    $region66: #{mlp_bel_med_forward.1} parent=1 // pred_check
      _
    $region67: #{mlp_bel_med_forward.1} parent=1 // pred_check_branch
      %184 = sbr.rel (0) target = $region69
    $region68: #{mlp_bel_med_forward.1} parent=1 // pred_region
      %s186 = ssub.s32 16, 16
      %187 = vsyncadd [#allocation24], %s186
      %s189 = sshll.u32 [#allocation23], 4
      %s190 = int_to_ptr.vmem [resolvable:$true] %s189
      %192 = dma.hbm_to_vmem [thread:$0]  %s16, 16, %s190, [#allocation24]
    $region69: #{mlp_bel_med_forward.1} parent=1 // pred_fallthru
      _
    // Predicated region
    $region70: #{mlp_bel_med_forward.1} parent=1 // pred_check
      _
    $region71: #{mlp_bel_med_forward.1} parent=1 // pred_check_branch
      %194 = sbr.rel (0) target = $region73
    $region72: #{mlp_bel_med_forward.1} parent=1 // pred_region
      %s196 = ssub.s32 16, 16
      %197 = vsyncadd [#allocation4], %s196
      %200 = dma.hbm_to_smem %s17, 16, [#allocation25], [#allocation4]
    $region73: #{mlp_bel_med_forward.1} parent=1 // pred_fallthru
      _
    // Predicated region
    $region74: #{mlp_bel_med_forward.1} parent=1 // pred_check
      _
    $region75: #{mlp_bel_med_forward.1} parent=1 // pred_check_branch
      %202 = sbr.rel (0) target = $region77
    $region76: #{mlp_bel_med_forward.1} parent=1 // pred_region
      %s204 = ssub.s32 256, 256
      %205 = vsyncadd [#allocation24], %s204
      %s206 = sshll.u32 [#allocation26], 4
      %s207 = int_to_ptr.vmem [resolvable:$true] %s206
      %212 = dma.hbm_to_vmem [thread:$0]  %s18, 256, %s207, [#allocation24], 64, 64, 4
    $region77: #{mlp_bel_med_forward.1} parent=1 // pred_fallthru
      _
    // Predicated region
    $region78: #{mlp_bel_med_forward.1} parent=1 // pred_check
      _
    $region79: #{mlp_bel_med_forward.1} parent=1 // pred_check_branch
      %214 = sbr.rel (0) target = $region81
    $region80: #{mlp_bel_med_forward.1} parent=1 // pred_region
      %s216 = ssub.s32 16, 16
      %217 = vsyncadd [#allocation28], %s216
      %s219 = sshll.u32 [#allocation27], 4
      %s220 = int_to_ptr.vmem [resolvable:$true] %s219
      %222 = dma.hbm_to_vmem [thread:$0]  %s19, 16, %s220, [#allocation28]
    $region81: #{mlp_bel_med_forward.1} parent=1 // pred_fallthru
      _
    // Predicated region
    $region82: #{mlp_bel_med_forward.1} parent=1 // pred_check
      _
    $region83: #{mlp_bel_med_forward.1} parent=1 // pred_check_branch
      %224 = sbr.rel (0) target = $region85
    $region84: #{mlp_bel_med_forward.1} parent=1 // pred_region
      %225 = dma.done [#allocation3], 5120
    $region85: #{mlp_bel_med_forward.1} parent=1 // pred_fallthru
      _
    // Predicated region
    $region86: #{mlp_bel_med_forward.1} parent=1 // pred_check
      _
    $region87: #{mlp_bel_med_forward.1} parent=1 // pred_check_branch
      %227 = sbr.rel (0) target = $region89
    $region88: #{mlp_bel_med_forward.1} parent=1 // pred_region
      %228 = dma.done [#allocation6], 160
    $region89: #{mlp_bel_med_forward.1} parent=1 // pred_fallthru
      _
    // Predicated region
    $region90: #{mlp_bel_med_forward.1} parent=1 // pred_check
      _
    $region91: #{mlp_bel_med_forward.1} parent=1 // pred_check_branch
      %230 = sbr.rel (0) target = $region93
    $region92: #{mlp_bel_med_forward.1} parent=1 // pred_region
      %231 = dma.done [#allocation6], 71680
    $region93: #{mlp_bel_med_forward.1} parent=1 // pred_fallthru
      _
    // Predicated region
    $region94: #{mlp_bel_med_forward.1} parent=1 // pred_check
      _
    $region95: #{mlp_bel_med_forward.1} parent=1 // pred_check_branch
      %233 = sbr.rel (0) target = $region97
    $region96: #{mlp_bel_med_forward.1} parent=1 // pred_region
      %234 = dma.done [#allocation9], 112
    $region97: #{mlp_bel_med_forward.1} parent=1 // pred_fallthru
      _
    // Predicated region
    $region98: #{mlp_bel_med_forward.1} parent=1 // pred_check
      _
    $region99: #{mlp_bel_med_forward.1} parent=1 // pred_check_branch
      %236 = sbr.rel (0) target = $region101
    $region100: #{mlp_bel_med_forward.1} parent=1 // pred_region
      %237 = dma.done [#allocation9], 28672
    $region101: #{mlp_bel_med_forward.1} parent=1 // pred_fallthru
      _
    // Predicated region
    $region102: #{mlp_bel_med_forward.1} parent=1 // pred_check
      _
    $region103: #{mlp_bel_med_forward.1} parent=1 // pred_check_branch
      %239 = sbr.rel (0) target = $region105
    $region104: #{mlp_bel_med_forward.1} parent=1 // pred_region
      %240 = dma.done [#allocation12], 64
    $region105: #{mlp_bel_med_forward.1} parent=1 // pred_fallthru
      _
    // Predicated region
    $region106: #{mlp_bel_med_forward.1} parent=1 // pred_check
      _
    $region107: #{mlp_bel_med_forward.1} parent=1 // pred_check_branch
      %242 = sbr.rel (0) target = $region109
    $region108: #{mlp_bel_med_forward.1} parent=1 // pred_region
      %243 = dma.done [#allocation12], 12288
    $region109: #{mlp_bel_med_forward.1} parent=1 // pred_fallthru
      _
    // Predicated region
    $region110: #{mlp_bel_med_forward.1} parent=1 // pred_check
      _
    $region111: #{mlp_bel_med_forward.1} parent=1 // pred_check_branch
      %245 = sbr.rel (0) target = $region113
    $region112: #{mlp_bel_med_forward.1} parent=1 // pred_region
      %246 = dma.done [#allocation15], 48
    $region113: #{mlp_bel_med_forward.1} parent=1 // pred_fallthru
      _
    // Predicated region
    $region114: #{mlp_bel_med_forward.1} parent=1 // pred_check
      _
    $region115: #{mlp_bel_med_forward.1} parent=1 // pred_check_branch
      %248 = sbr.rel (0) target = $region117
    $region116: #{mlp_bel_med_forward.1} parent=1 // pred_region
      %249 = dma.done [#allocation15], 6144
    $region117: #{mlp_bel_med_forward.1} parent=1 // pred_fallthru
      _
    // Predicated region
    $region118: #{mlp_bel_med_forward.1} parent=1 // pred_check
      _
    $region119: #{mlp_bel_med_forward.1} parent=1 // pred_check_branch
      %251 = sbr.rel (0) target = $region121
    $region120: #{mlp_bel_med_forward.1} parent=1 // pred_region
      %252 = dma.done [#allocation18], 32
    $region121: #{mlp_bel_med_forward.1} parent=1 // pred_fallthru
      _
    // Predicated region
    $region122: #{mlp_bel_med_forward.1} parent=1 // pred_check
      _
    $region123: #{mlp_bel_med_forward.1} parent=1 // pred_check_branch
      %254 = sbr.rel (0) target = $region125
    $region124: #{mlp_bel_med_forward.1} parent=1 // pred_region
      %255 = dma.done [#allocation18], 2048
    $region125: #{mlp_bel_med_forward.1} parent=1 // pred_fallthru
      _
    // Predicated region
    $region126: #{mlp_bel_med_forward.1} parent=1 // pred_check
      _
    $region127: #{mlp_bel_med_forward.1} parent=1 // pred_check_branch
      %257 = sbr.rel (0) target = $region129
    $region128: #{mlp_bel_med_forward.1} parent=1 // pred_region
      %258 = dma.done [#allocation21], 16
    $region129: #{mlp_bel_med_forward.1} parent=1 // pred_fallthru
      _
    // Predicated region
    $region130: #{mlp_bel_med_forward.1} parent=1 // pred_check
      _
    $region131: #{mlp_bel_med_forward.1} parent=1 // pred_check_branch
      %260 = sbr.rel (0) target = $region133
    $region132: #{mlp_bel_med_forward.1} parent=1 // pred_region
      %261 = dma.done [#allocation21], 16
    $region133: #{mlp_bel_med_forward.1} parent=1 // pred_fallthru
      _
    // Predicated region
    $region134: #{mlp_bel_med_forward.1} parent=1 // pred_check
      _
    $region135: #{mlp_bel_med_forward.1} parent=1 // pred_check_branch
      %263 = sbr.rel (0) target = $region137
    $region136: #{mlp_bel_med_forward.1} parent=1 // pred_region
      %264 = dma.done [#allocation24], 16
    $region137: #{mlp_bel_med_forward.1} parent=1 // pred_fallthru
      _
    // Predicated region
    $region138: #{mlp_bel_med_forward.1} parent=1 // pred_check
      _
    $region139: #{mlp_bel_med_forward.1} parent=1 // pred_check_branch
      %266 = sbr.rel (0) target = $region141
    $region140: #{mlp_bel_med_forward.1} parent=1 // pred_region
      %267 = dma.done [#allocation4], 16
    $region141: #{mlp_bel_med_forward.1} parent=1 // pred_fallthru
      _
    // Predicated region
    $region142: #{mlp_bel_med_forward.1} parent=1 // pred_check
      _
    $region143: #{mlp_bel_med_forward.1} parent=1 // pred_check_branch
      %269 = sbr.rel (0) target = $region145
    $region144: #{mlp_bel_med_forward.1} parent=1 // pred_region
      %270 = dma.done [#allocation24], 256
    $region145: #{mlp_bel_med_forward.1} parent=1 // pred_fallthru
      _
    // Predicated region
    $region146: #{mlp_bel_med_forward.1} parent=1 // pred_check
      _
    $region147: #{mlp_bel_med_forward.1} parent=1 // pred_check_branch
      %272 = sbr.rel (0) target = $region149
    $region148: #{mlp_bel_med_forward.1} parent=1 // pred_region
      %273 = dma.done [#allocation28], 16
    $region149: #{mlp_bel_med_forward.1} parent=1 // pred_fallthru
      _
    %274 = sfence
    %v276 = vld [vmem:[%s0] sm:$0xff]
    %v277 = vpack.c.bf16 %v276, %v276
    %v278 = vld [vmem:[#allocation2] sm:$0xff]
    %v279 = vld [vmem:[#allocation2 + $0x8] sm:$0xff]
    %v280 = vld [vmem:[#allocation2 + $0x10] sm:$0xff]
    %v281 = vld [vmem:[#allocation2 + $0x18] sm:$0xff]
    %v282 = vld [vmem:[#allocation2 + $0x20] sm:$0xff]
    %v283 = vld [vmem:[#allocation2 + $0x28] sm:$0xff]
    %v284 = vld [vmem:[#allocation2 + $0x30] sm:$0xff]
    %v285 = vld [vmem:[#allocation2 + $0x38] sm:$0xff]
    %v286 = vld [vmem:[#allocation2 + $0x40] sm:$0xff]
    %v287 = vld [vmem:[#allocation2 + $0x48] sm:$0xff]
    %v288 = vld [vmem:[#allocation2 + $0x50] sm:$0xff]
    %v289 = vld [vmem:[#allocation2 + $0x58] sm:$0xff]
    %v290 = vld [vmem:[#allocation2 + $0x60] sm:$0xff]
    %v291 = vld [vmem:[#allocation2 + $0x68] sm:$0xff]
    %v292 = vld [vmem:[#allocation2 + $0x70] sm:$0xff]
    %v293 = vld [vmem:[#allocation2 + $0x78] sm:$0xff]
    %v294 = vld [vmem:[#allocation2 + $0x80] sm:$0xff]
    %v295 = vld [vmem:[#allocation2 + $0x88] sm:$0xff]
    %v296 = vld [vmem:[#allocation2 + $0x90] sm:$0xff]
    %v297 = vld [vmem:[#allocation2 + $0x98] sm:$0xff]
    %v298 = vld [vmem:[#allocation2 + $0xa0] sm:$0xff]
    %v299 = vld [vmem:[#allocation2 + $0xa8] sm:$0xff]
    %v300 = vld [vmem:[#allocation2 + $0xb0] sm:$0xff]
    %v301 = vld [vmem:[#allocation2 + $0xb8] sm:$0xff]
    %v302 = vld [vmem:[#allocation2 + $0xc0] sm:$0xff]
    %v303 = vld [vmem:[#allocation2 + $0xc8] sm:$0xff]
    %v304 = vld [vmem:[#allocation2 + $0xd0] sm:$0xff]
    %v305 = vld [vmem:[#allocation2 + $0xd8] sm:$0xff]
    %v306 = vld [vmem:[#allocation2 + $0xe0] sm:$0xff]
    %v307 = vld [vmem:[#allocation2 + $0xe8] sm:$0xff]
    %v308 = vld [vmem:[#allocation2 + $0xf0] sm:$0xff]
    %v309 = vld [vmem:[#allocation2 + $0xf8] sm:$0xff]
    %v310 = vld [vmem:[#allocation2 + $0x100] sm:$0xff]
    %v311 = vld [vmem:[#allocation2 + $0x108] sm:$0xff]
    %v312 = vld [vmem:[#allocation2 + $0x110] sm:$0xff]
    %v313 = vld [vmem:[#allocation2 + $0x118] sm:$0xff]
    %v314 = vld [vmem:[#allocation2 + $0x120] sm:$0xff]
    %v315 = vld [vmem:[#allocation2 + $0x128] sm:$0xff]
    %v316 = vld [vmem:[#allocation2 + $0x130] sm:$0xff]
    %v317 = vld [vmem:[#allocation2 + $0x138] sm:$0xff]
    %v318 = vld [vmem:[#allocation5] sm:$0xff]
    %v319 = vld [vmem:[#allocation5 + $0x8] sm:$0x3]
    %v322 = vlaneseq
    %v323 = vshrl.u32 %v322, 7
    %v324 = vsub.s32 0, %v323
    %v325 = vrot.slane %v318, %v324
    %v326 = vlaneseq
    %v327 = vshrl.u32 %v326, 7
    %v328 = vsub.s32 1, %v327
    %v329 = vrot.slane %v318, %v328
    %v330 = vlaneseq
    %v331 = vshrl.u32 %v330, 7
    %v332 = vsub.s32 2, %v331
    %v333 = vrot.slane %v318, %v332
    %v334 = vlaneseq
    %v335 = vshrl.u32 %v334, 7
    %v336 = vsub.s32 3, %v335
    %v337 = vrot.slane %v318, %v336
    %v338 = vlaneseq
    %v339 = vshrl.u32 %v338, 7
    %v340 = vsub.s32 4, %v339
    %v341 = vrot.slane %v318, %v340
    %v342 = vlaneseq
    %v343 = vshrl.u32 %v342, 7
    %v344 = vsub.s32 5, %v343
    %v345 = vrot.slane %v318, %v344
    %v346 = vlaneseq
    %v347 = vshrl.u32 %v346, 7
    %v348 = vsub.s32 6, %v347
    %v349 = vrot.slane %v318, %v348
    %v350 = vlaneseq
    %v351 = vshrl.u32 %v350, 7
    %v352 = vsub.s32 7, %v351
    %v353 = vrot.slane %v318, %v352
    %v354 = vlaneseq
    %v355 = vshrl.u32 %v354, 7
    %v356 = vsub.s32 0, %v355
    %v357 = vrot.slane %v319, %v356
    %v358 = vlaneseq
    %v359 = vshrl.u32 %v358, 7
    %v360 = vsub.s32 1, %v359
    %v361 = vrot.slane %v319, %v360
    %v412 = vunpack.c.l.b16 %v278
    %v413 = vunpack.c.h.b16 %v278
    %v414 = vunpack.c.l.b16 %v279
    %v415 = vunpack.c.h.b16 %v279
    %v416 = vunpack.c.l.b16 %v280
    %v417 = vunpack.c.h.b16 %v280
    %v418 = vunpack.c.l.b16 %v281
    %v419 = vunpack.c.h.b16 %v281
    %v420 = vunpack.c.l.b16 %v282
    %v421 = vunpack.c.h.b16 %v282
    %v422 = vunpack.c.l.b16 %v283
    %v423 = vunpack.c.h.b16 %v283
    %v424 = vunpack.c.l.b16 %v284
    %v425 = vunpack.c.h.b16 %v284
    %v426 = vunpack.c.l.b16 %v285
    %v427 = vunpack.c.h.b16 %v285
    %v428 = vunpack.c.l.b16 %v286
    %v429 = vunpack.c.h.b16 %v286
    %v430 = vunpack.c.l.b16 %v287
    %v431 = vunpack.c.h.b16 %v287
    %v432 = vunpack.c.l.b16 %v288
    %v433 = vunpack.c.h.b16 %v288
    %v434 = vunpack.c.l.b16 %v289
    %v435 = vunpack.c.h.b16 %v289
    %v436 = vunpack.c.l.b16 %v290
    %v437 = vunpack.c.h.b16 %v290
    %v438 = vunpack.c.l.b16 %v291
    %v439 = vunpack.c.h.b16 %v291
    %v440 = vunpack.c.l.b16 %v292
    %v441 = vunpack.c.h.b16 %v292
    %v442 = vunpack.c.l.b16 %v293
    %v443 = vunpack.c.h.b16 %v293
    %v444 = vunpack.c.l.b16 %v294
    %v445 = vunpack.c.h.b16 %v294
    %v446 = vunpack.c.l.b16 %v295
    %v447 = vunpack.c.h.b16 %v295
    %v448 = vunpack.c.l.b16 %v296
    %v449 = vunpack.c.h.b16 %v296
    %v450 = vunpack.c.l.b16 %v297
    %v451 = vunpack.c.h.b16 %v297
    %v452 = vunpack.c.l.b16 %v298
    %v453 = vunpack.c.h.b16 %v298
    %v454 = vunpack.c.l.b16 %v299
    %v455 = vunpack.c.h.b16 %v299
    %v456 = vunpack.c.l.b16 %v300
    %v457 = vunpack.c.h.b16 %v300
    %v458 = vunpack.c.l.b16 %v301
    %v459 = vunpack.c.h.b16 %v301
    %v460 = vunpack.c.l.b16 %v302
    %v461 = vunpack.c.h.b16 %v302
    %v462 = vunpack.c.l.b16 %v303
    %v463 = vunpack.c.h.b16 %v303
    %v464 = vunpack.c.l.b16 %v304
    %v465 = vunpack.c.h.b16 %v304
    %v466 = vunpack.c.l.b16 %v305
    %v467 = vunpack.c.h.b16 %v305
    %v468 = vunpack.c.l.b16 %v306
    %v469 = vunpack.c.h.b16 %v306
    %v470 = vunpack.c.l.b16 %v307
    %v471 = vunpack.c.h.b16 %v307
    %v472 = vunpack.c.l.b16 %v308
    %v473 = vunpack.c.h.b16 %v308
    %v474 = vunpack.c.l.b16 %v309
    %v475 = vunpack.c.h.b16 %v309
    %v476 = vunpack.c.l.b16 %v310
    %v477 = vunpack.c.h.b16 %v310
    %v478 = vunpack.c.l.b16 %v311
    %v479 = vunpack.c.h.b16 %v311
    %v480 = vunpack.c.l.b16 %v312
    %v481 = vunpack.c.h.b16 %v312
    %v482 = vunpack.c.l.b16 %v313
    %v483 = vunpack.c.h.b16 %v313
    %v484 = vunpack.c.l.b16 %v314
    %v485 = vunpack.c.h.b16 %v314
    %v486 = vunpack.c.l.b16 %v315
    %v487 = vunpack.c.h.b16 %v315
    %v488 = vunpack.c.l.b16 %v316
    %v489 = vunpack.c.h.b16 %v316
    %v490 = vunpack.c.l.b16 %v317
    %v491 = vunpack.c.h.b16 %v317
    %v492 = vpack.c.b16 %v422, %v412
    %v493 = vpack.c.b16 %v423, %v413
    %v494 = vpack.c.b16 %v424, %v414
    %v495 = vpack.c.b16 %v425, %v415
    %v496 = vpack.c.b16 %v426, %v416
    %v497 = vpack.c.b16 %v427, %v417
    %v498 = vpack.c.b16 %v428, %v418
    %v499 = vpack.c.b16 %v429, %v419
    %v500 = vpack.c.b16 %v430, %v420
    %v501 = vpack.c.b16 %v431, %v421
    %v502 = vpack.c.b16 %v442, %v432
    %v503 = vpack.c.b16 %v443, %v433
    %v504 = vpack.c.b16 %v444, %v434
    %v505 = vpack.c.b16 %v445, %v435
    %v506 = vpack.c.b16 %v446, %v436
    %v507 = vpack.c.b16 %v447, %v437
    %v508 = vpack.c.b16 %v448, %v438
    %v509 = vpack.c.b16 %v449, %v439
    %v510 = vpack.c.b16 %v450, %v440
    %v511 = vpack.c.b16 %v451, %v441
    %v512 = vpack.c.b16 %v462, %v452
    %v513 = vpack.c.b16 %v463, %v453
    %v514 = vpack.c.b16 %v464, %v454
    %v515 = vpack.c.b16 %v465, %v455
    %v516 = vpack.c.b16 %v466, %v456
    %v517 = vpack.c.b16 %v467, %v457
    %v518 = vpack.c.b16 %v468, %v458
    %v519 = vpack.c.b16 %v469, %v459
    %v520 = vpack.c.b16 %v470, %v460
    %v521 = vpack.c.b16 %v471, %v461
    %v522 = vpack.c.b16 %v482, %v472
    %v523 = vpack.c.b16 %v483, %v473
    %v524 = vpack.c.b16 %v484, %v474
    %v525 = vpack.c.b16 %v485, %v475
    %v526 = vpack.c.b16 %v486, %v476
    %v527 = vpack.c.b16 %v487, %v477
    %v528 = vpack.c.b16 %v488, %v478
    %v529 = vpack.c.b16 %v489, %v479
    %v530 = vpack.c.b16 %v490, %v480
    %v531 = vpack.c.b16 %v491, %v481
    %vm572 = vcmask 523264
    %v574 = vsel %vm572, %v277, 0
    %576 = vmatprep.subr.bf16.mxu0 0
    %577 = vmatpush1.bf16.msra.mxu0 0
    %578 = vmatprep.subr.bf16.mxu0 0
    %579 = vmatpush1.bf16.msra.mxu0 0
    %580 = vmatprep.subr.bf16.mxu0 0
    %581 = vmatpush1.bf16.msra.mxu0 0
    %582 = vmatprep.subr.bf16.mxu0 0
    %583 = vmatpush1.bf16.msra.mxu0 0
    %584 = vmatprep.subr.bf16.mxu0 %v523
    %585 = vmatpush1.bf16.msra.mxu0 %v522
    %586 = vmatprep.subr.bf16.mxu0 %v513
    %587 = vmatpush1.bf16.msra.mxu0 %v512
    %588 = vmatprep.subr.bf16.mxu0 %v503
    %589 = vmatpush1.bf16.msra.mxu0 %v502
    %590 = vmatprep.subr.bf16.mxu0 %v493
    %591 = vmatpush1.bf16.msra.mxu0 %v492
    %592 = vmatprep.subr.bf16.mxu0 0
    %593 = vmatpush2.bf16.msra.mxu0 0
    %594 = vmatprep.subr.bf16.mxu0 0
    %595 = vmatpush2.bf16.msra.mxu0 0
    %596 = vmatprep.subr.bf16.mxu0 0
    %597 = vmatpush2.bf16.msra.mxu0 0
    %598 = vmatprep.subr.bf16.mxu0 0
    %599 = vmatpush2.bf16.msra.mxu0 0
    %600 = vmatprep.subr.bf16.mxu0 0
    %601 = vmatpush2.bf16.msra.mxu0 0
    %602 = vmatprep.subr.bf16.mxu0 0
    %603 = vmatpush2.bf16.msra.mxu0 0
    %604 = vmatprep.subr.bf16.mxu0 0
    %605 = vmatpush2.bf16.msra.mxu0 0
    %606 = vmatprep.subr.bf16.mxu0 0
    %607 = vmatpush2.bf16.msra.mxu0 0
    %608 = vmatprep.mubr.bf16.mxu0 0
    %609 = vmatmul.mubr.bf16.gmra.mxu0 %v574
    %v610 = vpop.f32.mrf.mxu0
    %v611 = vadd.f32 %v325, %v610
    %v612 = vpop.f32.mrf.mxu0
    %v613 = vadd.f32 %v329, %v612
    %v614 = vpop.f32.mrf.mxu0
    %v615 = vpop.f32.mrf.mxu0
    %616 = vdwg.mxu0
    %617 = vmatprep.subr.bf16.mxu0 0
    %618 = vmatpush1.bf16.msra.mxu0 0
    %619 = vmatprep.subr.bf16.mxu0 0
    %620 = vmatpush1.bf16.msra.mxu0 0
    %621 = vmatprep.subr.bf16.mxu0 0
    %622 = vmatpush1.bf16.msra.mxu0 0
    %623 = vmatprep.subr.bf16.mxu0 0
    %624 = vmatpush1.bf16.msra.mxu0 0
    %625 = vmatprep.subr.bf16.mxu0 %v525
    %626 = vmatpush1.bf16.msra.mxu0 %v524
    %627 = vmatprep.subr.bf16.mxu0 %v515
    %628 = vmatpush1.bf16.msra.mxu0 %v514
    %629 = vmatprep.subr.bf16.mxu0 %v505
    %630 = vmatpush1.bf16.msra.mxu0 %v504
    %631 = vmatprep.subr.bf16.mxu0 %v495
    %632 = vmatpush1.bf16.msra.mxu0 %v494
    %633 = vmatprep.subr.bf16.mxu0 0
    %634 = vmatpush2.bf16.msra.mxu0 0
    %635 = vmatprep.subr.bf16.mxu0 0
    %636 = vmatpush2.bf16.msra.mxu0 0
    %637 = vmatprep.subr.bf16.mxu0 0
    %638 = vmatpush2.bf16.msra.mxu0 0
    %639 = vmatprep.subr.bf16.mxu0 0
    %640 = vmatpush2.bf16.msra.mxu0 0
    %641 = vmatprep.subr.bf16.mxu0 0
    %642 = vmatpush2.bf16.msra.mxu0 0
    %643 = vmatprep.subr.bf16.mxu0 0
    %644 = vmatpush2.bf16.msra.mxu0 0
    %645 = vmatprep.subr.bf16.mxu0 0
    %646 = vmatpush2.bf16.msra.mxu0 0
    %647 = vmatprep.subr.bf16.mxu0 0
    %648 = vmatpush2.bf16.msra.mxu0 0
    %649 = vmatprep.mubr.bf16.mxu0 0
    %650 = vmatmul.mubr.bf16.gmra.mxu0 %v574
    %v651 = vpop.f32.mrf.mxu0
    %v652 = vadd.f32 %v333, %v651
    %v653 = vpop.f32.mrf.mxu0
    %v654 = vadd.f32 %v337, %v653
    %v655 = vpop.f32.mrf.mxu0
    %v656 = vpop.f32.mrf.mxu0
    %657 = vdwg.mxu0
    %658 = vmatprep.subr.bf16.mxu0 0
    %659 = vmatpush1.bf16.msra.mxu0 0
    %660 = vmatprep.subr.bf16.mxu0 0
    %661 = vmatpush1.bf16.msra.mxu0 0
    %662 = vmatprep.subr.bf16.mxu0 0
    %663 = vmatpush1.bf16.msra.mxu0 0
    %664 = vmatprep.subr.bf16.mxu0 0
    %665 = vmatpush1.bf16.msra.mxu0 0
    %666 = vmatprep.subr.bf16.mxu0 %v527
    %667 = vmatpush1.bf16.msra.mxu0 %v526
    %668 = vmatprep.subr.bf16.mxu0 %v517
    %669 = vmatpush1.bf16.msra.mxu0 %v516
    %670 = vmatprep.subr.bf16.mxu0 %v507
    %671 = vmatpush1.bf16.msra.mxu0 %v506
    %672 = vmatprep.subr.bf16.mxu0 %v497
    %673 = vmatpush1.bf16.msra.mxu0 %v496
    %674 = vmatprep.subr.bf16.mxu0 0
    %675 = vmatpush2.bf16.msra.mxu0 0
    %676 = vmatprep.subr.bf16.mxu0 0
    %677 = vmatpush2.bf16.msra.mxu0 0
    %678 = vmatprep.subr.bf16.mxu0 0
    %679 = vmatpush2.bf16.msra.mxu0 0
    %680 = vmatprep.subr.bf16.mxu0 0
    %681 = vmatpush2.bf16.msra.mxu0 0
    %682 = vmatprep.subr.bf16.mxu0 0
    %683 = vmatpush2.bf16.msra.mxu0 0
    %684 = vmatprep.subr.bf16.mxu0 0
    %685 = vmatpush2.bf16.msra.mxu0 0
    %686 = vmatprep.subr.bf16.mxu0 0
    %687 = vmatpush2.bf16.msra.mxu0 0
    %688 = vmatprep.subr.bf16.mxu0 0
    %689 = vmatpush2.bf16.msra.mxu0 0
    %690 = vmatprep.mubr.bf16.mxu0 0
    %691 = vmatmul.mubr.bf16.gmra.mxu0 %v574
    %v692 = vpop.f32.mrf.mxu0
    %v693 = vadd.f32 %v341, %v692
    %v694 = vpop.f32.mrf.mxu0
    %v695 = vadd.f32 %v345, %v694
    %v696 = vpop.f32.mrf.mxu0
    %v697 = vpop.f32.mrf.mxu0
    %698 = vdwg.mxu0
    %699 = vmatprep.subr.bf16.mxu0 0
    %700 = vmatpush1.bf16.msra.mxu0 0
    %701 = vmatprep.subr.bf16.mxu0 0
    %702 = vmatpush1.bf16.msra.mxu0 0
    %703 = vmatprep.subr.bf16.mxu0 0
    %704 = vmatpush1.bf16.msra.mxu0 0
    %705 = vmatprep.subr.bf16.mxu0 0
    %706 = vmatpush1.bf16.msra.mxu0 0
    %707 = vmatprep.subr.bf16.mxu0 %v529
    %708 = vmatpush1.bf16.msra.mxu0 %v528
    %709 = vmatprep.subr.bf16.mxu0 %v519
    %710 = vmatpush1.bf16.msra.mxu0 %v518
    %711 = vmatprep.subr.bf16.mxu0 %v509
    %712 = vmatpush1.bf16.msra.mxu0 %v508
    %713 = vmatprep.subr.bf16.mxu0 %v499
    %714 = vmatpush1.bf16.msra.mxu0 %v498
    %715 = vmatprep.subr.bf16.mxu0 0
    %716 = vmatpush2.bf16.msra.mxu0 0
    %717 = vmatprep.subr.bf16.mxu0 0
    %718 = vmatpush2.bf16.msra.mxu0 0
    %719 = vmatprep.subr.bf16.mxu0 0
    %720 = vmatpush2.bf16.msra.mxu0 0
    %721 = vmatprep.subr.bf16.mxu0 0
    %722 = vmatpush2.bf16.msra.mxu0 0
    %723 = vmatprep.subr.bf16.mxu0 0
    %724 = vmatpush2.bf16.msra.mxu0 0
    %725 = vmatprep.subr.bf16.mxu0 0
    %726 = vmatpush2.bf16.msra.mxu0 0
    %727 = vmatprep.subr.bf16.mxu0 0
    %728 = vmatpush2.bf16.msra.mxu0 0
    %729 = vmatprep.subr.bf16.mxu0 0
    %730 = vmatpush2.bf16.msra.mxu0 0
    %731 = vmatprep.mubr.bf16.mxu0 0
    %732 = vmatmul.mubr.bf16.gmra.mxu0 %v574
    %v733 = vpop.f32.mrf.mxu0
    %v734 = vadd.f32 %v349, %v733
    %v735 = vpop.f32.mrf.mxu0
    %v736 = vadd.f32 %v353, %v735
    %v737 = vpop.f32.mrf.mxu0
    %v738 = vpop.f32.mrf.mxu0
    %739 = vdwg.mxu0
    %740 = vmatprep.subr.bf16.mxu0 0
    %741 = vmatpush1.bf16.msra.mxu0 0
    %742 = vmatprep.subr.bf16.mxu0 0
    %743 = vmatpush1.bf16.msra.mxu0 0
    %744 = vmatprep.subr.bf16.mxu0 0
    %745 = vmatpush1.bf16.msra.mxu0 0
    %746 = vmatprep.subr.bf16.mxu0 0
    %747 = vmatpush1.bf16.msra.mxu0 0
    %748 = vmatprep.subr.bf16.mxu0 %v531
    %749 = vmatpush1.bf16.msra.mxu0 %v530
    %750 = vmatprep.subr.bf16.mxu0 %v521
    %751 = vmatpush1.bf16.msra.mxu0 %v520
    %752 = vmatprep.subr.bf16.mxu0 %v511
    %753 = vmatpush1.bf16.msra.mxu0 %v510
    %754 = vmatprep.subr.bf16.mxu0 %v501
    %755 = vmatpush1.bf16.msra.mxu0 %v500
    %756 = vmatprep.subr.bf16.mxu0 0
    %757 = vmatpush2.bf16.msra.mxu0 0
    %758 = vmatprep.subr.bf16.mxu0 0
    %759 = vmatpush2.bf16.msra.mxu0 0
    %760 = vmatprep.subr.bf16.mxu0 0
    %761 = vmatpush2.bf16.msra.mxu0 0
    %762 = vmatprep.subr.bf16.mxu0 0
    %763 = vmatpush2.bf16.msra.mxu0 0
    %764 = vmatprep.subr.bf16.mxu0 0
    %765 = vmatpush2.bf16.msra.mxu0 0
    %766 = vmatprep.subr.bf16.mxu0 0
    %767 = vmatpush2.bf16.msra.mxu0 0
    %768 = vmatprep.subr.bf16.mxu0 0
    %769 = vmatpush2.bf16.msra.mxu0 0
    %770 = vmatprep.subr.bf16.mxu0 0
    %771 = vmatpush2.bf16.msra.mxu0 0
    %772 = vmatprep.mubr.bf16.mxu0 0
    %773 = vmatmul.mubr.bf16.gmra.mxu0 %v574
    %v774 = vpop.f32.mrf.mxu0
    %v775 = vadd.f32 %v357, %v774
    %v776 = vpop.f32.mrf.mxu0
    %v777 = vadd.f32 %v361, %v776
    %v778 = vpop.f32.mrf.mxu0
    %v779 = vpop.f32.mrf.mxu0
    %780 = vdwg.mxu0
    %s781 = sld [smem:[#allocation25]]
    %vm782 = vcmp.ge.f32.partialorder %v611, 0.0
    %vm783 = vcmp.ge.f32.partialorder %v613, 0.0
    %vm784 = vcmp.ge.f32.partialorder %v652, 0.0
    %vm785 = vcmp.ge.f32.partialorder %v654, 0.0
    %vm786 = vcmp.ge.f32.partialorder %v693, 0.0
    %vm787 = vcmp.ge.f32.partialorder %v695, 0.0
    %vm788 = vcmp.ge.f32.partialorder %v734, 0.0
    %vm789 = vcmp.ge.f32.partialorder %v736, 0.0
    %vm790 = vcmp.ge.f32.partialorder %v775, 0.0
    %vm791 = vcmp.ge.f32.partialorder %v777, 0.0
    %v792 = vstv %s781
    %v793 = vmul.f32 %v792, %v611
    %v794 = vmul.f32 %v792, %v613
    %v795 = vmul.f32 %v792, %v652
    %v796 = vmul.f32 %v792, %v654
    %v797 = vmul.f32 %v792, %v693
    %v798 = vmul.f32 %v792, %v695
    %v799 = vmul.f32 %v792, %v734
    %v800 = vmul.f32 %v792, %v736
    %v801 = vmul.f32 %v792, %v775
    %v802 = vmul.f32 %v792, %v777
    %v803 = vsel %vm782, %v611, %v793
    %v804 = vsel %vm783, %v613, %v794
    %v805 = vsel %vm784, %v652, %v795
    %v806 = vsel %vm785, %v654, %v796
    %v807 = vsel %vm786, %v693, %v797
    %v808 = vsel %vm787, %v695, %v798
    %v809 = vsel %vm788, %v734, %v799
    %v810 = vsel %vm789, %v736, %v800
    %v811 = vsel %vm790, %v775, %v801
    %v812 = vsel %vm791, %v777, %v802
    %v813 = vpack.c.bf16 %v803, %v803
    %v814 = vpack.c.bf16 %v804, %v804
    %v815 = vpack.c.bf16 %v805, %v805
    %v816 = vpack.c.bf16 %v806, %v806
    %v817 = vpack.c.bf16 %v807, %v807
    %v818 = vpack.c.bf16 %v808, %v808
    %v819 = vpack.c.bf16 %v809, %v809
    %v820 = vpack.c.bf16 %v810, %v810
    %v821 = vpack.c.bf16 %v811, %v811
    %v822 = vpack.c.bf16 %v812, %v812
    %v823 = vld [vmem:[#allocation7] sm:$0xff]
    %v824 = vld [vmem:[#allocation7 + $0x8] sm:$0xff]
    %v825 = vld [vmem:[#allocation7 + $0x10] sm:$0xff]
    %v826 = vld [vmem:[#allocation7 + $0x18] sm:$0xf]
    %v827 = vld [vmem:[#allocation7 + $0x1c] sm:$0xff]
    %v828 = vld [vmem:[#allocation7 + $0x24] sm:$0xff]
    %v829 = vld [vmem:[#allocation7 + $0x2c] sm:$0xff]
    %v830 = vld [vmem:[#allocation7 + $0x34] sm:$0xf]
    %v831 = vld [vmem:[#allocation7 + $0x38] sm:$0xff]
    %v832 = vld [vmem:[#allocation7 + $0x40] sm:$0xff]
    %v833 = vld [vmem:[#allocation7 + $0x48] sm:$0xff]
    %v834 = vld [vmem:[#allocation7 + $0x50] sm:$0xf]
    %v835 = vld [vmem:[#allocation7 + $0x54] sm:$0xff]
    %v836 = vld [vmem:[#allocation7 + $0x5c] sm:$0xff]
    %v837 = vld [vmem:[#allocation7 + $0x64] sm:$0xff]
    %v838 = vld [vmem:[#allocation7 + $0x6c] sm:$0xf]
    %v839 = vld [vmem:[#allocation7 + $0x70] sm:$0xff]
    %v840 = vld [vmem:[#allocation7 + $0x78] sm:$0xff]
    %v841 = vld [vmem:[#allocation7 + $0x80] sm:$0xff]
    %v842 = vld [vmem:[#allocation7 + $0x88] sm:$0xf]
    %v843 = vld [vmem:[#allocation7 + $0x8c] sm:$0xff]
    %v844 = vld [vmem:[#allocation7 + $0x94] sm:$0xff]
    %v845 = vld [vmem:[#allocation7 + $0x9c] sm:$0xff]
    %v846 = vld [vmem:[#allocation7 + $0xa4] sm:$0xf]
    %v847 = vld [vmem:[#allocation7 + $0xa8] sm:$0xff]
    %v848 = vld [vmem:[#allocation7 + $0xb0] sm:$0xff]
    %v849 = vld [vmem:[#allocation7 + $0xb8] sm:$0xff]
    %v850 = vld [vmem:[#allocation7 + $0xc0] sm:$0xf]
    %v851 = vld [vmem:[#allocation7 + $0xc4] sm:$0xff]
    %v852 = vld [vmem:[#allocation7 + $0xcc] sm:$0xff]
    %v853 = vld [vmem:[#allocation7 + $0xd4] sm:$0xff]
    %v854 = vld [vmem:[#allocation7 + $0xdc] sm:$0xf]
    %v855 = vld [vmem:[#allocation7 + $0xe0] sm:$0xff]
    %v856 = vld [vmem:[#allocation7 + $0xe8] sm:$0xff]
    %v857 = vld [vmem:[#allocation7 + $0xf0] sm:$0xff]
    %v858 = vld [vmem:[#allocation7 + $0xf8] sm:$0xf]
    %v859 = vld [vmem:[#allocation7 + $0xfc] sm:$0xff]
    %v860 = vld [vmem:[#allocation7 + $0x104] sm:$0xff]
    %v861 = vld [vmem:[#allocation7 + $0x10c] sm:$0xff]
    %v862 = vld [vmem:[#allocation7 + $0x114] sm:$0xf]
    %v863 = vld [vmem:[#allocation7 + $0x118] sm:$0xff]
    %v864 = vld [vmem:[#allocation7 + $0x120] sm:$0xff]
    %v865 = vld [vmem:[#allocation7 + $0x128] sm:$0xff]
    %v866 = vld [vmem:[#allocation7 + $0x130] sm:$0xf]
    %v867 = vld [vmem:[#allocation7 + $0x134] sm:$0xff]
    %v868 = vld [vmem:[#allocation7 + $0x13c] sm:$0xff]
    %v869 = vld [vmem:[#allocation7 + $0x144] sm:$0xff]
    %v870 = vld [vmem:[#allocation7 + $0x14c] sm:$0xf]
    %v871 = vld [vmem:[#allocation7 + $0x150] sm:$0xff]
    %v872 = vld [vmem:[#allocation7 + $0x158] sm:$0xff]
    %v873 = vld [vmem:[#allocation7 + $0x160] sm:$0xff]
    %v874 = vld [vmem:[#allocation7 + $0x168] sm:$0xf]
    %v875 = vld [vmem:[#allocation7 + $0x16c] sm:$0xff]
    %v876 = vld [vmem:[#allocation7 + $0x174] sm:$0xff]
    %v877 = vld [vmem:[#allocation7 + $0x17c] sm:$0xff]
    %v878 = vld [vmem:[#allocation7 + $0x184] sm:$0xf]
    %v879 = vld [vmem:[#allocation7 + $0x188] sm:$0xff]
    %v880 = vld [vmem:[#allocation7 + $0x190] sm:$0xff]
    %v881 = vld [vmem:[#allocation7 + $0x198] sm:$0xff]
    %v882 = vld [vmem:[#allocation7 + $0x1a0] sm:$0xf]
    %v883 = vld [vmem:[#allocation7 + $0x1a4] sm:$0xff]
    %v884 = vld [vmem:[#allocation7 + $0x1ac] sm:$0xff]
    %v885 = vld [vmem:[#allocation7 + $0x1b4] sm:$0xff]
    %v886 = vld [vmem:[#allocation7 + $0x1bc] sm:$0xf]
    %v887 = vld [vmem:[#allocation7 + $0x1c0] sm:$0xff]
    %v888 = vld [vmem:[#allocation7 + $0x1c8] sm:$0xff]
    %v889 = vld [vmem:[#allocation7 + $0x1d0] sm:$0xff]
    %v890 = vld [vmem:[#allocation7 + $0x1d8] sm:$0xf]
    %v891 = vld [vmem:[#allocation7 + $0x1dc] sm:$0xff]
    %v892 = vld [vmem:[#allocation7 + $0x1e4] sm:$0xff]
    %v893 = vld [vmem:[#allocation7 + $0x1ec] sm:$0xff]
    %v894 = vld [vmem:[#allocation7 + $0x1f4] sm:$0xf]
    %v895 = vld [vmem:[#allocation7 + $0x1f8] sm:$0xff]
    %v896 = vld [vmem:[#allocation7 + $0x200] sm:$0xff]
    %v897 = vld [vmem:[#allocation7 + $0x208] sm:$0xff]
    %v898 = vld [vmem:[#allocation7 + $0x210] sm:$0xf]
    %v899 = vld [vmem:[#allocation7 + $0x214] sm:$0xff]
    %v900 = vld [vmem:[#allocation7 + $0x21c] sm:$0xff]
    %v901 = vld [vmem:[#allocation7 + $0x224] sm:$0xff]
    %v902 = vld [vmem:[#allocation7 + $0x22c] sm:$0xf]
    %v903 = vld [vmem:[#allocation7 + $0x230] sm:$0xff]
    %v904 = vld [vmem:[#allocation7 + $0x238] sm:$0xff]
    %v905 = vld [vmem:[#allocation7 + $0x240] sm:$0xff]
    %v906 = vld [vmem:[#allocation7 + $0x248] sm:$0xf]
    %v907 = vld [vmem:[#allocation7 + $0x24c] sm:$0xff]
    %v908 = vld [vmem:[#allocation7 + $0x254] sm:$0xff]
    %v909 = vld [vmem:[#allocation7 + $0x25c] sm:$0xff]
    %v910 = vld [vmem:[#allocation7 + $0x264] sm:$0xf]
    %v911 = vld [vmem:[#allocation7 + $0x268] sm:$0xff]
    %v912 = vld [vmem:[#allocation7 + $0x270] sm:$0xff]
    %v913 = vld [vmem:[#allocation7 + $0x278] sm:$0xff]
    %v914 = vld [vmem:[#allocation7 + $0x280] sm:$0xf]
    %v915 = vld [vmem:[#allocation7 + $0x284] sm:$0xff]
    %v916 = vld [vmem:[#allocation7 + $0x28c] sm:$0xff]
    %v917 = vld [vmem:[#allocation7 + $0x294] sm:$0xff]
    %v918 = vld [vmem:[#allocation7 + $0x29c] sm:$0xf]
    %v919 = vld [vmem:[#allocation7 + $0x2a0] sm:$0xff]
    %v920 = vld [vmem:[#allocation7 + $0x2a8] sm:$0xff]
    %v921 = vld [vmem:[#allocation7 + $0x2b0] sm:$0xff]
    %v922 = vld [vmem:[#allocation7 + $0x2b8] sm:$0xf]
    %v923 = vld [vmem:[#allocation7 + $0x2bc] sm:$0xff]
    %v924 = vld [vmem:[#allocation7 + $0x2c4] sm:$0xff]
    %v925 = vld [vmem:[#allocation7 + $0x2cc] sm:$0xff]
    %v926 = vld [vmem:[#allocation7 + $0x2d4] sm:$0xf]
    %v927 = vld [vmem:[#allocation7 + $0x2d8] sm:$0xff]
    %v928 = vld [vmem:[#allocation7 + $0x2e0] sm:$0xff]
    %v929 = vld [vmem:[#allocation7 + $0x2e8] sm:$0xff]
    %v930 = vld [vmem:[#allocation7 + $0x2f0] sm:$0xf]
    %v931 = vld [vmem:[#allocation7 + $0x2f4] sm:$0xff]
    %v932 = vld [vmem:[#allocation7 + $0x2fc] sm:$0xff]
    %v933 = vld [vmem:[#allocation7 + $0x304] sm:$0xff]
    %v934 = vld [vmem:[#allocation7 + $0x30c] sm:$0xf]
    %v935 = vld [vmem:[#allocation7 + $0x310] sm:$0xff]
    %v936 = vld [vmem:[#allocation7 + $0x318] sm:$0xff]
    %v937 = vld [vmem:[#allocation7 + $0x320] sm:$0xff]
    %v938 = vld [vmem:[#allocation7 + $0x328] sm:$0xf]
    %v939 = vld [vmem:[#allocation7 + $0x32c] sm:$0xff]
    %v940 = vld [vmem:[#allocation7 + $0x334] sm:$0xff]
    %v941 = vld [vmem:[#allocation7 + $0x33c] sm:$0xff]
    %v942 = vld [vmem:[#allocation7 + $0x344] sm:$0xf]
    %v943 = vld [vmem:[#allocation7 + $0x348] sm:$0xff]
    %v944 = vld [vmem:[#allocation7 + $0x350] sm:$0xff]
    %v945 = vld [vmem:[#allocation7 + $0x358] sm:$0xff]
    %v946 = vld [vmem:[#allocation7 + $0x360] sm:$0xf]
    %v947 = vld [vmem:[#allocation7 + $0x364] sm:$0xff]
    %v948 = vld [vmem:[#allocation7 + $0x36c] sm:$0xff]
    %v949 = vld [vmem:[#allocation7 + $0x374] sm:$0xff]
    %v950 = vld [vmem:[#allocation7 + $0x37c] sm:$0xf]
    %v951 = vld [vmem:[#allocation7 + $0x380] sm:$0xff]
    %v952 = vld [vmem:[#allocation7 + $0x388] sm:$0xff]
    %v953 = vld [vmem:[#allocation7 + $0x390] sm:$0xff]
    %v954 = vld [vmem:[#allocation7 + $0x398] sm:$0xf]
    %v955 = vld [vmem:[#allocation7 + $0x39c] sm:$0xff]
    %v956 = vld [vmem:[#allocation7 + $0x3a4] sm:$0xff]
    %v957 = vld [vmem:[#allocation7 + $0x3ac] sm:$0xff]
    %v958 = vld [vmem:[#allocation7 + $0x3b4] sm:$0xf]
    %v959 = vld [vmem:[#allocation7 + $0x3b8] sm:$0xff]
    %v960 = vld [vmem:[#allocation7 + $0x3c0] sm:$0xff]
    %v961 = vld [vmem:[#allocation7 + $0x3c8] sm:$0xff]
    %v962 = vld [vmem:[#allocation7 + $0x3d0] sm:$0xf]
    %v963 = vld [vmem:[#allocation7 + $0x3d4] sm:$0xff]
    %v964 = vld [vmem:[#allocation7 + $0x3dc] sm:$0xff]
    %v965 = vld [vmem:[#allocation7 + $0x3e4] sm:$0xff]
    %v966 = vld [vmem:[#allocation7 + $0x3ec] sm:$0xf]
    %v967 = vld [vmem:[#allocation7 + $0x3f0] sm:$0xff]
    %v968 = vld [vmem:[#allocation7 + $0x3f8] sm:$0xff]
    %v969 = vld [vmem:[#allocation7 + $0x400] sm:$0xff]
    %v970 = vld [vmem:[#allocation7 + $0x408] sm:$0xf]
    %v971 = vld [vmem:[#allocation7 + $0x40c] sm:$0xff]
    %v972 = vld [vmem:[#allocation7 + $0x414] sm:$0xff]
    %v973 = vld [vmem:[#allocation7 + $0x41c] sm:$0xff]
    %v974 = vld [vmem:[#allocation7 + $0x424] sm:$0xf]
    %v975 = vld [vmem:[#allocation7 + $0x428] sm:$0xff]
    %v976 = vld [vmem:[#allocation7 + $0x430] sm:$0xff]
    %v977 = vld [vmem:[#allocation7 + $0x438] sm:$0xff]
    %v978 = vld [vmem:[#allocation7 + $0x440] sm:$0xf]
    %v979 = vld [vmem:[#allocation7 + $0x444] sm:$0xff]
    %v980 = vld [vmem:[#allocation7 + $0x44c] sm:$0xff]
    %v981 = vld [vmem:[#allocation7 + $0x454] sm:$0xff]
    %v982 = vld [vmem:[#allocation7 + $0x45c] sm:$0xf]
    %v983 = vld [vmem:[#allocation7 + $0x460] sm:$0xff]
    %v984 = vld [vmem:[#allocation7 + $0x468] sm:$0xff]
    %v985 = vld [vmem:[#allocation7 + $0x470] sm:$0xff]
    %v986 = vld [vmem:[#allocation7 + $0x478] sm:$0xf]
    %v987 = vld [vmem:[#allocation7 + $0x47c] sm:$0xff]
    %v988 = vld [vmem:[#allocation7 + $0x484] sm:$0xff]
    %v989 = vld [vmem:[#allocation7 + $0x48c] sm:$0xff]
    %v990 = vld [vmem:[#allocation7 + $0x494] sm:$0xf]
    %v991 = vld [vmem:[#allocation7 + $0x498] sm:$0xff]
    %v992 = vld [vmem:[#allocation7 + $0x4a0] sm:$0xff]
    %v993 = vld [vmem:[#allocation7 + $0x4a8] sm:$0xff]
    %v994 = vld [vmem:[#allocation7 + $0x4b0] sm:$0xf]
    %v995 = vld [vmem:[#allocation7 + $0x4b4] sm:$0xff]
    %v996 = vld [vmem:[#allocation7 + $0x4bc] sm:$0xff]
    %v997 = vld [vmem:[#allocation7 + $0x4c4] sm:$0xff]
    %v998 = vld [vmem:[#allocation7 + $0x4cc] sm:$0xf]
    %v999 = vld [vmem:[#allocation7 + $0x4d0] sm:$0xff]
    %v1000 = vld [vmem:[#allocation7 + $0x4d8] sm:$0xff]
    %v1001 = vld [vmem:[#allocation7 + $0x4e0] sm:$0xff]
    %v1002 = vld [vmem:[#allocation7 + $0x4e8] sm:$0xf]
    %v1003 = vld [vmem:[#allocation7 + $0x4ec] sm:$0xff]
    %v1004 = vld [vmem:[#allocation7 + $0x4f4] sm:$0xff]
    %v1005 = vld [vmem:[#allocation7 + $0x4fc] sm:$0xff]
    %v1006 = vld [vmem:[#allocation7 + $0x504] sm:$0xf]
    %v1007 = vld [vmem:[#allocation7 + $0x508] sm:$0xff]
    %v1008 = vld [vmem:[#allocation7 + $0x510] sm:$0xff]
    %v1009 = vld [vmem:[#allocation7 + $0x518] sm:$0xff]
    %v1010 = vld [vmem:[#allocation7 + $0x520] sm:$0xf]
    %v1011 = vld [vmem:[#allocation7 + $0x524] sm:$0xff]
    %v1012 = vld [vmem:[#allocation7 + $0x52c] sm:$0xff]
    %v1013 = vld [vmem:[#allocation7 + $0x534] sm:$0xff]
    %v1014 = vld [vmem:[#allocation7 + $0x53c] sm:$0xf]
    %v1015 = vld [vmem:[#allocation7 + $0x540] sm:$0xff]
    %v1016 = vld [vmem:[#allocation7 + $0x548] sm:$0xff]
    %v1017 = vld [vmem:[#allocation7 + $0x550] sm:$0xff]
    %v1018 = vld [vmem:[#allocation7 + $0x558] sm:$0xf]
    %v1019 = vld [vmem:[#allocation7 + $0x55c] sm:$0xff]
    %v1020 = vld [vmem:[#allocation7 + $0x564] sm:$0xff]
    %v1021 = vld [vmem:[#allocation7 + $0x56c] sm:$0xff]
    %v1022 = vld [vmem:[#allocation7 + $0x574] sm:$0xf]
    %v1023 = vld [vmem:[#allocation7 + $0x578] sm:$0xff]
    %v1024 = vld [vmem:[#allocation7 + $0x580] sm:$0xff]
    %v1025 = vld [vmem:[#allocation7 + $0x588] sm:$0xff]
    %v1026 = vld [vmem:[#allocation7 + $0x590] sm:$0xf]
    %v1027 = vld [vmem:[#allocation7 + $0x594] sm:$0xff]
    %v1028 = vld [vmem:[#allocation7 + $0x59c] sm:$0xff]
    %v1029 = vld [vmem:[#allocation7 + $0x5a4] sm:$0xff]
    %v1030 = vld [vmem:[#allocation7 + $0x5ac] sm:$0xf]
    %v1031 = vld [vmem:[#allocation7 + $0x5b0] sm:$0xff]
    %v1032 = vld [vmem:[#allocation7 + $0x5b8] sm:$0xff]
    %v1033 = vld [vmem:[#allocation7 + $0x5c0] sm:$0xff]
    %v1034 = vld [vmem:[#allocation7 + $0x5c8] sm:$0xf]
    %v1035 = vld [vmem:[#allocation7 + $0x5cc] sm:$0xff]
    %v1036 = vld [vmem:[#allocation7 + $0x5d4] sm:$0xff]
    %v1037 = vld [vmem:[#allocation7 + $0x5dc] sm:$0xff]
    %v1038 = vld [vmem:[#allocation7 + $0x5e4] sm:$0xf]
    %v1039 = vld [vmem:[#allocation7 + $0x5e8] sm:$0xff]
    %v1040 = vld [vmem:[#allocation7 + $0x5f0] sm:$0xff]
    %v1041 = vld [vmem:[#allocation7 + $0x5f8] sm:$0xff]
    %v1042 = vld [vmem:[#allocation7 + $0x600] sm:$0xf]
    %v1043 = vld [vmem:[#allocation7 + $0x604] sm:$0xff]
    %v1044 = vld [vmem:[#allocation7 + $0x60c] sm:$0xff]
    %v1045 = vld [vmem:[#allocation7 + $0x614] sm:$0xff]
    %v1046 = vld [vmem:[#allocation7 + $0x61c] sm:$0xf]
    %v1047 = vld [vmem:[#allocation7 + $0x620] sm:$0xff]
    %v1048 = vld [vmem:[#allocation7 + $0x628] sm:$0xff]
    %v1049 = vld [vmem:[#allocation7 + $0x630] sm:$0xff]
    %v1050 = vld [vmem:[#allocation7 + $0x638] sm:$0xf]
    %v1051 = vld [vmem:[#allocation7 + $0x63c] sm:$0xff]
    %v1052 = vld [vmem:[#allocation7 + $0x644] sm:$0xff]
    %v1053 = vld [vmem:[#allocation7 + $0x64c] sm:$0xff]
    %v1054 = vld [vmem:[#allocation7 + $0x654] sm:$0xf]
    %v1055 = vld [vmem:[#allocation7 + $0x658] sm:$0xff]
    %v1056 = vld [vmem:[#allocation7 + $0x660] sm:$0xff]
    %v1057 = vld [vmem:[#allocation7 + $0x668] sm:$0xff]
    %v1058 = vld [vmem:[#allocation7 + $0x670] sm:$0xf]
    %v1059 = vld [vmem:[#allocation7 + $0x674] sm:$0xff]
    %v1060 = vld [vmem:[#allocation7 + $0x67c] sm:$0xff]
    %v1061 = vld [vmem:[#allocation7 + $0x684] sm:$0xff]
    %v1062 = vld [vmem:[#allocation7 + $0x68c] sm:$0xf]
    %v1063 = vld [vmem:[#allocation7 + $0x690] sm:$0xff]
    %v1064 = vld [vmem:[#allocation7 + $0x698] sm:$0xff]
    %v1065 = vld [vmem:[#allocation7 + $0x6a0] sm:$0xff]
    %v1066 = vld [vmem:[#allocation7 + $0x6a8] sm:$0xf]
    %v1067 = vld [vmem:[#allocation7 + $0x6ac] sm:$0xff]
    %v1068 = vld [vmem:[#allocation7 + $0x6b4] sm:$0xff]
    %v1069 = vld [vmem:[#allocation7 + $0x6bc] sm:$0xff]
    %v1070 = vld [vmem:[#allocation7 + $0x6c4] sm:$0xf]
    %v1071 = vld [vmem:[#allocation7 + $0x6c8] sm:$0xff]
    %v1072 = vld [vmem:[#allocation7 + $0x6d0] sm:$0xff]
    %v1073 = vld [vmem:[#allocation7 + $0x6d8] sm:$0xff]
    %v1074 = vld [vmem:[#allocation7 + $0x6e0] sm:$0xf]
    %v1075 = vld [vmem:[#allocation7 + $0x6e4] sm:$0xff]
    %v1076 = vld [vmem:[#allocation7 + $0x6ec] sm:$0xff]
    %v1077 = vld [vmem:[#allocation7 + $0x6f4] sm:$0xff]
    %v1078 = vld [vmem:[#allocation7 + $0x6fc] sm:$0xf]
    %v1079 = vld [vmem:[#allocation7 + $0x700] sm:$0xff]
    %v1080 = vld [vmem:[#allocation7 + $0x708] sm:$0xff]
    %v1081 = vld [vmem:[#allocation7 + $0x710] sm:$0xff]
    %v1082 = vld [vmem:[#allocation7 + $0x718] sm:$0xf]
    %v1083 = vld [vmem:[#allocation7 + $0x71c] sm:$0xff]
    %v1084 = vld [vmem:[#allocation7 + $0x724] sm:$0xff]
    %v1085 = vld [vmem:[#allocation7 + $0x72c] sm:$0xff]
    %v1086 = vld [vmem:[#allocation7 + $0x734] sm:$0xf]
    %v1087 = vld [vmem:[#allocation7 + $0x738] sm:$0xff]
    %v1088 = vld [vmem:[#allocation7 + $0x740] sm:$0xff]
    %v1089 = vld [vmem:[#allocation7 + $0x748] sm:$0xff]
    %v1090 = vld [vmem:[#allocation7 + $0x750] sm:$0xf]
    %v1091 = vld [vmem:[#allocation7 + $0x754] sm:$0xff]
    %v1092 = vld [vmem:[#allocation7 + $0x75c] sm:$0xff]
    %v1093 = vld [vmem:[#allocation7 + $0x764] sm:$0xff]
    %v1094 = vld [vmem:[#allocation7 + $0x76c] sm:$0xf]
    %v1095 = vld [vmem:[#allocation7 + $0x770] sm:$0xff]
    %v1096 = vld [vmem:[#allocation7 + $0x778] sm:$0xff]
    %v1097 = vld [vmem:[#allocation7 + $0x780] sm:$0xff]
    %v1098 = vld [vmem:[#allocation7 + $0x788] sm:$0xf]
    %v1099 = vld [vmem:[#allocation7 + $0x78c] sm:$0xff]
    %v1100 = vld [vmem:[#allocation7 + $0x794] sm:$0xff]
    %v1101 = vld [vmem:[#allocation7 + $0x79c] sm:$0xff]
    %v1102 = vld [vmem:[#allocation7 + $0x7a4] sm:$0xf]
    %v1103 = vld [vmem:[#allocation7 + $0x7a8] sm:$0xff]
    %v1104 = vld [vmem:[#allocation7 + $0x7b0] sm:$0xff]
    %v1105 = vld [vmem:[#allocation7 + $0x7b8] sm:$0xff]
    %v1106 = vld [vmem:[#allocation7 + $0x7c0] sm:$0xf]
    %v1107 = vld [vmem:[#allocation7 + $0x7c4] sm:$0xff]
    %v1108 = vld [vmem:[#allocation7 + $0x7cc] sm:$0xff]
    %v1109 = vld [vmem:[#allocation7 + $0x7d4] sm:$0xff]
    %v1110 = vld [vmem:[#allocation7 + $0x7dc] sm:$0xf]
    %v1111 = vld [vmem:[#allocation7 + $0x7e0] sm:$0xff]
    %v1112 = vld [vmem:[#allocation7 + $0x7e8] sm:$0xff]
    %v1113 = vld [vmem:[#allocation7 + $0x7f0] sm:$0xff]
    %v1114 = vld [vmem:[#allocation7 + $0x7f8] sm:$0xf]
    %v1115 = vld [vmem:[#allocation7 + $0x7fc] sm:$0xff]
    %v1116 = vld [vmem:[#allocation7 + $0x804] sm:$0xff]
    %v1117 = vld [vmem:[#allocation7 + $0x80c] sm:$0xff]
    %v1118 = vld [vmem:[#allocation7 + $0x814] sm:$0xf]
    %v1119 = vld [vmem:[#allocation7 + $0x818] sm:$0xff]
    %v1120 = vld [vmem:[#allocation7 + $0x820] sm:$0xff]
    %v1121 = vld [vmem:[#allocation7 + $0x828] sm:$0xff]
    %v1122 = vld [vmem:[#allocation7 + $0x830] sm:$0xf]
    %v1123 = vld [vmem:[#allocation7 + $0x834] sm:$0xff]
    %v1124 = vld [vmem:[#allocation7 + $0x83c] sm:$0xff]
    %v1125 = vld [vmem:[#allocation7 + $0x844] sm:$0xff]
    %v1126 = vld [vmem:[#allocation7 + $0x84c] sm:$0xf]
    %v1127 = vld [vmem:[#allocation7 + $0x850] sm:$0xff]
    %v1128 = vld [vmem:[#allocation7 + $0x858] sm:$0xff]
    %v1129 = vld [vmem:[#allocation7 + $0x860] sm:$0xff]
    %v1130 = vld [vmem:[#allocation7 + $0x868] sm:$0xf]
    %v1131 = vld [vmem:[#allocation7 + $0x86c] sm:$0xff]
    %v1132 = vld [vmem:[#allocation7 + $0x874] sm:$0xff]
    %v1133 = vld [vmem:[#allocation7 + $0x87c] sm:$0xff]
    %v1134 = vld [vmem:[#allocation7 + $0x884] sm:$0xf]
    %v1135 = vld [vmem:[#allocation7 + $0x888] sm:$0xff]
    %v1136 = vld [vmem:[#allocation7 + $0x890] sm:$0xff]
    %v1137 = vld [vmem:[#allocation7 + $0x898] sm:$0xff]
    %v1138 = vld [vmem:[#allocation7 + $0x8a0] sm:$0xf]
    %v1139 = vld [vmem:[#allocation7 + $0x8a4] sm:$0xff]
    %v1140 = vld [vmem:[#allocation7 + $0x8ac] sm:$0xff]
    %v1141 = vld [vmem:[#allocation7 + $0x8b4] sm:$0xff]
    %v1142 = vld [vmem:[#allocation7 + $0x8bc] sm:$0xf]
    %v1143 = vld [vmem:[#allocation7 + $0x8c0] sm:$0xff]
    %v1144 = vld [vmem:[#allocation7 + $0x8c8] sm:$0xff]
    %v1145 = vld [vmem:[#allocation7 + $0x8d0] sm:$0xff]
    %v1146 = vld [vmem:[#allocation7 + $0x8d8] sm:$0xf]
    %v1147 = vld [vmem:[#allocation7 + $0x8dc] sm:$0xff]
    %v1148 = vld [vmem:[#allocation7 + $0x8e4] sm:$0xff]
    %v1149 = vld [vmem:[#allocation7 + $0x8ec] sm:$0xff]
    %v1150 = vld [vmem:[#allocation7 + $0x8f4] sm:$0xf]
    %v1151 = vld [vmem:[#allocation7 + $0x8f8] sm:$0xff]
    %v1152 = vld [vmem:[#allocation7 + $0x900] sm:$0xff]
    %v1153 = vld [vmem:[#allocation7 + $0x908] sm:$0xff]
    %v1154 = vld [vmem:[#allocation7 + $0x910] sm:$0xf]
    %v1155 = vld [vmem:[#allocation7 + $0x914] sm:$0xff]
    %v1156 = vld [vmem:[#allocation7 + $0x91c] sm:$0xff]
    %v1157 = vld [vmem:[#allocation7 + $0x924] sm:$0xff]
    %v1158 = vld [vmem:[#allocation7 + $0x92c] sm:$0xf]
    %v1159 = vld [vmem:[#allocation7 + $0x930] sm:$0xff]
    %v1160 = vld [vmem:[#allocation7 + $0x938] sm:$0xff]
    %v1161 = vld [vmem:[#allocation7 + $0x940] sm:$0xff]
    %v1162 = vld [vmem:[#allocation7 + $0x948] sm:$0xf]
    %v1163 = vld [vmem:[#allocation7 + $0x94c] sm:$0xff]
    %v1164 = vld [vmem:[#allocation7 + $0x954] sm:$0xff]
    %v1165 = vld [vmem:[#allocation7 + $0x95c] sm:$0xff]
    %v1166 = vld [vmem:[#allocation7 + $0x964] sm:$0xf]
    %v1167 = vld [vmem:[#allocation7 + $0x968] sm:$0xff]
    %v1168 = vld [vmem:[#allocation7 + $0x970] sm:$0xff]
    %v1169 = vld [vmem:[#allocation7 + $0x978] sm:$0xff]
    %v1170 = vld [vmem:[#allocation7 + $0x980] sm:$0xf]
    %v1171 = vld [vmem:[#allocation7 + $0x984] sm:$0xff]
    %v1172 = vld [vmem:[#allocation7 + $0x98c] sm:$0xff]
    %v1173 = vld [vmem:[#allocation7 + $0x994] sm:$0xff]
    %v1174 = vld [vmem:[#allocation7 + $0x99c] sm:$0xf]
    %v1175 = vld [vmem:[#allocation7 + $0x9a0] sm:$0xff]
    %v1176 = vld [vmem:[#allocation7 + $0x9a8] sm:$0xff]
    %v1177 = vld [vmem:[#allocation7 + $0x9b0] sm:$0xff]
    %v1178 = vld [vmem:[#allocation7 + $0x9b8] sm:$0xf]
    %v1179 = vld [vmem:[#allocation7 + $0x9bc] sm:$0xff]
    %v1180 = vld [vmem:[#allocation7 + $0x9c4] sm:$0xff]
    %v1181 = vld [vmem:[#allocation7 + $0x9cc] sm:$0xff]
    %v1182 = vld [vmem:[#allocation7 + $0x9d4] sm:$0xf]
    %v1183 = vld [vmem:[#allocation7 + $0x9d8] sm:$0xff]
    %v1184 = vld [vmem:[#allocation7 + $0x9e0] sm:$0xff]
    %v1185 = vld [vmem:[#allocation7 + $0x9e8] sm:$0xff]
    %v1186 = vld [vmem:[#allocation7 + $0x9f0] sm:$0xf]
    %v1187 = vld [vmem:[#allocation7 + $0x9f4] sm:$0xff]
    %v1188 = vld [vmem:[#allocation7 + $0x9fc] sm:$0xff]
    %v1189 = vld [vmem:[#allocation7 + $0xa04] sm:$0xff]
    %v1190 = vld [vmem:[#allocation7 + $0xa0c] sm:$0xf]
    %v1191 = vld [vmem:[#allocation7 + $0xa10] sm:$0xff]
    %v1192 = vld [vmem:[#allocation7 + $0xa18] sm:$0xff]
    %v1193 = vld [vmem:[#allocation7 + $0xa20] sm:$0xff]
    %v1194 = vld [vmem:[#allocation7 + $0xa28] sm:$0xf]
    %v1195 = vld [vmem:[#allocation7 + $0xa2c] sm:$0xff]
    %v1196 = vld [vmem:[#allocation7 + $0xa34] sm:$0xff]
    %v1197 = vld [vmem:[#allocation7 + $0xa3c] sm:$0xff]
    %v1198 = vld [vmem:[#allocation7 + $0xa44] sm:$0xf]
    %v1199 = vld [vmem:[#allocation7 + $0xa48] sm:$0xff]
    %v1200 = vld [vmem:[#allocation7 + $0xa50] sm:$0xff]
    %v1201 = vld [vmem:[#allocation7 + $0xa58] sm:$0xff]
    %v1202 = vld [vmem:[#allocation7 + $0xa60] sm:$0xf]
    %v1203 = vld [vmem:[#allocation7 + $0xa64] sm:$0xff]
    %v1204 = vld [vmem:[#allocation7 + $0xa6c] sm:$0xff]
    %v1205 = vld [vmem:[#allocation7 + $0xa74] sm:$0xff]
    %v1206 = vld [vmem:[#allocation7 + $0xa7c] sm:$0xf]
    %v1207 = vld [vmem:[#allocation7 + $0xa80] sm:$0xff]
    %v1208 = vld [vmem:[#allocation7 + $0xa88] sm:$0xff]
    %v1209 = vld [vmem:[#allocation7 + $0xa90] sm:$0xff]
    %v1210 = vld [vmem:[#allocation7 + $0xa98] sm:$0xf]
    %v1211 = vld [vmem:[#allocation7 + $0xa9c] sm:$0xff]
    %v1212 = vld [vmem:[#allocation7 + $0xaa4] sm:$0xff]
    %v1213 = vld [vmem:[#allocation7 + $0xaac] sm:$0xff]
    %v1214 = vld [vmem:[#allocation7 + $0xab4] sm:$0xf]
    %v1215 = vld [vmem:[#allocation7 + $0xab8] sm:$0xff]
    %v1216 = vld [vmem:[#allocation7 + $0xac0] sm:$0xff]
    %v1217 = vld [vmem:[#allocation7 + $0xac8] sm:$0xff]
    %v1218 = vld [vmem:[#allocation7 + $0xad0] sm:$0xf]
    %v1219 = vld [vmem:[#allocation7 + $0xad4] sm:$0xff]
    %v1220 = vld [vmem:[#allocation7 + $0xadc] sm:$0xff]
    %v1221 = vld [vmem:[#allocation7 + $0xae4] sm:$0xff]
    %v1222 = vld [vmem:[#allocation7 + $0xaec] sm:$0xf]
    %v1223 = vld [vmem:[#allocation7 + $0xaf0] sm:$0xff]
    %v1224 = vld [vmem:[#allocation7 + $0xaf8] sm:$0xff]
    %v1225 = vld [vmem:[#allocation7 + $0xb00] sm:$0xff]
    %v1226 = vld [vmem:[#allocation7 + $0xb08] sm:$0xf]
    %v1227 = vld [vmem:[#allocation7 + $0xb0c] sm:$0xff]
    %v1228 = vld [vmem:[#allocation7 + $0xb14] sm:$0xff]
    %v1229 = vld [vmem:[#allocation7 + $0xb1c] sm:$0xff]
    %v1230 = vld [vmem:[#allocation7 + $0xb24] sm:$0xf]
    %v1231 = vld [vmem:[#allocation7 + $0xb28] sm:$0xff]
    %v1232 = vld [vmem:[#allocation7 + $0xb30] sm:$0xff]
    %v1233 = vld [vmem:[#allocation7 + $0xb38] sm:$0xff]
    %v1234 = vld [vmem:[#allocation7 + $0xb40] sm:$0xf]
    %v1235 = vld [vmem:[#allocation7 + $0xb44] sm:$0xff]
    %v1236 = vld [vmem:[#allocation7 + $0xb4c] sm:$0xff]
    %v1237 = vld [vmem:[#allocation7 + $0xb54] sm:$0xff]
    %v1238 = vld [vmem:[#allocation7 + $0xb5c] sm:$0xf]
    %v1239 = vld [vmem:[#allocation7 + $0xb60] sm:$0xff]
    %v1240 = vld [vmem:[#allocation7 + $0xb68] sm:$0xff]
    %v1241 = vld [vmem:[#allocation7 + $0xb70] sm:$0xff]
    %v1242 = vld [vmem:[#allocation7 + $0xb78] sm:$0xf]
    %v1243 = vld [vmem:[#allocation7 + $0xb7c] sm:$0xff]
    %v1244 = vld [vmem:[#allocation7 + $0xb84] sm:$0xff]
    %v1245 = vld [vmem:[#allocation7 + $0xb8c] sm:$0xff]
    %v1246 = vld [vmem:[#allocation7 + $0xb94] sm:$0xf]
    %v1247 = vld [vmem:[#allocation7 + $0xb98] sm:$0xff]
    %v1248 = vld [vmem:[#allocation7 + $0xba0] sm:$0xff]
    %v1249 = vld [vmem:[#allocation7 + $0xba8] sm:$0xff]
    %v1250 = vld [vmem:[#allocation7 + $0xbb0] sm:$0xf]
    %v1251 = vld [vmem:[#allocation7 + $0xbb4] sm:$0xff]
    %v1252 = vld [vmem:[#allocation7 + $0xbbc] sm:$0xff]
    %v1253 = vld [vmem:[#allocation7 + $0xbc4] sm:$0xff]
    %v1254 = vld [vmem:[#allocation7 + $0xbcc] sm:$0xf]
    %v1255 = vld [vmem:[#allocation7 + $0xbd0] sm:$0xff]
    %v1256 = vld [vmem:[#allocation7 + $0xbd8] sm:$0xff]
    %v1257 = vld [vmem:[#allocation7 + $0xbe0] sm:$0xff]
    %v1258 = vld [vmem:[#allocation7 + $0xbe8] sm:$0xf]
    %v1259 = vld [vmem:[#allocation7 + $0xbec] sm:$0xff]
    %v1260 = vld [vmem:[#allocation7 + $0xbf4] sm:$0xff]
    %v1261 = vld [vmem:[#allocation7 + $0xbfc] sm:$0xff]
    %v1262 = vld [vmem:[#allocation7 + $0xc04] sm:$0xf]
    %v1263 = vld [vmem:[#allocation7 + $0xc08] sm:$0xff]
    %v1264 = vld [vmem:[#allocation7 + $0xc10] sm:$0xff]
    %v1265 = vld [vmem:[#allocation7 + $0xc18] sm:$0xff]
    %v1266 = vld [vmem:[#allocation7 + $0xc20] sm:$0xf]
    %v1267 = vld [vmem:[#allocation7 + $0xc24] sm:$0xff]
    %v1268 = vld [vmem:[#allocation7 + $0xc2c] sm:$0xff]
    %v1269 = vld [vmem:[#allocation7 + $0xc34] sm:$0xff]
    %v1270 = vld [vmem:[#allocation7 + $0xc3c] sm:$0xf]
    %v1271 = vld [vmem:[#allocation7 + $0xc40] sm:$0xff]
    %v1272 = vld [vmem:[#allocation7 + $0xc48] sm:$0xff]
    %v1273 = vld [vmem:[#allocation7 + $0xc50] sm:$0xff]
    %v1274 = vld [vmem:[#allocation7 + $0xc58] sm:$0xf]
    %v1275 = vld [vmem:[#allocation7 + $0xc5c] sm:$0xff]
    %v1276 = vld [vmem:[#allocation7 + $0xc64] sm:$0xff]
    %v1277 = vld [vmem:[#allocation7 + $0xc6c] sm:$0xff]
    %v1278 = vld [vmem:[#allocation7 + $0xc74] sm:$0xf]
    %v1279 = vld [vmem:[#allocation7 + $0xc78] sm:$0xff]
    %v1280 = vld [vmem:[#allocation7 + $0xc80] sm:$0xff]
    %v1281 = vld [vmem:[#allocation7 + $0xc88] sm:$0xff]
    %v1282 = vld [vmem:[#allocation7 + $0xc90] sm:$0xf]
    %v1283 = vld [vmem:[#allocation7 + $0xc94] sm:$0xff]
    %v1284 = vld [vmem:[#allocation7 + $0xc9c] sm:$0xff]
    %v1285 = vld [vmem:[#allocation7 + $0xca4] sm:$0xff]
    %v1286 = vld [vmem:[#allocation7 + $0xcac] sm:$0xf]
    %v1287 = vld [vmem:[#allocation7 + $0xcb0] sm:$0xff]
    %v1288 = vld [vmem:[#allocation7 + $0xcb8] sm:$0xff]
    %v1289 = vld [vmem:[#allocation7 + $0xcc0] sm:$0xff]
    %v1290 = vld [vmem:[#allocation7 + $0xcc8] sm:$0xf]
    %v1291 = vld [vmem:[#allocation7 + $0xccc] sm:$0xff]
    %v1292 = vld [vmem:[#allocation7 + $0xcd4] sm:$0xff]
    %v1293 = vld [vmem:[#allocation7 + $0xcdc] sm:$0xff]
    %v1294 = vld [vmem:[#allocation7 + $0xce4] sm:$0xf]
    %v1295 = vld [vmem:[#allocation7 + $0xce8] sm:$0xff]
    %v1296 = vld [vmem:[#allocation7 + $0xcf0] sm:$0xff]
    %v1297 = vld [vmem:[#allocation7 + $0xcf8] sm:$0xff]
    %v1298 = vld [vmem:[#allocation7 + $0xd00] sm:$0xf]
    %v1299 = vld [vmem:[#allocation7 + $0xd04] sm:$0xff]
    %v1300 = vld [vmem:[#allocation7 + $0xd0c] sm:$0xff]
    %v1301 = vld [vmem:[#allocation7 + $0xd14] sm:$0xff]
    %v1302 = vld [vmem:[#allocation7 + $0xd1c] sm:$0xf]
    %v1303 = vld [vmem:[#allocation7 + $0xd20] sm:$0xff]
    %v1304 = vld [vmem:[#allocation7 + $0xd28] sm:$0xff]
    %v1305 = vld [vmem:[#allocation7 + $0xd30] sm:$0xff]
    %v1306 = vld [vmem:[#allocation7 + $0xd38] sm:$0xf]
    %v1307 = vld [vmem:[#allocation7 + $0xd3c] sm:$0xff]
    %v1308 = vld [vmem:[#allocation7 + $0xd44] sm:$0xff]
    %v1309 = vld [vmem:[#allocation7 + $0xd4c] sm:$0xff]
    %v1310 = vld [vmem:[#allocation7 + $0xd54] sm:$0xf]
    %v1311 = vld [vmem:[#allocation7 + $0xd58] sm:$0xff]
    %v1312 = vld [vmem:[#allocation7 + $0xd60] sm:$0xff]
    %v1313 = vld [vmem:[#allocation7 + $0xd68] sm:$0xff]
    %v1314 = vld [vmem:[#allocation7 + $0xd70] sm:$0xf]
    %v1315 = vld [vmem:[#allocation7 + $0xd74] sm:$0xff]
    %v1316 = vld [vmem:[#allocation7 + $0xd7c] sm:$0xff]
    %v1317 = vld [vmem:[#allocation7 + $0xd84] sm:$0xff]
    %v1318 = vld [vmem:[#allocation7 + $0xd8c] sm:$0xf]
    %v1319 = vld [vmem:[#allocation7 + $0xd90] sm:$0xff]
    %v1320 = vld [vmem:[#allocation7 + $0xd98] sm:$0xff]
    %v1321 = vld [vmem:[#allocation7 + $0xda0] sm:$0xff]
    %v1322 = vld [vmem:[#allocation7 + $0xda8] sm:$0xf]
    %v1323 = vld [vmem:[#allocation7 + $0xdac] sm:$0xff]
    %v1324 = vld [vmem:[#allocation7 + $0xdb4] sm:$0xff]
    %v1325 = vld [vmem:[#allocation7 + $0xdbc] sm:$0xff]
    %v1326 = vld [vmem:[#allocation7 + $0xdc4] sm:$0xf]
    %v1327 = vld [vmem:[#allocation7 + $0xdc8] sm:$0xff]
    %v1328 = vld [vmem:[#allocation7 + $0xdd0] sm:$0xff]
    %v1329 = vld [vmem:[#allocation7 + $0xdd8] sm:$0xff]
    %v1330 = vld [vmem:[#allocation7 + $0xde0] sm:$0xf]
    %v1331 = vld [vmem:[#allocation7 + $0xde4] sm:$0xff]
    %v1332 = vld [vmem:[#allocation7 + $0xdec] sm:$0xff]
    %v1333 = vld [vmem:[#allocation7 + $0xdf4] sm:$0xff]
    %v1334 = vld [vmem:[#allocation7 + $0xdfc] sm:$0xf]
    %v1335 = vld [vmem:[#allocation7 + $0xe00] sm:$0xff]
    %v1336 = vld [vmem:[#allocation7 + $0xe08] sm:$0xff]
    %v1337 = vld [vmem:[#allocation7 + $0xe10] sm:$0xff]
    %v1338 = vld [vmem:[#allocation7 + $0xe18] sm:$0xf]
    %v1339 = vld [vmem:[#allocation7 + $0xe1c] sm:$0xff]
    %v1340 = vld [vmem:[#allocation7 + $0xe24] sm:$0xff]
    %v1341 = vld [vmem:[#allocation7 + $0xe2c] sm:$0xff]
    %v1342 = vld [vmem:[#allocation7 + $0xe34] sm:$0xf]
    %v1343 = vld [vmem:[#allocation7 + $0xe38] sm:$0xff]
    %v1344 = vld [vmem:[#allocation7 + $0xe40] sm:$0xff]
    %v1345 = vld [vmem:[#allocation7 + $0xe48] sm:$0xff]
    %v1346 = vld [vmem:[#allocation7 + $0xe50] sm:$0xf]
    %v1347 = vld [vmem:[#allocation7 + $0xe54] sm:$0xff]
    %v1348 = vld [vmem:[#allocation7 + $0xe5c] sm:$0xff]
    %v1349 = vld [vmem:[#allocation7 + $0xe64] sm:$0xff]
    %v1350 = vld [vmem:[#allocation7 + $0xe6c] sm:$0xf]
    %v1351 = vld [vmem:[#allocation7 + $0xe70] sm:$0xff]
    %v1352 = vld [vmem:[#allocation7 + $0xe78] sm:$0xff]
    %v1353 = vld [vmem:[#allocation7 + $0xe80] sm:$0xff]
    %v1354 = vld [vmem:[#allocation7 + $0xe88] sm:$0xf]
    %v1355 = vld [vmem:[#allocation7 + $0xe8c] sm:$0xff]
    %v1356 = vld [vmem:[#allocation7 + $0xe94] sm:$0xff]
    %v1357 = vld [vmem:[#allocation7 + $0xe9c] sm:$0xff]
    %v1358 = vld [vmem:[#allocation7 + $0xea4] sm:$0xf]
    %v1359 = vld [vmem:[#allocation7 + $0xea8] sm:$0xff]
    %v1360 = vld [vmem:[#allocation7 + $0xeb0] sm:$0xff]
    %v1361 = vld [vmem:[#allocation7 + $0xeb8] sm:$0xff]
    %v1362 = vld [vmem:[#allocation7 + $0xec0] sm:$0xf]
    %v1363 = vld [vmem:[#allocation7 + $0xec4] sm:$0xff]
    %v1364 = vld [vmem:[#allocation7 + $0xecc] sm:$0xff]
    %v1365 = vld [vmem:[#allocation7 + $0xed4] sm:$0xff]
    %v1366 = vld [vmem:[#allocation7 + $0xedc] sm:$0xf]
    %v1367 = vld [vmem:[#allocation7 + $0xee0] sm:$0xff]
    %v1368 = vld [vmem:[#allocation7 + $0xee8] sm:$0xff]
    %v1369 = vld [vmem:[#allocation7 + $0xef0] sm:$0xff]
    %v1370 = vld [vmem:[#allocation7 + $0xef8] sm:$0xf]
    %v1371 = vld [vmem:[#allocation7 + $0xefc] sm:$0xff]
    %v1372 = vld [vmem:[#allocation7 + $0xf04] sm:$0xff]
    %v1373 = vld [vmem:[#allocation7 + $0xf0c] sm:$0xff]
    %v1374 = vld [vmem:[#allocation7 + $0xf14] sm:$0xf]
    %v1375 = vld [vmem:[#allocation7 + $0xf18] sm:$0xff]
    %v1376 = vld [vmem:[#allocation7 + $0xf20] sm:$0xff]
    %v1377 = vld [vmem:[#allocation7 + $0xf28] sm:$0xff]
    %v1378 = vld [vmem:[#allocation7 + $0xf30] sm:$0xf]
    %v1379 = vld [vmem:[#allocation7 + $0xf34] sm:$0xff]
    %v1380 = vld [vmem:[#allocation7 + $0xf3c] sm:$0xff]
    %v1381 = vld [vmem:[#allocation7 + $0xf44] sm:$0xff]
    %v1382 = vld [vmem:[#allocation7 + $0xf4c] sm:$0xf]
    %v1383 = vld [vmem:[#allocation7 + $0xf50] sm:$0xff]
    %v1384 = vld [vmem:[#allocation7 + $0xf58] sm:$0xff]
    %v1385 = vld [vmem:[#allocation7 + $0xf60] sm:$0xff]
    %v1386 = vld [vmem:[#allocation7 + $0xf68] sm:$0xf]
    %v1387 = vld [vmem:[#allocation7 + $0xf6c] sm:$0xff]
    %v1388 = vld [vmem:[#allocation7 + $0xf74] sm:$0xff]
    %v1389 = vld [vmem:[#allocation7 + $0xf7c] sm:$0xff]
    %v1390 = vld [vmem:[#allocation7 + $0xf84] sm:$0xf]
    %v1391 = vld [vmem:[#allocation7 + $0xf88] sm:$0xff]
    %v1392 = vld [vmem:[#allocation7 + $0xf90] sm:$0xff]
    %v1393 = vld [vmem:[#allocation7 + $0xf98] sm:$0xff]
    %v1394 = vld [vmem:[#allocation7 + $0xfa0] sm:$0xf]
    %v1395 = vld [vmem:[#allocation7 + $0xfa4] sm:$0xff]
    %v1396 = vld [vmem:[#allocation7 + $0xfac] sm:$0xff]
    %v1397 = vld [vmem:[#allocation7 + $0xfb4] sm:$0xff]
    %v1398 = vld [vmem:[#allocation7 + $0xfbc] sm:$0xf]
    %v1399 = vld [vmem:[#allocation7 + $0xfc0] sm:$0xff]
    %v1400 = vld [vmem:[#allocation7 + $0xfc8] sm:$0xff]
    %v1401 = vld [vmem:[#allocation7 + $0xfd0] sm:$0xff]
    %v1402 = vld [vmem:[#allocation7 + $0xfd8] sm:$0xf]
    %v1403 = vld [vmem:[#allocation7 + $0xfdc] sm:$0xff]
    %v1404 = vld [vmem:[#allocation7 + $0xfe4] sm:$0xff]
    %v1405 = vld [vmem:[#allocation7 + $0xfec] sm:$0xff]
    %v1406 = vld [vmem:[#allocation7 + $0xff4] sm:$0xf]
    %v1407 = vld [vmem:[#allocation7 + $0xff8] sm:$0xff]
    %v1408 = vld [vmem:[#allocation7 + $0x1000] sm:$0xff]
    %v1409 = vld [vmem:[#allocation7 + $0x1008] sm:$0xff]
    %v1410 = vld [vmem:[#allocation7 + $0x1010] sm:$0xf]
    %v1411 = vld [vmem:[#allocation7 + $0x1014] sm:$0xff]
    %v1412 = vld [vmem:[#allocation7 + $0x101c] sm:$0xff]
    %v1413 = vld [vmem:[#allocation7 + $0x1024] sm:$0xff]
    %v1414 = vld [vmem:[#allocation7 + $0x102c] sm:$0xf]
    %v1415 = vld [vmem:[#allocation7 + $0x1030] sm:$0xff]
    %v1416 = vld [vmem:[#allocation7 + $0x1038] sm:$0xff]
    %v1417 = vld [vmem:[#allocation7 + $0x1040] sm:$0xff]
    %v1418 = vld [vmem:[#allocation7 + $0x1048] sm:$0xf]
    %v1419 = vld [vmem:[#allocation7 + $0x104c] sm:$0xff]
    %v1420 = vld [vmem:[#allocation7 + $0x1054] sm:$0xff]
    %v1421 = vld [vmem:[#allocation7 + $0x105c] sm:$0xff]
    %v1422 = vld [vmem:[#allocation7 + $0x1064] sm:$0xf]
    %v1423 = vld [vmem:[#allocation7 + $0x1068] sm:$0xff]
    %v1424 = vld [vmem:[#allocation7 + $0x1070] sm:$0xff]
    %v1425 = vld [vmem:[#allocation7 + $0x1078] sm:$0xff]
    %v1426 = vld [vmem:[#allocation7 + $0x1080] sm:$0xf]
    %v1427 = vld [vmem:[#allocation7 + $0x1084] sm:$0xff]
    %v1428 = vld [vmem:[#allocation7 + $0x108c] sm:$0xff]
    %v1429 = vld [vmem:[#allocation7 + $0x1094] sm:$0xff]
    %v1430 = vld [vmem:[#allocation7 + $0x109c] sm:$0xf]
    %v1431 = vld [vmem:[#allocation7 + $0x10a0] sm:$0xff]
    %v1432 = vld [vmem:[#allocation7 + $0x10a8] sm:$0xff]
    %v1433 = vld [vmem:[#allocation7 + $0x10b0] sm:$0xff]
    %v1434 = vld [vmem:[#allocation7 + $0x10b8] sm:$0xf]
    %v1435 = vld [vmem:[#allocation7 + $0x10bc] sm:$0xff]
    %v1436 = vld [vmem:[#allocation7 + $0x10c4] sm:$0xff]
    %v1437 = vld [vmem:[#allocation7 + $0x10cc] sm:$0xff]
    %v1438 = vld [vmem:[#allocation7 + $0x10d4] sm:$0xf]
    %v1439 = vld [vmem:[#allocation7 + $0x10d8] sm:$0xff]
    %v1440 = vld [vmem:[#allocation7 + $0x10e0] sm:$0xff]
    %v1441 = vld [vmem:[#allocation7 + $0x10e8] sm:$0xff]
    %v1442 = vld [vmem:[#allocation7 + $0x10f0] sm:$0xf]
    %v1443 = vld [vmem:[#allocation7 + $0x10f4] sm:$0xff]
    %v1444 = vld [vmem:[#allocation7 + $0x10fc] sm:$0xff]
    %v1445 = vld [vmem:[#allocation7 + $0x1104] sm:$0xff]
    %v1446 = vld [vmem:[#allocation7 + $0x110c] sm:$0xf]
    %v1447 = vld [vmem:[#allocation7 + $0x1110] sm:$0xff]
    %v1448 = vld [vmem:[#allocation7 + $0x1118] sm:$0xff]
    %v1449 = vld [vmem:[#allocation7 + $0x1120] sm:$0xff]
    %v1450 = vld [vmem:[#allocation7 + $0x1128] sm:$0xf]
    %v1451 = vld [vmem:[#allocation7 + $0x112c] sm:$0xff]
    %v1452 = vld [vmem:[#allocation7 + $0x1134] sm:$0xff]
    %v1453 = vld [vmem:[#allocation7 + $0x113c] sm:$0xff]
    %v1454 = vld [vmem:[#allocation7 + $0x1144] sm:$0xf]
    %v1455 = vld [vmem:[#allocation7 + $0x1148] sm:$0xff]
    %v1456 = vld [vmem:[#allocation7 + $0x1150] sm:$0xff]
    %v1457 = vld [vmem:[#allocation7 + $0x1158] sm:$0xff]
    %v1458 = vld [vmem:[#allocation7 + $0x1160] sm:$0xf]
    %v1459 = vld [vmem:[#allocation7 + $0x1164] sm:$0xff]
    %v1460 = vld [vmem:[#allocation7 + $0x116c] sm:$0xff]
    %v1461 = vld [vmem:[#allocation7 + $0x1174] sm:$0xff]
    %v1462 = vld [vmem:[#allocation7 + $0x117c] sm:$0xf]
    %v1463 = vld [vmem:[#allocation8] sm:$0xff]
    %v1465 = vlaneseq
    %v1466 = vshrl.u32 %v1465, 7
    %v1467 = vsub.s32 0, %v1466
    %v1468 = vrot.slane %v1463, %v1467
    %v1469 = vlaneseq
    %v1470 = vshrl.u32 %v1469, 7
    %v1471 = vsub.s32 1, %v1470
    %v1472 = vrot.slane %v1463, %v1471
    %v1473 = vlaneseq
    %v1474 = vshrl.u32 %v1473, 7
    %v1475 = vsub.s32 2, %v1474
    %v1476 = vrot.slane %v1463, %v1475
    %v1477 = vlaneseq
    %v1478 = vshrl.u32 %v1477, 7
    %v1479 = vsub.s32 3, %v1478
    %v1480 = vrot.slane %v1463, %v1479
    %v1481 = vlaneseq
    %v1482 = vshrl.u32 %v1481, 7
    %v1483 = vsub.s32 4, %v1482
    %v1484 = vrot.slane %v1463, %v1483
    %v1485 = vlaneseq
    %v1486 = vshrl.u32 %v1485, 7
    %v1487 = vsub.s32 5, %v1486
    %v1488 = vrot.slane %v1463, %v1487
    %v1489 = vlaneseq
    %v1490 = vshrl.u32 %v1489, 7
    %v1491 = vsub.s32 6, %v1490
    %v1492 = vrot.slane %v1463, %v1491
    %v2140 = vunpack.c.l.b16 %v823
    %v2141 = vunpack.c.h.b16 %v823
    %v2142 = vunpack.c.l.b16 %v824
    %v2143 = vunpack.c.h.b16 %v824
    %v2144 = vunpack.c.l.b16 %v825
    %v2145 = vunpack.c.h.b16 %v825
    %v2146 = vunpack.c.l.b16 %v826
    %v2147 = vunpack.c.l.b16 %v827
    %v2148 = vunpack.c.h.b16 %v827
    %v2149 = vunpack.c.l.b16 %v828
    %v2150 = vunpack.c.h.b16 %v828
    %v2151 = vunpack.c.l.b16 %v829
    %v2152 = vunpack.c.h.b16 %v829
    %v2153 = vunpack.c.l.b16 %v830
    %v2154 = vunpack.c.l.b16 %v831
    %v2155 = vunpack.c.h.b16 %v831
    %v2156 = vunpack.c.l.b16 %v832
    %v2157 = vunpack.c.h.b16 %v832
    %v2158 = vunpack.c.l.b16 %v833
    %v2159 = vunpack.c.h.b16 %v833
    %v2160 = vunpack.c.l.b16 %v834
    %v2161 = vunpack.c.l.b16 %v835
    %v2162 = vunpack.c.h.b16 %v835
    %v2163 = vunpack.c.l.b16 %v836
    %v2164 = vunpack.c.h.b16 %v836
    %v2165 = vunpack.c.l.b16 %v837
    %v2166 = vunpack.c.h.b16 %v837
    %v2167 = vunpack.c.l.b16 %v838
    %v2168 = vunpack.c.l.b16 %v839
    %v2169 = vunpack.c.h.b16 %v839
    %v2170 = vunpack.c.l.b16 %v840
    %v2171 = vunpack.c.h.b16 %v840
    %v2172 = vunpack.c.l.b16 %v841
    %v2173 = vunpack.c.h.b16 %v841
    %v2174 = vunpack.c.l.b16 %v842
    %v2175 = vunpack.c.l.b16 %v843
    %v2176 = vunpack.c.h.b16 %v843
    %v2177 = vunpack.c.l.b16 %v844
    %v2178 = vunpack.c.h.b16 %v844
    %v2179 = vunpack.c.l.b16 %v845
    %v2180 = vunpack.c.h.b16 %v845
    %v2181 = vunpack.c.l.b16 %v846
    %v2182 = vunpack.c.l.b16 %v847
    %v2183 = vunpack.c.h.b16 %v847
    %v2184 = vunpack.c.l.b16 %v848
    %v2185 = vunpack.c.h.b16 %v848
    %v2186 = vunpack.c.l.b16 %v849
    %v2187 = vunpack.c.h.b16 %v849
    %v2188 = vunpack.c.l.b16 %v850
    %v2189 = vunpack.c.l.b16 %v851
    %v2190 = vunpack.c.h.b16 %v851
    %v2191 = vunpack.c.l.b16 %v852
    %v2192 = vunpack.c.h.b16 %v852
    %v2193 = vunpack.c.l.b16 %v853
    %v2194 = vunpack.c.h.b16 %v853
    %v2195 = vunpack.c.l.b16 %v854
    %v2196 = vunpack.c.l.b16 %v855
    %v2197 = vunpack.c.h.b16 %v855
    %v2198 = vunpack.c.l.b16 %v856
    %v2199 = vunpack.c.h.b16 %v856
    %v2200 = vunpack.c.l.b16 %v857
    %v2201 = vunpack.c.h.b16 %v857
    %v2202 = vunpack.c.l.b16 %v858
    %v2203 = vunpack.c.l.b16 %v859
    %v2204 = vunpack.c.h.b16 %v859
    %v2205 = vunpack.c.l.b16 %v860
    %v2206 = vunpack.c.h.b16 %v860
    %v2207 = vunpack.c.l.b16 %v861
    %v2208 = vunpack.c.h.b16 %v861
    %v2209 = vunpack.c.l.b16 %v862
    %v2210 = vunpack.c.l.b16 %v863
    %v2211 = vunpack.c.h.b16 %v863
    %v2212 = vunpack.c.l.b16 %v864
    %v2213 = vunpack.c.h.b16 %v864
    %v2214 = vunpack.c.l.b16 %v865
    %v2215 = vunpack.c.h.b16 %v865
    %v2216 = vunpack.c.l.b16 %v866
    %v2217 = vunpack.c.l.b16 %v867
    %v2218 = vunpack.c.h.b16 %v867
    %v2219 = vunpack.c.l.b16 %v868
    %v2220 = vunpack.c.h.b16 %v868
    %v2221 = vunpack.c.l.b16 %v869
    %v2222 = vunpack.c.h.b16 %v869
    %v2223 = vunpack.c.l.b16 %v870
    %v2224 = vunpack.c.l.b16 %v871
    %v2225 = vunpack.c.h.b16 %v871
    %v2226 = vunpack.c.l.b16 %v872
    %v2227 = vunpack.c.h.b16 %v872
    %v2228 = vunpack.c.l.b16 %v873
    %v2229 = vunpack.c.h.b16 %v873
    %v2230 = vunpack.c.l.b16 %v874
    %v2231 = vunpack.c.l.b16 %v875
    %v2232 = vunpack.c.h.b16 %v875
    %v2233 = vunpack.c.l.b16 %v876
    %v2234 = vunpack.c.h.b16 %v876
    %v2235 = vunpack.c.l.b16 %v877
    %v2236 = vunpack.c.h.b16 %v877
    %v2237 = vunpack.c.l.b16 %v878
    %v2238 = vunpack.c.l.b16 %v879
    %v2239 = vunpack.c.h.b16 %v879
    %v2240 = vunpack.c.l.b16 %v880
    %v2241 = vunpack.c.h.b16 %v880
    %v2242 = vunpack.c.l.b16 %v881
    %v2243 = vunpack.c.h.b16 %v881
    %v2244 = vunpack.c.l.b16 %v882
    %v2245 = vunpack.c.l.b16 %v883
    %v2246 = vunpack.c.h.b16 %v883
    %v2247 = vunpack.c.l.b16 %v884
    %v2248 = vunpack.c.h.b16 %v884
    %v2249 = vunpack.c.l.b16 %v885
    %v2250 = vunpack.c.h.b16 %v885
    %v2251 = vunpack.c.l.b16 %v886
    %v2252 = vunpack.c.l.b16 %v887
    %v2253 = vunpack.c.h.b16 %v887
    %v2254 = vunpack.c.l.b16 %v888
    %v2255 = vunpack.c.h.b16 %v888
    %v2256 = vunpack.c.l.b16 %v889
    %v2257 = vunpack.c.h.b16 %v889
    %v2258 = vunpack.c.l.b16 %v890
    %v2259 = vunpack.c.l.b16 %v891
    %v2260 = vunpack.c.h.b16 %v891
    %v2261 = vunpack.c.l.b16 %v892
    %v2262 = vunpack.c.h.b16 %v892
    %v2263 = vunpack.c.l.b16 %v893
    %v2264 = vunpack.c.h.b16 %v893
    %v2265 = vunpack.c.l.b16 %v894
    %v2266 = vunpack.c.l.b16 %v895
    %v2267 = vunpack.c.h.b16 %v895
    %v2268 = vunpack.c.l.b16 %v896
    %v2269 = vunpack.c.h.b16 %v896
    %v2270 = vunpack.c.l.b16 %v897
    %v2271 = vunpack.c.h.b16 %v897
    %v2272 = vunpack.c.l.b16 %v898
    %v2273 = vunpack.c.l.b16 %v899
    %v2274 = vunpack.c.h.b16 %v899
    %v2275 = vunpack.c.l.b16 %v900
    %v2276 = vunpack.c.h.b16 %v900
    %v2277 = vunpack.c.l.b16 %v901
    %v2278 = vunpack.c.h.b16 %v901
    %v2279 = vunpack.c.l.b16 %v902
    %v2280 = vunpack.c.l.b16 %v903
    %v2281 = vunpack.c.h.b16 %v903
    %v2282 = vunpack.c.l.b16 %v904
    %v2283 = vunpack.c.h.b16 %v904
    %v2284 = vunpack.c.l.b16 %v905
    %v2285 = vunpack.c.h.b16 %v905
    %v2286 = vunpack.c.l.b16 %v906
    %v2287 = vunpack.c.l.b16 %v907
    %v2288 = vunpack.c.h.b16 %v907
    %v2289 = vunpack.c.l.b16 %v908
    %v2290 = vunpack.c.h.b16 %v908
    %v2291 = vunpack.c.l.b16 %v909
    %v2292 = vunpack.c.h.b16 %v909
    %v2293 = vunpack.c.l.b16 %v910
    %v2294 = vunpack.c.l.b16 %v911
    %v2295 = vunpack.c.h.b16 %v911
    %v2296 = vunpack.c.l.b16 %v912
    %v2297 = vunpack.c.h.b16 %v912
    %v2298 = vunpack.c.l.b16 %v913
    %v2299 = vunpack.c.h.b16 %v913
    %v2300 = vunpack.c.l.b16 %v914
    %v2301 = vunpack.c.l.b16 %v915
    %v2302 = vunpack.c.h.b16 %v915
    %v2303 = vunpack.c.l.b16 %v916
    %v2304 = vunpack.c.h.b16 %v916
    %v2305 = vunpack.c.l.b16 %v917
    %v2306 = vunpack.c.h.b16 %v917
    %v2307 = vunpack.c.l.b16 %v918
    %v2308 = vunpack.c.l.b16 %v919
    %v2309 = vunpack.c.h.b16 %v919
    %v2310 = vunpack.c.l.b16 %v920
    %v2311 = vunpack.c.h.b16 %v920
    %v2312 = vunpack.c.l.b16 %v921
    %v2313 = vunpack.c.h.b16 %v921
    %v2314 = vunpack.c.l.b16 %v922
    %v2315 = vunpack.c.l.b16 %v923
    %v2316 = vunpack.c.h.b16 %v923
    %v2317 = vunpack.c.l.b16 %v924
    %v2318 = vunpack.c.h.b16 %v924
    %v2319 = vunpack.c.l.b16 %v925
    %v2320 = vunpack.c.h.b16 %v925
    %v2321 = vunpack.c.l.b16 %v926
    %v2322 = vunpack.c.l.b16 %v927
    %v2323 = vunpack.c.h.b16 %v927
    %v2324 = vunpack.c.l.b16 %v928
    %v2325 = vunpack.c.h.b16 %v928
    %v2326 = vunpack.c.l.b16 %v929
    %v2327 = vunpack.c.h.b16 %v929
    %v2328 = vunpack.c.l.b16 %v930
    %v2329 = vunpack.c.l.b16 %v931
    %v2330 = vunpack.c.h.b16 %v931
    %v2331 = vunpack.c.l.b16 %v932
    %v2332 = vunpack.c.h.b16 %v932
    %v2333 = vunpack.c.l.b16 %v933
    %v2334 = vunpack.c.h.b16 %v933
    %v2335 = vunpack.c.l.b16 %v934
    %v2336 = vunpack.c.l.b16 %v935
    %v2337 = vunpack.c.h.b16 %v935
    %v2338 = vunpack.c.l.b16 %v936
    %v2339 = vunpack.c.h.b16 %v936
    %v2340 = vunpack.c.l.b16 %v937
    %v2341 = vunpack.c.h.b16 %v937
    %v2342 = vunpack.c.l.b16 %v938
    %v2343 = vunpack.c.l.b16 %v939
    %v2344 = vunpack.c.h.b16 %v939
    %v2345 = vunpack.c.l.b16 %v940
    %v2346 = vunpack.c.h.b16 %v940
    %v2347 = vunpack.c.l.b16 %v941
    %v2348 = vunpack.c.h.b16 %v941
    %v2349 = vunpack.c.l.b16 %v942
    %v2350 = vunpack.c.l.b16 %v943
    %v2351 = vunpack.c.h.b16 %v943
    %v2352 = vunpack.c.l.b16 %v944
    %v2353 = vunpack.c.h.b16 %v944
    %v2354 = vunpack.c.l.b16 %v945
    %v2355 = vunpack.c.h.b16 %v945
    %v2356 = vunpack.c.l.b16 %v946
    %v2357 = vunpack.c.l.b16 %v947
    %v2358 = vunpack.c.h.b16 %v947
    %v2359 = vunpack.c.l.b16 %v948
    %v2360 = vunpack.c.h.b16 %v948
    %v2361 = vunpack.c.l.b16 %v949
    %v2362 = vunpack.c.h.b16 %v949
    %v2363 = vunpack.c.l.b16 %v950
    %v2364 = vunpack.c.l.b16 %v951
    %v2365 = vunpack.c.h.b16 %v951
    %v2366 = vunpack.c.l.b16 %v952
    %v2367 = vunpack.c.h.b16 %v952
    %v2368 = vunpack.c.l.b16 %v953
    %v2369 = vunpack.c.h.b16 %v953
    %v2370 = vunpack.c.l.b16 %v954
    %v2371 = vunpack.c.l.b16 %v955
    %v2372 = vunpack.c.h.b16 %v955
    %v2373 = vunpack.c.l.b16 %v956
    %v2374 = vunpack.c.h.b16 %v956
    %v2375 = vunpack.c.l.b16 %v957
    %v2376 = vunpack.c.h.b16 %v957
    %v2377 = vunpack.c.l.b16 %v958
    %v2378 = vunpack.c.l.b16 %v959
    %v2379 = vunpack.c.h.b16 %v959
    %v2380 = vunpack.c.l.b16 %v960
    %v2381 = vunpack.c.h.b16 %v960
    %v2382 = vunpack.c.l.b16 %v961
    %v2383 = vunpack.c.h.b16 %v961
    %v2384 = vunpack.c.l.b16 %v962
    %v2385 = vunpack.c.l.b16 %v963
    %v2386 = vunpack.c.h.b16 %v963
    %v2387 = vunpack.c.l.b16 %v964
    %v2388 = vunpack.c.h.b16 %v964
    %v2389 = vunpack.c.l.b16 %v965
    %v2390 = vunpack.c.h.b16 %v965
    %v2391 = vunpack.c.l.b16 %v966
    %v2392 = vunpack.c.l.b16 %v967
    %v2393 = vunpack.c.h.b16 %v967
    %v2394 = vunpack.c.l.b16 %v968
    %v2395 = vunpack.c.h.b16 %v968
    %v2396 = vunpack.c.l.b16 %v969
    %v2397 = vunpack.c.h.b16 %v969
    %v2398 = vunpack.c.l.b16 %v970
    %v2399 = vunpack.c.l.b16 %v971
    %v2400 = vunpack.c.h.b16 %v971
    %v2401 = vunpack.c.l.b16 %v972
    %v2402 = vunpack.c.h.b16 %v972
    %v2403 = vunpack.c.l.b16 %v973
    %v2404 = vunpack.c.h.b16 %v973
    %v2405 = vunpack.c.l.b16 %v974
    %v2406 = vunpack.c.l.b16 %v975
    %v2407 = vunpack.c.h.b16 %v975
    %v2408 = vunpack.c.l.b16 %v976
    %v2409 = vunpack.c.h.b16 %v976
    %v2410 = vunpack.c.l.b16 %v977
    %v2411 = vunpack.c.h.b16 %v977
    %v2412 = vunpack.c.l.b16 %v978
    %v2413 = vunpack.c.l.b16 %v979
    %v2414 = vunpack.c.h.b16 %v979
    %v2415 = vunpack.c.l.b16 %v980
    %v2416 = vunpack.c.h.b16 %v980
    %v2417 = vunpack.c.l.b16 %v981
    %v2418 = vunpack.c.h.b16 %v981
    %v2419 = vunpack.c.l.b16 %v982
    %v2420 = vunpack.c.l.b16 %v983
    %v2421 = vunpack.c.h.b16 %v983
    %v2422 = vunpack.c.l.b16 %v984
    %v2423 = vunpack.c.h.b16 %v984
    %v2424 = vunpack.c.l.b16 %v985
    %v2425 = vunpack.c.h.b16 %v985
    %v2426 = vunpack.c.l.b16 %v986
    %v2427 = vunpack.c.l.b16 %v987
    %v2428 = vunpack.c.h.b16 %v987
    %v2429 = vunpack.c.l.b16 %v988
    %v2430 = vunpack.c.h.b16 %v988
    %v2431 = vunpack.c.l.b16 %v989
    %v2432 = vunpack.c.h.b16 %v989
    %v2433 = vunpack.c.l.b16 %v990
    %v2434 = vunpack.c.l.b16 %v991
    %v2435 = vunpack.c.h.b16 %v991
    %v2436 = vunpack.c.l.b16 %v992
    %v2437 = vunpack.c.h.b16 %v992
    %v2438 = vunpack.c.l.b16 %v993
    %v2439 = vunpack.c.h.b16 %v993
    %v2440 = vunpack.c.l.b16 %v994
    %v2441 = vunpack.c.l.b16 %v995
    %v2442 = vunpack.c.h.b16 %v995
    %v2443 = vunpack.c.l.b16 %v996
    %v2444 = vunpack.c.h.b16 %v996
    %v2445 = vunpack.c.l.b16 %v997
    %v2446 = vunpack.c.h.b16 %v997
    %v2447 = vunpack.c.l.b16 %v998
    %v2448 = vunpack.c.l.b16 %v999
    %v2449 = vunpack.c.h.b16 %v999
    %v2450 = vunpack.c.l.b16 %v1000
    %v2451 = vunpack.c.h.b16 %v1000
    %v2452 = vunpack.c.l.b16 %v1001
    %v2453 = vunpack.c.h.b16 %v1001
    %v2454 = vunpack.c.l.b16 %v1002
    %v2455 = vunpack.c.l.b16 %v1003
    %v2456 = vunpack.c.h.b16 %v1003
    %v2457 = vunpack.c.l.b16 %v1004
    %v2458 = vunpack.c.h.b16 %v1004
    %v2459 = vunpack.c.l.b16 %v1005
    %v2460 = vunpack.c.h.b16 %v1005
    %v2461 = vunpack.c.l.b16 %v1006
    %v2462 = vunpack.c.l.b16 %v1007
    %v2463 = vunpack.c.h.b16 %v1007
    %v2464 = vunpack.c.l.b16 %v1008
    %v2465 = vunpack.c.h.b16 %v1008
    %v2466 = vunpack.c.l.b16 %v1009
    %v2467 = vunpack.c.h.b16 %v1009
    %v2468 = vunpack.c.l.b16 %v1010
    %v2469 = vunpack.c.l.b16 %v1011
    %v2470 = vunpack.c.h.b16 %v1011
    %v2471 = vunpack.c.l.b16 %v1012
    %v2472 = vunpack.c.h.b16 %v1012
    %v2473 = vunpack.c.l.b16 %v1013
    %v2474 = vunpack.c.h.b16 %v1013
    %v2475 = vunpack.c.l.b16 %v1014
    %v2476 = vunpack.c.l.b16 %v1015
    %v2477 = vunpack.c.h.b16 %v1015
    %v2478 = vunpack.c.l.b16 %v1016
    %v2479 = vunpack.c.h.b16 %v1016
    %v2480 = vunpack.c.l.b16 %v1017
    %v2481 = vunpack.c.h.b16 %v1017
    %v2482 = vunpack.c.l.b16 %v1018
    %v2483 = vunpack.c.l.b16 %v1019
    %v2484 = vunpack.c.h.b16 %v1019
    %v2485 = vunpack.c.l.b16 %v1020
    %v2486 = vunpack.c.h.b16 %v1020
    %v2487 = vunpack.c.l.b16 %v1021
    %v2488 = vunpack.c.h.b16 %v1021
    %v2489 = vunpack.c.l.b16 %v1022
    %v2490 = vunpack.c.l.b16 %v1023
    %v2491 = vunpack.c.h.b16 %v1023
    %v2492 = vunpack.c.l.b16 %v1024
    %v2493 = vunpack.c.h.b16 %v1024
    %v2494 = vunpack.c.l.b16 %v1025
    %v2495 = vunpack.c.h.b16 %v1025
    %v2496 = vunpack.c.l.b16 %v1026
    %v2497 = vunpack.c.l.b16 %v1027
    %v2498 = vunpack.c.h.b16 %v1027
    %v2499 = vunpack.c.l.b16 %v1028
    %v2500 = vunpack.c.h.b16 %v1028
    %v2501 = vunpack.c.l.b16 %v1029
    %v2502 = vunpack.c.h.b16 %v1029
    %v2503 = vunpack.c.l.b16 %v1030
    %v2504 = vunpack.c.l.b16 %v1031
    %v2505 = vunpack.c.h.b16 %v1031
    %v2506 = vunpack.c.l.b16 %v1032
    %v2507 = vunpack.c.h.b16 %v1032
    %v2508 = vunpack.c.l.b16 %v1033
    %v2509 = vunpack.c.h.b16 %v1033
    %v2510 = vunpack.c.l.b16 %v1034
    %v2511 = vunpack.c.l.b16 %v1035
    %v2512 = vunpack.c.h.b16 %v1035
    %v2513 = vunpack.c.l.b16 %v1036
    %v2514 = vunpack.c.h.b16 %v1036
    %v2515 = vunpack.c.l.b16 %v1037
    %v2516 = vunpack.c.h.b16 %v1037
    %v2517 = vunpack.c.l.b16 %v1038
    %v2518 = vunpack.c.l.b16 %v1039
    %v2519 = vunpack.c.h.b16 %v1039
    %v2520 = vunpack.c.l.b16 %v1040
    %v2521 = vunpack.c.h.b16 %v1040
    %v2522 = vunpack.c.l.b16 %v1041
    %v2523 = vunpack.c.h.b16 %v1041
    %v2524 = vunpack.c.l.b16 %v1042
    %v2525 = vunpack.c.l.b16 %v1043
    %v2526 = vunpack.c.h.b16 %v1043
    %v2527 = vunpack.c.l.b16 %v1044
    %v2528 = vunpack.c.h.b16 %v1044
    %v2529 = vunpack.c.l.b16 %v1045
    %v2530 = vunpack.c.h.b16 %v1045
    %v2531 = vunpack.c.l.b16 %v1046
    %v2532 = vunpack.c.l.b16 %v1047
    %v2533 = vunpack.c.h.b16 %v1047
    %v2534 = vunpack.c.l.b16 %v1048
    %v2535 = vunpack.c.h.b16 %v1048
    %v2536 = vunpack.c.l.b16 %v1049
    %v2537 = vunpack.c.h.b16 %v1049
    %v2538 = vunpack.c.l.b16 %v1050
    %v2539 = vunpack.c.l.b16 %v1051
    %v2540 = vunpack.c.h.b16 %v1051
    %v2541 = vunpack.c.l.b16 %v1052
    %v2542 = vunpack.c.h.b16 %v1052
    %v2543 = vunpack.c.l.b16 %v1053
    %v2544 = vunpack.c.h.b16 %v1053
    %v2545 = vunpack.c.l.b16 %v1054
    %v2546 = vunpack.c.l.b16 %v1055
    %v2547 = vunpack.c.h.b16 %v1055
    %v2548 = vunpack.c.l.b16 %v1056
    %v2549 = vunpack.c.h.b16 %v1056
    %v2550 = vunpack.c.l.b16 %v1057
    %v2551 = vunpack.c.h.b16 %v1057
    %v2552 = vunpack.c.l.b16 %v1058
    %v2553 = vunpack.c.l.b16 %v1059
    %v2554 = vunpack.c.h.b16 %v1059
    %v2555 = vunpack.c.l.b16 %v1060
    %v2556 = vunpack.c.h.b16 %v1060
    %v2557 = vunpack.c.l.b16 %v1061
    %v2558 = vunpack.c.h.b16 %v1061
    %v2559 = vunpack.c.l.b16 %v1062
    %v2560 = vunpack.c.l.b16 %v1063
    %v2561 = vunpack.c.h.b16 %v1063
    %v2562 = vunpack.c.l.b16 %v1064
    %v2563 = vunpack.c.h.b16 %v1064
    %v2564 = vunpack.c.l.b16 %v1065
    %v2565 = vunpack.c.h.b16 %v1065
    %v2566 = vunpack.c.l.b16 %v1066
    %v2567 = vunpack.c.l.b16 %v1067
    %v2568 = vunpack.c.h.b16 %v1067
    %v2569 = vunpack.c.l.b16 %v1068
    %v2570 = vunpack.c.h.b16 %v1068
    %v2571 = vunpack.c.l.b16 %v1069
    %v2572 = vunpack.c.h.b16 %v1069
    %v2573 = vunpack.c.l.b16 %v1070
    %v2574 = vunpack.c.l.b16 %v1071
    %v2575 = vunpack.c.h.b16 %v1071
    %v2576 = vunpack.c.l.b16 %v1072
    %v2577 = vunpack.c.h.b16 %v1072
    %v2578 = vunpack.c.l.b16 %v1073
    %v2579 = vunpack.c.h.b16 %v1073
    %v2580 = vunpack.c.l.b16 %v1074
    %v2581 = vunpack.c.l.b16 %v1075
    %v2582 = vunpack.c.h.b16 %v1075
    %v2583 = vunpack.c.l.b16 %v1076
    %v2584 = vunpack.c.h.b16 %v1076
    %v2585 = vunpack.c.l.b16 %v1077
    %v2586 = vunpack.c.h.b16 %v1077
    %v2587 = vunpack.c.l.b16 %v1078
    %v2588 = vunpack.c.l.b16 %v1079
    %v2589 = vunpack.c.h.b16 %v1079
    %v2590 = vunpack.c.l.b16 %v1080
    %v2591 = vunpack.c.h.b16 %v1080
    %v2592 = vunpack.c.l.b16 %v1081
    %v2593 = vunpack.c.h.b16 %v1081
    %v2594 = vunpack.c.l.b16 %v1082
    %v2595 = vunpack.c.l.b16 %v1083
    %v2596 = vunpack.c.h.b16 %v1083
    %v2597 = vunpack.c.l.b16 %v1084
    %v2598 = vunpack.c.h.b16 %v1084
    %v2599 = vunpack.c.l.b16 %v1085
    %v2600 = vunpack.c.h.b16 %v1085
    %v2601 = vunpack.c.l.b16 %v1086
    %v2602 = vunpack.c.l.b16 %v1087
    %v2603 = vunpack.c.h.b16 %v1087
    %v2604 = vunpack.c.l.b16 %v1088
    %v2605 = vunpack.c.h.b16 %v1088
    %v2606 = vunpack.c.l.b16 %v1089
    %v2607 = vunpack.c.h.b16 %v1089
    %v2608 = vunpack.c.l.b16 %v1090
    %v2609 = vunpack.c.l.b16 %v1091
    %v2610 = vunpack.c.h.b16 %v1091
    %v2611 = vunpack.c.l.b16 %v1092
    %v2612 = vunpack.c.h.b16 %v1092
    %v2613 = vunpack.c.l.b16 %v1093
    %v2614 = vunpack.c.h.b16 %v1093
    %v2615 = vunpack.c.l.b16 %v1094
    %v2616 = vunpack.c.l.b16 %v1095
    %v2617 = vunpack.c.h.b16 %v1095
    %v2618 = vunpack.c.l.b16 %v1096
    %v2619 = vunpack.c.h.b16 %v1096
    %v2620 = vunpack.c.l.b16 %v1097
    %v2621 = vunpack.c.h.b16 %v1097
    %v2622 = vunpack.c.l.b16 %v1098
    %v2623 = vunpack.c.l.b16 %v1099
    %v2624 = vunpack.c.h.b16 %v1099
    %v2625 = vunpack.c.l.b16 %v1100
    %v2626 = vunpack.c.h.b16 %v1100
    %v2627 = vunpack.c.l.b16 %v1101
    %v2628 = vunpack.c.h.b16 %v1101
    %v2629 = vunpack.c.l.b16 %v1102
    %v2630 = vunpack.c.l.b16 %v1103
    %v2631 = vunpack.c.h.b16 %v1103
    %v2632 = vunpack.c.l.b16 %v1104
    %v2633 = vunpack.c.h.b16 %v1104
    %v2634 = vunpack.c.l.b16 %v1105
    %v2635 = vunpack.c.h.b16 %v1105
    %v2636 = vunpack.c.l.b16 %v1106
    %v2637 = vunpack.c.l.b16 %v1107
    %v2638 = vunpack.c.h.b16 %v1107
    %v2639 = vunpack.c.l.b16 %v1108
    %v2640 = vunpack.c.h.b16 %v1108
    %v2641 = vunpack.c.l.b16 %v1109
    %v2642 = vunpack.c.h.b16 %v1109
    %v2643 = vunpack.c.l.b16 %v1110
    %v2644 = vunpack.c.l.b16 %v1111
    %v2645 = vunpack.c.h.b16 %v1111
    %v2646 = vunpack.c.l.b16 %v1112
    %v2647 = vunpack.c.h.b16 %v1112
    %v2648 = vunpack.c.l.b16 %v1113
    %v2649 = vunpack.c.h.b16 %v1113
    %v2650 = vunpack.c.l.b16 %v1114
    %v2651 = vunpack.c.l.b16 %v1115
    %v2652 = vunpack.c.h.b16 %v1115
    %v2653 = vunpack.c.l.b16 %v1116
    %v2654 = vunpack.c.h.b16 %v1116
    %v2655 = vunpack.c.l.b16 %v1117
    %v2656 = vunpack.c.h.b16 %v1117
    %v2657 = vunpack.c.l.b16 %v1118
    %v2658 = vunpack.c.l.b16 %v1119
    %v2659 = vunpack.c.h.b16 %v1119
    %v2660 = vunpack.c.l.b16 %v1120
    %v2661 = vunpack.c.h.b16 %v1120
    %v2662 = vunpack.c.l.b16 %v1121
    %v2663 = vunpack.c.h.b16 %v1121
    %v2664 = vunpack.c.l.b16 %v1122
    %v2665 = vunpack.c.l.b16 %v1123
    %v2666 = vunpack.c.h.b16 %v1123
    %v2667 = vunpack.c.l.b16 %v1124
    %v2668 = vunpack.c.h.b16 %v1124
    %v2669 = vunpack.c.l.b16 %v1125
    %v2670 = vunpack.c.h.b16 %v1125
    %v2671 = vunpack.c.l.b16 %v1126
    %v2672 = vunpack.c.l.b16 %v1127
    %v2673 = vunpack.c.h.b16 %v1127
    %v2674 = vunpack.c.l.b16 %v1128
    %v2675 = vunpack.c.h.b16 %v1128
    %v2676 = vunpack.c.l.b16 %v1129
    %v2677 = vunpack.c.h.b16 %v1129
    %v2678 = vunpack.c.l.b16 %v1130
    %v2679 = vunpack.c.l.b16 %v1131
    %v2680 = vunpack.c.h.b16 %v1131
    %v2681 = vunpack.c.l.b16 %v1132
    %v2682 = vunpack.c.h.b16 %v1132
    %v2683 = vunpack.c.l.b16 %v1133
    %v2684 = vunpack.c.h.b16 %v1133
    %v2685 = vunpack.c.l.b16 %v1134
    %v2686 = vunpack.c.l.b16 %v1135
    %v2687 = vunpack.c.h.b16 %v1135
    %v2688 = vunpack.c.l.b16 %v1136
    %v2689 = vunpack.c.h.b16 %v1136
    %v2690 = vunpack.c.l.b16 %v1137
    %v2691 = vunpack.c.h.b16 %v1137
    %v2692 = vunpack.c.l.b16 %v1138
    %v2693 = vunpack.c.l.b16 %v1139
    %v2694 = vunpack.c.h.b16 %v1139
    %v2695 = vunpack.c.l.b16 %v1140
    %v2696 = vunpack.c.h.b16 %v1140
    %v2697 = vunpack.c.l.b16 %v1141
    %v2698 = vunpack.c.h.b16 %v1141
    %v2699 = vunpack.c.l.b16 %v1142
    %v2700 = vunpack.c.l.b16 %v1143
    %v2701 = vunpack.c.h.b16 %v1143
    %v2702 = vunpack.c.l.b16 %v1144
    %v2703 = vunpack.c.h.b16 %v1144
    %v2704 = vunpack.c.l.b16 %v1145
    %v2705 = vunpack.c.h.b16 %v1145
    %v2706 = vunpack.c.l.b16 %v1146
    %v2707 = vunpack.c.l.b16 %v1147
    %v2708 = vunpack.c.h.b16 %v1147
    %v2709 = vunpack.c.l.b16 %v1148
    %v2710 = vunpack.c.h.b16 %v1148
    %v2711 = vunpack.c.l.b16 %v1149
    %v2712 = vunpack.c.h.b16 %v1149
    %v2713 = vunpack.c.l.b16 %v1150
    %v2714 = vunpack.c.l.b16 %v1151
    %v2715 = vunpack.c.h.b16 %v1151
    %v2716 = vunpack.c.l.b16 %v1152
    %v2717 = vunpack.c.h.b16 %v1152
    %v2718 = vunpack.c.l.b16 %v1153
    %v2719 = vunpack.c.h.b16 %v1153
    %v2720 = vunpack.c.l.b16 %v1154
    %v2721 = vunpack.c.l.b16 %v1155
    %v2722 = vunpack.c.h.b16 %v1155
    %v2723 = vunpack.c.l.b16 %v1156
    %v2724 = vunpack.c.h.b16 %v1156
    %v2725 = vunpack.c.l.b16 %v1157
    %v2726 = vunpack.c.h.b16 %v1157
    %v2727 = vunpack.c.l.b16 %v1158
    %v2728 = vunpack.c.l.b16 %v1159
    %v2729 = vunpack.c.h.b16 %v1159
    %v2730 = vunpack.c.l.b16 %v1160
    %v2731 = vunpack.c.h.b16 %v1160
    %v2732 = vunpack.c.l.b16 %v1161
    %v2733 = vunpack.c.h.b16 %v1161
    %v2734 = vunpack.c.l.b16 %v1162
    %v2735 = vunpack.c.l.b16 %v1163
    %v2736 = vunpack.c.h.b16 %v1163
    %v2737 = vunpack.c.l.b16 %v1164
    %v2738 = vunpack.c.h.b16 %v1164
    %v2739 = vunpack.c.l.b16 %v1165
    %v2740 = vunpack.c.h.b16 %v1165
    %v2741 = vunpack.c.l.b16 %v1166
    %v2742 = vunpack.c.l.b16 %v1167
    %v2743 = vunpack.c.h.b16 %v1167
    %v2744 = vunpack.c.l.b16 %v1168
    %v2745 = vunpack.c.h.b16 %v1168
    %v2746 = vunpack.c.l.b16 %v1169
    %v2747 = vunpack.c.h.b16 %v1169
    %v2748 = vunpack.c.l.b16 %v1170
    %v2749 = vunpack.c.l.b16 %v1171
    %v2750 = vunpack.c.h.b16 %v1171
    %v2751 = vunpack.c.l.b16 %v1172
    %v2752 = vunpack.c.h.b16 %v1172
    %v2753 = vunpack.c.l.b16 %v1173
    %v2754 = vunpack.c.h.b16 %v1173
    %v2755 = vunpack.c.l.b16 %v1174
    %v2756 = vunpack.c.l.b16 %v1175
    %v2757 = vunpack.c.h.b16 %v1175
    %v2758 = vunpack.c.l.b16 %v1176
    %v2759 = vunpack.c.h.b16 %v1176
    %v2760 = vunpack.c.l.b16 %v1177
    %v2761 = vunpack.c.h.b16 %v1177
    %v2762 = vunpack.c.l.b16 %v1178
    %v2763 = vunpack.c.l.b16 %v1179
    %v2764 = vunpack.c.h.b16 %v1179
    %v2765 = vunpack.c.l.b16 %v1180
    %v2766 = vunpack.c.h.b16 %v1180
    %v2767 = vunpack.c.l.b16 %v1181
    %v2768 = vunpack.c.h.b16 %v1181
    %v2769 = vunpack.c.l.b16 %v1182
    %v2770 = vunpack.c.l.b16 %v1183
    %v2771 = vunpack.c.h.b16 %v1183
    %v2772 = vunpack.c.l.b16 %v1184
    %v2773 = vunpack.c.h.b16 %v1184
    %v2774 = vunpack.c.l.b16 %v1185
    %v2775 = vunpack.c.h.b16 %v1185
    %v2776 = vunpack.c.l.b16 %v1186
    %v2777 = vunpack.c.l.b16 %v1187
    %v2778 = vunpack.c.h.b16 %v1187
    %v2779 = vunpack.c.l.b16 %v1188
    %v2780 = vunpack.c.h.b16 %v1188
    %v2781 = vunpack.c.l.b16 %v1189
    %v2782 = vunpack.c.h.b16 %v1189
    %v2783 = vunpack.c.l.b16 %v1190
    %v2784 = vunpack.c.l.b16 %v1191
    %v2785 = vunpack.c.h.b16 %v1191
    %v2786 = vunpack.c.l.b16 %v1192
    %v2787 = vunpack.c.h.b16 %v1192
    %v2788 = vunpack.c.l.b16 %v1193
    %v2789 = vunpack.c.h.b16 %v1193
    %v2790 = vunpack.c.l.b16 %v1194
    %v2791 = vunpack.c.l.b16 %v1195
    %v2792 = vunpack.c.h.b16 %v1195
    %v2793 = vunpack.c.l.b16 %v1196
    %v2794 = vunpack.c.h.b16 %v1196
    %v2795 = vunpack.c.l.b16 %v1197
    %v2796 = vunpack.c.h.b16 %v1197
    %v2797 = vunpack.c.l.b16 %v1198
    %v2798 = vunpack.c.l.b16 %v1199
    %v2799 = vunpack.c.h.b16 %v1199
    %v2800 = vunpack.c.l.b16 %v1200
    %v2801 = vunpack.c.h.b16 %v1200
    %v2802 = vunpack.c.l.b16 %v1201
    %v2803 = vunpack.c.h.b16 %v1201
    %v2804 = vunpack.c.l.b16 %v1202
    %v2805 = vunpack.c.l.b16 %v1203
    %v2806 = vunpack.c.h.b16 %v1203
    %v2807 = vunpack.c.l.b16 %v1204
    %v2808 = vunpack.c.h.b16 %v1204
    %v2809 = vunpack.c.l.b16 %v1205
    %v2810 = vunpack.c.h.b16 %v1205
    %v2811 = vunpack.c.l.b16 %v1206
    %v2812 = vunpack.c.l.b16 %v1207
    %v2813 = vunpack.c.h.b16 %v1207
    %v2814 = vunpack.c.l.b16 %v1208
    %v2815 = vunpack.c.h.b16 %v1208
    %v2816 = vunpack.c.l.b16 %v1209
    %v2817 = vunpack.c.h.b16 %v1209
    %v2818 = vunpack.c.l.b16 %v1210
    %v2819 = vunpack.c.l.b16 %v1211
    %v2820 = vunpack.c.h.b16 %v1211
    %v2821 = vunpack.c.l.b16 %v1212
    %v2822 = vunpack.c.h.b16 %v1212
    %v2823 = vunpack.c.l.b16 %v1213
    %v2824 = vunpack.c.h.b16 %v1213
    %v2825 = vunpack.c.l.b16 %v1214
    %v2826 = vunpack.c.l.b16 %v1215
    %v2827 = vunpack.c.h.b16 %v1215
    %v2828 = vunpack.c.l.b16 %v1216
    %v2829 = vunpack.c.h.b16 %v1216
    %v2830 = vunpack.c.l.b16 %v1217
    %v2831 = vunpack.c.h.b16 %v1217
    %v2832 = vunpack.c.l.b16 %v1218
    %v2833 = vunpack.c.l.b16 %v1219
    %v2834 = vunpack.c.h.b16 %v1219
    %v2835 = vunpack.c.l.b16 %v1220
    %v2836 = vunpack.c.h.b16 %v1220
    %v2837 = vunpack.c.l.b16 %v1221
    %v2838 = vunpack.c.h.b16 %v1221
    %v2839 = vunpack.c.l.b16 %v1222
    %v2840 = vunpack.c.l.b16 %v1223
    %v2841 = vunpack.c.h.b16 %v1223
    %v2842 = vunpack.c.l.b16 %v1224
    %v2843 = vunpack.c.h.b16 %v1224
    %v2844 = vunpack.c.l.b16 %v1225
    %v2845 = vunpack.c.h.b16 %v1225
    %v2846 = vunpack.c.l.b16 %v1226
    %v2847 = vunpack.c.l.b16 %v1227
    %v2848 = vunpack.c.h.b16 %v1227
    %v2849 = vunpack.c.l.b16 %v1228
    %v2850 = vunpack.c.h.b16 %v1228
    %v2851 = vunpack.c.l.b16 %v1229
    %v2852 = vunpack.c.h.b16 %v1229
    %v2853 = vunpack.c.l.b16 %v1230
    %v2854 = vunpack.c.l.b16 %v1231
    %v2855 = vunpack.c.h.b16 %v1231
    %v2856 = vunpack.c.l.b16 %v1232
    %v2857 = vunpack.c.h.b16 %v1232
    %v2858 = vunpack.c.l.b16 %v1233
    %v2859 = vunpack.c.h.b16 %v1233
    %v2860 = vunpack.c.l.b16 %v1234
    %v2861 = vunpack.c.l.b16 %v1235
    %v2862 = vunpack.c.h.b16 %v1235
    %v2863 = vunpack.c.l.b16 %v1236
    %v2864 = vunpack.c.h.b16 %v1236
    %v2865 = vunpack.c.l.b16 %v1237
    %v2866 = vunpack.c.h.b16 %v1237
    %v2867 = vunpack.c.l.b16 %v1238
    %v2868 = vunpack.c.l.b16 %v1239
    %v2869 = vunpack.c.h.b16 %v1239
    %v2870 = vunpack.c.l.b16 %v1240
    %v2871 = vunpack.c.h.b16 %v1240
    %v2872 = vunpack.c.l.b16 %v1241
    %v2873 = vunpack.c.h.b16 %v1241
    %v2874 = vunpack.c.l.b16 %v1242
    %v2875 = vunpack.c.l.b16 %v1243
    %v2876 = vunpack.c.h.b16 %v1243
    %v2877 = vunpack.c.l.b16 %v1244
    %v2878 = vunpack.c.h.b16 %v1244
    %v2879 = vunpack.c.l.b16 %v1245
    %v2880 = vunpack.c.h.b16 %v1245
    %v2881 = vunpack.c.l.b16 %v1246
    %v2882 = vunpack.c.l.b16 %v1247
    %v2883 = vunpack.c.h.b16 %v1247
    %v2884 = vunpack.c.l.b16 %v1248
    %v2885 = vunpack.c.h.b16 %v1248
    %v2886 = vunpack.c.l.b16 %v1249
    %v2887 = vunpack.c.h.b16 %v1249
    %v2888 = vunpack.c.l.b16 %v1250
    %v2889 = vunpack.c.l.b16 %v1251
    %v2890 = vunpack.c.h.b16 %v1251
    %v2891 = vunpack.c.l.b16 %v1252
    %v2892 = vunpack.c.h.b16 %v1252
    %v2893 = vunpack.c.l.b16 %v1253
    %v2894 = vunpack.c.h.b16 %v1253
    %v2895 = vunpack.c.l.b16 %v1254
    %v2896 = vunpack.c.l.b16 %v1255
    %v2897 = vunpack.c.h.b16 %v1255
    %v2898 = vunpack.c.l.b16 %v1256
    %v2899 = vunpack.c.h.b16 %v1256
    %v2900 = vunpack.c.l.b16 %v1257
    %v2901 = vunpack.c.h.b16 %v1257
    %v2902 = vunpack.c.l.b16 %v1258
    %v2903 = vunpack.c.l.b16 %v1259
    %v2904 = vunpack.c.h.b16 %v1259
    %v2905 = vunpack.c.l.b16 %v1260
    %v2906 = vunpack.c.h.b16 %v1260
    %v2907 = vunpack.c.l.b16 %v1261
    %v2908 = vunpack.c.h.b16 %v1261
    %v2909 = vunpack.c.l.b16 %v1262
    %v2910 = vunpack.c.l.b16 %v1263
    %v2911 = vunpack.c.h.b16 %v1263
    %v2912 = vunpack.c.l.b16 %v1264
    %v2913 = vunpack.c.h.b16 %v1264
    %v2914 = vunpack.c.l.b16 %v1265
    %v2915 = vunpack.c.h.b16 %v1265
    %v2916 = vunpack.c.l.b16 %v1266
    %v2917 = vunpack.c.l.b16 %v1267
    %v2918 = vunpack.c.h.b16 %v1267
    %v2919 = vunpack.c.l.b16 %v1268
    %v2920 = vunpack.c.h.b16 %v1268
    %v2921 = vunpack.c.l.b16 %v1269
    %v2922 = vunpack.c.h.b16 %v1269
    %v2923 = vunpack.c.l.b16 %v1270
    %v2924 = vunpack.c.l.b16 %v1271
    %v2925 = vunpack.c.h.b16 %v1271
    %v2926 = vunpack.c.l.b16 %v1272
    %v2927 = vunpack.c.h.b16 %v1272
    %v2928 = vunpack.c.l.b16 %v1273
    %v2929 = vunpack.c.h.b16 %v1273
    %v2930 = vunpack.c.l.b16 %v1274
    %v2931 = vunpack.c.l.b16 %v1275
    %v2932 = vunpack.c.h.b16 %v1275
    %v2933 = vunpack.c.l.b16 %v1276
    %v2934 = vunpack.c.h.b16 %v1276
    %v2935 = vunpack.c.l.b16 %v1277
    %v2936 = vunpack.c.h.b16 %v1277
    %v2937 = vunpack.c.l.b16 %v1278
    %v2938 = vunpack.c.l.b16 %v1279
    %v2939 = vunpack.c.h.b16 %v1279
    %v2940 = vunpack.c.l.b16 %v1280
    %v2941 = vunpack.c.h.b16 %v1280
    %v2942 = vunpack.c.l.b16 %v1281
    %v2943 = vunpack.c.h.b16 %v1281
    %v2944 = vunpack.c.l.b16 %v1282
    %v2945 = vunpack.c.l.b16 %v1283
    %v2946 = vunpack.c.h.b16 %v1283
    %v2947 = vunpack.c.l.b16 %v1284
    %v2948 = vunpack.c.h.b16 %v1284
    %v2949 = vunpack.c.l.b16 %v1285
    %v2950 = vunpack.c.h.b16 %v1285
    %v2951 = vunpack.c.l.b16 %v1286
    %v2952 = vunpack.c.l.b16 %v1287
    %v2953 = vunpack.c.h.b16 %v1287
    %v2954 = vunpack.c.l.b16 %v1288
    %v2955 = vunpack.c.h.b16 %v1288
    %v2956 = vunpack.c.l.b16 %v1289
    %v2957 = vunpack.c.h.b16 %v1289
    %v2958 = vunpack.c.l.b16 %v1290
    %v2959 = vunpack.c.l.b16 %v1291
    %v2960 = vunpack.c.h.b16 %v1291
    %v2961 = vunpack.c.l.b16 %v1292
    %v2962 = vunpack.c.h.b16 %v1292
    %v2963 = vunpack.c.l.b16 %v1293
    %v2964 = vunpack.c.h.b16 %v1293
    %v2965 = vunpack.c.l.b16 %v1294
    %v2966 = vunpack.c.l.b16 %v1295
    %v2967 = vunpack.c.h.b16 %v1295
    %v2968 = vunpack.c.l.b16 %v1296
    %v2969 = vunpack.c.h.b16 %v1296
    %v2970 = vunpack.c.l.b16 %v1297
    %v2971 = vunpack.c.h.b16 %v1297
    %v2972 = vunpack.c.l.b16 %v1298
    %v2973 = vunpack.c.l.b16 %v1299
    %v2974 = vunpack.c.h.b16 %v1299
    %v2975 = vunpack.c.l.b16 %v1300
    %v2976 = vunpack.c.h.b16 %v1300
    %v2977 = vunpack.c.l.b16 %v1301
    %v2978 = vunpack.c.h.b16 %v1301
    %v2979 = vunpack.c.l.b16 %v1302
    %v2980 = vunpack.c.l.b16 %v1303
    %v2981 = vunpack.c.h.b16 %v1303
    %v2982 = vunpack.c.l.b16 %v1304
    %v2983 = vunpack.c.h.b16 %v1304
    %v2984 = vunpack.c.l.b16 %v1305
    %v2985 = vunpack.c.h.b16 %v1305
    %v2986 = vunpack.c.l.b16 %v1306
    %v2987 = vunpack.c.l.b16 %v1307
    %v2988 = vunpack.c.h.b16 %v1307
    %v2989 = vunpack.c.l.b16 %v1308
    %v2990 = vunpack.c.h.b16 %v1308
    %v2991 = vunpack.c.l.b16 %v1309
    %v2992 = vunpack.c.h.b16 %v1309
    %v2993 = vunpack.c.l.b16 %v1310
    %v2994 = vunpack.c.l.b16 %v1311
    %v2995 = vunpack.c.h.b16 %v1311
    %v2996 = vunpack.c.l.b16 %v1312
    %v2997 = vunpack.c.h.b16 %v1312
    %v2998 = vunpack.c.l.b16 %v1313
    %v2999 = vunpack.c.h.b16 %v1313
    %v3000 = vunpack.c.l.b16 %v1314
    %v3001 = vunpack.c.l.b16 %v1315
    %v3002 = vunpack.c.h.b16 %v1315
    %v3003 = vunpack.c.l.b16 %v1316
    %v3004 = vunpack.c.h.b16 %v1316
    %v3005 = vunpack.c.l.b16 %v1317
    %v3006 = vunpack.c.h.b16 %v1317
    %v3007 = vunpack.c.l.b16 %v1318
    %v3008 = vunpack.c.l.b16 %v1319
    %v3009 = vunpack.c.h.b16 %v1319
    %v3010 = vunpack.c.l.b16 %v1320
    %v3011 = vunpack.c.h.b16 %v1320
    %v3012 = vunpack.c.l.b16 %v1321
    %v3013 = vunpack.c.h.b16 %v1321
    %v3014 = vunpack.c.l.b16 %v1322
    %v3015 = vunpack.c.l.b16 %v1323
    %v3016 = vunpack.c.h.b16 %v1323
    %v3017 = vunpack.c.l.b16 %v1324
    %v3018 = vunpack.c.h.b16 %v1324
    %v3019 = vunpack.c.l.b16 %v1325
    %v3020 = vunpack.c.h.b16 %v1325
    %v3021 = vunpack.c.l.b16 %v1326
    %v3022 = vunpack.c.l.b16 %v1327
    %v3023 = vunpack.c.h.b16 %v1327
    %v3024 = vunpack.c.l.b16 %v1328
    %v3025 = vunpack.c.h.b16 %v1328
    %v3026 = vunpack.c.l.b16 %v1329
    %v3027 = vunpack.c.h.b16 %v1329
    %v3028 = vunpack.c.l.b16 %v1330
    %v3029 = vunpack.c.l.b16 %v1331
    %v3030 = vunpack.c.h.b16 %v1331
    %v3031 = vunpack.c.l.b16 %v1332
    %v3032 = vunpack.c.h.b16 %v1332
    %v3033 = vunpack.c.l.b16 %v1333
    %v3034 = vunpack.c.h.b16 %v1333
    %v3035 = vunpack.c.l.b16 %v1334
    %v3036 = vunpack.c.l.b16 %v1335
    %v3037 = vunpack.c.h.b16 %v1335
    %v3038 = vunpack.c.l.b16 %v1336
    %v3039 = vunpack.c.h.b16 %v1336
    %v3040 = vunpack.c.l.b16 %v1337
    %v3041 = vunpack.c.h.b16 %v1337
    %v3042 = vunpack.c.l.b16 %v1338
    %v3043 = vunpack.c.l.b16 %v1339
    %v3044 = vunpack.c.h.b16 %v1339
    %v3045 = vunpack.c.l.b16 %v1340
    %v3046 = vunpack.c.h.b16 %v1340
    %v3047 = vunpack.c.l.b16 %v1341
    %v3048 = vunpack.c.h.b16 %v1341
    %v3049 = vunpack.c.l.b16 %v1342
    %v3050 = vunpack.c.l.b16 %v1343
    %v3051 = vunpack.c.h.b16 %v1343
    %v3052 = vunpack.c.l.b16 %v1344
    %v3053 = vunpack.c.h.b16 %v1344
    %v3054 = vunpack.c.l.b16 %v1345
    %v3055 = vunpack.c.h.b16 %v1345
    %v3056 = vunpack.c.l.b16 %v1346
    %v3057 = vunpack.c.l.b16 %v1347
    %v3058 = vunpack.c.h.b16 %v1347
    %v3059 = vunpack.c.l.b16 %v1348
    %v3060 = vunpack.c.h.b16 %v1348
    %v3061 = vunpack.c.l.b16 %v1349
    %v3062 = vunpack.c.h.b16 %v1349
    %v3063 = vunpack.c.l.b16 %v1350
    %v3064 = vunpack.c.l.b16 %v1351
    %v3065 = vunpack.c.h.b16 %v1351
    %v3066 = vunpack.c.l.b16 %v1352
    %v3067 = vunpack.c.h.b16 %v1352
    %v3068 = vunpack.c.l.b16 %v1353
    %v3069 = vunpack.c.h.b16 %v1353
    %v3070 = vunpack.c.l.b16 %v1354
    %v3071 = vunpack.c.l.b16 %v1355
    %v3072 = vunpack.c.h.b16 %v1355
    %v3073 = vunpack.c.l.b16 %v1356
    %v3074 = vunpack.c.h.b16 %v1356
    %v3075 = vunpack.c.l.b16 %v1357
    %v3076 = vunpack.c.h.b16 %v1357
    %v3077 = vunpack.c.l.b16 %v1358
    %v3078 = vunpack.c.l.b16 %v1359
    %v3079 = vunpack.c.h.b16 %v1359
    %v3080 = vunpack.c.l.b16 %v1360
    %v3081 = vunpack.c.h.b16 %v1360
    %v3082 = vunpack.c.l.b16 %v1361
    %v3083 = vunpack.c.h.b16 %v1361
    %v3084 = vunpack.c.l.b16 %v1362
    %v3085 = vunpack.c.l.b16 %v1363
    %v3086 = vunpack.c.h.b16 %v1363
    %v3087 = vunpack.c.l.b16 %v1364
    %v3088 = vunpack.c.h.b16 %v1364
    %v3089 = vunpack.c.l.b16 %v1365
    %v3090 = vunpack.c.h.b16 %v1365
    %v3091 = vunpack.c.l.b16 %v1366
    %v3092 = vunpack.c.l.b16 %v1367
    %v3093 = vunpack.c.h.b16 %v1367
    %v3094 = vunpack.c.l.b16 %v1368
    %v3095 = vunpack.c.h.b16 %v1368
    %v3096 = vunpack.c.l.b16 %v1369
    %v3097 = vunpack.c.h.b16 %v1369
    %v3098 = vunpack.c.l.b16 %v1370
    %v3099 = vunpack.c.l.b16 %v1371
    %v3100 = vunpack.c.h.b16 %v1371
    %v3101 = vunpack.c.l.b16 %v1372
    %v3102 = vunpack.c.h.b16 %v1372
    %v3103 = vunpack.c.l.b16 %v1373
    %v3104 = vunpack.c.h.b16 %v1373
    %v3105 = vunpack.c.l.b16 %v1374
    %v3106 = vunpack.c.l.b16 %v1375
    %v3107 = vunpack.c.h.b16 %v1375
    %v3108 = vunpack.c.l.b16 %v1376
    %v3109 = vunpack.c.h.b16 %v1376
    %v3110 = vunpack.c.l.b16 %v1377
    %v3111 = vunpack.c.h.b16 %v1377
    %v3112 = vunpack.c.l.b16 %v1378
    %v3113 = vunpack.c.l.b16 %v1379
    %v3114 = vunpack.c.h.b16 %v1379
    %v3115 = vunpack.c.l.b16 %v1380
    %v3116 = vunpack.c.h.b16 %v1380
    %v3117 = vunpack.c.l.b16 %v1381
    %v3118 = vunpack.c.h.b16 %v1381
    %v3119 = vunpack.c.l.b16 %v1382
    %v3120 = vunpack.c.l.b16 %v1383
    %v3121 = vunpack.c.h.b16 %v1383
    %v3122 = vunpack.c.l.b16 %v1384
    %v3123 = vunpack.c.h.b16 %v1384
    %v3124 = vunpack.c.l.b16 %v1385
    %v3125 = vunpack.c.h.b16 %v1385
    %v3126 = vunpack.c.l.b16 %v1386
    %v3127 = vunpack.c.l.b16 %v1387
    %v3128 = vunpack.c.h.b16 %v1387
    %v3129 = vunpack.c.l.b16 %v1388
    %v3130 = vunpack.c.h.b16 %v1388
    %v3131 = vunpack.c.l.b16 %v1389
    %v3132 = vunpack.c.h.b16 %v1389
    %v3133 = vunpack.c.l.b16 %v1390
    %v3134 = vunpack.c.l.b16 %v1391
    %v3135 = vunpack.c.h.b16 %v1391
    %v3136 = vunpack.c.l.b16 %v1392
    %v3137 = vunpack.c.h.b16 %v1392
    %v3138 = vunpack.c.l.b16 %v1393
    %v3139 = vunpack.c.h.b16 %v1393
    %v3140 = vunpack.c.l.b16 %v1394
    %v3141 = vunpack.c.l.b16 %v1395
    %v3142 = vunpack.c.h.b16 %v1395
    %v3143 = vunpack.c.l.b16 %v1396
    %v3144 = vunpack.c.h.b16 %v1396
    %v3145 = vunpack.c.l.b16 %v1397
    %v3146 = vunpack.c.h.b16 %v1397
    %v3147 = vunpack.c.l.b16 %v1398
    %v3148 = vunpack.c.l.b16 %v1399
    %v3149 = vunpack.c.h.b16 %v1399
    %v3150 = vunpack.c.l.b16 %v1400
    %v3151 = vunpack.c.h.b16 %v1400
    %v3152 = vunpack.c.l.b16 %v1401
    %v3153 = vunpack.c.h.b16 %v1401
    %v3154 = vunpack.c.l.b16 %v1402
    %v3155 = vunpack.c.l.b16 %v1403
    %v3156 = vunpack.c.h.b16 %v1403
    %v3157 = vunpack.c.l.b16 %v1404
    %v3158 = vunpack.c.h.b16 %v1404
    %v3159 = vunpack.c.l.b16 %v1405
    %v3160 = vunpack.c.h.b16 %v1405
    %v3161 = vunpack.c.l.b16 %v1406
    %v3162 = vunpack.c.l.b16 %v1407
    %v3163 = vunpack.c.h.b16 %v1407
    %v3164 = vunpack.c.l.b16 %v1408
    %v3165 = vunpack.c.h.b16 %v1408
    %v3166 = vunpack.c.l.b16 %v1409
    %v3167 = vunpack.c.h.b16 %v1409
    %v3168 = vunpack.c.l.b16 %v1410
    %v3169 = vunpack.c.l.b16 %v1411
    %v3170 = vunpack.c.h.b16 %v1411
    %v3171 = vunpack.c.l.b16 %v1412
    %v3172 = vunpack.c.h.b16 %v1412
    %v3173 = vunpack.c.l.b16 %v1413
    %v3174 = vunpack.c.h.b16 %v1413
    %v3175 = vunpack.c.l.b16 %v1414
    %v3176 = vunpack.c.l.b16 %v1415
    %v3177 = vunpack.c.h.b16 %v1415
    %v3178 = vunpack.c.l.b16 %v1416
    %v3179 = vunpack.c.h.b16 %v1416
    %v3180 = vunpack.c.l.b16 %v1417
    %v3181 = vunpack.c.h.b16 %v1417
    %v3182 = vunpack.c.l.b16 %v1418
    %v3183 = vunpack.c.l.b16 %v1419
    %v3184 = vunpack.c.h.b16 %v1419
    %v3185 = vunpack.c.l.b16 %v1420
    %v3186 = vunpack.c.h.b16 %v1420
    %v3187 = vunpack.c.l.b16 %v1421
    %v3188 = vunpack.c.h.b16 %v1421
    %v3189 = vunpack.c.l.b16 %v1422
    %v3190 = vunpack.c.l.b16 %v1423
    %v3191 = vunpack.c.h.b16 %v1423
    %v3192 = vunpack.c.l.b16 %v1424
    %v3193 = vunpack.c.h.b16 %v1424
    %v3194 = vunpack.c.l.b16 %v1425
    %v3195 = vunpack.c.h.b16 %v1425
    %v3196 = vunpack.c.l.b16 %v1426
    %v3197 = vunpack.c.l.b16 %v1427
    %v3198 = vunpack.c.h.b16 %v1427
    %v3199 = vunpack.c.l.b16 %v1428
    %v3200 = vunpack.c.h.b16 %v1428
    %v3201 = vunpack.c.l.b16 %v1429
    %v3202 = vunpack.c.h.b16 %v1429
    %v3203 = vunpack.c.l.b16 %v1430
    %v3204 = vunpack.c.l.b16 %v1431
    %v3205 = vunpack.c.h.b16 %v1431
    %v3206 = vunpack.c.l.b16 %v1432
    %v3207 = vunpack.c.h.b16 %v1432
    %v3208 = vunpack.c.l.b16 %v1433
    %v3209 = vunpack.c.h.b16 %v1433
    %v3210 = vunpack.c.l.b16 %v1434
    %v3211 = vunpack.c.l.b16 %v1435
    %v3212 = vunpack.c.h.b16 %v1435
    %v3213 = vunpack.c.l.b16 %v1436
    %v3214 = vunpack.c.h.b16 %v1436
    %v3215 = vunpack.c.l.b16 %v1437
    %v3216 = vunpack.c.h.b16 %v1437
    %v3217 = vunpack.c.l.b16 %v1438
    %v3218 = vunpack.c.l.b16 %v1439
    %v3219 = vunpack.c.h.b16 %v1439
    %v3220 = vunpack.c.l.b16 %v1440
    %v3221 = vunpack.c.h.b16 %v1440
    %v3222 = vunpack.c.l.b16 %v1441
    %v3223 = vunpack.c.h.b16 %v1441
    %v3224 = vunpack.c.l.b16 %v1442
    %v3225 = vunpack.c.l.b16 %v1443
    %v3226 = vunpack.c.h.b16 %v1443
    %v3227 = vunpack.c.l.b16 %v1444
    %v3228 = vunpack.c.h.b16 %v1444
    %v3229 = vunpack.c.l.b16 %v1445
    %v3230 = vunpack.c.h.b16 %v1445
    %v3231 = vunpack.c.l.b16 %v1446
    %v3232 = vunpack.c.l.b16 %v1447
    %v3233 = vunpack.c.h.b16 %v1447
    %v3234 = vunpack.c.l.b16 %v1448
    %v3235 = vunpack.c.h.b16 %v1448
    %v3236 = vunpack.c.l.b16 %v1449
    %v3237 = vunpack.c.h.b16 %v1449
    %v3238 = vunpack.c.l.b16 %v1450
    %v3239 = vunpack.c.l.b16 %v1451
    %v3240 = vunpack.c.h.b16 %v1451
    %v3241 = vunpack.c.l.b16 %v1452
    %v3242 = vunpack.c.h.b16 %v1452
    %v3243 = vunpack.c.l.b16 %v1453
    %v3244 = vunpack.c.h.b16 %v1453
    %v3245 = vunpack.c.l.b16 %v1454
    %v3246 = vunpack.c.l.b16 %v1455
    %v3247 = vunpack.c.h.b16 %v1455
    %v3248 = vunpack.c.l.b16 %v1456
    %v3249 = vunpack.c.h.b16 %v1456
    %v3250 = vunpack.c.l.b16 %v1457
    %v3251 = vunpack.c.h.b16 %v1457
    %v3252 = vunpack.c.l.b16 %v1458
    %v3253 = vunpack.c.l.b16 %v1459
    %v3254 = vunpack.c.h.b16 %v1459
    %v3255 = vunpack.c.l.b16 %v1460
    %v3256 = vunpack.c.h.b16 %v1460
    %v3257 = vunpack.c.l.b16 %v1461
    %v3258 = vunpack.c.h.b16 %v1461
    %v3259 = vunpack.c.l.b16 %v1462
    %v3260 = vpack.c.b16 %v2147, %v2140
    %v3261 = vpack.c.b16 %v2148, %v2141
    %v3262 = vpack.c.b16 %v2149, %v2142
    %v3263 = vpack.c.b16 %v2150, %v2143
    %v3264 = vpack.c.b16 %v2151, %v2144
    %v3265 = vpack.c.b16 %v2152, %v2145
    %v3266 = vpack.c.b16 %v2153, %v2146
    %v3267 = vpack.c.b16 %v2161, %v2154
    %v3268 = vpack.c.b16 %v2162, %v2155
    %v3269 = vpack.c.b16 %v2163, %v2156
    %v3270 = vpack.c.b16 %v2164, %v2157
    %v3271 = vpack.c.b16 %v2165, %v2158
    %v3272 = vpack.c.b16 %v2166, %v2159
    %v3273 = vpack.c.b16 %v2167, %v2160
    %v3274 = vpack.c.b16 %v2175, %v2168
    %v3275 = vpack.c.b16 %v2176, %v2169
    %v3276 = vpack.c.b16 %v2177, %v2170
    %v3277 = vpack.c.b16 %v2178, %v2171
    %v3278 = vpack.c.b16 %v2179, %v2172
    %v3279 = vpack.c.b16 %v2180, %v2173
    %v3280 = vpack.c.b16 %v2181, %v2174
    %v3281 = vpack.c.b16 %v2189, %v2182
    %v3282 = vpack.c.b16 %v2190, %v2183
    %v3283 = vpack.c.b16 %v2191, %v2184
    %v3284 = vpack.c.b16 %v2192, %v2185
    %v3285 = vpack.c.b16 %v2193, %v2186
    %v3286 = vpack.c.b16 %v2194, %v2187
    %v3287 = vpack.c.b16 %v2195, %v2188
    %v3288 = vpack.c.b16 %v2203, %v2196
    %v3289 = vpack.c.b16 %v2204, %v2197
    %v3290 = vpack.c.b16 %v2205, %v2198
    %v3291 = vpack.c.b16 %v2206, %v2199
    %v3292 = vpack.c.b16 %v2207, %v2200
    %v3293 = vpack.c.b16 %v2208, %v2201
    %v3294 = vpack.c.b16 %v2209, %v2202
    %v3295 = vpack.c.b16 %v2217, %v2210
    %v3296 = vpack.c.b16 %v2218, %v2211
    %v3297 = vpack.c.b16 %v2219, %v2212
    %v3298 = vpack.c.b16 %v2220, %v2213
    %v3299 = vpack.c.b16 %v2221, %v2214
    %v3300 = vpack.c.b16 %v2222, %v2215
    %v3301 = vpack.c.b16 %v2223, %v2216
    %v3302 = vpack.c.b16 %v2231, %v2224
    %v3303 = vpack.c.b16 %v2232, %v2225
    %v3304 = vpack.c.b16 %v2233, %v2226
    %v3305 = vpack.c.b16 %v2234, %v2227
    %v3306 = vpack.c.b16 %v2235, %v2228
    %v3307 = vpack.c.b16 %v2236, %v2229
    %v3308 = vpack.c.b16 %v2237, %v2230
    %v3309 = vpack.c.b16 %v2245, %v2238
    %v3310 = vpack.c.b16 %v2246, %v2239
    %v3311 = vpack.c.b16 %v2247, %v2240
    %v3312 = vpack.c.b16 %v2248, %v2241
    %v3313 = vpack.c.b16 %v2249, %v2242
    %v3314 = vpack.c.b16 %v2250, %v2243
    %v3315 = vpack.c.b16 %v2251, %v2244
    %v3316 = vpack.c.b16 %v2259, %v2252
    %v3317 = vpack.c.b16 %v2260, %v2253
    %v3318 = vpack.c.b16 %v2261, %v2254
    %v3319 = vpack.c.b16 %v2262, %v2255
    %v3320 = vpack.c.b16 %v2263, %v2256
    %v3321 = vpack.c.b16 %v2264, %v2257
    %v3322 = vpack.c.b16 %v2265, %v2258
    %v3323 = vpack.c.b16 %v2273, %v2266
    %v3324 = vpack.c.b16 %v2274, %v2267
    %v3325 = vpack.c.b16 %v2275, %v2268
    %v3326 = vpack.c.b16 %v2276, %v2269
    %v3327 = vpack.c.b16 %v2277, %v2270
    %v3328 = vpack.c.b16 %v2278, %v2271
    %v3329 = vpack.c.b16 %v2279, %v2272
    %v3330 = vpack.c.b16 %v2287, %v2280
    %v3331 = vpack.c.b16 %v2288, %v2281
    %v3332 = vpack.c.b16 %v2289, %v2282
    %v3333 = vpack.c.b16 %v2290, %v2283
    %v3334 = vpack.c.b16 %v2291, %v2284
    %v3335 = vpack.c.b16 %v2292, %v2285
    %v3336 = vpack.c.b16 %v2293, %v2286
    %v3337 = vpack.c.b16 %v2301, %v2294
    %v3338 = vpack.c.b16 %v2302, %v2295
    %v3339 = vpack.c.b16 %v2303, %v2296
    %v3340 = vpack.c.b16 %v2304, %v2297
    %v3341 = vpack.c.b16 %v2305, %v2298
    %v3342 = vpack.c.b16 %v2306, %v2299
    %v3343 = vpack.c.b16 %v2307, %v2300
    %v3344 = vpack.c.b16 %v2315, %v2308
    %v3345 = vpack.c.b16 %v2316, %v2309
    %v3346 = vpack.c.b16 %v2317, %v2310
    %v3347 = vpack.c.b16 %v2318, %v2311
    %v3348 = vpack.c.b16 %v2319, %v2312
    %v3349 = vpack.c.b16 %v2320, %v2313
    %v3350 = vpack.c.b16 %v2321, %v2314
    %v3351 = vpack.c.b16 %v2329, %v2322
    %v3352 = vpack.c.b16 %v2330, %v2323
    %v3353 = vpack.c.b16 %v2331, %v2324
    %v3354 = vpack.c.b16 %v2332, %v2325
    %v3355 = vpack.c.b16 %v2333, %v2326
    %v3356 = vpack.c.b16 %v2334, %v2327
    %v3357 = vpack.c.b16 %v2335, %v2328
    %v3358 = vpack.c.b16 %v2343, %v2336
    %v3359 = vpack.c.b16 %v2344, %v2337
    %v3360 = vpack.c.b16 %v2345, %v2338
    %v3361 = vpack.c.b16 %v2346, %v2339
    %v3362 = vpack.c.b16 %v2347, %v2340
    %v3363 = vpack.c.b16 %v2348, %v2341
    %v3364 = vpack.c.b16 %v2349, %v2342
    %v3365 = vpack.c.b16 %v2357, %v2350
    %v3366 = vpack.c.b16 %v2358, %v2351
    %v3367 = vpack.c.b16 %v2359, %v2352
    %v3368 = vpack.c.b16 %v2360, %v2353
    %v3369 = vpack.c.b16 %v2361, %v2354
    %v3370 = vpack.c.b16 %v2362, %v2355
    %v3371 = vpack.c.b16 %v2363, %v2356
    %v3372 = vpack.c.b16 %v2371, %v2364
    %v3373 = vpack.c.b16 %v2372, %v2365
    %v3374 = vpack.c.b16 %v2373, %v2366
    %v3375 = vpack.c.b16 %v2374, %v2367
    %v3376 = vpack.c.b16 %v2375, %v2368
    %v3377 = vpack.c.b16 %v2376, %v2369
    %v3378 = vpack.c.b16 %v2377, %v2370
    %v3379 = vpack.c.b16 %v2385, %v2378
    %v3380 = vpack.c.b16 %v2386, %v2379
    %v3381 = vpack.c.b16 %v2387, %v2380
    %v3382 = vpack.c.b16 %v2388, %v2381
    %v3383 = vpack.c.b16 %v2389, %v2382
    %v3384 = vpack.c.b16 %v2390, %v2383
    %v3385 = vpack.c.b16 %v2391, %v2384
    %v3386 = vpack.c.b16 %v2399, %v2392
    %v3387 = vpack.c.b16 %v2400, %v2393
    %v3388 = vpack.c.b16 %v2401, %v2394
    %v3389 = vpack.c.b16 %v2402, %v2395
    %v3390 = vpack.c.b16 %v2403, %v2396
    %v3391 = vpack.c.b16 %v2404, %v2397
    %v3392 = vpack.c.b16 %v2405, %v2398
    %v3393 = vpack.c.b16 %v2413, %v2406
    %v3394 = vpack.c.b16 %v2414, %v2407
    %v3395 = vpack.c.b16 %v2415, %v2408
    %v3396 = vpack.c.b16 %v2416, %v2409
    %v3397 = vpack.c.b16 %v2417, %v2410
    %v3398 = vpack.c.b16 %v2418, %v2411
    %v3399 = vpack.c.b16 %v2419, %v2412
    %v3400 = vpack.c.b16 %v2427, %v2420
    %v3401 = vpack.c.b16 %v2428, %v2421
    %v3402 = vpack.c.b16 %v2429, %v2422
    %v3403 = vpack.c.b16 %v2430, %v2423
    %v3404 = vpack.c.b16 %v2431, %v2424
    %v3405 = vpack.c.b16 %v2432, %v2425
    %v3406 = vpack.c.b16 %v2433, %v2426
    %v3407 = vpack.c.b16 %v2441, %v2434
    %v3408 = vpack.c.b16 %v2442, %v2435
    %v3409 = vpack.c.b16 %v2443, %v2436
    %v3410 = vpack.c.b16 %v2444, %v2437
    %v3411 = vpack.c.b16 %v2445, %v2438
    %v3412 = vpack.c.b16 %v2446, %v2439
    %v3413 = vpack.c.b16 %v2447, %v2440
    %v3414 = vpack.c.b16 %v2455, %v2448
    %v3415 = vpack.c.b16 %v2456, %v2449
    %v3416 = vpack.c.b16 %v2457, %v2450
    %v3417 = vpack.c.b16 %v2458, %v2451
    %v3418 = vpack.c.b16 %v2459, %v2452
    %v3419 = vpack.c.b16 %v2460, %v2453
    %v3420 = vpack.c.b16 %v2461, %v2454
    %v3421 = vpack.c.b16 %v2469, %v2462
    %v3422 = vpack.c.b16 %v2470, %v2463
    %v3423 = vpack.c.b16 %v2471, %v2464
    %v3424 = vpack.c.b16 %v2472, %v2465
    %v3425 = vpack.c.b16 %v2473, %v2466
    %v3426 = vpack.c.b16 %v2474, %v2467
    %v3427 = vpack.c.b16 %v2475, %v2468
    %v3428 = vpack.c.b16 %v2483, %v2476
    %v3429 = vpack.c.b16 %v2484, %v2477
    %v3430 = vpack.c.b16 %v2485, %v2478
    %v3431 = vpack.c.b16 %v2486, %v2479
    %v3432 = vpack.c.b16 %v2487, %v2480
    %v3433 = vpack.c.b16 %v2488, %v2481
    %v3434 = vpack.c.b16 %v2489, %v2482
    %v3435 = vpack.c.b16 %v2497, %v2490
    %v3436 = vpack.c.b16 %v2498, %v2491
    %v3437 = vpack.c.b16 %v2499, %v2492
    %v3438 = vpack.c.b16 %v2500, %v2493
    %v3439 = vpack.c.b16 %v2501, %v2494
    %v3440 = vpack.c.b16 %v2502, %v2495
    %v3441 = vpack.c.b16 %v2503, %v2496
    %v3442 = vpack.c.b16 %v2511, %v2504
    %v3443 = vpack.c.b16 %v2512, %v2505
    %v3444 = vpack.c.b16 %v2513, %v2506
    %v3445 = vpack.c.b16 %v2514, %v2507
    %v3446 = vpack.c.b16 %v2515, %v2508
    %v3447 = vpack.c.b16 %v2516, %v2509
    %v3448 = vpack.c.b16 %v2517, %v2510
    %v3449 = vpack.c.b16 %v2525, %v2518
    %v3450 = vpack.c.b16 %v2526, %v2519
    %v3451 = vpack.c.b16 %v2527, %v2520
    %v3452 = vpack.c.b16 %v2528, %v2521
    %v3453 = vpack.c.b16 %v2529, %v2522
    %v3454 = vpack.c.b16 %v2530, %v2523
    %v3455 = vpack.c.b16 %v2531, %v2524
    %v3456 = vpack.c.b16 %v2539, %v2532
    %v3457 = vpack.c.b16 %v2540, %v2533
    %v3458 = vpack.c.b16 %v2541, %v2534
    %v3459 = vpack.c.b16 %v2542, %v2535
    %v3460 = vpack.c.b16 %v2543, %v2536
    %v3461 = vpack.c.b16 %v2544, %v2537
    %v3462 = vpack.c.b16 %v2545, %v2538
    %v3463 = vpack.c.b16 %v2553, %v2546
    %v3464 = vpack.c.b16 %v2554, %v2547
    %v3465 = vpack.c.b16 %v2555, %v2548
    %v3466 = vpack.c.b16 %v2556, %v2549
    %v3467 = vpack.c.b16 %v2557, %v2550
    %v3468 = vpack.c.b16 %v2558, %v2551
    %v3469 = vpack.c.b16 %v2559, %v2552
    %v3470 = vpack.c.b16 %v2567, %v2560
    %v3471 = vpack.c.b16 %v2568, %v2561
    %v3472 = vpack.c.b16 %v2569, %v2562
    %v3473 = vpack.c.b16 %v2570, %v2563
    %v3474 = vpack.c.b16 %v2571, %v2564
    %v3475 = vpack.c.b16 %v2572, %v2565
    %v3476 = vpack.c.b16 %v2573, %v2566
    %v3477 = vpack.c.b16 %v2581, %v2574
    %v3478 = vpack.c.b16 %v2582, %v2575
    %v3479 = vpack.c.b16 %v2583, %v2576
    %v3480 = vpack.c.b16 %v2584, %v2577
    %v3481 = vpack.c.b16 %v2585, %v2578
    %v3482 = vpack.c.b16 %v2586, %v2579
    %v3483 = vpack.c.b16 %v2587, %v2580
    %v3484 = vpack.c.b16 %v2595, %v2588
    %v3485 = vpack.c.b16 %v2596, %v2589
    %v3486 = vpack.c.b16 %v2597, %v2590
    %v3487 = vpack.c.b16 %v2598, %v2591
    %v3488 = vpack.c.b16 %v2599, %v2592
    %v3489 = vpack.c.b16 %v2600, %v2593
    %v3490 = vpack.c.b16 %v2601, %v2594
    %v3491 = vpack.c.b16 %v2609, %v2602
    %v3492 = vpack.c.b16 %v2610, %v2603
    %v3493 = vpack.c.b16 %v2611, %v2604
    %v3494 = vpack.c.b16 %v2612, %v2605
    %v3495 = vpack.c.b16 %v2613, %v2606
    %v3496 = vpack.c.b16 %v2614, %v2607
    %v3497 = vpack.c.b16 %v2615, %v2608
    %v3498 = vpack.c.b16 %v2623, %v2616
    %v3499 = vpack.c.b16 %v2624, %v2617
    %v3500 = vpack.c.b16 %v2625, %v2618
    %v3501 = vpack.c.b16 %v2626, %v2619
    %v3502 = vpack.c.b16 %v2627, %v2620
    %v3503 = vpack.c.b16 %v2628, %v2621
    %v3504 = vpack.c.b16 %v2629, %v2622
    %v3505 = vpack.c.b16 %v2637, %v2630
    %v3506 = vpack.c.b16 %v2638, %v2631
    %v3507 = vpack.c.b16 %v2639, %v2632
    %v3508 = vpack.c.b16 %v2640, %v2633
    %v3509 = vpack.c.b16 %v2641, %v2634
    %v3510 = vpack.c.b16 %v2642, %v2635
    %v3511 = vpack.c.b16 %v2643, %v2636
    %v3512 = vpack.c.b16 %v2651, %v2644
    %v3513 = vpack.c.b16 %v2652, %v2645
    %v3514 = vpack.c.b16 %v2653, %v2646
    %v3515 = vpack.c.b16 %v2654, %v2647
    %v3516 = vpack.c.b16 %v2655, %v2648
    %v3517 = vpack.c.b16 %v2656, %v2649
    %v3518 = vpack.c.b16 %v2657, %v2650
    %v3519 = vpack.c.b16 %v2665, %v2658
    %v3520 = vpack.c.b16 %v2666, %v2659
    %v3521 = vpack.c.b16 %v2667, %v2660
    %v3522 = vpack.c.b16 %v2668, %v2661
    %v3523 = vpack.c.b16 %v2669, %v2662
    %v3524 = vpack.c.b16 %v2670, %v2663
    %v3525 = vpack.c.b16 %v2671, %v2664
    %v3526 = vpack.c.b16 %v2679, %v2672
    %v3527 = vpack.c.b16 %v2680, %v2673
    %v3528 = vpack.c.b16 %v2681, %v2674
    %v3529 = vpack.c.b16 %v2682, %v2675
    %v3530 = vpack.c.b16 %v2683, %v2676
    %v3531 = vpack.c.b16 %v2684, %v2677
    %v3532 = vpack.c.b16 %v2685, %v2678
    %v3533 = vpack.c.b16 %v2693, %v2686
    %v3534 = vpack.c.b16 %v2694, %v2687
    %v3535 = vpack.c.b16 %v2695, %v2688
    %v3536 = vpack.c.b16 %v2696, %v2689
    %v3537 = vpack.c.b16 %v2697, %v2690
    %v3538 = vpack.c.b16 %v2698, %v2691
    %v3539 = vpack.c.b16 %v2699, %v2692
    %v3540 = vpack.c.b16 %v2707, %v2700
    %v3541 = vpack.c.b16 %v2708, %v2701
    %v3542 = vpack.c.b16 %v2709, %v2702
    %v3543 = vpack.c.b16 %v2710, %v2703
    %v3544 = vpack.c.b16 %v2711, %v2704
    %v3545 = vpack.c.b16 %v2712, %v2705
    %v3546 = vpack.c.b16 %v2713, %v2706
    %v3547 = vpack.c.b16 %v2721, %v2714
    %v3548 = vpack.c.b16 %v2722, %v2715
    %v3549 = vpack.c.b16 %v2723, %v2716
    %v3550 = vpack.c.b16 %v2724, %v2717
    %v3551 = vpack.c.b16 %v2725, %v2718
    %v3552 = vpack.c.b16 %v2726, %v2719
    %v3553 = vpack.c.b16 %v2727, %v2720
    %v3554 = vpack.c.b16 %v2735, %v2728
    %v3555 = vpack.c.b16 %v2736, %v2729
    %v3556 = vpack.c.b16 %v2737, %v2730
    %v3557 = vpack.c.b16 %v2738, %v2731
    %v3558 = vpack.c.b16 %v2739, %v2732
    %v3559 = vpack.c.b16 %v2740, %v2733
    %v3560 = vpack.c.b16 %v2741, %v2734
    %v3561 = vpack.c.b16 %v2749, %v2742
    %v3562 = vpack.c.b16 %v2750, %v2743
    %v3563 = vpack.c.b16 %v2751, %v2744
    %v3564 = vpack.c.b16 %v2752, %v2745
    %v3565 = vpack.c.b16 %v2753, %v2746
    %v3566 = vpack.c.b16 %v2754, %v2747
    %v3567 = vpack.c.b16 %v2755, %v2748
    %v3568 = vpack.c.b16 %v2763, %v2756
    %v3569 = vpack.c.b16 %v2764, %v2757
    %v3570 = vpack.c.b16 %v2765, %v2758
    %v3571 = vpack.c.b16 %v2766, %v2759
    %v3572 = vpack.c.b16 %v2767, %v2760
    %v3573 = vpack.c.b16 %v2768, %v2761
    %v3574 = vpack.c.b16 %v2769, %v2762
    %v3575 = vpack.c.b16 %v2777, %v2770
    %v3576 = vpack.c.b16 %v2778, %v2771
    %v3577 = vpack.c.b16 %v2779, %v2772
    %v3578 = vpack.c.b16 %v2780, %v2773
    %v3579 = vpack.c.b16 %v2781, %v2774
    %v3580 = vpack.c.b16 %v2782, %v2775
    %v3581 = vpack.c.b16 %v2783, %v2776
    %v3582 = vpack.c.b16 %v2791, %v2784
    %v3583 = vpack.c.b16 %v2792, %v2785
    %v3584 = vpack.c.b16 %v2793, %v2786
    %v3585 = vpack.c.b16 %v2794, %v2787
    %v3586 = vpack.c.b16 %v2795, %v2788
    %v3587 = vpack.c.b16 %v2796, %v2789
    %v3588 = vpack.c.b16 %v2797, %v2790
    %v3589 = vpack.c.b16 %v2805, %v2798
    %v3590 = vpack.c.b16 %v2806, %v2799
    %v3591 = vpack.c.b16 %v2807, %v2800
    %v3592 = vpack.c.b16 %v2808, %v2801
    %v3593 = vpack.c.b16 %v2809, %v2802
    %v3594 = vpack.c.b16 %v2810, %v2803
    %v3595 = vpack.c.b16 %v2811, %v2804
    %v3596 = vpack.c.b16 %v2819, %v2812
    %v3597 = vpack.c.b16 %v2820, %v2813
    %v3598 = vpack.c.b16 %v2821, %v2814
    %v3599 = vpack.c.b16 %v2822, %v2815
    %v3600 = vpack.c.b16 %v2823, %v2816
    %v3601 = vpack.c.b16 %v2824, %v2817
    %v3602 = vpack.c.b16 %v2825, %v2818
    %v3603 = vpack.c.b16 %v2833, %v2826
    %v3604 = vpack.c.b16 %v2834, %v2827
    %v3605 = vpack.c.b16 %v2835, %v2828
    %v3606 = vpack.c.b16 %v2836, %v2829
    %v3607 = vpack.c.b16 %v2837, %v2830
    %v3608 = vpack.c.b16 %v2838, %v2831
    %v3609 = vpack.c.b16 %v2839, %v2832
    %v3610 = vpack.c.b16 %v2847, %v2840
    %v3611 = vpack.c.b16 %v2848, %v2841
    %v3612 = vpack.c.b16 %v2849, %v2842
    %v3613 = vpack.c.b16 %v2850, %v2843
    %v3614 = vpack.c.b16 %v2851, %v2844
    %v3615 = vpack.c.b16 %v2852, %v2845
    %v3616 = vpack.c.b16 %v2853, %v2846
    %v3617 = vpack.c.b16 %v2861, %v2854
    %v3618 = vpack.c.b16 %v2862, %v2855
    %v3619 = vpack.c.b16 %v2863, %v2856
    %v3620 = vpack.c.b16 %v2864, %v2857
    %v3621 = vpack.c.b16 %v2865, %v2858
    %v3622 = vpack.c.b16 %v2866, %v2859
    %v3623 = vpack.c.b16 %v2867, %v2860
    %v3624 = vpack.c.b16 %v2875, %v2868
    %v3625 = vpack.c.b16 %v2876, %v2869
    %v3626 = vpack.c.b16 %v2877, %v2870
    %v3627 = vpack.c.b16 %v2878, %v2871
    %v3628 = vpack.c.b16 %v2879, %v2872
    %v3629 = vpack.c.b16 %v2880, %v2873
    %v3630 = vpack.c.b16 %v2881, %v2874
    %v3631 = vpack.c.b16 %v2889, %v2882
    %v3632 = vpack.c.b16 %v2890, %v2883
    %v3633 = vpack.c.b16 %v2891, %v2884
    %v3634 = vpack.c.b16 %v2892, %v2885
    %v3635 = vpack.c.b16 %v2893, %v2886
    %v3636 = vpack.c.b16 %v2894, %v2887
    %v3637 = vpack.c.b16 %v2895, %v2888
    %v3638 = vpack.c.b16 %v2903, %v2896
    %v3639 = vpack.c.b16 %v2904, %v2897
    %v3640 = vpack.c.b16 %v2905, %v2898
    %v3641 = vpack.c.b16 %v2906, %v2899
    %v3642 = vpack.c.b16 %v2907, %v2900
    %v3643 = vpack.c.b16 %v2908, %v2901
    %v3644 = vpack.c.b16 %v2909, %v2902
    %v3645 = vpack.c.b16 %v2917, %v2910
    %v3646 = vpack.c.b16 %v2918, %v2911
    %v3647 = vpack.c.b16 %v2919, %v2912
    %v3648 = vpack.c.b16 %v2920, %v2913
    %v3649 = vpack.c.b16 %v2921, %v2914
    %v3650 = vpack.c.b16 %v2922, %v2915
    %v3651 = vpack.c.b16 %v2923, %v2916
    %v3652 = vpack.c.b16 %v2931, %v2924
    %v3653 = vpack.c.b16 %v2932, %v2925
    %v3654 = vpack.c.b16 %v2933, %v2926
    %v3655 = vpack.c.b16 %v2934, %v2927
    %v3656 = vpack.c.b16 %v2935, %v2928
    %v3657 = vpack.c.b16 %v2936, %v2929
    %v3658 = vpack.c.b16 %v2937, %v2930
    %v3659 = vpack.c.b16 %v2945, %v2938
    %v3660 = vpack.c.b16 %v2946, %v2939
    %v3661 = vpack.c.b16 %v2947, %v2940
    %v3662 = vpack.c.b16 %v2948, %v2941
    %v3663 = vpack.c.b16 %v2949, %v2942
    %v3664 = vpack.c.b16 %v2950, %v2943
    %v3665 = vpack.c.b16 %v2951, %v2944
    %v3666 = vpack.c.b16 %v2959, %v2952
    %v3667 = vpack.c.b16 %v2960, %v2953
    %v3668 = vpack.c.b16 %v2961, %v2954
    %v3669 = vpack.c.b16 %v2962, %v2955
    %v3670 = vpack.c.b16 %v2963, %v2956
    %v3671 = vpack.c.b16 %v2964, %v2957
    %v3672 = vpack.c.b16 %v2965, %v2958
    %v3673 = vpack.c.b16 %v2973, %v2966
    %v3674 = vpack.c.b16 %v2974, %v2967
    %v3675 = vpack.c.b16 %v2975, %v2968
    %v3676 = vpack.c.b16 %v2976, %v2969
    %v3677 = vpack.c.b16 %v2977, %v2970
    %v3678 = vpack.c.b16 %v2978, %v2971
    %v3679 = vpack.c.b16 %v2979, %v2972
    %v3680 = vpack.c.b16 %v2987, %v2980
    %v3681 = vpack.c.b16 %v2988, %v2981
    %v3682 = vpack.c.b16 %v2989, %v2982
    %v3683 = vpack.c.b16 %v2990, %v2983
    %v3684 = vpack.c.b16 %v2991, %v2984
    %v3685 = vpack.c.b16 %v2992, %v2985
    %v3686 = vpack.c.b16 %v2993, %v2986
    %v3687 = vpack.c.b16 %v3001, %v2994
    %v3688 = vpack.c.b16 %v3002, %v2995
    %v3689 = vpack.c.b16 %v3003, %v2996
    %v3690 = vpack.c.b16 %v3004, %v2997
    %v3691 = vpack.c.b16 %v3005, %v2998
    %v3692 = vpack.c.b16 %v3006, %v2999
    %v3693 = vpack.c.b16 %v3007, %v3000
    %v3694 = vpack.c.b16 %v3015, %v3008
    %v3695 = vpack.c.b16 %v3016, %v3009
    %v3696 = vpack.c.b16 %v3017, %v3010
    %v3697 = vpack.c.b16 %v3018, %v3011
    %v3698 = vpack.c.b16 %v3019, %v3012
    %v3699 = vpack.c.b16 %v3020, %v3013
    %v3700 = vpack.c.b16 %v3021, %v3014
    %v3701 = vpack.c.b16 %v3029, %v3022
    %v3702 = vpack.c.b16 %v3030, %v3023
    %v3703 = vpack.c.b16 %v3031, %v3024
    %v3704 = vpack.c.b16 %v3032, %v3025
    %v3705 = vpack.c.b16 %v3033, %v3026
    %v3706 = vpack.c.b16 %v3034, %v3027
    %v3707 = vpack.c.b16 %v3035, %v3028
    %v3708 = vpack.c.b16 %v3043, %v3036
    %v3709 = vpack.c.b16 %v3044, %v3037
    %v3710 = vpack.c.b16 %v3045, %v3038
    %v3711 = vpack.c.b16 %v3046, %v3039
    %v3712 = vpack.c.b16 %v3047, %v3040
    %v3713 = vpack.c.b16 %v3048, %v3041
    %v3714 = vpack.c.b16 %v3049, %v3042
    %v3715 = vpack.c.b16 %v3057, %v3050
    %v3716 = vpack.c.b16 %v3058, %v3051
    %v3717 = vpack.c.b16 %v3059, %v3052
    %v3718 = vpack.c.b16 %v3060, %v3053
    %v3719 = vpack.c.b16 %v3061, %v3054
    %v3720 = vpack.c.b16 %v3062, %v3055
    %v3721 = vpack.c.b16 %v3063, %v3056
    %v3722 = vpack.c.b16 %v3071, %v3064
    %v3723 = vpack.c.b16 %v3072, %v3065
    %v3724 = vpack.c.b16 %v3073, %v3066
    %v3725 = vpack.c.b16 %v3074, %v3067
    %v3726 = vpack.c.b16 %v3075, %v3068
    %v3727 = vpack.c.b16 %v3076, %v3069
    %v3728 = vpack.c.b16 %v3077, %v3070
    %v3729 = vpack.c.b16 %v3085, %v3078
    %v3730 = vpack.c.b16 %v3086, %v3079
    %v3731 = vpack.c.b16 %v3087, %v3080
    %v3732 = vpack.c.b16 %v3088, %v3081
    %v3733 = vpack.c.b16 %v3089, %v3082
    %v3734 = vpack.c.b16 %v3090, %v3083
    %v3735 = vpack.c.b16 %v3091, %v3084
    %v3736 = vpack.c.b16 %v3099, %v3092
    %v3737 = vpack.c.b16 %v3100, %v3093
    %v3738 = vpack.c.b16 %v3101, %v3094
    %v3739 = vpack.c.b16 %v3102, %v3095
    %v3740 = vpack.c.b16 %v3103, %v3096
    %v3741 = vpack.c.b16 %v3104, %v3097
    %v3742 = vpack.c.b16 %v3105, %v3098
    %v3743 = vpack.c.b16 %v3113, %v3106
    %v3744 = vpack.c.b16 %v3114, %v3107
    %v3745 = vpack.c.b16 %v3115, %v3108
    %v3746 = vpack.c.b16 %v3116, %v3109
    %v3747 = vpack.c.b16 %v3117, %v3110
    %v3748 = vpack.c.b16 %v3118, %v3111
    %v3749 = vpack.c.b16 %v3119, %v3112
    %v3750 = vpack.c.b16 %v3127, %v3120
    %v3751 = vpack.c.b16 %v3128, %v3121
    %v3752 = vpack.c.b16 %v3129, %v3122
    %v3753 = vpack.c.b16 %v3130, %v3123
    %v3754 = vpack.c.b16 %v3131, %v3124
    %v3755 = vpack.c.b16 %v3132, %v3125
    %v3756 = vpack.c.b16 %v3133, %v3126
    %v3757 = vpack.c.b16 %v3141, %v3134
    %v3758 = vpack.c.b16 %v3142, %v3135
    %v3759 = vpack.c.b16 %v3143, %v3136
    %v3760 = vpack.c.b16 %v3144, %v3137
    %v3761 = vpack.c.b16 %v3145, %v3138
    %v3762 = vpack.c.b16 %v3146, %v3139
    %v3763 = vpack.c.b16 %v3147, %v3140
    %v3764 = vpack.c.b16 %v3155, %v3148
    %v3765 = vpack.c.b16 %v3156, %v3149
    %v3766 = vpack.c.b16 %v3157, %v3150
    %v3767 = vpack.c.b16 %v3158, %v3151
    %v3768 = vpack.c.b16 %v3159, %v3152
    %v3769 = vpack.c.b16 %v3160, %v3153
    %v3770 = vpack.c.b16 %v3161, %v3154
    %v3771 = vpack.c.b16 %v3169, %v3162
    %v3772 = vpack.c.b16 %v3170, %v3163
    %v3773 = vpack.c.b16 %v3171, %v3164
    %v3774 = vpack.c.b16 %v3172, %v3165
    %v3775 = vpack.c.b16 %v3173, %v3166
    %v3776 = vpack.c.b16 %v3174, %v3167
    %v3777 = vpack.c.b16 %v3175, %v3168
    %v3778 = vpack.c.b16 %v3183, %v3176
    %v3779 = vpack.c.b16 %v3184, %v3177
    %v3780 = vpack.c.b16 %v3185, %v3178
    %v3781 = vpack.c.b16 %v3186, %v3179
    %v3782 = vpack.c.b16 %v3187, %v3180
    %v3783 = vpack.c.b16 %v3188, %v3181
    %v3784 = vpack.c.b16 %v3189, %v3182
    %v3785 = vpack.c.b16 %v3197, %v3190
    %v3786 = vpack.c.b16 %v3198, %v3191
    %v3787 = vpack.c.b16 %v3199, %v3192
    %v3788 = vpack.c.b16 %v3200, %v3193
    %v3789 = vpack.c.b16 %v3201, %v3194
    %v3790 = vpack.c.b16 %v3202, %v3195
    %v3791 = vpack.c.b16 %v3203, %v3196
    %v3792 = vpack.c.b16 %v3211, %v3204
    %v3793 = vpack.c.b16 %v3212, %v3205
    %v3794 = vpack.c.b16 %v3213, %v3206
    %v3795 = vpack.c.b16 %v3214, %v3207
    %v3796 = vpack.c.b16 %v3215, %v3208
    %v3797 = vpack.c.b16 %v3216, %v3209
    %v3798 = vpack.c.b16 %v3217, %v3210
    %v3799 = vpack.c.b16 %v3225, %v3218
    %v3800 = vpack.c.b16 %v3226, %v3219
    %v3801 = vpack.c.b16 %v3227, %v3220
    %v3802 = vpack.c.b16 %v3228, %v3221
    %v3803 = vpack.c.b16 %v3229, %v3222
    %v3804 = vpack.c.b16 %v3230, %v3223
    %v3805 = vpack.c.b16 %v3231, %v3224
    %v3806 = vpack.c.b16 %v3239, %v3232
    %v3807 = vpack.c.b16 %v3240, %v3233
    %v3808 = vpack.c.b16 %v3241, %v3234
    %v3809 = vpack.c.b16 %v3242, %v3235
    %v3810 = vpack.c.b16 %v3243, %v3236
    %v3811 = vpack.c.b16 %v3244, %v3237
    %v3812 = vpack.c.b16 %v3245, %v3238
    %v3813 = vpack.c.b16 %v3253, %v3246
    %v3814 = vpack.c.b16 %v3254, %v3247
    %v3815 = vpack.c.b16 %v3255, %v3248
    %v3816 = vpack.c.b16 %v3256, %v3249
    %v3817 = vpack.c.b16 %v3257, %v3250
    %v3818 = vpack.c.b16 %v3258, %v3251
    %v3819 = vpack.c.b16 %v3259, %v3252
    %4380 = vmatprep.subr.bf16.mxu0 %v3310
    %4381 = vmatpush1.bf16.msra.mxu0 %v3309
    %4382 = vmatprep.subr.bf16.mxu0 %v3303
    %4383 = vmatpush1.bf16.msra.mxu0 %v3302
    %4384 = vmatprep.subr.bf16.mxu0 %v3296
    %4385 = vmatpush1.bf16.msra.mxu0 %v3295
    %4386 = vmatprep.subr.bf16.mxu0 %v3289
    %4387 = vmatpush1.bf16.msra.mxu0 %v3288
    %4388 = vmatprep.subr.bf16.mxu0 %v3282
    %4389 = vmatpush1.bf16.msra.mxu0 %v3281
    %4390 = vmatprep.subr.bf16.mxu0 %v3275
    %4391 = vmatpush1.bf16.msra.mxu0 %v3274
    %4392 = vmatprep.subr.bf16.mxu0 %v3268
    %4393 = vmatpush1.bf16.msra.mxu0 %v3267
    %4394 = vmatprep.subr.bf16.mxu0 %v3261
    %4395 = vmatpush1.bf16.msra.mxu0 %v3260
    %4396 = vmatprep.subr.bf16.mxu0 %v3366
    %4397 = vmatpush2.bf16.msra.mxu0 %v3365
    %4398 = vmatprep.subr.bf16.mxu0 %v3359
    %4399 = vmatpush2.bf16.msra.mxu0 %v3358
    %4400 = vmatprep.subr.bf16.mxu0 %v3352
    %4401 = vmatpush2.bf16.msra.mxu0 %v3351
    %4402 = vmatprep.subr.bf16.mxu0 %v3345
    %4403 = vmatpush2.bf16.msra.mxu0 %v3344
    %4404 = vmatprep.subr.bf16.mxu0 %v3338
    %4405 = vmatpush2.bf16.msra.mxu0 %v3337
    %4406 = vmatprep.subr.bf16.mxu0 %v3331
    %4407 = vmatpush2.bf16.msra.mxu0 %v3330
    %4408 = vmatprep.subr.bf16.mxu0 %v3324
    %4409 = vmatpush2.bf16.msra.mxu0 %v3323
    %4410 = vmatprep.subr.bf16.mxu0 %v3317
    %4411 = vmatpush2.bf16.msra.mxu0 %v3316
    %4412 = vmatprep.mubr.bf16.mxu0 %v814
    %4413 = vmatmul.mubr.bf16.gmra.mxu0 %v813
    %v4414 = vpop.f32.mrf.mxu0
    %v4415 = vadd.f32 %v1468, %v4414
    %v4416 = vpop.f32.mrf.mxu0
    %v4417 = vadd.f32 %v1472, %v4416
    %v4418 = vpop.f32.mrf.mxu0
    %v4419 = vpop.f32.mrf.mxu0
    %4420 = vdwg.mxu0
    %4421 = vmatprep.subr.bf16.mxu0 %v3422
    %4422 = vmatpush1.bf16.msra.mxu0 %v3421
    %4423 = vmatprep.subr.bf16.mxu0 %v3415
    %4424 = vmatpush1.bf16.msra.mxu0 %v3414
    %4425 = vmatprep.subr.bf16.mxu0 %v3408
    %4426 = vmatpush1.bf16.msra.mxu0 %v3407
    %4427 = vmatprep.subr.bf16.mxu0 %v3401
    %4428 = vmatpush1.bf16.msra.mxu0 %v3400
    %4429 = vmatprep.subr.bf16.mxu0 %v3394
    %4430 = vmatpush1.bf16.msra.mxu0 %v3393
    %4431 = vmatprep.subr.bf16.mxu0 %v3387
    %4432 = vmatpush1.bf16.msra.mxu0 %v3386
    %4433 = vmatprep.subr.bf16.mxu0 %v3380
    %4434 = vmatpush1.bf16.msra.mxu0 %v3379
    %4435 = vmatprep.subr.bf16.mxu0 %v3373
    %4436 = vmatpush1.bf16.msra.mxu0 %v3372
    %4437 = vmatprep.subr.bf16.mxu0 %v3478
    %4438 = vmatpush2.bf16.msra.mxu0 %v3477
    %4439 = vmatprep.subr.bf16.mxu0 %v3471
    %4440 = vmatpush2.bf16.msra.mxu0 %v3470
    %4441 = vmatprep.subr.bf16.mxu0 %v3464
    %4442 = vmatpush2.bf16.msra.mxu0 %v3463
    %4443 = vmatprep.subr.bf16.mxu0 %v3457
    %4444 = vmatpush2.bf16.msra.mxu0 %v3456
    %4445 = vmatprep.subr.bf16.mxu0 %v3450
    %4446 = vmatpush2.bf16.msra.mxu0 %v3449
    %4447 = vmatprep.subr.bf16.mxu0 %v3443
    %4448 = vmatpush2.bf16.msra.mxu0 %v3442
    %4449 = vmatprep.subr.bf16.mxu0 %v3436
    %4450 = vmatpush2.bf16.msra.mxu0 %v3435
    %4451 = vmatprep.subr.bf16.mxu0 %v3429
    %4452 = vmatpush2.bf16.msra.mxu0 %v3428
    %4453 = vmatprep.mubr.bf16.mxu0 %v816
    %4454 = vmatmul.mubr.bf16.gmra.mxu0 %v815
    %v4455 = vpop.f32.mrf.mxu0
    %v4456 = vadd.f32 %v4415, %v4455
    %v4457 = vpop.f32.mrf.mxu0
    %v4458 = vadd.f32 %v4417, %v4457
    %v4459 = vpop.f32.mrf.mxu0
    %v4460 = vpop.f32.mrf.mxu0
    %4461 = vdwg.mxu0
    %4462 = vmatprep.subr.bf16.mxu0 %v3534
    %4463 = vmatpush1.bf16.msra.mxu0 %v3533
    %4464 = vmatprep.subr.bf16.mxu0 %v3527
    %4465 = vmatpush1.bf16.msra.mxu0 %v3526
    %4466 = vmatprep.subr.bf16.mxu0 %v3520
    %4467 = vmatpush1.bf16.msra.mxu0 %v3519
    %4468 = vmatprep.subr.bf16.mxu0 %v3513
    %4469 = vmatpush1.bf16.msra.mxu0 %v3512
    %4470 = vmatprep.subr.bf16.mxu0 %v3506
    %4471 = vmatpush1.bf16.msra.mxu0 %v3505
    %4472 = vmatprep.subr.bf16.mxu0 %v3499
    %4473 = vmatpush1.bf16.msra.mxu0 %v3498
    %4474 = vmatprep.subr.bf16.mxu0 %v3492
    %4475 = vmatpush1.bf16.msra.mxu0 %v3491
    %4476 = vmatprep.subr.bf16.mxu0 %v3485
    %4477 = vmatpush1.bf16.msra.mxu0 %v3484
    %4478 = vmatprep.subr.bf16.mxu0 %v3590
    %4479 = vmatpush2.bf16.msra.mxu0 %v3589
    %4480 = vmatprep.subr.bf16.mxu0 %v3583
    %4481 = vmatpush2.bf16.msra.mxu0 %v3582
    %4482 = vmatprep.subr.bf16.mxu0 %v3576
    %4483 = vmatpush2.bf16.msra.mxu0 %v3575
    %4484 = vmatprep.subr.bf16.mxu0 %v3569
    %4485 = vmatpush2.bf16.msra.mxu0 %v3568
    %4486 = vmatprep.subr.bf16.mxu0 %v3562
    %4487 = vmatpush2.bf16.msra.mxu0 %v3561
    %4488 = vmatprep.subr.bf16.mxu0 %v3555
    %4489 = vmatpush2.bf16.msra.mxu0 %v3554
    %4490 = vmatprep.subr.bf16.mxu0 %v3548
    %4491 = vmatpush2.bf16.msra.mxu0 %v3547
    %4492 = vmatprep.subr.bf16.mxu0 %v3541
    %4493 = vmatpush2.bf16.msra.mxu0 %v3540
    %4494 = vmatprep.mubr.bf16.mxu0 %v818
    %4495 = vmatmul.mubr.bf16.gmra.mxu0 %v817
    %v4496 = vpop.f32.mrf.mxu0
    %v4497 = vadd.f32 %v4456, %v4496
    %v4498 = vpop.f32.mrf.mxu0
    %v4499 = vadd.f32 %v4458, %v4498
    %v4500 = vpop.f32.mrf.mxu0
    %v4501 = vpop.f32.mrf.mxu0
    %4502 = vdwg.mxu0
    %4503 = vmatprep.subr.bf16.mxu0 %v3646
    %4504 = vmatpush1.bf16.msra.mxu0 %v3645
    %4505 = vmatprep.subr.bf16.mxu0 %v3639
    %4506 = vmatpush1.bf16.msra.mxu0 %v3638
    %4507 = vmatprep.subr.bf16.mxu0 %v3632
    %4508 = vmatpush1.bf16.msra.mxu0 %v3631
    %4509 = vmatprep.subr.bf16.mxu0 %v3625
    %4510 = vmatpush1.bf16.msra.mxu0 %v3624
    %4511 = vmatprep.subr.bf16.mxu0 %v3618
    %4512 = vmatpush1.bf16.msra.mxu0 %v3617
    %4513 = vmatprep.subr.bf16.mxu0 %v3611
    %4514 = vmatpush1.bf16.msra.mxu0 %v3610
    %4515 = vmatprep.subr.bf16.mxu0 %v3604
    %4516 = vmatpush1.bf16.msra.mxu0 %v3603
    %4517 = vmatprep.subr.bf16.mxu0 %v3597
    %4518 = vmatpush1.bf16.msra.mxu0 %v3596
    %4519 = vmatprep.subr.bf16.mxu0 %v3702
    %4520 = vmatpush2.bf16.msra.mxu0 %v3701
    %4521 = vmatprep.subr.bf16.mxu0 %v3695
    %4522 = vmatpush2.bf16.msra.mxu0 %v3694
    %4523 = vmatprep.subr.bf16.mxu0 %v3688
    %4524 = vmatpush2.bf16.msra.mxu0 %v3687
    %4525 = vmatprep.subr.bf16.mxu0 %v3681
    %4526 = vmatpush2.bf16.msra.mxu0 %v3680
    %4527 = vmatprep.subr.bf16.mxu0 %v3674
    %4528 = vmatpush2.bf16.msra.mxu0 %v3673
    %4529 = vmatprep.subr.bf16.mxu0 %v3667
    %4530 = vmatpush2.bf16.msra.mxu0 %v3666
    %4531 = vmatprep.subr.bf16.mxu0 %v3660
    %4532 = vmatpush2.bf16.msra.mxu0 %v3659
    %4533 = vmatprep.subr.bf16.mxu0 %v3653
    %4534 = vmatpush2.bf16.msra.mxu0 %v3652
    %4535 = vmatprep.mubr.bf16.mxu0 %v820
    %4536 = vmatmul.mubr.bf16.gmra.mxu0 %v819
    %v4537 = vpop.f32.mrf.mxu0
    %v4538 = vadd.f32 %v4497, %v4537
    %v4539 = vpop.f32.mrf.mxu0
    %v4540 = vadd.f32 %v4499, %v4539
    %v4541 = vpop.f32.mrf.mxu0
    %v4542 = vpop.f32.mrf.mxu0
    %4543 = vdwg.mxu0
    %4544 = vmatprep.subr.bf16.mxu0 %v3758
    %4545 = vmatpush1.bf16.msra.mxu0 %v3757
    %4546 = vmatprep.subr.bf16.mxu0 %v3751
    %4547 = vmatpush1.bf16.msra.mxu0 %v3750
    %4548 = vmatprep.subr.bf16.mxu0 %v3744
    %4549 = vmatpush1.bf16.msra.mxu0 %v3743
    %4550 = vmatprep.subr.bf16.mxu0 %v3737
    %4551 = vmatpush1.bf16.msra.mxu0 %v3736
    %4552 = vmatprep.subr.bf16.mxu0 %v3730
    %4553 = vmatpush1.bf16.msra.mxu0 %v3729
    %4554 = vmatprep.subr.bf16.mxu0 %v3723
    %4555 = vmatpush1.bf16.msra.mxu0 %v3722
    %4556 = vmatprep.subr.bf16.mxu0 %v3716
    %4557 = vmatpush1.bf16.msra.mxu0 %v3715
    %4558 = vmatprep.subr.bf16.mxu0 %v3709
    %4559 = vmatpush1.bf16.msra.mxu0 %v3708
    %4560 = vmatprep.subr.bf16.mxu0 %v3814
    %4561 = vmatpush2.bf16.msra.mxu0 %v3813
    %4562 = vmatprep.subr.bf16.mxu0 %v3807
    %4563 = vmatpush2.bf16.msra.mxu0 %v3806
    %4564 = vmatprep.subr.bf16.mxu0 %v3800
    %4565 = vmatpush2.bf16.msra.mxu0 %v3799
    %4566 = vmatprep.subr.bf16.mxu0 %v3793
    %4567 = vmatpush2.bf16.msra.mxu0 %v3792
    %4568 = vmatprep.subr.bf16.mxu0 %v3786
    %4569 = vmatpush2.bf16.msra.mxu0 %v3785
    %4570 = vmatprep.subr.bf16.mxu0 %v3779
    %4571 = vmatpush2.bf16.msra.mxu0 %v3778
    %4572 = vmatprep.subr.bf16.mxu0 %v3772
    %4573 = vmatpush2.bf16.msra.mxu0 %v3771
    %4574 = vmatprep.subr.bf16.mxu0 %v3765
    %4575 = vmatpush2.bf16.msra.mxu0 %v3764
    %4576 = vmatprep.mubr.bf16.mxu0 %v822
    %4577 = vmatmul.mubr.bf16.gmra.mxu0 %v821
    %v4578 = vpop.f32.mrf.mxu0
    %v4579 = vadd.f32 %v4538, %v4578
    %v4580 = vpop.f32.mrf.mxu0
    %v4581 = vadd.f32 %v4540, %v4580
    %v4582 = vpop.f32.mrf.mxu0
    %v4583 = vpop.f32.mrf.mxu0
    %4584 = vdwg.mxu0
    %4585 = vmatprep.subr.bf16.mxu0 %v3312
    %4586 = vmatpush1.bf16.msra.mxu0 %v3311
    %4587 = vmatprep.subr.bf16.mxu0 %v3305
    %4588 = vmatpush1.bf16.msra.mxu0 %v3304
    %4589 = vmatprep.subr.bf16.mxu0 %v3298
    %4590 = vmatpush1.bf16.msra.mxu0 %v3297
    %4591 = vmatprep.subr.bf16.mxu0 %v3291
    %4592 = vmatpush1.bf16.msra.mxu0 %v3290
    %4593 = vmatprep.subr.bf16.mxu0 %v3284
    %4594 = vmatpush1.bf16.msra.mxu0 %v3283
    %4595 = vmatprep.subr.bf16.mxu0 %v3277
    %4596 = vmatpush1.bf16.msra.mxu0 %v3276
    %4597 = vmatprep.subr.bf16.mxu0 %v3270
    %4598 = vmatpush1.bf16.msra.mxu0 %v3269
    %4599 = vmatprep.subr.bf16.mxu0 %v3263
    %4600 = vmatpush1.bf16.msra.mxu0 %v3262
    %4601 = vmatprep.subr.bf16.mxu0 %v3368
    %4602 = vmatpush2.bf16.msra.mxu0 %v3367
    %4603 = vmatprep.subr.bf16.mxu0 %v3361
    %4604 = vmatpush2.bf16.msra.mxu0 %v3360
    %4605 = vmatprep.subr.bf16.mxu0 %v3354
    %4606 = vmatpush2.bf16.msra.mxu0 %v3353
    %4607 = vmatprep.subr.bf16.mxu0 %v3347
    %4608 = vmatpush2.bf16.msra.mxu0 %v3346
    %4609 = vmatprep.subr.bf16.mxu0 %v3340
    %4610 = vmatpush2.bf16.msra.mxu0 %v3339
    %4611 = vmatprep.subr.bf16.mxu0 %v3333
    %4612 = vmatpush2.bf16.msra.mxu0 %v3332
    %4613 = vmatprep.subr.bf16.mxu0 %v3326
    %4614 = vmatpush2.bf16.msra.mxu0 %v3325
    %4615 = vmatprep.subr.bf16.mxu0 %v3319
    %4616 = vmatpush2.bf16.msra.mxu0 %v3318
    %4617 = vmatprep.mubr.bf16.mxu0 %v814
    %4618 = vmatmul.mubr.bf16.gmra.mxu0 %v813
    %v4619 = vpop.f32.mrf.mxu0
    %v4620 = vadd.f32 %v1476, %v4619
    %v4621 = vpop.f32.mrf.mxu0
    %v4622 = vadd.f32 %v1480, %v4621
    %v4623 = vpop.f32.mrf.mxu0
    %v4624 = vpop.f32.mrf.mxu0
    %4625 = vdwg.mxu0
    %4626 = vmatprep.subr.bf16.mxu0 %v3424
    %4627 = vmatpush1.bf16.msra.mxu0 %v3423
    %4628 = vmatprep.subr.bf16.mxu0 %v3417
    %4629 = vmatpush1.bf16.msra.mxu0 %v3416
    %4630 = vmatprep.subr.bf16.mxu0 %v3410
    %4631 = vmatpush1.bf16.msra.mxu0 %v3409
    %4632 = vmatprep.subr.bf16.mxu0 %v3403
    %4633 = vmatpush1.bf16.msra.mxu0 %v3402
    %4634 = vmatprep.subr.bf16.mxu0 %v3396
    %4635 = vmatpush1.bf16.msra.mxu0 %v3395
    %4636 = vmatprep.subr.bf16.mxu0 %v3389
    %4637 = vmatpush1.bf16.msra.mxu0 %v3388
    %4638 = vmatprep.subr.bf16.mxu0 %v3382
    %4639 = vmatpush1.bf16.msra.mxu0 %v3381
    %4640 = vmatprep.subr.bf16.mxu0 %v3375
    %4641 = vmatpush1.bf16.msra.mxu0 %v3374
    %4642 = vmatprep.subr.bf16.mxu0 %v3480
    %4643 = vmatpush2.bf16.msra.mxu0 %v3479
    %4644 = vmatprep.subr.bf16.mxu0 %v3473
    %4645 = vmatpush2.bf16.msra.mxu0 %v3472
    %4646 = vmatprep.subr.bf16.mxu0 %v3466
    %4647 = vmatpush2.bf16.msra.mxu0 %v3465
    %4648 = vmatprep.subr.bf16.mxu0 %v3459
    %4649 = vmatpush2.bf16.msra.mxu0 %v3458
    %4650 = vmatprep.subr.bf16.mxu0 %v3452
    %4651 = vmatpush2.bf16.msra.mxu0 %v3451
    %4652 = vmatprep.subr.bf16.mxu0 %v3445
    %4653 = vmatpush2.bf16.msra.mxu0 %v3444
    %4654 = vmatprep.subr.bf16.mxu0 %v3438
    %4655 = vmatpush2.bf16.msra.mxu0 %v3437
    %4656 = vmatprep.subr.bf16.mxu0 %v3431
    %4657 = vmatpush2.bf16.msra.mxu0 %v3430
    %4658 = vmatprep.mubr.bf16.mxu0 %v816
    %4659 = vmatmul.mubr.bf16.gmra.mxu0 %v815
    %v4660 = vpop.f32.mrf.mxu0
    %v4661 = vadd.f32 %v4620, %v4660
    %v4662 = vpop.f32.mrf.mxu0
    %v4663 = vadd.f32 %v4622, %v4662
    %v4664 = vpop.f32.mrf.mxu0
    %v4665 = vpop.f32.mrf.mxu0
    %4666 = vdwg.mxu0
    %4667 = vmatprep.subr.bf16.mxu0 %v3536
    %4668 = vmatpush1.bf16.msra.mxu0 %v3535
    %4669 = vmatprep.subr.bf16.mxu0 %v3529
    %4670 = vmatpush1.bf16.msra.mxu0 %v3528
    %4671 = vmatprep.subr.bf16.mxu0 %v3522
    %4672 = vmatpush1.bf16.msra.mxu0 %v3521
    %4673 = vmatprep.subr.bf16.mxu0 %v3515
    %4674 = vmatpush1.bf16.msra.mxu0 %v3514
    %4675 = vmatprep.subr.bf16.mxu0 %v3508
    %4676 = vmatpush1.bf16.msra.mxu0 %v3507
    %4677 = vmatprep.subr.bf16.mxu0 %v3501
    %4678 = vmatpush1.bf16.msra.mxu0 %v3500
    %4679 = vmatprep.subr.bf16.mxu0 %v3494
    %4680 = vmatpush1.bf16.msra.mxu0 %v3493
    %4681 = vmatprep.subr.bf16.mxu0 %v3487
    %4682 = vmatpush1.bf16.msra.mxu0 %v3486
    %4683 = vmatprep.subr.bf16.mxu0 %v3592
    %4684 = vmatpush2.bf16.msra.mxu0 %v3591
    %4685 = vmatprep.subr.bf16.mxu0 %v3585
    %4686 = vmatpush2.bf16.msra.mxu0 %v3584
    %4687 = vmatprep.subr.bf16.mxu0 %v3578
    %4688 = vmatpush2.bf16.msra.mxu0 %v3577
    %4689 = vmatprep.subr.bf16.mxu0 %v3571
    %4690 = vmatpush2.bf16.msra.mxu0 %v3570
    %4691 = vmatprep.subr.bf16.mxu0 %v3564
    %4692 = vmatpush2.bf16.msra.mxu0 %v3563
    %4693 = vmatprep.subr.bf16.mxu0 %v3557
    %4694 = vmatpush2.bf16.msra.mxu0 %v3556
    %4695 = vmatprep.subr.bf16.mxu0 %v3550
    %4696 = vmatpush2.bf16.msra.mxu0 %v3549
    %4697 = vmatprep.subr.bf16.mxu0 %v3543
    %4698 = vmatpush2.bf16.msra.mxu0 %v3542
    %4699 = vmatprep.mubr.bf16.mxu0 %v818
    %4700 = vmatmul.mubr.bf16.gmra.mxu0 %v817
    %v4701 = vpop.f32.mrf.mxu0
    %v4702 = vadd.f32 %v4661, %v4701
    %v4703 = vpop.f32.mrf.mxu0
    %v4704 = vadd.f32 %v4663, %v4703
    %v4705 = vpop.f32.mrf.mxu0
    %v4706 = vpop.f32.mrf.mxu0
    %4707 = vdwg.mxu0
    %4708 = vmatprep.subr.bf16.mxu0 %v3648
    %4709 = vmatpush1.bf16.msra.mxu0 %v3647
    %4710 = vmatprep.subr.bf16.mxu0 %v3641
    %4711 = vmatpush1.bf16.msra.mxu0 %v3640
    %4712 = vmatprep.subr.bf16.mxu0 %v3634
    %4713 = vmatpush1.bf16.msra.mxu0 %v3633
    %4714 = vmatprep.subr.bf16.mxu0 %v3627
    %4715 = vmatpush1.bf16.msra.mxu0 %v3626
    %4716 = vmatprep.subr.bf16.mxu0 %v3620
    %4717 = vmatpush1.bf16.msra.mxu0 %v3619
    %4718 = vmatprep.subr.bf16.mxu0 %v3613
    %4719 = vmatpush1.bf16.msra.mxu0 %v3612
    %4720 = vmatprep.subr.bf16.mxu0 %v3606
    %4721 = vmatpush1.bf16.msra.mxu0 %v3605
    %4722 = vmatprep.subr.bf16.mxu0 %v3599
    %4723 = vmatpush1.bf16.msra.mxu0 %v3598
    %4724 = vmatprep.subr.bf16.mxu0 %v3704
    %4725 = vmatpush2.bf16.msra.mxu0 %v3703
    %4726 = vmatprep.subr.bf16.mxu0 %v3697
    %4727 = vmatpush2.bf16.msra.mxu0 %v3696
    %4728 = vmatprep.subr.bf16.mxu0 %v3690
    %4729 = vmatpush2.bf16.msra.mxu0 %v3689
    %4730 = vmatprep.subr.bf16.mxu0 %v3683
    %4731 = vmatpush2.bf16.msra.mxu0 %v3682
    %4732 = vmatprep.subr.bf16.mxu0 %v3676
    %4733 = vmatpush2.bf16.msra.mxu0 %v3675
    %4734 = vmatprep.subr.bf16.mxu0 %v3669
    %4735 = vmatpush2.bf16.msra.mxu0 %v3668
    %4736 = vmatprep.subr.bf16.mxu0 %v3662
    %4737 = vmatpush2.bf16.msra.mxu0 %v3661
    %4738 = vmatprep.subr.bf16.mxu0 %v3655
    %4739 = vmatpush2.bf16.msra.mxu0 %v3654
    %4740 = vmatprep.mubr.bf16.mxu0 %v820
    %4741 = vmatmul.mubr.bf16.gmra.mxu0 %v819
    %v4742 = vpop.f32.mrf.mxu0
    %v4743 = vadd.f32 %v4702, %v4742
    %v4744 = vpop.f32.mrf.mxu0
    %v4745 = vadd.f32 %v4704, %v4744
    %v4746 = vpop.f32.mrf.mxu0
    %v4747 = vpop.f32.mrf.mxu0
    %4748 = vdwg.mxu0
    %4749 = vmatprep.subr.bf16.mxu0 %v3760
    %4750 = vmatpush1.bf16.msra.mxu0 %v3759
    %4751 = vmatprep.subr.bf16.mxu0 %v3753
    %4752 = vmatpush1.bf16.msra.mxu0 %v3752
    %4753 = vmatprep.subr.bf16.mxu0 %v3746
    %4754 = vmatpush1.bf16.msra.mxu0 %v3745
    %4755 = vmatprep.subr.bf16.mxu0 %v3739
    %4756 = vmatpush1.bf16.msra.mxu0 %v3738
    %4757 = vmatprep.subr.bf16.mxu0 %v3732
    %4758 = vmatpush1.bf16.msra.mxu0 %v3731
    %4759 = vmatprep.subr.bf16.mxu0 %v3725
    %4760 = vmatpush1.bf16.msra.mxu0 %v3724
    %4761 = vmatprep.subr.bf16.mxu0 %v3718
    %4762 = vmatpush1.bf16.msra.mxu0 %v3717
    %4763 = vmatprep.subr.bf16.mxu0 %v3711
    %4764 = vmatpush1.bf16.msra.mxu0 %v3710
    %4765 = vmatprep.subr.bf16.mxu0 %v3816
    %4766 = vmatpush2.bf16.msra.mxu0 %v3815
    %4767 = vmatprep.subr.bf16.mxu0 %v3809
    %4768 = vmatpush2.bf16.msra.mxu0 %v3808
    %4769 = vmatprep.subr.bf16.mxu0 %v3802
    %4770 = vmatpush2.bf16.msra.mxu0 %v3801
    %4771 = vmatprep.subr.bf16.mxu0 %v3795
    %4772 = vmatpush2.bf16.msra.mxu0 %v3794
    %4773 = vmatprep.subr.bf16.mxu0 %v3788
    %4774 = vmatpush2.bf16.msra.mxu0 %v3787
    %4775 = vmatprep.subr.bf16.mxu0 %v3781
    %4776 = vmatpush2.bf16.msra.mxu0 %v3780
    %4777 = vmatprep.subr.bf16.mxu0 %v3774
    %4778 = vmatpush2.bf16.msra.mxu0 %v3773
    %4779 = vmatprep.subr.bf16.mxu0 %v3767
    %4780 = vmatpush2.bf16.msra.mxu0 %v3766
    %4781 = vmatprep.mubr.bf16.mxu0 %v822
    %4782 = vmatmul.mubr.bf16.gmra.mxu0 %v821
    %v4783 = vpop.f32.mrf.mxu0
    %v4784 = vadd.f32 %v4743, %v4783
    %v4785 = vpop.f32.mrf.mxu0
    %v4786 = vadd.f32 %v4745, %v4785
    %v4787 = vpop.f32.mrf.mxu0
    %v4788 = vpop.f32.mrf.mxu0
    %4789 = vdwg.mxu0
    %4790 = vmatprep.subr.bf16.mxu0 %v3314
    %4791 = vmatpush1.bf16.msra.mxu0 %v3313
    %4792 = vmatprep.subr.bf16.mxu0 %v3307
    %4793 = vmatpush1.bf16.msra.mxu0 %v3306
    %4794 = vmatprep.subr.bf16.mxu0 %v3300
    %4795 = vmatpush1.bf16.msra.mxu0 %v3299
    %4796 = vmatprep.subr.bf16.mxu0 %v3293
    %4797 = vmatpush1.bf16.msra.mxu0 %v3292
    %4798 = vmatprep.subr.bf16.mxu0 %v3286
    %4799 = vmatpush1.bf16.msra.mxu0 %v3285
    %4800 = vmatprep.subr.bf16.mxu0 %v3279
    %4801 = vmatpush1.bf16.msra.mxu0 %v3278
    %4802 = vmatprep.subr.bf16.mxu0 %v3272
    %4803 = vmatpush1.bf16.msra.mxu0 %v3271
    %4804 = vmatprep.subr.bf16.mxu0 %v3265
    %4805 = vmatpush1.bf16.msra.mxu0 %v3264
    %4806 = vmatprep.subr.bf16.mxu0 %v3370
    %4807 = vmatpush2.bf16.msra.mxu0 %v3369
    %4808 = vmatprep.subr.bf16.mxu0 %v3363
    %4809 = vmatpush2.bf16.msra.mxu0 %v3362
    %4810 = vmatprep.subr.bf16.mxu0 %v3356
    %4811 = vmatpush2.bf16.msra.mxu0 %v3355
    %4812 = vmatprep.subr.bf16.mxu0 %v3349
    %4813 = vmatpush2.bf16.msra.mxu0 %v3348
    %4814 = vmatprep.subr.bf16.mxu0 %v3342
    %4815 = vmatpush2.bf16.msra.mxu0 %v3341
    %4816 = vmatprep.subr.bf16.mxu0 %v3335
    %4817 = vmatpush2.bf16.msra.mxu0 %v3334
    %4818 = vmatprep.subr.bf16.mxu0 %v3328
    %4819 = vmatpush2.bf16.msra.mxu0 %v3327
    %4820 = vmatprep.subr.bf16.mxu0 %v3321
    %4821 = vmatpush2.bf16.msra.mxu0 %v3320
    %4822 = vmatprep.mubr.bf16.mxu0 %v814
    %4823 = vmatmul.mubr.bf16.gmra.mxu0 %v813
    %v4824 = vpop.f32.mrf.mxu0
    %v4825 = vadd.f32 %v1484, %v4824
    %v4826 = vpop.f32.mrf.mxu0
    %v4827 = vadd.f32 %v1488, %v4826
    %v4828 = vpop.f32.mrf.mxu0
    %v4829 = vpop.f32.mrf.mxu0
    %4830 = vdwg.mxu0
    %4831 = vmatprep.subr.bf16.mxu0 %v3426
    %4832 = vmatpush1.bf16.msra.mxu0 %v3425
    %4833 = vmatprep.subr.bf16.mxu0 %v3419
    %4834 = vmatpush1.bf16.msra.mxu0 %v3418
    %4835 = vmatprep.subr.bf16.mxu0 %v3412
    %4836 = vmatpush1.bf16.msra.mxu0 %v3411
    %4837 = vmatprep.subr.bf16.mxu0 %v3405
    %4838 = vmatpush1.bf16.msra.mxu0 %v3404
    %4839 = vmatprep.subr.bf16.mxu0 %v3398
    %4840 = vmatpush1.bf16.msra.mxu0 %v3397
    %4841 = vmatprep.subr.bf16.mxu0 %v3391
    %4842 = vmatpush1.bf16.msra.mxu0 %v3390
    %4843 = vmatprep.subr.bf16.mxu0 %v3384
    %4844 = vmatpush1.bf16.msra.mxu0 %v3383
    %4845 = vmatprep.subr.bf16.mxu0 %v3377
    %4846 = vmatpush1.bf16.msra.mxu0 %v3376
    %4847 = vmatprep.subr.bf16.mxu0 %v3482
    %4848 = vmatpush2.bf16.msra.mxu0 %v3481
    %4849 = vmatprep.subr.bf16.mxu0 %v3475
    %4850 = vmatpush2.bf16.msra.mxu0 %v3474
    %4851 = vmatprep.subr.bf16.mxu0 %v3468
    %4852 = vmatpush2.bf16.msra.mxu0 %v3467
    %4853 = vmatprep.subr.bf16.mxu0 %v3461
    %4854 = vmatpush2.bf16.msra.mxu0 %v3460
    %4855 = vmatprep.subr.bf16.mxu0 %v3454
    %4856 = vmatpush2.bf16.msra.mxu0 %v3453
    %4857 = vmatprep.subr.bf16.mxu0 %v3447
    %4858 = vmatpush2.bf16.msra.mxu0 %v3446
    %4859 = vmatprep.subr.bf16.mxu0 %v3440
    %4860 = vmatpush2.bf16.msra.mxu0 %v3439
    %4861 = vmatprep.subr.bf16.mxu0 %v3433
    %4862 = vmatpush2.bf16.msra.mxu0 %v3432
    %4863 = vmatprep.mubr.bf16.mxu0 %v816
    %4864 = vmatmul.mubr.bf16.gmra.mxu0 %v815
    %v4865 = vpop.f32.mrf.mxu0
    %v4866 = vadd.f32 %v4825, %v4865
    %v4867 = vpop.f32.mrf.mxu0
    %v4868 = vadd.f32 %v4827, %v4867
    %v4869 = vpop.f32.mrf.mxu0
    %v4870 = vpop.f32.mrf.mxu0
    %4871 = vdwg.mxu0
    %4872 = vmatprep.subr.bf16.mxu0 %v3538
    %4873 = vmatpush1.bf16.msra.mxu0 %v3537
    %4874 = vmatprep.subr.bf16.mxu0 %v3531
    %4875 = vmatpush1.bf16.msra.mxu0 %v3530
    %4876 = vmatprep.subr.bf16.mxu0 %v3524
    %4877 = vmatpush1.bf16.msra.mxu0 %v3523
    %4878 = vmatprep.subr.bf16.mxu0 %v3517
    %4879 = vmatpush1.bf16.msra.mxu0 %v3516
    %4880 = vmatprep.subr.bf16.mxu0 %v3510
    %4881 = vmatpush1.bf16.msra.mxu0 %v3509
    %4882 = vmatprep.subr.bf16.mxu0 %v3503
    %4883 = vmatpush1.bf16.msra.mxu0 %v3502
    %4884 = vmatprep.subr.bf16.mxu0 %v3496
    %4885 = vmatpush1.bf16.msra.mxu0 %v3495
    %4886 = vmatprep.subr.bf16.mxu0 %v3489
    %4887 = vmatpush1.bf16.msra.mxu0 %v3488
    %4888 = vmatprep.subr.bf16.mxu0 %v3594
    %4889 = vmatpush2.bf16.msra.mxu0 %v3593
    %4890 = vmatprep.subr.bf16.mxu0 %v3587
    %4891 = vmatpush2.bf16.msra.mxu0 %v3586
    %4892 = vmatprep.subr.bf16.mxu0 %v3580
    %4893 = vmatpush2.bf16.msra.mxu0 %v3579
    %4894 = vmatprep.subr.bf16.mxu0 %v3573
    %4895 = vmatpush2.bf16.msra.mxu0 %v3572
    %4896 = vmatprep.subr.bf16.mxu0 %v3566
    %4897 = vmatpush2.bf16.msra.mxu0 %v3565
    %4898 = vmatprep.subr.bf16.mxu0 %v3559
    %4899 = vmatpush2.bf16.msra.mxu0 %v3558
    %4900 = vmatprep.subr.bf16.mxu0 %v3552
    %4901 = vmatpush2.bf16.msra.mxu0 %v3551
    %4902 = vmatprep.subr.bf16.mxu0 %v3545
    %4903 = vmatpush2.bf16.msra.mxu0 %v3544
    %4904 = vmatprep.mubr.bf16.mxu0 %v818
    %4905 = vmatmul.mubr.bf16.gmra.mxu0 %v817
    %v4906 = vpop.f32.mrf.mxu0
    %v4907 = vadd.f32 %v4866, %v4906
    %v4908 = vpop.f32.mrf.mxu0
    %v4909 = vadd.f32 %v4868, %v4908
    %v4910 = vpop.f32.mrf.mxu0
    %v4911 = vpop.f32.mrf.mxu0
    %4912 = vdwg.mxu0
    %4913 = vmatprep.subr.bf16.mxu0 %v3650
    %4914 = vmatpush1.bf16.msra.mxu0 %v3649
    %4915 = vmatprep.subr.bf16.mxu0 %v3643
    %4916 = vmatpush1.bf16.msra.mxu0 %v3642
    %4917 = vmatprep.subr.bf16.mxu0 %v3636
    %4918 = vmatpush1.bf16.msra.mxu0 %v3635
    %4919 = vmatprep.subr.bf16.mxu0 %v3629
    %4920 = vmatpush1.bf16.msra.mxu0 %v3628
    %4921 = vmatprep.subr.bf16.mxu0 %v3622
    %4922 = vmatpush1.bf16.msra.mxu0 %v3621
    %4923 = vmatprep.subr.bf16.mxu0 %v3615
    %4924 = vmatpush1.bf16.msra.mxu0 %v3614
    %4925 = vmatprep.subr.bf16.mxu0 %v3608
    %4926 = vmatpush1.bf16.msra.mxu0 %v3607
    %4927 = vmatprep.subr.bf16.mxu0 %v3601
    %4928 = vmatpush1.bf16.msra.mxu0 %v3600
    %4929 = vmatprep.subr.bf16.mxu0 %v3706
    %4930 = vmatpush2.bf16.msra.mxu0 %v3705
    %4931 = vmatprep.subr.bf16.mxu0 %v3699
    %4932 = vmatpush2.bf16.msra.mxu0 %v3698
    %4933 = vmatprep.subr.bf16.mxu0 %v3692
    %4934 = vmatpush2.bf16.msra.mxu0 %v3691
    %4935 = vmatprep.subr.bf16.mxu0 %v3685
    %4936 = vmatpush2.bf16.msra.mxu0 %v3684
    %4937 = vmatprep.subr.bf16.mxu0 %v3678
    %4938 = vmatpush2.bf16.msra.mxu0 %v3677
    %4939 = vmatprep.subr.bf16.mxu0 %v3671
    %4940 = vmatpush2.bf16.msra.mxu0 %v3670
    %4941 = vmatprep.subr.bf16.mxu0 %v3664
    %4942 = vmatpush2.bf16.msra.mxu0 %v3663
    %4943 = vmatprep.subr.bf16.mxu0 %v3657
    %4944 = vmatpush2.bf16.msra.mxu0 %v3656
    %4945 = vmatprep.mubr.bf16.mxu0 %v820
    %4946 = vmatmul.mubr.bf16.gmra.mxu0 %v819
    %v4947 = vpop.f32.mrf.mxu0
    %v4948 = vadd.f32 %v4907, %v4947
    %v4949 = vpop.f32.mrf.mxu0
    %v4950 = vadd.f32 %v4909, %v4949
    %v4951 = vpop.f32.mrf.mxu0
    %v4952 = vpop.f32.mrf.mxu0
    %4953 = vdwg.mxu0
    %4954 = vmatprep.subr.bf16.mxu0 %v3762
    %4955 = vmatpush1.bf16.msra.mxu0 %v3761
    %4956 = vmatprep.subr.bf16.mxu0 %v3755
    %4957 = vmatpush1.bf16.msra.mxu0 %v3754
    %4958 = vmatprep.subr.bf16.mxu0 %v3748
    %4959 = vmatpush1.bf16.msra.mxu0 %v3747
    %4960 = vmatprep.subr.bf16.mxu0 %v3741
    %4961 = vmatpush1.bf16.msra.mxu0 %v3740
    %4962 = vmatprep.subr.bf16.mxu0 %v3734
    %4963 = vmatpush1.bf16.msra.mxu0 %v3733
    %4964 = vmatprep.subr.bf16.mxu0 %v3727
    %4965 = vmatpush1.bf16.msra.mxu0 %v3726
    %4966 = vmatprep.subr.bf16.mxu0 %v3720
    %4967 = vmatpush1.bf16.msra.mxu0 %v3719
    %4968 = vmatprep.subr.bf16.mxu0 %v3713
    %4969 = vmatpush1.bf16.msra.mxu0 %v3712
    %4970 = vmatprep.subr.bf16.mxu0 %v3818
    %4971 = vmatpush2.bf16.msra.mxu0 %v3817
    %4972 = vmatprep.subr.bf16.mxu0 %v3811
    %4973 = vmatpush2.bf16.msra.mxu0 %v3810
    %4974 = vmatprep.subr.bf16.mxu0 %v3804
    %4975 = vmatpush2.bf16.msra.mxu0 %v3803
    %4976 = vmatprep.subr.bf16.mxu0 %v3797
    %4977 = vmatpush2.bf16.msra.mxu0 %v3796
    %4978 = vmatprep.subr.bf16.mxu0 %v3790
    %4979 = vmatpush2.bf16.msra.mxu0 %v3789
    %4980 = vmatprep.subr.bf16.mxu0 %v3783
    %4981 = vmatpush2.bf16.msra.mxu0 %v3782
    %4982 = vmatprep.subr.bf16.mxu0 %v3776
    %4983 = vmatpush2.bf16.msra.mxu0 %v3775
    %4984 = vmatprep.subr.bf16.mxu0 %v3769
    %4985 = vmatpush2.bf16.msra.mxu0 %v3768
    %4986 = vmatprep.mubr.bf16.mxu0 %v822
    %4987 = vmatmul.mubr.bf16.gmra.mxu0 %v821
    %v4988 = vpop.f32.mrf.mxu0
    %v4989 = vadd.f32 %v4948, %v4988
    %v4990 = vpop.f32.mrf.mxu0
    %v4991 = vadd.f32 %v4950, %v4990
    %v4992 = vpop.f32.mrf.mxu0
    %v4993 = vpop.f32.mrf.mxu0
    %4994 = vdwg.mxu0
    %4995 = vmatprep.subr.bf16.mxu0 0
    %4996 = vmatpush1.bf16.msra.mxu0 %v3315
    %4997 = vmatprep.subr.bf16.mxu0 0
    %4998 = vmatpush1.bf16.msra.mxu0 %v3308
    %4999 = vmatprep.subr.bf16.mxu0 0
    %5000 = vmatpush1.bf16.msra.mxu0 %v3301
    %5001 = vmatprep.subr.bf16.mxu0 0
    %5002 = vmatpush1.bf16.msra.mxu0 %v3294
    %5003 = vmatprep.subr.bf16.mxu0 0
    %5004 = vmatpush1.bf16.msra.mxu0 %v3287
    %5005 = vmatprep.subr.bf16.mxu0 0
    %5006 = vmatpush1.bf16.msra.mxu0 %v3280
    %5007 = vmatprep.subr.bf16.mxu0 0
    %5008 = vmatpush1.bf16.msra.mxu0 %v3273
    %5009 = vmatprep.subr.bf16.mxu0 0
    %5010 = vmatpush1.bf16.msra.mxu0 %v3266
    %5011 = vmatprep.subr.bf16.mxu0 0
    %5012 = vmatpush2.bf16.msra.mxu0 %v3371
    %5013 = vmatprep.subr.bf16.mxu0 0
    %5014 = vmatpush2.bf16.msra.mxu0 %v3364
    %5015 = vmatprep.subr.bf16.mxu0 0
    %5016 = vmatpush2.bf16.msra.mxu0 %v3357
    %5017 = vmatprep.subr.bf16.mxu0 0
    %5018 = vmatpush2.bf16.msra.mxu0 %v3350
    %5019 = vmatprep.subr.bf16.mxu0 0
    %5020 = vmatpush2.bf16.msra.mxu0 %v3343
    %5021 = vmatprep.subr.bf16.mxu0 0
    %5022 = vmatpush2.bf16.msra.mxu0 %v3336
    %5023 = vmatprep.subr.bf16.mxu0 0
    %5024 = vmatpush2.bf16.msra.mxu0 %v3329
    %5025 = vmatprep.subr.bf16.mxu0 0
    %5026 = vmatpush2.bf16.msra.mxu0 %v3322
    %5027 = vmatprep.mubr.bf16.mxu0 %v814
    %5028 = vmatmul.mubr.bf16.gmra.mxu0 %v813
    %v5029 = vpop.f32.mrf.mxu0
    %v5030 = vadd.f32 %v1492, %v5029
    %v5031 = vpop.f32.mrf.mxu0
    %v5032 = vpop.f32.mrf.mxu0
    %v5033 = vpop.f32.mrf.mxu0
    %5034 = vdwg.mxu0
    %5035 = vmatprep.subr.bf16.mxu0 0
    %5036 = vmatpush1.bf16.msra.mxu0 %v3427
    %5037 = vmatprep.subr.bf16.mxu0 0
    %5038 = vmatpush1.bf16.msra.mxu0 %v3420
    %5039 = vmatprep.subr.bf16.mxu0 0
    %5040 = vmatpush1.bf16.msra.mxu0 %v3413
    %5041 = vmatprep.subr.bf16.mxu0 0
    %5042 = vmatpush1.bf16.msra.mxu0 %v3406
    %5043 = vmatprep.subr.bf16.mxu0 0
    %5044 = vmatpush1.bf16.msra.mxu0 %v3399
    %5045 = vmatprep.subr.bf16.mxu0 0
    %5046 = vmatpush1.bf16.msra.mxu0 %v3392
    %5047 = vmatprep.subr.bf16.mxu0 0
    %5048 = vmatpush1.bf16.msra.mxu0 %v3385
    %5049 = vmatprep.subr.bf16.mxu0 0
    %5050 = vmatpush1.bf16.msra.mxu0 %v3378
    %5051 = vmatprep.subr.bf16.mxu0 0
    %5052 = vmatpush2.bf16.msra.mxu0 %v3483
    %5053 = vmatprep.subr.bf16.mxu0 0
    %5054 = vmatpush2.bf16.msra.mxu0 %v3476
    %5055 = vmatprep.subr.bf16.mxu0 0
    %5056 = vmatpush2.bf16.msra.mxu0 %v3469
    %5057 = vmatprep.subr.bf16.mxu0 0
    %5058 = vmatpush2.bf16.msra.mxu0 %v3462
    %5059 = vmatprep.subr.bf16.mxu0 0
    %5060 = vmatpush2.bf16.msra.mxu0 %v3455
    %5061 = vmatprep.subr.bf16.mxu0 0
    %5062 = vmatpush2.bf16.msra.mxu0 %v3448
    %5063 = vmatprep.subr.bf16.mxu0 0
    %5064 = vmatpush2.bf16.msra.mxu0 %v3441
    %5065 = vmatprep.subr.bf16.mxu0 0
    %5066 = vmatpush2.bf16.msra.mxu0 %v3434
    %5067 = vmatprep.mubr.bf16.mxu0 %v816
    %5068 = vmatmul.mubr.bf16.gmra.mxu0 %v815
    %v5069 = vpop.f32.mrf.mxu0
    %v5070 = vadd.f32 %v5030, %v5069
    %v5071 = vpop.f32.mrf.mxu0
    %v5072 = vpop.f32.mrf.mxu0
    %v5073 = vpop.f32.mrf.mxu0
    %5074 = vdwg.mxu0
    %5075 = vmatprep.subr.bf16.mxu0 0
    %5076 = vmatpush1.bf16.msra.mxu0 %v3539
    %5077 = vmatprep.subr.bf16.mxu0 0
    %5078 = vmatpush1.bf16.msra.mxu0 %v3532
    %5079 = vmatprep.subr.bf16.mxu0 0
    %5080 = vmatpush1.bf16.msra.mxu0 %v3525
    %5081 = vmatprep.subr.bf16.mxu0 0
    %5082 = vmatpush1.bf16.msra.mxu0 %v3518
    %5083 = vmatprep.subr.bf16.mxu0 0
    %5084 = vmatpush1.bf16.msra.mxu0 %v3511
    %5085 = vmatprep.subr.bf16.mxu0 0
    %5086 = vmatpush1.bf16.msra.mxu0 %v3504
    %5087 = vmatprep.subr.bf16.mxu0 0
    %5088 = vmatpush1.bf16.msra.mxu0 %v3497
    %5089 = vmatprep.subr.bf16.mxu0 0
    %5090 = vmatpush1.bf16.msra.mxu0 %v3490
    %5091 = vmatprep.subr.bf16.mxu0 0
    %5092 = vmatpush2.bf16.msra.mxu0 %v3595
    %5093 = vmatprep.subr.bf16.mxu0 0
    %5094 = vmatpush2.bf16.msra.mxu0 %v3588
    %5095 = vmatprep.subr.bf16.mxu0 0
    %5096 = vmatpush2.bf16.msra.mxu0 %v3581
    %5097 = vmatprep.subr.bf16.mxu0 0
    %5098 = vmatpush2.bf16.msra.mxu0 %v3574
    %5099 = vmatprep.subr.bf16.mxu0 0
    %5100 = vmatpush2.bf16.msra.mxu0 %v3567
    %5101 = vmatprep.subr.bf16.mxu0 0
    %5102 = vmatpush2.bf16.msra.mxu0 %v3560
    %5103 = vmatprep.subr.bf16.mxu0 0
    %5104 = vmatpush2.bf16.msra.mxu0 %v3553
    %5105 = vmatprep.subr.bf16.mxu0 0
    %5106 = vmatpush2.bf16.msra.mxu0 %v3546
    %5107 = vmatprep.mubr.bf16.mxu0 %v818
    %5108 = vmatmul.mubr.bf16.gmra.mxu0 %v817
    %v5109 = vpop.f32.mrf.mxu0
    %v5110 = vadd.f32 %v5070, %v5109
    %v5111 = vpop.f32.mrf.mxu0
    %v5112 = vpop.f32.mrf.mxu0
    %v5113 = vpop.f32.mrf.mxu0
    %5114 = vdwg.mxu0
    %5115 = vmatprep.subr.bf16.mxu0 0
    %5116 = vmatpush1.bf16.msra.mxu0 %v3651
    %5117 = vmatprep.subr.bf16.mxu0 0
    %5118 = vmatpush1.bf16.msra.mxu0 %v3644
    %5119 = vmatprep.subr.bf16.mxu0 0
    %5120 = vmatpush1.bf16.msra.mxu0 %v3637
    %5121 = vmatprep.subr.bf16.mxu0 0
    %5122 = vmatpush1.bf16.msra.mxu0 %v3630
    %5123 = vmatprep.subr.bf16.mxu0 0
    %5124 = vmatpush1.bf16.msra.mxu0 %v3623
    %5125 = vmatprep.subr.bf16.mxu0 0
    %5126 = vmatpush1.bf16.msra.mxu0 %v3616
    %5127 = vmatprep.subr.bf16.mxu0 0
    %5128 = vmatpush1.bf16.msra.mxu0 %v3609
    %5129 = vmatprep.subr.bf16.mxu0 0
    %5130 = vmatpush1.bf16.msra.mxu0 %v3602
    %5131 = vmatprep.subr.bf16.mxu0 0
    %5132 = vmatpush2.bf16.msra.mxu0 %v3707
    %5133 = vmatprep.subr.bf16.mxu0 0
    %5134 = vmatpush2.bf16.msra.mxu0 %v3700
    %5135 = vmatprep.subr.bf16.mxu0 0
    %5136 = vmatpush2.bf16.msra.mxu0 %v3693
    %5137 = vmatprep.subr.bf16.mxu0 0
    %5138 = vmatpush2.bf16.msra.mxu0 %v3686
    %5139 = vmatprep.subr.bf16.mxu0 0
    %5140 = vmatpush2.bf16.msra.mxu0 %v3679
    %5141 = vmatprep.subr.bf16.mxu0 0
    %5142 = vmatpush2.bf16.msra.mxu0 %v3672
    %5143 = vmatprep.subr.bf16.mxu0 0
    %5144 = vmatpush2.bf16.msra.mxu0 %v3665
    %5145 = vmatprep.subr.bf16.mxu0 0
    %5146 = vmatpush2.bf16.msra.mxu0 %v3658
    %5147 = vmatprep.mubr.bf16.mxu0 %v820
    %5148 = vmatmul.mubr.bf16.gmra.mxu0 %v819
    %v5149 = vpop.f32.mrf.mxu0
    %v5150 = vadd.f32 %v5110, %v5149
    %v5151 = vpop.f32.mrf.mxu0
    %v5152 = vpop.f32.mrf.mxu0
    %v5153 = vpop.f32.mrf.mxu0
    %5154 = vdwg.mxu0
    %5155 = vmatprep.subr.bf16.mxu0 0
    %5156 = vmatpush1.bf16.msra.mxu0 %v3763
    %5157 = vmatprep.subr.bf16.mxu0 0
    %5158 = vmatpush1.bf16.msra.mxu0 %v3756
    %5159 = vmatprep.subr.bf16.mxu0 0
    %5160 = vmatpush1.bf16.msra.mxu0 %v3749
    %5161 = vmatprep.subr.bf16.mxu0 0
    %5162 = vmatpush1.bf16.msra.mxu0 %v3742
    %5163 = vmatprep.subr.bf16.mxu0 0
    %5164 = vmatpush1.bf16.msra.mxu0 %v3735
    %5165 = vmatprep.subr.bf16.mxu0 0
    %5166 = vmatpush1.bf16.msra.mxu0 %v3728
    %5167 = vmatprep.subr.bf16.mxu0 0
    %5168 = vmatpush1.bf16.msra.mxu0 %v3721
    %5169 = vmatprep.subr.bf16.mxu0 0
    %5170 = vmatpush1.bf16.msra.mxu0 %v3714
    %5171 = vmatprep.subr.bf16.mxu0 0
    %5172 = vmatpush2.bf16.msra.mxu0 %v3819
    %5173 = vmatprep.subr.bf16.mxu0 0
    %5174 = vmatpush2.bf16.msra.mxu0 %v3812
    %5175 = vmatprep.subr.bf16.mxu0 0
    %5176 = vmatpush2.bf16.msra.mxu0 %v3805
    %5177 = vmatprep.subr.bf16.mxu0 0
    %5178 = vmatpush2.bf16.msra.mxu0 %v3798
    %5179 = vmatprep.subr.bf16.mxu0 0
    %5180 = vmatpush2.bf16.msra.mxu0 %v3791
    %5181 = vmatprep.subr.bf16.mxu0 0
    %5182 = vmatpush2.bf16.msra.mxu0 %v3784
    %5183 = vmatprep.subr.bf16.mxu0 0
    %5184 = vmatpush2.bf16.msra.mxu0 %v3777
    %5185 = vmatprep.subr.bf16.mxu0 0
    %5186 = vmatpush2.bf16.msra.mxu0 %v3770
    %5187 = vmatprep.mubr.bf16.mxu0 %v822
    %5188 = vmatmul.mubr.bf16.gmra.mxu0 %v821
    %v5189 = vpop.f32.mrf.mxu0
    %v5190 = vadd.f32 %v5150, %v5189
    %v5191 = vpop.f32.mrf.mxu0
    %v5192 = vpop.f32.mrf.mxu0
    %v5193 = vpop.f32.mrf.mxu0
    %5194 = vdwg.mxu0
    %s5195 = sld [smem:[#allocation25 + $0x1]]
    %vm5196 = vcmp.ge.f32.partialorder %v4579, 0.0
    %vm5197 = vcmp.ge.f32.partialorder %v4581, 0.0
    %vm5198 = vcmp.ge.f32.partialorder %v4784, 0.0
    %vm5199 = vcmp.ge.f32.partialorder %v4786, 0.0
    %vm5200 = vcmp.ge.f32.partialorder %v4989, 0.0
    %vm5201 = vcmp.ge.f32.partialorder %v4991, 0.0
    %vm5202 = vcmp.ge.f32.partialorder %v5190, 0.0
    %v5203 = vstv %s5195
    %v5204 = vmul.f32 %v5203, %v4579
    %v5205 = vmul.f32 %v5203, %v4581
    %v5206 = vmul.f32 %v5203, %v4784
    %v5207 = vmul.f32 %v5203, %v4786
    %v5208 = vmul.f32 %v5203, %v4989
    %v5209 = vmul.f32 %v5203, %v4991
    %v5210 = vmul.f32 %v5203, %v5190
    %v5211 = vsel %vm5196, %v4579, %v5204
    %v5212 = vsel %vm5197, %v4581, %v5205
    %v5213 = vsel %vm5198, %v4784, %v5206
    %v5214 = vsel %vm5199, %v4786, %v5207
    %v5215 = vsel %vm5200, %v4989, %v5208
    %v5216 = vsel %vm5201, %v4991, %v5209
    %v5217 = vsel %vm5202, %v5190, %v5210
    %v5218 = vpack.c.bf16 %v5211, %v5211
    %v5219 = vpack.c.bf16 %v5212, %v5212
    %v5220 = vpack.c.bf16 %v5213, %v5213
    %v5221 = vpack.c.bf16 %v5214, %v5214
    %v5222 = vpack.c.bf16 %v5215, %v5215
    %v5223 = vpack.c.bf16 %v5216, %v5216
    %v5224 = vpack.c.bf16 %v5217, %v5217
    %v5225 = vld [vmem:[#allocation10] sm:$0xff]
    %v5226 = vld [vmem:[#allocation10 + $0x8] sm:$0xff]
    %v5227 = vld [vmem:[#allocation10 + $0x10] sm:$0xff]
    %v5228 = vld [vmem:[#allocation10 + $0x18] sm:$0xff]
    %v5229 = vld [vmem:[#allocation10 + $0x20] sm:$0xff]
    %v5230 = vld [vmem:[#allocation10 + $0x28] sm:$0xff]
    %v5231 = vld [vmem:[#allocation10 + $0x30] sm:$0xff]
    %v5232 = vld [vmem:[#allocation10 + $0x38] sm:$0xff]
    %v5233 = vld [vmem:[#allocation10 + $0x40] sm:$0xff]
    %v5234 = vld [vmem:[#allocation10 + $0x48] sm:$0xff]
    %v5235 = vld [vmem:[#allocation10 + $0x50] sm:$0xff]
    %v5236 = vld [vmem:[#allocation10 + $0x58] sm:$0xff]
    %v5237 = vld [vmem:[#allocation10 + $0x60] sm:$0xff]
    %v5238 = vld [vmem:[#allocation10 + $0x68] sm:$0xff]
    %v5239 = vld [vmem:[#allocation10 + $0x70] sm:$0xff]
    %v5240 = vld [vmem:[#allocation10 + $0x78] sm:$0xff]
    %v5241 = vld [vmem:[#allocation10 + $0x80] sm:$0xff]
    %v5242 = vld [vmem:[#allocation10 + $0x88] sm:$0xff]
    %v5243 = vld [vmem:[#allocation10 + $0x90] sm:$0xff]
    %v5244 = vld [vmem:[#allocation10 + $0x98] sm:$0xff]
    %v5245 = vld [vmem:[#allocation10 + $0xa0] sm:$0xff]
    %v5246 = vld [vmem:[#allocation10 + $0xa8] sm:$0xff]
    %v5247 = vld [vmem:[#allocation10 + $0xb0] sm:$0xff]
    %v5248 = vld [vmem:[#allocation10 + $0xb8] sm:$0xff]
    %v5249 = vld [vmem:[#allocation10 + $0xc0] sm:$0xff]
    %v5250 = vld [vmem:[#allocation10 + $0xc8] sm:$0xff]
    %v5251 = vld [vmem:[#allocation10 + $0xd0] sm:$0xff]
    %v5252 = vld [vmem:[#allocation10 + $0xd8] sm:$0xff]
    %v5253 = vld [vmem:[#allocation10 + $0xe0] sm:$0xff]
    %v5254 = vld [vmem:[#allocation10 + $0xe8] sm:$0xff]
    %v5255 = vld [vmem:[#allocation10 + $0xf0] sm:$0xff]
    %v5256 = vld [vmem:[#allocation10 + $0xf8] sm:$0xff]
    %v5257 = vld [vmem:[#allocation10 + $0x100] sm:$0xff]
    %v5258 = vld [vmem:[#allocation10 + $0x108] sm:$0xff]
    %v5259 = vld [vmem:[#allocation10 + $0x110] sm:$0xff]
    %v5260 = vld [vmem:[#allocation10 + $0x118] sm:$0xff]
    %v5261 = vld [vmem:[#allocation10 + $0x120] sm:$0xff]
    %v5262 = vld [vmem:[#allocation10 + $0x128] sm:$0xff]
    %v5263 = vld [vmem:[#allocation10 + $0x130] sm:$0xff]
    %v5264 = vld [vmem:[#allocation10 + $0x138] sm:$0xff]
    %v5265 = vld [vmem:[#allocation10 + $0x140] sm:$0xff]
    %v5266 = vld [vmem:[#allocation10 + $0x148] sm:$0xff]
    %v5267 = vld [vmem:[#allocation10 + $0x150] sm:$0xff]
    %v5268 = vld [vmem:[#allocation10 + $0x158] sm:$0xff]
    %v5269 = vld [vmem:[#allocation10 + $0x160] sm:$0xff]
    %v5270 = vld [vmem:[#allocation10 + $0x168] sm:$0xff]
    %v5271 = vld [vmem:[#allocation10 + $0x170] sm:$0xff]
    %v5272 = vld [vmem:[#allocation10 + $0x178] sm:$0xff]
    %v5273 = vld [vmem:[#allocation10 + $0x180] sm:$0xff]
    %v5274 = vld [vmem:[#allocation10 + $0x188] sm:$0xff]
    %v5275 = vld [vmem:[#allocation10 + $0x190] sm:$0xff]
    %v5276 = vld [vmem:[#allocation10 + $0x198] sm:$0xff]
    %v5277 = vld [vmem:[#allocation10 + $0x1a0] sm:$0xff]
    %v5278 = vld [vmem:[#allocation10 + $0x1a8] sm:$0xff]
    %v5279 = vld [vmem:[#allocation10 + $0x1b0] sm:$0xff]
    %v5280 = vld [vmem:[#allocation10 + $0x1b8] sm:$0xff]
    %v5281 = vld [vmem:[#allocation10 + $0x1c0] sm:$0xff]
    %v5282 = vld [vmem:[#allocation10 + $0x1c8] sm:$0xff]
    %v5283 = vld [vmem:[#allocation10 + $0x1d0] sm:$0xff]
    %v5284 = vld [vmem:[#allocation10 + $0x1d8] sm:$0xff]
    %v5285 = vld [vmem:[#allocation10 + $0x1e0] sm:$0xff]
    %v5286 = vld [vmem:[#allocation10 + $0x1e8] sm:$0xff]
    %v5287 = vld [vmem:[#allocation10 + $0x1f0] sm:$0xff]
    %v5288 = vld [vmem:[#allocation10 + $0x1f8] sm:$0xff]
    %v5289 = vld [vmem:[#allocation10 + $0x200] sm:$0xff]
    %v5290 = vld [vmem:[#allocation10 + $0x208] sm:$0xff]
    %v5291 = vld [vmem:[#allocation10 + $0x210] sm:$0xff]
    %v5292 = vld [vmem:[#allocation10 + $0x218] sm:$0xff]
    %v5293 = vld [vmem:[#allocation10 + $0x220] sm:$0xff]
    %v5294 = vld [vmem:[#allocation10 + $0x228] sm:$0xff]
    %v5295 = vld [vmem:[#allocation10 + $0x230] sm:$0xff]
    %v5296 = vld [vmem:[#allocation10 + $0x238] sm:$0xff]
    %v5297 = vld [vmem:[#allocation10 + $0x240] sm:$0xff]
    %v5298 = vld [vmem:[#allocation10 + $0x248] sm:$0xff]
    %v5299 = vld [vmem:[#allocation10 + $0x250] sm:$0xff]
    %v5300 = vld [vmem:[#allocation10 + $0x258] sm:$0xff]
    %v5301 = vld [vmem:[#allocation10 + $0x260] sm:$0xff]
    %v5302 = vld [vmem:[#allocation10 + $0x268] sm:$0xff]
    %v5303 = vld [vmem:[#allocation10 + $0x270] sm:$0xff]
    %v5304 = vld [vmem:[#allocation10 + $0x278] sm:$0xff]
    %v5305 = vld [vmem:[#allocation10 + $0x280] sm:$0xff]
    %v5306 = vld [vmem:[#allocation10 + $0x288] sm:$0xff]
    %v5307 = vld [vmem:[#allocation10 + $0x290] sm:$0xff]
    %v5308 = vld [vmem:[#allocation10 + $0x298] sm:$0xff]
    %v5309 = vld [vmem:[#allocation10 + $0x2a0] sm:$0xff]
    %v5310 = vld [vmem:[#allocation10 + $0x2a8] sm:$0xff]
    %v5311 = vld [vmem:[#allocation10 + $0x2b0] sm:$0xff]
    %v5312 = vld [vmem:[#allocation10 + $0x2b8] sm:$0xff]
    %v5313 = vld [vmem:[#allocation10 + $0x2c0] sm:$0xff]
    %v5314 = vld [vmem:[#allocation10 + $0x2c8] sm:$0xff]
    %v5315 = vld [vmem:[#allocation10 + $0x2d0] sm:$0xff]
    %v5316 = vld [vmem:[#allocation10 + $0x2d8] sm:$0xff]
    %v5317 = vld [vmem:[#allocation10 + $0x2e0] sm:$0xff]
    %v5318 = vld [vmem:[#allocation10 + $0x2e8] sm:$0xff]
    %v5319 = vld [vmem:[#allocation10 + $0x2f0] sm:$0xff]
    %v5320 = vld [vmem:[#allocation10 + $0x2f8] sm:$0xff]
    %v5321 = vld [vmem:[#allocation10 + $0x300] sm:$0xff]
    %v5322 = vld [vmem:[#allocation10 + $0x308] sm:$0xff]
    %v5323 = vld [vmem:[#allocation10 + $0x310] sm:$0xff]
    %v5324 = vld [vmem:[#allocation10 + $0x318] sm:$0xff]
    %v5325 = vld [vmem:[#allocation10 + $0x320] sm:$0xff]
    %v5326 = vld [vmem:[#allocation10 + $0x328] sm:$0xff]
    %v5327 = vld [vmem:[#allocation10 + $0x330] sm:$0xff]
    %v5328 = vld [vmem:[#allocation10 + $0x338] sm:$0xff]
    %v5329 = vld [vmem:[#allocation10 + $0x340] sm:$0xff]
    %v5330 = vld [vmem:[#allocation10 + $0x348] sm:$0xff]
    %v5331 = vld [vmem:[#allocation10 + $0x350] sm:$0xff]
    %v5332 = vld [vmem:[#allocation10 + $0x358] sm:$0xff]
    %v5333 = vld [vmem:[#allocation10 + $0x360] sm:$0xff]
    %v5334 = vld [vmem:[#allocation10 + $0x368] sm:$0xff]
    %v5335 = vld [vmem:[#allocation10 + $0x370] sm:$0xff]
    %v5336 = vld [vmem:[#allocation10 + $0x378] sm:$0xff]
    %v5337 = vld [vmem:[#allocation10 + $0x380] sm:$0xff]
    %v5338 = vld [vmem:[#allocation10 + $0x388] sm:$0xff]
    %v5339 = vld [vmem:[#allocation10 + $0x390] sm:$0xff]
    %v5340 = vld [vmem:[#allocation10 + $0x398] sm:$0xff]
    %v5341 = vld [vmem:[#allocation10 + $0x3a0] sm:$0xff]
    %v5342 = vld [vmem:[#allocation10 + $0x3a8] sm:$0xff]
    %v5343 = vld [vmem:[#allocation10 + $0x3b0] sm:$0xff]
    %v5344 = vld [vmem:[#allocation10 + $0x3b8] sm:$0xff]
    %v5345 = vld [vmem:[#allocation10 + $0x3c0] sm:$0xff]
    %v5346 = vld [vmem:[#allocation10 + $0x3c8] sm:$0xff]
    %v5347 = vld [vmem:[#allocation10 + $0x3d0] sm:$0xff]
    %v5348 = vld [vmem:[#allocation10 + $0x3d8] sm:$0xff]
    %v5349 = vld [vmem:[#allocation10 + $0x3e0] sm:$0xff]
    %v5350 = vld [vmem:[#allocation10 + $0x3e8] sm:$0xff]
    %v5351 = vld [vmem:[#allocation10 + $0x3f0] sm:$0xff]
    %v5352 = vld [vmem:[#allocation10 + $0x3f8] sm:$0xff]
    %v5353 = vld [vmem:[#allocation10 + $0x400] sm:$0xff]
    %v5354 = vld [vmem:[#allocation10 + $0x408] sm:$0xff]
    %v5355 = vld [vmem:[#allocation10 + $0x410] sm:$0xff]
    %v5356 = vld [vmem:[#allocation10 + $0x418] sm:$0xff]
    %v5357 = vld [vmem:[#allocation10 + $0x420] sm:$0xff]
    %v5358 = vld [vmem:[#allocation10 + $0x428] sm:$0xff]
    %v5359 = vld [vmem:[#allocation10 + $0x430] sm:$0xff]
    %v5360 = vld [vmem:[#allocation10 + $0x438] sm:$0xff]
    %v5361 = vld [vmem:[#allocation10 + $0x440] sm:$0xff]
    %v5362 = vld [vmem:[#allocation10 + $0x448] sm:$0xff]
    %v5363 = vld [vmem:[#allocation10 + $0x450] sm:$0xff]
    %v5364 = vld [vmem:[#allocation10 + $0x458] sm:$0xff]
    %v5365 = vld [vmem:[#allocation10 + $0x460] sm:$0xff]
    %v5366 = vld [vmem:[#allocation10 + $0x468] sm:$0xff]
    %v5367 = vld [vmem:[#allocation10 + $0x470] sm:$0xff]
    %v5368 = vld [vmem:[#allocation10 + $0x478] sm:$0xff]
    %v5369 = vld [vmem:[#allocation10 + $0x480] sm:$0xff]
    %v5370 = vld [vmem:[#allocation10 + $0x488] sm:$0xff]
    %v5371 = vld [vmem:[#allocation10 + $0x490] sm:$0xff]
    %v5372 = vld [vmem:[#allocation10 + $0x498] sm:$0xff]
    %v5373 = vld [vmem:[#allocation10 + $0x4a0] sm:$0xff]
    %v5374 = vld [vmem:[#allocation10 + $0x4a8] sm:$0xff]
    %v5375 = vld [vmem:[#allocation10 + $0x4b0] sm:$0xff]
    %v5376 = vld [vmem:[#allocation10 + $0x4b8] sm:$0xff]
    %v5377 = vld [vmem:[#allocation10 + $0x4c0] sm:$0xff]
    %v5378 = vld [vmem:[#allocation10 + $0x4c8] sm:$0xff]
    %v5379 = vld [vmem:[#allocation10 + $0x4d0] sm:$0xff]
    %v5380 = vld [vmem:[#allocation10 + $0x4d8] sm:$0xff]
    %v5381 = vld [vmem:[#allocation10 + $0x4e0] sm:$0xff]
    %v5382 = vld [vmem:[#allocation10 + $0x4e8] sm:$0xff]
    %v5383 = vld [vmem:[#allocation10 + $0x4f0] sm:$0xff]
    %v5384 = vld [vmem:[#allocation10 + $0x4f8] sm:$0xff]
    %v5385 = vld [vmem:[#allocation10 + $0x500] sm:$0xff]
    %v5386 = vld [vmem:[#allocation10 + $0x508] sm:$0xff]
    %v5387 = vld [vmem:[#allocation10 + $0x510] sm:$0xff]
    %v5388 = vld [vmem:[#allocation10 + $0x518] sm:$0xff]
    %v5389 = vld [vmem:[#allocation10 + $0x520] sm:$0xff]
    %v5390 = vld [vmem:[#allocation10 + $0x528] sm:$0xff]
    %v5391 = vld [vmem:[#allocation10 + $0x530] sm:$0xff]
    %v5392 = vld [vmem:[#allocation10 + $0x538] sm:$0xff]
    %v5393 = vld [vmem:[#allocation10 + $0x540] sm:$0xff]
    %v5394 = vld [vmem:[#allocation10 + $0x548] sm:$0xff]
    %v5395 = vld [vmem:[#allocation10 + $0x550] sm:$0xff]
    %v5396 = vld [vmem:[#allocation10 + $0x558] sm:$0xff]
    %v5397 = vld [vmem:[#allocation10 + $0x560] sm:$0xff]
    %v5398 = vld [vmem:[#allocation10 + $0x568] sm:$0xff]
    %v5399 = vld [vmem:[#allocation10 + $0x570] sm:$0xff]
    %v5400 = vld [vmem:[#allocation10 + $0x578] sm:$0xff]
    %v5401 = vld [vmem:[#allocation10 + $0x580] sm:$0xff]
    %v5402 = vld [vmem:[#allocation10 + $0x588] sm:$0xff]
    %v5403 = vld [vmem:[#allocation10 + $0x590] sm:$0xff]
    %v5404 = vld [vmem:[#allocation10 + $0x598] sm:$0xff]
    %v5405 = vld [vmem:[#allocation10 + $0x5a0] sm:$0xff]
    %v5406 = vld [vmem:[#allocation10 + $0x5a8] sm:$0xff]
    %v5407 = vld [vmem:[#allocation10 + $0x5b0] sm:$0xff]
    %v5408 = vld [vmem:[#allocation10 + $0x5b8] sm:$0xff]
    %v5409 = vld [vmem:[#allocation10 + $0x5c0] sm:$0xff]
    %v5410 = vld [vmem:[#allocation10 + $0x5c8] sm:$0xff]
    %v5411 = vld [vmem:[#allocation10 + $0x5d0] sm:$0xff]
    %v5412 = vld [vmem:[#allocation10 + $0x5d8] sm:$0xff]
    %v5413 = vld [vmem:[#allocation10 + $0x5e0] sm:$0xff]
    %v5414 = vld [vmem:[#allocation10 + $0x5e8] sm:$0xff]
    %v5415 = vld [vmem:[#allocation10 + $0x5f0] sm:$0xff]
    %v5416 = vld [vmem:[#allocation10 + $0x5f8] sm:$0xff]
    %v5417 = vld [vmem:[#allocation10 + $0x600] sm:$0xff]
    %v5418 = vld [vmem:[#allocation10 + $0x608] sm:$0xff]
    %v5419 = vld [vmem:[#allocation10 + $0x610] sm:$0xff]
    %v5420 = vld [vmem:[#allocation10 + $0x618] sm:$0xff]
    %v5421 = vld [vmem:[#allocation10 + $0x620] sm:$0xff]
    %v5422 = vld [vmem:[#allocation10 + $0x628] sm:$0xff]
    %v5423 = vld [vmem:[#allocation10 + $0x630] sm:$0xff]
    %v5424 = vld [vmem:[#allocation10 + $0x638] sm:$0xff]
    %v5425 = vld [vmem:[#allocation10 + $0x640] sm:$0xff]
    %v5426 = vld [vmem:[#allocation10 + $0x648] sm:$0xff]
    %v5427 = vld [vmem:[#allocation10 + $0x650] sm:$0xff]
    %v5428 = vld [vmem:[#allocation10 + $0x658] sm:$0xff]
    %v5429 = vld [vmem:[#allocation10 + $0x660] sm:$0xff]
    %v5430 = vld [vmem:[#allocation10 + $0x668] sm:$0xff]
    %v5431 = vld [vmem:[#allocation10 + $0x670] sm:$0xff]
    %v5432 = vld [vmem:[#allocation10 + $0x678] sm:$0xff]
    %v5433 = vld [vmem:[#allocation10 + $0x680] sm:$0xff]
    %v5434 = vld [vmem:[#allocation10 + $0x688] sm:$0xff]
    %v5435 = vld [vmem:[#allocation10 + $0x690] sm:$0xff]
    %v5436 = vld [vmem:[#allocation10 + $0x698] sm:$0xff]
    %v5437 = vld [vmem:[#allocation10 + $0x6a0] sm:$0xff]
    %v5438 = vld [vmem:[#allocation10 + $0x6a8] sm:$0xff]
    %v5439 = vld [vmem:[#allocation10 + $0x6b0] sm:$0xff]
    %v5440 = vld [vmem:[#allocation10 + $0x6b8] sm:$0xff]
    %v5441 = vld [vmem:[#allocation10 + $0x6c0] sm:$0xff]
    %v5442 = vld [vmem:[#allocation10 + $0x6c8] sm:$0xff]
    %v5443 = vld [vmem:[#allocation10 + $0x6d0] sm:$0xff]
    %v5444 = vld [vmem:[#allocation10 + $0x6d8] sm:$0xff]
    %v5445 = vld [vmem:[#allocation10 + $0x6e0] sm:$0xff]
    %v5446 = vld [vmem:[#allocation10 + $0x6e8] sm:$0xff]
    %v5447 = vld [vmem:[#allocation10 + $0x6f0] sm:$0xff]
    %v5448 = vld [vmem:[#allocation10 + $0x6f8] sm:$0xff]
    %v5449 = vld [vmem:[#allocation11] sm:$0xf]
    %v5451 = vlaneseq
    %v5452 = vshrl.u32 %v5451, 7
    %v5453 = vsub.s32 0, %v5452
    %v5454 = vrot.slane %v5449, %v5453
    %v5455 = vlaneseq
    %v5456 = vshrl.u32 %v5455, 7
    %v5457 = vsub.s32 1, %v5456
    %v5458 = vrot.slane %v5449, %v5457
    %v5459 = vlaneseq
    %v5460 = vshrl.u32 %v5459, 7
    %v5461 = vsub.s32 2, %v5460
    %v5462 = vrot.slane %v5449, %v5461
    %v5463 = vlaneseq
    %v5464 = vshrl.u32 %v5463, 7
    %v5465 = vsub.s32 3, %v5464
    %v5466 = vrot.slane %v5449, %v5465
    %v5695 = vunpack.c.l.b16 %v5225
    %v5696 = vunpack.c.h.b16 %v5225
    %v5697 = vunpack.c.l.b16 %v5226
    %v5698 = vunpack.c.h.b16 %v5226
    %v5699 = vunpack.c.l.b16 %v5227
    %v5700 = vunpack.c.h.b16 %v5227
    %v5701 = vunpack.c.l.b16 %v5228
    %v5702 = vunpack.c.h.b16 %v5228
    %v5703 = vunpack.c.l.b16 %v5229
    %v5704 = vunpack.c.h.b16 %v5229
    %v5705 = vunpack.c.l.b16 %v5230
    %v5706 = vunpack.c.h.b16 %v5230
    %v5707 = vunpack.c.l.b16 %v5231
    %v5708 = vunpack.c.h.b16 %v5231
    %v5709 = vunpack.c.l.b16 %v5232
    %v5710 = vunpack.c.h.b16 %v5232
    %v5711 = vunpack.c.l.b16 %v5233
    %v5712 = vunpack.c.h.b16 %v5233
    %v5713 = vunpack.c.l.b16 %v5234
    %v5714 = vunpack.c.h.b16 %v5234
    %v5715 = vunpack.c.l.b16 %v5235
    %v5716 = vunpack.c.h.b16 %v5235
    %v5717 = vunpack.c.l.b16 %v5236
    %v5718 = vunpack.c.h.b16 %v5236
    %v5719 = vunpack.c.l.b16 %v5237
    %v5720 = vunpack.c.h.b16 %v5237
    %v5721 = vunpack.c.l.b16 %v5238
    %v5722 = vunpack.c.h.b16 %v5238
    %v5723 = vunpack.c.l.b16 %v5239
    %v5724 = vunpack.c.h.b16 %v5239
    %v5725 = vunpack.c.l.b16 %v5240
    %v5726 = vunpack.c.h.b16 %v5240
    %v5727 = vunpack.c.l.b16 %v5241
    %v5728 = vunpack.c.h.b16 %v5241
    %v5729 = vunpack.c.l.b16 %v5242
    %v5730 = vunpack.c.h.b16 %v5242
    %v5731 = vunpack.c.l.b16 %v5243
    %v5732 = vunpack.c.h.b16 %v5243
    %v5733 = vunpack.c.l.b16 %v5244
    %v5734 = vunpack.c.h.b16 %v5244
    %v5735 = vunpack.c.l.b16 %v5245
    %v5736 = vunpack.c.h.b16 %v5245
    %v5737 = vunpack.c.l.b16 %v5246
    %v5738 = vunpack.c.h.b16 %v5246
    %v5739 = vunpack.c.l.b16 %v5247
    %v5740 = vunpack.c.h.b16 %v5247
    %v5741 = vunpack.c.l.b16 %v5248
    %v5742 = vunpack.c.h.b16 %v5248
    %v5743 = vunpack.c.l.b16 %v5249
    %v5744 = vunpack.c.h.b16 %v5249
    %v5745 = vunpack.c.l.b16 %v5250
    %v5746 = vunpack.c.h.b16 %v5250
    %v5747 = vunpack.c.l.b16 %v5251
    %v5748 = vunpack.c.h.b16 %v5251
    %v5749 = vunpack.c.l.b16 %v5252
    %v5750 = vunpack.c.h.b16 %v5252
    %v5751 = vunpack.c.l.b16 %v5253
    %v5752 = vunpack.c.h.b16 %v5253
    %v5753 = vunpack.c.l.b16 %v5254
    %v5754 = vunpack.c.h.b16 %v5254
    %v5755 = vunpack.c.l.b16 %v5255
    %v5756 = vunpack.c.h.b16 %v5255
    %v5757 = vunpack.c.l.b16 %v5256
    %v5758 = vunpack.c.h.b16 %v5256
    %v5759 = vunpack.c.l.b16 %v5257
    %v5760 = vunpack.c.h.b16 %v5257
    %v5761 = vunpack.c.l.b16 %v5258
    %v5762 = vunpack.c.h.b16 %v5258
    %v5763 = vunpack.c.l.b16 %v5259
    %v5764 = vunpack.c.h.b16 %v5259
    %v5765 = vunpack.c.l.b16 %v5260
    %v5766 = vunpack.c.h.b16 %v5260
    %v5767 = vunpack.c.l.b16 %v5261
    %v5768 = vunpack.c.h.b16 %v5261
    %v5769 = vunpack.c.l.b16 %v5262
    %v5770 = vunpack.c.h.b16 %v5262
    %v5771 = vunpack.c.l.b16 %v5263
    %v5772 = vunpack.c.h.b16 %v5263
    %v5773 = vunpack.c.l.b16 %v5264
    %v5774 = vunpack.c.h.b16 %v5264
    %v5775 = vunpack.c.l.b16 %v5265
    %v5776 = vunpack.c.h.b16 %v5265
    %v5777 = vunpack.c.l.b16 %v5266
    %v5778 = vunpack.c.h.b16 %v5266
    %v5779 = vunpack.c.l.b16 %v5267
    %v5780 = vunpack.c.h.b16 %v5267
    %v5781 = vunpack.c.l.b16 %v5268
    %v5782 = vunpack.c.h.b16 %v5268
    %v5783 = vunpack.c.l.b16 %v5269
    %v5784 = vunpack.c.h.b16 %v5269
    %v5785 = vunpack.c.l.b16 %v5270
    %v5786 = vunpack.c.h.b16 %v5270
    %v5787 = vunpack.c.l.b16 %v5271
    %v5788 = vunpack.c.h.b16 %v5271
    %v5789 = vunpack.c.l.b16 %v5272
    %v5790 = vunpack.c.h.b16 %v5272
    %v5791 = vunpack.c.l.b16 %v5273
    %v5792 = vunpack.c.h.b16 %v5273
    %v5793 = vunpack.c.l.b16 %v5274
    %v5794 = vunpack.c.h.b16 %v5274
    %v5795 = vunpack.c.l.b16 %v5275
    %v5796 = vunpack.c.h.b16 %v5275
    %v5797 = vunpack.c.l.b16 %v5276
    %v5798 = vunpack.c.h.b16 %v5276
    %v5799 = vunpack.c.l.b16 %v5277
    %v5800 = vunpack.c.h.b16 %v5277
    %v5801 = vunpack.c.l.b16 %v5278
    %v5802 = vunpack.c.h.b16 %v5278
    %v5803 = vunpack.c.l.b16 %v5279
    %v5804 = vunpack.c.h.b16 %v5279
    %v5805 = vunpack.c.l.b16 %v5280
    %v5806 = vunpack.c.h.b16 %v5280
    %v5807 = vunpack.c.l.b16 %v5281
    %v5808 = vunpack.c.h.b16 %v5281
    %v5809 = vunpack.c.l.b16 %v5282
    %v5810 = vunpack.c.h.b16 %v5282
    %v5811 = vunpack.c.l.b16 %v5283
    %v5812 = vunpack.c.h.b16 %v5283
    %v5813 = vunpack.c.l.b16 %v5284
    %v5814 = vunpack.c.h.b16 %v5284
    %v5815 = vunpack.c.l.b16 %v5285
    %v5816 = vunpack.c.h.b16 %v5285
    %v5817 = vunpack.c.l.b16 %v5286
    %v5818 = vunpack.c.h.b16 %v5286
    %v5819 = vunpack.c.l.b16 %v5287
    %v5820 = vunpack.c.h.b16 %v5287
    %v5821 = vunpack.c.l.b16 %v5288
    %v5822 = vunpack.c.h.b16 %v5288
    %v5823 = vunpack.c.l.b16 %v5289
    %v5824 = vunpack.c.h.b16 %v5289
    %v5825 = vunpack.c.l.b16 %v5290
    %v5826 = vunpack.c.h.b16 %v5290
    %v5827 = vunpack.c.l.b16 %v5291
    %v5828 = vunpack.c.h.b16 %v5291
    %v5829 = vunpack.c.l.b16 %v5292
    %v5830 = vunpack.c.h.b16 %v5292
    %v5831 = vunpack.c.l.b16 %v5293
    %v5832 = vunpack.c.h.b16 %v5293
    %v5833 = vunpack.c.l.b16 %v5294
    %v5834 = vunpack.c.h.b16 %v5294
    %v5835 = vunpack.c.l.b16 %v5295
    %v5836 = vunpack.c.h.b16 %v5295
    %v5837 = vunpack.c.l.b16 %v5296
    %v5838 = vunpack.c.h.b16 %v5296
    %v5839 = vunpack.c.l.b16 %v5297
    %v5840 = vunpack.c.h.b16 %v5297
    %v5841 = vunpack.c.l.b16 %v5298
    %v5842 = vunpack.c.h.b16 %v5298
    %v5843 = vunpack.c.l.b16 %v5299
    %v5844 = vunpack.c.h.b16 %v5299
    %v5845 = vunpack.c.l.b16 %v5300
    %v5846 = vunpack.c.h.b16 %v5300
    %v5847 = vunpack.c.l.b16 %v5301
    %v5848 = vunpack.c.h.b16 %v5301
    %v5849 = vunpack.c.l.b16 %v5302
    %v5850 = vunpack.c.h.b16 %v5302
    %v5851 = vunpack.c.l.b16 %v5303
    %v5852 = vunpack.c.h.b16 %v5303
    %v5853 = vunpack.c.l.b16 %v5304
    %v5854 = vunpack.c.h.b16 %v5304
    %v5855 = vunpack.c.l.b16 %v5305
    %v5856 = vunpack.c.h.b16 %v5305
    %v5857 = vunpack.c.l.b16 %v5306
    %v5858 = vunpack.c.h.b16 %v5306
    %v5859 = vunpack.c.l.b16 %v5307
    %v5860 = vunpack.c.h.b16 %v5307
    %v5861 = vunpack.c.l.b16 %v5308
    %v5862 = vunpack.c.h.b16 %v5308
    %v5863 = vunpack.c.l.b16 %v5309
    %v5864 = vunpack.c.h.b16 %v5309
    %v5865 = vunpack.c.l.b16 %v5310
    %v5866 = vunpack.c.h.b16 %v5310
    %v5867 = vunpack.c.l.b16 %v5311
    %v5868 = vunpack.c.h.b16 %v5311
    %v5869 = vunpack.c.l.b16 %v5312
    %v5870 = vunpack.c.h.b16 %v5312
    %v5871 = vunpack.c.l.b16 %v5313
    %v5872 = vunpack.c.h.b16 %v5313
    %v5873 = vunpack.c.l.b16 %v5314
    %v5874 = vunpack.c.h.b16 %v5314
    %v5875 = vunpack.c.l.b16 %v5315
    %v5876 = vunpack.c.h.b16 %v5315
    %v5877 = vunpack.c.l.b16 %v5316
    %v5878 = vunpack.c.h.b16 %v5316
    %v5879 = vunpack.c.l.b16 %v5317
    %v5880 = vunpack.c.h.b16 %v5317
    %v5881 = vunpack.c.l.b16 %v5318
    %v5882 = vunpack.c.h.b16 %v5318
    %v5883 = vunpack.c.l.b16 %v5319
    %v5884 = vunpack.c.h.b16 %v5319
    %v5885 = vunpack.c.l.b16 %v5320
    %v5886 = vunpack.c.h.b16 %v5320
    %v5887 = vunpack.c.l.b16 %v5321
    %v5888 = vunpack.c.h.b16 %v5321
    %v5889 = vunpack.c.l.b16 %v5322
    %v5890 = vunpack.c.h.b16 %v5322
    %v5891 = vunpack.c.l.b16 %v5323
    %v5892 = vunpack.c.h.b16 %v5323
    %v5893 = vunpack.c.l.b16 %v5324
    %v5894 = vunpack.c.h.b16 %v5324
    %v5895 = vunpack.c.l.b16 %v5325
    %v5896 = vunpack.c.h.b16 %v5325
    %v5897 = vunpack.c.l.b16 %v5326
    %v5898 = vunpack.c.h.b16 %v5326
    %v5899 = vunpack.c.l.b16 %v5327
    %v5900 = vunpack.c.h.b16 %v5327
    %v5901 = vunpack.c.l.b16 %v5328
    %v5902 = vunpack.c.h.b16 %v5328
    %v5903 = vunpack.c.l.b16 %v5329
    %v5904 = vunpack.c.h.b16 %v5329
    %v5905 = vunpack.c.l.b16 %v5330
    %v5906 = vunpack.c.h.b16 %v5330
    %v5907 = vunpack.c.l.b16 %v5331
    %v5908 = vunpack.c.h.b16 %v5331
    %v5909 = vunpack.c.l.b16 %v5332
    %v5910 = vunpack.c.h.b16 %v5332
    %v5911 = vunpack.c.l.b16 %v5333
    %v5912 = vunpack.c.h.b16 %v5333
    %v5913 = vunpack.c.l.b16 %v5334
    %v5914 = vunpack.c.h.b16 %v5334
    %v5915 = vunpack.c.l.b16 %v5335
    %v5916 = vunpack.c.h.b16 %v5335
    %v5917 = vunpack.c.l.b16 %v5336
    %v5918 = vunpack.c.h.b16 %v5336
    %v5919 = vunpack.c.l.b16 %v5337
    %v5920 = vunpack.c.h.b16 %v5337
    %v5921 = vunpack.c.l.b16 %v5338
    %v5922 = vunpack.c.h.b16 %v5338
    %v5923 = vunpack.c.l.b16 %v5339
    %v5924 = vunpack.c.h.b16 %v5339
    %v5925 = vunpack.c.l.b16 %v5340
    %v5926 = vunpack.c.h.b16 %v5340
    %v5927 = vunpack.c.l.b16 %v5341
    %v5928 = vunpack.c.h.b16 %v5341
    %v5929 = vunpack.c.l.b16 %v5342
    %v5930 = vunpack.c.h.b16 %v5342
    %v5931 = vunpack.c.l.b16 %v5343
    %v5932 = vunpack.c.h.b16 %v5343
    %v5933 = vunpack.c.l.b16 %v5344
    %v5934 = vunpack.c.h.b16 %v5344
    %v5935 = vunpack.c.l.b16 %v5345
    %v5936 = vunpack.c.h.b16 %v5345
    %v5937 = vunpack.c.l.b16 %v5346
    %v5938 = vunpack.c.h.b16 %v5346
    %v5939 = vunpack.c.l.b16 %v5347
    %v5940 = vunpack.c.h.b16 %v5347
    %v5941 = vunpack.c.l.b16 %v5348
    %v5942 = vunpack.c.h.b16 %v5348
    %v5943 = vunpack.c.l.b16 %v5349
    %v5944 = vunpack.c.h.b16 %v5349
    %v5945 = vunpack.c.l.b16 %v5350
    %v5946 = vunpack.c.h.b16 %v5350
    %v5947 = vunpack.c.l.b16 %v5351
    %v5948 = vunpack.c.h.b16 %v5351
    %v5949 = vunpack.c.l.b16 %v5352
    %v5950 = vunpack.c.h.b16 %v5352
    %v5951 = vunpack.c.l.b16 %v5353
    %v5952 = vunpack.c.h.b16 %v5353
    %v5953 = vunpack.c.l.b16 %v5354
    %v5954 = vunpack.c.h.b16 %v5354
    %v5955 = vunpack.c.l.b16 %v5355
    %v5956 = vunpack.c.h.b16 %v5355
    %v5957 = vunpack.c.l.b16 %v5356
    %v5958 = vunpack.c.h.b16 %v5356
    %v5959 = vunpack.c.l.b16 %v5357
    %v5960 = vunpack.c.h.b16 %v5357
    %v5961 = vunpack.c.l.b16 %v5358
    %v5962 = vunpack.c.h.b16 %v5358
    %v5963 = vunpack.c.l.b16 %v5359
    %v5964 = vunpack.c.h.b16 %v5359
    %v5965 = vunpack.c.l.b16 %v5360
    %v5966 = vunpack.c.h.b16 %v5360
    %v5967 = vunpack.c.l.b16 %v5361
    %v5968 = vunpack.c.h.b16 %v5361
    %v5969 = vunpack.c.l.b16 %v5362
    %v5970 = vunpack.c.h.b16 %v5362
    %v5971 = vunpack.c.l.b16 %v5363
    %v5972 = vunpack.c.h.b16 %v5363
    %v5973 = vunpack.c.l.b16 %v5364
    %v5974 = vunpack.c.h.b16 %v5364
    %v5975 = vunpack.c.l.b16 %v5365
    %v5976 = vunpack.c.h.b16 %v5365
    %v5977 = vunpack.c.l.b16 %v5366
    %v5978 = vunpack.c.h.b16 %v5366
    %v5979 = vunpack.c.l.b16 %v5367
    %v5980 = vunpack.c.h.b16 %v5367
    %v5981 = vunpack.c.l.b16 %v5368
    %v5982 = vunpack.c.h.b16 %v5368
    %v5983 = vunpack.c.l.b16 %v5369
    %v5984 = vunpack.c.h.b16 %v5369
    %v5985 = vunpack.c.l.b16 %v5370
    %v5986 = vunpack.c.h.b16 %v5370
    %v5987 = vunpack.c.l.b16 %v5371
    %v5988 = vunpack.c.h.b16 %v5371
    %v5989 = vunpack.c.l.b16 %v5372
    %v5990 = vunpack.c.h.b16 %v5372
    %v5991 = vunpack.c.l.b16 %v5373
    %v5992 = vunpack.c.h.b16 %v5373
    %v5993 = vunpack.c.l.b16 %v5374
    %v5994 = vunpack.c.h.b16 %v5374
    %v5995 = vunpack.c.l.b16 %v5375
    %v5996 = vunpack.c.h.b16 %v5375
    %v5997 = vunpack.c.l.b16 %v5376
    %v5998 = vunpack.c.h.b16 %v5376
    %v5999 = vunpack.c.l.b16 %v5377
    %v6000 = vunpack.c.h.b16 %v5377
    %v6001 = vunpack.c.l.b16 %v5378
    %v6002 = vunpack.c.h.b16 %v5378
    %v6003 = vunpack.c.l.b16 %v5379
    %v6004 = vunpack.c.h.b16 %v5379
    %v6005 = vunpack.c.l.b16 %v5380
    %v6006 = vunpack.c.h.b16 %v5380
    %v6007 = vunpack.c.l.b16 %v5381
    %v6008 = vunpack.c.h.b16 %v5381
    %v6009 = vunpack.c.l.b16 %v5382
    %v6010 = vunpack.c.h.b16 %v5382
    %v6011 = vunpack.c.l.b16 %v5383
    %v6012 = vunpack.c.h.b16 %v5383
    %v6013 = vunpack.c.l.b16 %v5384
    %v6014 = vunpack.c.h.b16 %v5384
    %v6015 = vunpack.c.l.b16 %v5385
    %v6016 = vunpack.c.h.b16 %v5385
    %v6017 = vunpack.c.l.b16 %v5386
    %v6018 = vunpack.c.h.b16 %v5386
    %v6019 = vunpack.c.l.b16 %v5387
    %v6020 = vunpack.c.h.b16 %v5387
    %v6021 = vunpack.c.l.b16 %v5388
    %v6022 = vunpack.c.h.b16 %v5388
    %v6023 = vunpack.c.l.b16 %v5389
    %v6024 = vunpack.c.h.b16 %v5389
    %v6025 = vunpack.c.l.b16 %v5390
    %v6026 = vunpack.c.h.b16 %v5390
    %v6027 = vunpack.c.l.b16 %v5391
    %v6028 = vunpack.c.h.b16 %v5391
    %v6029 = vunpack.c.l.b16 %v5392
    %v6030 = vunpack.c.h.b16 %v5392
    %v6031 = vunpack.c.l.b16 %v5393
    %v6032 = vunpack.c.h.b16 %v5393
    %v6033 = vunpack.c.l.b16 %v5394
    %v6034 = vunpack.c.h.b16 %v5394
    %v6035 = vunpack.c.l.b16 %v5395
    %v6036 = vunpack.c.h.b16 %v5395
    %v6037 = vunpack.c.l.b16 %v5396
    %v6038 = vunpack.c.h.b16 %v5396
    %v6039 = vunpack.c.l.b16 %v5397
    %v6040 = vunpack.c.h.b16 %v5397
    %v6041 = vunpack.c.l.b16 %v5398
    %v6042 = vunpack.c.h.b16 %v5398
    %v6043 = vunpack.c.l.b16 %v5399
    %v6044 = vunpack.c.h.b16 %v5399
    %v6045 = vunpack.c.l.b16 %v5400
    %v6046 = vunpack.c.h.b16 %v5400
    %v6047 = vunpack.c.l.b16 %v5401
    %v6048 = vunpack.c.h.b16 %v5401
    %v6049 = vunpack.c.l.b16 %v5402
    %v6050 = vunpack.c.h.b16 %v5402
    %v6051 = vunpack.c.l.b16 %v5403
    %v6052 = vunpack.c.h.b16 %v5403
    %v6053 = vunpack.c.l.b16 %v5404
    %v6054 = vunpack.c.h.b16 %v5404
    %v6055 = vunpack.c.l.b16 %v5405
    %v6056 = vunpack.c.h.b16 %v5405
    %v6057 = vunpack.c.l.b16 %v5406
    %v6058 = vunpack.c.h.b16 %v5406
    %v6059 = vunpack.c.l.b16 %v5407
    %v6060 = vunpack.c.h.b16 %v5407
    %v6061 = vunpack.c.l.b16 %v5408
    %v6062 = vunpack.c.h.b16 %v5408
    %v6063 = vunpack.c.l.b16 %v5409
    %v6064 = vunpack.c.h.b16 %v5409
    %v6065 = vunpack.c.l.b16 %v5410
    %v6066 = vunpack.c.h.b16 %v5410
    %v6067 = vunpack.c.l.b16 %v5411
    %v6068 = vunpack.c.h.b16 %v5411
    %v6069 = vunpack.c.l.b16 %v5412
    %v6070 = vunpack.c.h.b16 %v5412
    %v6071 = vunpack.c.l.b16 %v5413
    %v6072 = vunpack.c.h.b16 %v5413
    %v6073 = vunpack.c.l.b16 %v5414
    %v6074 = vunpack.c.h.b16 %v5414
    %v6075 = vunpack.c.l.b16 %v5415
    %v6076 = vunpack.c.h.b16 %v5415
    %v6077 = vunpack.c.l.b16 %v5416
    %v6078 = vunpack.c.h.b16 %v5416
    %v6079 = vunpack.c.l.b16 %v5417
    %v6080 = vunpack.c.h.b16 %v5417
    %v6081 = vunpack.c.l.b16 %v5418
    %v6082 = vunpack.c.h.b16 %v5418
    %v6083 = vunpack.c.l.b16 %v5419
    %v6084 = vunpack.c.h.b16 %v5419
    %v6085 = vunpack.c.l.b16 %v5420
    %v6086 = vunpack.c.h.b16 %v5420
    %v6087 = vunpack.c.l.b16 %v5421
    %v6088 = vunpack.c.h.b16 %v5421
    %v6089 = vunpack.c.l.b16 %v5422
    %v6090 = vunpack.c.h.b16 %v5422
    %v6091 = vunpack.c.l.b16 %v5423
    %v6092 = vunpack.c.h.b16 %v5423
    %v6093 = vunpack.c.l.b16 %v5424
    %v6094 = vunpack.c.h.b16 %v5424
    %v6095 = vunpack.c.l.b16 %v5425
    %v6096 = vunpack.c.h.b16 %v5425
    %v6097 = vunpack.c.l.b16 %v5426
    %v6098 = vunpack.c.h.b16 %v5426
    %v6099 = vunpack.c.l.b16 %v5427
    %v6100 = vunpack.c.h.b16 %v5427
    %v6101 = vunpack.c.l.b16 %v5428
    %v6102 = vunpack.c.h.b16 %v5428
    %v6103 = vunpack.c.l.b16 %v5429
    %v6104 = vunpack.c.h.b16 %v5429
    %v6105 = vunpack.c.l.b16 %v5430
    %v6106 = vunpack.c.h.b16 %v5430
    %v6107 = vunpack.c.l.b16 %v5431
    %v6108 = vunpack.c.h.b16 %v5431
    %v6109 = vunpack.c.l.b16 %v5432
    %v6110 = vunpack.c.h.b16 %v5432
    %v6111 = vunpack.c.l.b16 %v5433
    %v6112 = vunpack.c.h.b16 %v5433
    %v6113 = vunpack.c.l.b16 %v5434
    %v6114 = vunpack.c.h.b16 %v5434
    %v6115 = vunpack.c.l.b16 %v5435
    %v6116 = vunpack.c.h.b16 %v5435
    %v6117 = vunpack.c.l.b16 %v5436
    %v6118 = vunpack.c.h.b16 %v5436
    %v6119 = vunpack.c.l.b16 %v5437
    %v6120 = vunpack.c.h.b16 %v5437
    %v6121 = vunpack.c.l.b16 %v5438
    %v6122 = vunpack.c.h.b16 %v5438
    %v6123 = vunpack.c.l.b16 %v5439
    %v6124 = vunpack.c.h.b16 %v5439
    %v6125 = vunpack.c.l.b16 %v5440
    %v6126 = vunpack.c.h.b16 %v5440
    %v6127 = vunpack.c.l.b16 %v5441
    %v6128 = vunpack.c.h.b16 %v5441
    %v6129 = vunpack.c.l.b16 %v5442
    %v6130 = vunpack.c.h.b16 %v5442
    %v6131 = vunpack.c.l.b16 %v5443
    %v6132 = vunpack.c.h.b16 %v5443
    %v6133 = vunpack.c.l.b16 %v5444
    %v6134 = vunpack.c.h.b16 %v5444
    %v6135 = vunpack.c.l.b16 %v5445
    %v6136 = vunpack.c.h.b16 %v5445
    %v6137 = vunpack.c.l.b16 %v5446
    %v6138 = vunpack.c.h.b16 %v5446
    %v6139 = vunpack.c.l.b16 %v5447
    %v6140 = vunpack.c.h.b16 %v5447
    %v6141 = vunpack.c.l.b16 %v5448
    %v6142 = vunpack.c.h.b16 %v5448
    %v6143 = vpack.c.b16 %v5699, %v5695
    %v6144 = vpack.c.b16 %v5700, %v5696
    %v6145 = vpack.c.b16 %v5701, %v5697
    %v6146 = vpack.c.b16 %v5702, %v5698
    %v6147 = vpack.c.b16 %v5707, %v5703
    %v6148 = vpack.c.b16 %v5708, %v5704
    %v6149 = vpack.c.b16 %v5709, %v5705
    %v6150 = vpack.c.b16 %v5710, %v5706
    %v6151 = vpack.c.b16 %v5715, %v5711
    %v6152 = vpack.c.b16 %v5716, %v5712
    %v6153 = vpack.c.b16 %v5717, %v5713
    %v6154 = vpack.c.b16 %v5718, %v5714
    %v6155 = vpack.c.b16 %v5723, %v5719
    %v6156 = vpack.c.b16 %v5724, %v5720
    %v6157 = vpack.c.b16 %v5725, %v5721
    %v6158 = vpack.c.b16 %v5726, %v5722
    %v6159 = vpack.c.b16 %v5731, %v5727
    %v6160 = vpack.c.b16 %v5732, %v5728
    %v6161 = vpack.c.b16 %v5733, %v5729
    %v6162 = vpack.c.b16 %v5734, %v5730
    %v6163 = vpack.c.b16 %v5739, %v5735
    %v6164 = vpack.c.b16 %v5740, %v5736
    %v6165 = vpack.c.b16 %v5741, %v5737
    %v6166 = vpack.c.b16 %v5742, %v5738
    %v6167 = vpack.c.b16 %v5747, %v5743
    %v6168 = vpack.c.b16 %v5748, %v5744
    %v6169 = vpack.c.b16 %v5749, %v5745
    %v6170 = vpack.c.b16 %v5750, %v5746
    %v6171 = vpack.c.b16 %v5755, %v5751
    %v6172 = vpack.c.b16 %v5756, %v5752
    %v6173 = vpack.c.b16 %v5757, %v5753
    %v6174 = vpack.c.b16 %v5758, %v5754
    %v6175 = vpack.c.b16 %v5763, %v5759
    %v6176 = vpack.c.b16 %v5764, %v5760
    %v6177 = vpack.c.b16 %v5765, %v5761
    %v6178 = vpack.c.b16 %v5766, %v5762
    %v6179 = vpack.c.b16 %v5771, %v5767
    %v6180 = vpack.c.b16 %v5772, %v5768
    %v6181 = vpack.c.b16 %v5773, %v5769
    %v6182 = vpack.c.b16 %v5774, %v5770
    %v6183 = vpack.c.b16 %v5779, %v5775
    %v6184 = vpack.c.b16 %v5780, %v5776
    %v6185 = vpack.c.b16 %v5781, %v5777
    %v6186 = vpack.c.b16 %v5782, %v5778
    %v6187 = vpack.c.b16 %v5787, %v5783
    %v6188 = vpack.c.b16 %v5788, %v5784
    %v6189 = vpack.c.b16 %v5789, %v5785
    %v6190 = vpack.c.b16 %v5790, %v5786
    %v6191 = vpack.c.b16 %v5795, %v5791
    %v6192 = vpack.c.b16 %v5796, %v5792
    %v6193 = vpack.c.b16 %v5797, %v5793
    %v6194 = vpack.c.b16 %v5798, %v5794
    %v6195 = vpack.c.b16 %v5803, %v5799
    %v6196 = vpack.c.b16 %v5804, %v5800
    %v6197 = vpack.c.b16 %v5805, %v5801
    %v6198 = vpack.c.b16 %v5806, %v5802
    %v6199 = vpack.c.b16 %v5811, %v5807
    %v6200 = vpack.c.b16 %v5812, %v5808
    %v6201 = vpack.c.b16 %v5813, %v5809
    %v6202 = vpack.c.b16 %v5814, %v5810
    %v6203 = vpack.c.b16 %v5819, %v5815
    %v6204 = vpack.c.b16 %v5820, %v5816
    %v6205 = vpack.c.b16 %v5821, %v5817
    %v6206 = vpack.c.b16 %v5822, %v5818
    %v6207 = vpack.c.b16 %v5827, %v5823
    %v6208 = vpack.c.b16 %v5828, %v5824
    %v6209 = vpack.c.b16 %v5829, %v5825
    %v6210 = vpack.c.b16 %v5830, %v5826
    %v6211 = vpack.c.b16 %v5835, %v5831
    %v6212 = vpack.c.b16 %v5836, %v5832
    %v6213 = vpack.c.b16 %v5837, %v5833
    %v6214 = vpack.c.b16 %v5838, %v5834
    %v6215 = vpack.c.b16 %v5843, %v5839
    %v6216 = vpack.c.b16 %v5844, %v5840
    %v6217 = vpack.c.b16 %v5845, %v5841
    %v6218 = vpack.c.b16 %v5846, %v5842
    %v6219 = vpack.c.b16 %v5851, %v5847
    %v6220 = vpack.c.b16 %v5852, %v5848
    %v6221 = vpack.c.b16 %v5853, %v5849
    %v6222 = vpack.c.b16 %v5854, %v5850
    %v6223 = vpack.c.b16 %v5859, %v5855
    %v6224 = vpack.c.b16 %v5860, %v5856
    %v6225 = vpack.c.b16 %v5861, %v5857
    %v6226 = vpack.c.b16 %v5862, %v5858
    %v6227 = vpack.c.b16 %v5867, %v5863
    %v6228 = vpack.c.b16 %v5868, %v5864
    %v6229 = vpack.c.b16 %v5869, %v5865
    %v6230 = vpack.c.b16 %v5870, %v5866
    %v6231 = vpack.c.b16 %v5875, %v5871
    %v6232 = vpack.c.b16 %v5876, %v5872
    %v6233 = vpack.c.b16 %v5877, %v5873
    %v6234 = vpack.c.b16 %v5878, %v5874
    %v6235 = vpack.c.b16 %v5883, %v5879
    %v6236 = vpack.c.b16 %v5884, %v5880
    %v6237 = vpack.c.b16 %v5885, %v5881
    %v6238 = vpack.c.b16 %v5886, %v5882
    %v6239 = vpack.c.b16 %v5891, %v5887
    %v6240 = vpack.c.b16 %v5892, %v5888
    %v6241 = vpack.c.b16 %v5893, %v5889
    %v6242 = vpack.c.b16 %v5894, %v5890
    %v6243 = vpack.c.b16 %v5899, %v5895
    %v6244 = vpack.c.b16 %v5900, %v5896
    %v6245 = vpack.c.b16 %v5901, %v5897
    %v6246 = vpack.c.b16 %v5902, %v5898
    %v6247 = vpack.c.b16 %v5907, %v5903
    %v6248 = vpack.c.b16 %v5908, %v5904
    %v6249 = vpack.c.b16 %v5909, %v5905
    %v6250 = vpack.c.b16 %v5910, %v5906
    %v6251 = vpack.c.b16 %v5915, %v5911
    %v6252 = vpack.c.b16 %v5916, %v5912
    %v6253 = vpack.c.b16 %v5917, %v5913
    %v6254 = vpack.c.b16 %v5918, %v5914
    %v6255 = vpack.c.b16 %v5923, %v5919
    %v6256 = vpack.c.b16 %v5924, %v5920
    %v6257 = vpack.c.b16 %v5925, %v5921
    %v6258 = vpack.c.b16 %v5926, %v5922
    %v6259 = vpack.c.b16 %v5931, %v5927
    %v6260 = vpack.c.b16 %v5932, %v5928
    %v6261 = vpack.c.b16 %v5933, %v5929
    %v6262 = vpack.c.b16 %v5934, %v5930
    %v6263 = vpack.c.b16 %v5939, %v5935
    %v6264 = vpack.c.b16 %v5940, %v5936
    %v6265 = vpack.c.b16 %v5941, %v5937
    %v6266 = vpack.c.b16 %v5942, %v5938
    %v6267 = vpack.c.b16 %v5947, %v5943
    %v6268 = vpack.c.b16 %v5948, %v5944
    %v6269 = vpack.c.b16 %v5949, %v5945
    %v6270 = vpack.c.b16 %v5950, %v5946
    %v6271 = vpack.c.b16 %v5955, %v5951
    %v6272 = vpack.c.b16 %v5956, %v5952
    %v6273 = vpack.c.b16 %v5957, %v5953
    %v6274 = vpack.c.b16 %v5958, %v5954
    %v6275 = vpack.c.b16 %v5963, %v5959
    %v6276 = vpack.c.b16 %v5964, %v5960
    %v6277 = vpack.c.b16 %v5965, %v5961
    %v6278 = vpack.c.b16 %v5966, %v5962
    %v6279 = vpack.c.b16 %v5971, %v5967
    %v6280 = vpack.c.b16 %v5972, %v5968
    %v6281 = vpack.c.b16 %v5973, %v5969
    %v6282 = vpack.c.b16 %v5974, %v5970
    %v6283 = vpack.c.b16 %v5979, %v5975
    %v6284 = vpack.c.b16 %v5980, %v5976
    %v6285 = vpack.c.b16 %v5981, %v5977
    %v6286 = vpack.c.b16 %v5982, %v5978
    %v6287 = vpack.c.b16 %v5987, %v5983
    %v6288 = vpack.c.b16 %v5988, %v5984
    %v6289 = vpack.c.b16 %v5989, %v5985
    %v6290 = vpack.c.b16 %v5990, %v5986
    %v6291 = vpack.c.b16 %v5995, %v5991
    %v6292 = vpack.c.b16 %v5996, %v5992
    %v6293 = vpack.c.b16 %v5997, %v5993
    %v6294 = vpack.c.b16 %v5998, %v5994
    %v6295 = vpack.c.b16 %v6003, %v5999
    %v6296 = vpack.c.b16 %v6004, %v6000
    %v6297 = vpack.c.b16 %v6005, %v6001
    %v6298 = vpack.c.b16 %v6006, %v6002
    %v6299 = vpack.c.b16 %v6011, %v6007
    %v6300 = vpack.c.b16 %v6012, %v6008
    %v6301 = vpack.c.b16 %v6013, %v6009
    %v6302 = vpack.c.b16 %v6014, %v6010
    %v6303 = vpack.c.b16 %v6019, %v6015
    %v6304 = vpack.c.b16 %v6020, %v6016
    %v6305 = vpack.c.b16 %v6021, %v6017
    %v6306 = vpack.c.b16 %v6022, %v6018
    %v6307 = vpack.c.b16 %v6027, %v6023
    %v6308 = vpack.c.b16 %v6028, %v6024
    %v6309 = vpack.c.b16 %v6029, %v6025
    %v6310 = vpack.c.b16 %v6030, %v6026
    %v6311 = vpack.c.b16 %v6035, %v6031
    %v6312 = vpack.c.b16 %v6036, %v6032
    %v6313 = vpack.c.b16 %v6037, %v6033
    %v6314 = vpack.c.b16 %v6038, %v6034
    %v6315 = vpack.c.b16 %v6043, %v6039
    %v6316 = vpack.c.b16 %v6044, %v6040
    %v6317 = vpack.c.b16 %v6045, %v6041
    %v6318 = vpack.c.b16 %v6046, %v6042
    %v6319 = vpack.c.b16 %v6051, %v6047
    %v6320 = vpack.c.b16 %v6052, %v6048
    %v6321 = vpack.c.b16 %v6053, %v6049
    %v6322 = vpack.c.b16 %v6054, %v6050
    %v6323 = vpack.c.b16 %v6059, %v6055
    %v6324 = vpack.c.b16 %v6060, %v6056
    %v6325 = vpack.c.b16 %v6061, %v6057
    %v6326 = vpack.c.b16 %v6062, %v6058
    %v6327 = vpack.c.b16 %v6067, %v6063
    %v6328 = vpack.c.b16 %v6068, %v6064
    %v6329 = vpack.c.b16 %v6069, %v6065
    %v6330 = vpack.c.b16 %v6070, %v6066
    %v6331 = vpack.c.b16 %v6075, %v6071
    %v6332 = vpack.c.b16 %v6076, %v6072
    %v6333 = vpack.c.b16 %v6077, %v6073
    %v6334 = vpack.c.b16 %v6078, %v6074
    %v6335 = vpack.c.b16 %v6083, %v6079
    %v6336 = vpack.c.b16 %v6084, %v6080
    %v6337 = vpack.c.b16 %v6085, %v6081
    %v6338 = vpack.c.b16 %v6086, %v6082
    %v6339 = vpack.c.b16 %v6091, %v6087
    %v6340 = vpack.c.b16 %v6092, %v6088
    %v6341 = vpack.c.b16 %v6093, %v6089
    %v6342 = vpack.c.b16 %v6094, %v6090
    %v6343 = vpack.c.b16 %v6099, %v6095
    %v6344 = vpack.c.b16 %v6100, %v6096
    %v6345 = vpack.c.b16 %v6101, %v6097
    %v6346 = vpack.c.b16 %v6102, %v6098
    %v6347 = vpack.c.b16 %v6107, %v6103
    %v6348 = vpack.c.b16 %v6108, %v6104
    %v6349 = vpack.c.b16 %v6109, %v6105
    %v6350 = vpack.c.b16 %v6110, %v6106
    %v6351 = vpack.c.b16 %v6115, %v6111
    %v6352 = vpack.c.b16 %v6116, %v6112
    %v6353 = vpack.c.b16 %v6117, %v6113
    %v6354 = vpack.c.b16 %v6118, %v6114
    %v6355 = vpack.c.b16 %v6123, %v6119
    %v6356 = vpack.c.b16 %v6124, %v6120
    %v6357 = vpack.c.b16 %v6125, %v6121
    %v6358 = vpack.c.b16 %v6126, %v6122
    %v6359 = vpack.c.b16 %v6131, %v6127
    %v6360 = vpack.c.b16 %v6132, %v6128
    %v6361 = vpack.c.b16 %v6133, %v6129
    %v6362 = vpack.c.b16 %v6134, %v6130
    %v6363 = vpack.c.b16 %v6139, %v6135
    %v6364 = vpack.c.b16 %v6140, %v6136
    %v6365 = vpack.c.b16 %v6141, %v6137
    %v6366 = vpack.c.b16 %v6142, %v6138
    %6591 = vmatprep.subr.bf16.mxu0 %v6172
    %6592 = vmatpush1.bf16.msra.mxu0 %v6171
    %6593 = vmatprep.subr.bf16.mxu0 %v6168
    %6594 = vmatpush1.bf16.msra.mxu0 %v6167
    %6595 = vmatprep.subr.bf16.mxu0 %v6164
    %6596 = vmatpush1.bf16.msra.mxu0 %v6163
    %6597 = vmatprep.subr.bf16.mxu0 %v6160
    %6598 = vmatpush1.bf16.msra.mxu0 %v6159
    %6599 = vmatprep.subr.bf16.mxu0 %v6156
    %6600 = vmatpush1.bf16.msra.mxu0 %v6155
    %6601 = vmatprep.subr.bf16.mxu0 %v6152
    %6602 = vmatpush1.bf16.msra.mxu0 %v6151
    %6603 = vmatprep.subr.bf16.mxu0 %v6148
    %6604 = vmatpush1.bf16.msra.mxu0 %v6147
    %6605 = vmatprep.subr.bf16.mxu0 %v6144
    %6606 = vmatpush1.bf16.msra.mxu0 %v6143
    %6607 = vmatprep.subr.bf16.mxu0 %v6204
    %6608 = vmatpush2.bf16.msra.mxu0 %v6203
    %6609 = vmatprep.subr.bf16.mxu0 %v6200
    %6610 = vmatpush2.bf16.msra.mxu0 %v6199
    %6611 = vmatprep.subr.bf16.mxu0 %v6196
    %6612 = vmatpush2.bf16.msra.mxu0 %v6195
    %6613 = vmatprep.subr.bf16.mxu0 %v6192
    %6614 = vmatpush2.bf16.msra.mxu0 %v6191
    %6615 = vmatprep.subr.bf16.mxu0 %v6188
    %6616 = vmatpush2.bf16.msra.mxu0 %v6187
    %6617 = vmatprep.subr.bf16.mxu0 %v6184
    %6618 = vmatpush2.bf16.msra.mxu0 %v6183
    %6619 = vmatprep.subr.bf16.mxu0 %v6180
    %6620 = vmatpush2.bf16.msra.mxu0 %v6179
    %6621 = vmatprep.subr.bf16.mxu0 %v6176
    %6622 = vmatpush2.bf16.msra.mxu0 %v6175
    %6623 = vmatprep.mubr.bf16.mxu0 %v5219
    %6624 = vmatmul.mubr.bf16.gmra.mxu0 %v5218
    %v6625 = vpop.f32.mrf.mxu0
    %v6626 = vadd.f32 %v5454, %v6625
    %v6627 = vpop.f32.mrf.mxu0
    %v6628 = vadd.f32 %v5458, %v6627
    %v6629 = vpop.f32.mrf.mxu0
    %v6630 = vpop.f32.mrf.mxu0
    %6631 = vdwg.mxu0
    %6632 = vmatprep.subr.bf16.mxu0 %v6236
    %6633 = vmatpush1.bf16.msra.mxu0 %v6235
    %6634 = vmatprep.subr.bf16.mxu0 %v6232
    %6635 = vmatpush1.bf16.msra.mxu0 %v6231
    %6636 = vmatprep.subr.bf16.mxu0 %v6228
    %6637 = vmatpush1.bf16.msra.mxu0 %v6227
    %6638 = vmatprep.subr.bf16.mxu0 %v6224
    %6639 = vmatpush1.bf16.msra.mxu0 %v6223
    %6640 = vmatprep.subr.bf16.mxu0 %v6220
    %6641 = vmatpush1.bf16.msra.mxu0 %v6219
    %6642 = vmatprep.subr.bf16.mxu0 %v6216
    %6643 = vmatpush1.bf16.msra.mxu0 %v6215
    %6644 = vmatprep.subr.bf16.mxu0 %v6212
    %6645 = vmatpush1.bf16.msra.mxu0 %v6211
    %6646 = vmatprep.subr.bf16.mxu0 %v6208
    %6647 = vmatpush1.bf16.msra.mxu0 %v6207
    %6648 = vmatprep.subr.bf16.mxu0 %v6268
    %6649 = vmatpush2.bf16.msra.mxu0 %v6267
    %6650 = vmatprep.subr.bf16.mxu0 %v6264
    %6651 = vmatpush2.bf16.msra.mxu0 %v6263
    %6652 = vmatprep.subr.bf16.mxu0 %v6260
    %6653 = vmatpush2.bf16.msra.mxu0 %v6259
    %6654 = vmatprep.subr.bf16.mxu0 %v6256
    %6655 = vmatpush2.bf16.msra.mxu0 %v6255
    %6656 = vmatprep.subr.bf16.mxu0 %v6252
    %6657 = vmatpush2.bf16.msra.mxu0 %v6251
    %6658 = vmatprep.subr.bf16.mxu0 %v6248
    %6659 = vmatpush2.bf16.msra.mxu0 %v6247
    %6660 = vmatprep.subr.bf16.mxu0 %v6244
    %6661 = vmatpush2.bf16.msra.mxu0 %v6243
    %6662 = vmatprep.subr.bf16.mxu0 %v6240
    %6663 = vmatpush2.bf16.msra.mxu0 %v6239
    %6664 = vmatprep.mubr.bf16.mxu0 %v5221
    %6665 = vmatmul.mubr.bf16.gmra.mxu0 %v5220
    %v6666 = vpop.f32.mrf.mxu0
    %v6667 = vadd.f32 %v6626, %v6666
    %v6668 = vpop.f32.mrf.mxu0
    %v6669 = vadd.f32 %v6628, %v6668
    %v6670 = vpop.f32.mrf.mxu0
    %v6671 = vpop.f32.mrf.mxu0
    %6672 = vdwg.mxu0
    %6673 = vmatprep.subr.bf16.mxu0 %v6300
    %6674 = vmatpush1.bf16.msra.mxu0 %v6299
    %6675 = vmatprep.subr.bf16.mxu0 %v6296
    %6676 = vmatpush1.bf16.msra.mxu0 %v6295
    %6677 = vmatprep.subr.bf16.mxu0 %v6292
    %6678 = vmatpush1.bf16.msra.mxu0 %v6291
    %6679 = vmatprep.subr.bf16.mxu0 %v6288
    %6680 = vmatpush1.bf16.msra.mxu0 %v6287
    %6681 = vmatprep.subr.bf16.mxu0 %v6284
    %6682 = vmatpush1.bf16.msra.mxu0 %v6283
    %6683 = vmatprep.subr.bf16.mxu0 %v6280
    %6684 = vmatpush1.bf16.msra.mxu0 %v6279
    %6685 = vmatprep.subr.bf16.mxu0 %v6276
    %6686 = vmatpush1.bf16.msra.mxu0 %v6275
    %6687 = vmatprep.subr.bf16.mxu0 %v6272
    %6688 = vmatpush1.bf16.msra.mxu0 %v6271
    %6689 = vmatprep.subr.bf16.mxu0 %v6332
    %6690 = vmatpush2.bf16.msra.mxu0 %v6331
    %6691 = vmatprep.subr.bf16.mxu0 %v6328
    %6692 = vmatpush2.bf16.msra.mxu0 %v6327
    %6693 = vmatprep.subr.bf16.mxu0 %v6324
    %6694 = vmatpush2.bf16.msra.mxu0 %v6323
    %6695 = vmatprep.subr.bf16.mxu0 %v6320
    %6696 = vmatpush2.bf16.msra.mxu0 %v6319
    %6697 = vmatprep.subr.bf16.mxu0 %v6316
    %6698 = vmatpush2.bf16.msra.mxu0 %v6315
    %6699 = vmatprep.subr.bf16.mxu0 %v6312
    %6700 = vmatpush2.bf16.msra.mxu0 %v6311
    %6701 = vmatprep.subr.bf16.mxu0 %v6308
    %6702 = vmatpush2.bf16.msra.mxu0 %v6307
    %6703 = vmatprep.subr.bf16.mxu0 %v6304
    %6704 = vmatpush2.bf16.msra.mxu0 %v6303
    %6705 = vmatprep.mubr.bf16.mxu0 %v5223
    %6706 = vmatmul.mubr.bf16.gmra.mxu0 %v5222
    %v6707 = vpop.f32.mrf.mxu0
    %v6708 = vadd.f32 %v6667, %v6707
    %v6709 = vpop.f32.mrf.mxu0
    %v6710 = vadd.f32 %v6669, %v6709
    %v6711 = vpop.f32.mrf.mxu0
    %v6712 = vpop.f32.mrf.mxu0
    %6713 = vdwg.mxu0
    %6714 = vmatprep.subr.bf16.mxu0 %v6364
    %6715 = vmatpush1.bf16.msra.mxu0 %v6363
    %6716 = vmatprep.subr.bf16.mxu0 %v6360
    %6717 = vmatpush1.bf16.msra.mxu0 %v6359
    %6718 = vmatprep.subr.bf16.mxu0 %v6356
    %6719 = vmatpush1.bf16.msra.mxu0 %v6355
    %6720 = vmatprep.subr.bf16.mxu0 %v6352
    %6721 = vmatpush1.bf16.msra.mxu0 %v6351
    %6722 = vmatprep.subr.bf16.mxu0 %v6348
    %6723 = vmatpush1.bf16.msra.mxu0 %v6347
    %6724 = vmatprep.subr.bf16.mxu0 %v6344
    %6725 = vmatpush1.bf16.msra.mxu0 %v6343
    %6726 = vmatprep.subr.bf16.mxu0 %v6340
    %6727 = vmatpush1.bf16.msra.mxu0 %v6339
    %6728 = vmatprep.subr.bf16.mxu0 %v6336
    %6729 = vmatpush1.bf16.msra.mxu0 %v6335
    %6730 = vmatprep.subr.bf16.mxu0 0
    %6731 = vmatpush2.bf16.msra.mxu0 0
    %6732 = vmatprep.subr.bf16.mxu0 0
    %6733 = vmatpush2.bf16.msra.mxu0 0
    %6734 = vmatprep.subr.bf16.mxu0 0
    %6735 = vmatpush2.bf16.msra.mxu0 0
    %6736 = vmatprep.subr.bf16.mxu0 0
    %6737 = vmatpush2.bf16.msra.mxu0 0
    %6738 = vmatprep.subr.bf16.mxu0 0
    %6739 = vmatpush2.bf16.msra.mxu0 0
    %6740 = vmatprep.subr.bf16.mxu0 0
    %6741 = vmatpush2.bf16.msra.mxu0 0
    %6742 = vmatprep.subr.bf16.mxu0 0
    %6743 = vmatpush2.bf16.msra.mxu0 0
    %6744 = vmatprep.subr.bf16.mxu0 0
    %6745 = vmatpush2.bf16.msra.mxu0 0
    %6746 = vmatprep.mubr.bf16.mxu0 0
    %6747 = vmatmul.mubr.bf16.gmra.mxu0 %v5224
    %v6748 = vpop.f32.mrf.mxu0
    %v6749 = vadd.f32 %v6708, %v6748
    %v6750 = vpop.f32.mrf.mxu0
    %v6751 = vadd.f32 %v6710, %v6750
    %v6752 = vpop.f32.mrf.mxu0
    %v6753 = vpop.f32.mrf.mxu0
    %6754 = vdwg.mxu0
    %6755 = vmatprep.subr.bf16.mxu0 %v6174
    %6756 = vmatpush1.bf16.msra.mxu0 %v6173
    %6757 = vmatprep.subr.bf16.mxu0 %v6170
    %6758 = vmatpush1.bf16.msra.mxu0 %v6169
    %6759 = vmatprep.subr.bf16.mxu0 %v6166
    %6760 = vmatpush1.bf16.msra.mxu0 %v6165
    %6761 = vmatprep.subr.bf16.mxu0 %v6162
    %6762 = vmatpush1.bf16.msra.mxu0 %v6161
    %6763 = vmatprep.subr.bf16.mxu0 %v6158
    %6764 = vmatpush1.bf16.msra.mxu0 %v6157
    %6765 = vmatprep.subr.bf16.mxu0 %v6154
    %6766 = vmatpush1.bf16.msra.mxu0 %v6153
    %6767 = vmatprep.subr.bf16.mxu0 %v6150
    %6768 = vmatpush1.bf16.msra.mxu0 %v6149
    %6769 = vmatprep.subr.bf16.mxu0 %v6146
    %6770 = vmatpush1.bf16.msra.mxu0 %v6145
    %6771 = vmatprep.subr.bf16.mxu0 %v6206
    %6772 = vmatpush2.bf16.msra.mxu0 %v6205
    %6773 = vmatprep.subr.bf16.mxu0 %v6202
    %6774 = vmatpush2.bf16.msra.mxu0 %v6201
    %6775 = vmatprep.subr.bf16.mxu0 %v6198
    %6776 = vmatpush2.bf16.msra.mxu0 %v6197
    %6777 = vmatprep.subr.bf16.mxu0 %v6194
    %6778 = vmatpush2.bf16.msra.mxu0 %v6193
    %6779 = vmatprep.subr.bf16.mxu0 %v6190
    %6780 = vmatpush2.bf16.msra.mxu0 %v6189
    %6781 = vmatprep.subr.bf16.mxu0 %v6186
    %6782 = vmatpush2.bf16.msra.mxu0 %v6185
    %6783 = vmatprep.subr.bf16.mxu0 %v6182
    %6784 = vmatpush2.bf16.msra.mxu0 %v6181
    %6785 = vmatprep.subr.bf16.mxu0 %v6178
    %6786 = vmatpush2.bf16.msra.mxu0 %v6177
    %6787 = vmatprep.mubr.bf16.mxu0 %v5219
    %6788 = vmatmul.mubr.bf16.gmra.mxu0 %v5218
    %v6789 = vpop.f32.mrf.mxu0
    %v6790 = vadd.f32 %v5462, %v6789
    %v6791 = vpop.f32.mrf.mxu0
    %v6792 = vadd.f32 %v5466, %v6791
    %v6793 = vpop.f32.mrf.mxu0
    %v6794 = vpop.f32.mrf.mxu0
    %6795 = vdwg.mxu0
    %6796 = vmatprep.subr.bf16.mxu0 %v6238
    %6797 = vmatpush1.bf16.msra.mxu0 %v6237
    %6798 = vmatprep.subr.bf16.mxu0 %v6234
    %6799 = vmatpush1.bf16.msra.mxu0 %v6233
    %6800 = vmatprep.subr.bf16.mxu0 %v6230
    %6801 = vmatpush1.bf16.msra.mxu0 %v6229
    %6802 = vmatprep.subr.bf16.mxu0 %v6226
    %6803 = vmatpush1.bf16.msra.mxu0 %v6225
    %6804 = vmatprep.subr.bf16.mxu0 %v6222
    %6805 = vmatpush1.bf16.msra.mxu0 %v6221
    %6806 = vmatprep.subr.bf16.mxu0 %v6218
    %6807 = vmatpush1.bf16.msra.mxu0 %v6217
    %6808 = vmatprep.subr.bf16.mxu0 %v6214
    %6809 = vmatpush1.bf16.msra.mxu0 %v6213
    %6810 = vmatprep.subr.bf16.mxu0 %v6210
    %6811 = vmatpush1.bf16.msra.mxu0 %v6209
    %6812 = vmatprep.subr.bf16.mxu0 %v6270
    %6813 = vmatpush2.bf16.msra.mxu0 %v6269
    %6814 = vmatprep.subr.bf16.mxu0 %v6266
    %6815 = vmatpush2.bf16.msra.mxu0 %v6265
    %6816 = vmatprep.subr.bf16.mxu0 %v6262
    %6817 = vmatpush2.bf16.msra.mxu0 %v6261
    %6818 = vmatprep.subr.bf16.mxu0 %v6258
    %6819 = vmatpush2.bf16.msra.mxu0 %v6257
    %6820 = vmatprep.subr.bf16.mxu0 %v6254
    %6821 = vmatpush2.bf16.msra.mxu0 %v6253
    %6822 = vmatprep.subr.bf16.mxu0 %v6250
    %6823 = vmatpush2.bf16.msra.mxu0 %v6249
    %6824 = vmatprep.subr.bf16.mxu0 %v6246
    %6825 = vmatpush2.bf16.msra.mxu0 %v6245
    %6826 = vmatprep.subr.bf16.mxu0 %v6242
    %6827 = vmatpush2.bf16.msra.mxu0 %v6241
    %6828 = vmatprep.mubr.bf16.mxu0 %v5221
    %6829 = vmatmul.mubr.bf16.gmra.mxu0 %v5220
    %v6830 = vpop.f32.mrf.mxu0
    %v6831 = vadd.f32 %v6790, %v6830
    %v6832 = vpop.f32.mrf.mxu0
    %v6833 = vadd.f32 %v6792, %v6832
    %v6834 = vpop.f32.mrf.mxu0
    %v6835 = vpop.f32.mrf.mxu0
    %6836 = vdwg.mxu0
    %6837 = vmatprep.subr.bf16.mxu0 %v6302
    %6838 = vmatpush1.bf16.msra.mxu0 %v6301
    %6839 = vmatprep.subr.bf16.mxu0 %v6298
    %6840 = vmatpush1.bf16.msra.mxu0 %v6297
    %6841 = vmatprep.subr.bf16.mxu0 %v6294
    %6842 = vmatpush1.bf16.msra.mxu0 %v6293
    %6843 = vmatprep.subr.bf16.mxu0 %v6290
    %6844 = vmatpush1.bf16.msra.mxu0 %v6289
    %6845 = vmatprep.subr.bf16.mxu0 %v6286
    %6846 = vmatpush1.bf16.msra.mxu0 %v6285
    %6847 = vmatprep.subr.bf16.mxu0 %v6282
    %6848 = vmatpush1.bf16.msra.mxu0 %v6281
    %6849 = vmatprep.subr.bf16.mxu0 %v6278
    %6850 = vmatpush1.bf16.msra.mxu0 %v6277
    %6851 = vmatprep.subr.bf16.mxu0 %v6274
    %6852 = vmatpush1.bf16.msra.mxu0 %v6273
    %6853 = vmatprep.subr.bf16.mxu0 %v6334
    %6854 = vmatpush2.bf16.msra.mxu0 %v6333
    %6855 = vmatprep.subr.bf16.mxu0 %v6330
    %6856 = vmatpush2.bf16.msra.mxu0 %v6329
    %6857 = vmatprep.subr.bf16.mxu0 %v6326
    %6858 = vmatpush2.bf16.msra.mxu0 %v6325
    %6859 = vmatprep.subr.bf16.mxu0 %v6322
    %6860 = vmatpush2.bf16.msra.mxu0 %v6321
    %6861 = vmatprep.subr.bf16.mxu0 %v6318
    %6862 = vmatpush2.bf16.msra.mxu0 %v6317
    %6863 = vmatprep.subr.bf16.mxu0 %v6314
    %6864 = vmatpush2.bf16.msra.mxu0 %v6313
    %6865 = vmatprep.subr.bf16.mxu0 %v6310
    %6866 = vmatpush2.bf16.msra.mxu0 %v6309
    %6867 = vmatprep.subr.bf16.mxu0 %v6306
    %6868 = vmatpush2.bf16.msra.mxu0 %v6305
    %6869 = vmatprep.mubr.bf16.mxu0 %v5223
    %6870 = vmatmul.mubr.bf16.gmra.mxu0 %v5222
    %v6871 = vpop.f32.mrf.mxu0
    %v6872 = vadd.f32 %v6831, %v6871
    %v6873 = vpop.f32.mrf.mxu0
    %v6874 = vadd.f32 %v6833, %v6873
    %v6875 = vpop.f32.mrf.mxu0
    %v6876 = vpop.f32.mrf.mxu0
    %6877 = vdwg.mxu0
    %6878 = vmatprep.subr.bf16.mxu0 %v6366
    %6879 = vmatpush1.bf16.msra.mxu0 %v6365
    %6880 = vmatprep.subr.bf16.mxu0 %v6362
    %6881 = vmatpush1.bf16.msra.mxu0 %v6361
    %6882 = vmatprep.subr.bf16.mxu0 %v6358
    %6883 = vmatpush1.bf16.msra.mxu0 %v6357
    %6884 = vmatprep.subr.bf16.mxu0 %v6354
    %6885 = vmatpush1.bf16.msra.mxu0 %v6353
    %6886 = vmatprep.subr.bf16.mxu0 %v6350
    %6887 = vmatpush1.bf16.msra.mxu0 %v6349
    %6888 = vmatprep.subr.bf16.mxu0 %v6346
    %6889 = vmatpush1.bf16.msra.mxu0 %v6345
    %6890 = vmatprep.subr.bf16.mxu0 %v6342
    %6891 = vmatpush1.bf16.msra.mxu0 %v6341
    %6892 = vmatprep.subr.bf16.mxu0 %v6338
    %6893 = vmatpush1.bf16.msra.mxu0 %v6337
    %6894 = vmatprep.subr.bf16.mxu0 0
    %6895 = vmatpush2.bf16.msra.mxu0 0
    %6896 = vmatprep.subr.bf16.mxu0 0
    %6897 = vmatpush2.bf16.msra.mxu0 0
    %6898 = vmatprep.subr.bf16.mxu0 0
    %6899 = vmatpush2.bf16.msra.mxu0 0
    %6900 = vmatprep.subr.bf16.mxu0 0
    %6901 = vmatpush2.bf16.msra.mxu0 0
    %6902 = vmatprep.subr.bf16.mxu0 0
    %6903 = vmatpush2.bf16.msra.mxu0 0
    %6904 = vmatprep.subr.bf16.mxu0 0
    %6905 = vmatpush2.bf16.msra.mxu0 0
    %6906 = vmatprep.subr.bf16.mxu0 0
    %6907 = vmatpush2.bf16.msra.mxu0 0
    %6908 = vmatprep.subr.bf16.mxu0 0
    %6909 = vmatpush2.bf16.msra.mxu0 0
    %6910 = vmatprep.mubr.bf16.mxu0 0
    %6911 = vmatmul.mubr.bf16.gmra.mxu0 %v5224
    %v6912 = vpop.f32.mrf.mxu0
    %v6913 = vadd.f32 %v6872, %v6912
    %v6914 = vpop.f32.mrf.mxu0
    %v6915 = vadd.f32 %v6874, %v6914
    %v6916 = vpop.f32.mrf.mxu0
    %v6917 = vpop.f32.mrf.mxu0
    %6918 = vdwg.mxu0
    %s6919 = sld [smem:[#allocation25 + $0x2]]
    %vm6920 = vcmp.ge.f32.partialorder %v6749, 0.0
    %vm6921 = vcmp.ge.f32.partialorder %v6751, 0.0
    %vm6922 = vcmp.ge.f32.partialorder %v6913, 0.0
    %vm6923 = vcmp.ge.f32.partialorder %v6915, 0.0
    %v6924 = vstv %s6919
    %v6925 = vmul.f32 %v6924, %v6749
    %v6926 = vmul.f32 %v6924, %v6751
    %v6927 = vmul.f32 %v6924, %v6913
    %v6928 = vmul.f32 %v6924, %v6915
    %v6929 = vsel %vm6920, %v6749, %v6925
    %v6930 = vsel %vm6921, %v6751, %v6926
    %v6931 = vsel %vm6922, %v6913, %v6927
    %v6932 = vsel %vm6923, %v6915, %v6928
    %v6933 = vpack.c.bf16 %v6929, %v6929
    %v6934 = vpack.c.bf16 %v6930, %v6930
    %v6935 = vpack.c.bf16 %v6931, %v6931
    %v6936 = vpack.c.bf16 %v6932, %v6932
    %v6937 = vld [vmem:[#allocation13] sm:$0xff]
    %v6938 = vld [vmem:[#allocation13 + $0x8] sm:$0xf]
    %v6939 = vld [vmem:[#allocation13 + $0xc] sm:$0xff]
    %v6940 = vld [vmem:[#allocation13 + $0x14] sm:$0xf]
    %v6941 = vld [vmem:[#allocation13 + $0x18] sm:$0xff]
    %v6942 = vld [vmem:[#allocation13 + $0x20] sm:$0xf]
    %v6943 = vld [vmem:[#allocation13 + $0x24] sm:$0xff]
    %v6944 = vld [vmem:[#allocation13 + $0x2c] sm:$0xf]
    %v6945 = vld [vmem:[#allocation13 + $0x30] sm:$0xff]
    %v6946 = vld [vmem:[#allocation13 + $0x38] sm:$0xf]
    %v6947 = vld [vmem:[#allocation13 + $0x3c] sm:$0xff]
    %v6948 = vld [vmem:[#allocation13 + $0x44] sm:$0xf]
    %v6949 = vld [vmem:[#allocation13 + $0x48] sm:$0xff]
    %v6950 = vld [vmem:[#allocation13 + $0x50] sm:$0xf]
    %v6951 = vld [vmem:[#allocation13 + $0x54] sm:$0xff]
    %v6952 = vld [vmem:[#allocation13 + $0x5c] sm:$0xf]
    %v6953 = vld [vmem:[#allocation13 + $0x60] sm:$0xff]
    %v6954 = vld [vmem:[#allocation13 + $0x68] sm:$0xf]
    %v6955 = vld [vmem:[#allocation13 + $0x6c] sm:$0xff]
    %v6956 = vld [vmem:[#allocation13 + $0x74] sm:$0xf]
    %v6957 = vld [vmem:[#allocation13 + $0x78] sm:$0xff]
    %v6958 = vld [vmem:[#allocation13 + $0x80] sm:$0xf]
    %v6959 = vld [vmem:[#allocation13 + $0x84] sm:$0xff]
    %v6960 = vld [vmem:[#allocation13 + $0x8c] sm:$0xf]
    %v6961 = vld [vmem:[#allocation13 + $0x90] sm:$0xff]
    %v6962 = vld [vmem:[#allocation13 + $0x98] sm:$0xf]
    %v6963 = vld [vmem:[#allocation13 + $0x9c] sm:$0xff]
    %v6964 = vld [vmem:[#allocation13 + $0xa4] sm:$0xf]
    %v6965 = vld [vmem:[#allocation13 + $0xa8] sm:$0xff]
    %v6966 = vld [vmem:[#allocation13 + $0xb0] sm:$0xf]
    %v6967 = vld [vmem:[#allocation13 + $0xb4] sm:$0xff]
    %v6968 = vld [vmem:[#allocation13 + $0xbc] sm:$0xf]
    %v6969 = vld [vmem:[#allocation13 + $0xc0] sm:$0xff]
    %v6970 = vld [vmem:[#allocation13 + $0xc8] sm:$0xf]
    %v6971 = vld [vmem:[#allocation13 + $0xcc] sm:$0xff]
    %v6972 = vld [vmem:[#allocation13 + $0xd4] sm:$0xf]
    %v6973 = vld [vmem:[#allocation13 + $0xd8] sm:$0xff]
    %v6974 = vld [vmem:[#allocation13 + $0xe0] sm:$0xf]
    %v6975 = vld [vmem:[#allocation13 + $0xe4] sm:$0xff]
    %v6976 = vld [vmem:[#allocation13 + $0xec] sm:$0xf]
    %v6977 = vld [vmem:[#allocation13 + $0xf0] sm:$0xff]
    %v6978 = vld [vmem:[#allocation13 + $0xf8] sm:$0xf]
    %v6979 = vld [vmem:[#allocation13 + $0xfc] sm:$0xff]
    %v6980 = vld [vmem:[#allocation13 + $0x104] sm:$0xf]
    %v6981 = vld [vmem:[#allocation13 + $0x108] sm:$0xff]
    %v6982 = vld [vmem:[#allocation13 + $0x110] sm:$0xf]
    %v6983 = vld [vmem:[#allocation13 + $0x114] sm:$0xff]
    %v6984 = vld [vmem:[#allocation13 + $0x11c] sm:$0xf]
    %v6985 = vld [vmem:[#allocation13 + $0x120] sm:$0xff]
    %v6986 = vld [vmem:[#allocation13 + $0x128] sm:$0xf]
    %v6987 = vld [vmem:[#allocation13 + $0x12c] sm:$0xff]
    %v6988 = vld [vmem:[#allocation13 + $0x134] sm:$0xf]
    %v6989 = vld [vmem:[#allocation13 + $0x138] sm:$0xff]
    %v6990 = vld [vmem:[#allocation13 + $0x140] sm:$0xf]
    %v6991 = vld [vmem:[#allocation13 + $0x144] sm:$0xff]
    %v6992 = vld [vmem:[#allocation13 + $0x14c] sm:$0xf]
    %v6993 = vld [vmem:[#allocation13 + $0x150] sm:$0xff]
    %v6994 = vld [vmem:[#allocation13 + $0x158] sm:$0xf]
    %v6995 = vld [vmem:[#allocation13 + $0x15c] sm:$0xff]
    %v6996 = vld [vmem:[#allocation13 + $0x164] sm:$0xf]
    %v6997 = vld [vmem:[#allocation13 + $0x168] sm:$0xff]
    %v6998 = vld [vmem:[#allocation13 + $0x170] sm:$0xf]
    %v6999 = vld [vmem:[#allocation13 + $0x174] sm:$0xff]
    %v7000 = vld [vmem:[#allocation13 + $0x17c] sm:$0xf]
    %v7001 = vld [vmem:[#allocation13 + $0x180] sm:$0xff]
    %v7002 = vld [vmem:[#allocation13 + $0x188] sm:$0xf]
    %v7003 = vld [vmem:[#allocation13 + $0x18c] sm:$0xff]
    %v7004 = vld [vmem:[#allocation13 + $0x194] sm:$0xf]
    %v7005 = vld [vmem:[#allocation13 + $0x198] sm:$0xff]
    %v7006 = vld [vmem:[#allocation13 + $0x1a0] sm:$0xf]
    %v7007 = vld [vmem:[#allocation13 + $0x1a4] sm:$0xff]
    %v7008 = vld [vmem:[#allocation13 + $0x1ac] sm:$0xf]
    %v7009 = vld [vmem:[#allocation13 + $0x1b0] sm:$0xff]
    %v7010 = vld [vmem:[#allocation13 + $0x1b8] sm:$0xf]
    %v7011 = vld [vmem:[#allocation13 + $0x1bc] sm:$0xff]
    %v7012 = vld [vmem:[#allocation13 + $0x1c4] sm:$0xf]
    %v7013 = vld [vmem:[#allocation13 + $0x1c8] sm:$0xff]
    %v7014 = vld [vmem:[#allocation13 + $0x1d0] sm:$0xf]
    %v7015 = vld [vmem:[#allocation13 + $0x1d4] sm:$0xff]
    %v7016 = vld [vmem:[#allocation13 + $0x1dc] sm:$0xf]
    %v7017 = vld [vmem:[#allocation13 + $0x1e0] sm:$0xff]
    %v7018 = vld [vmem:[#allocation13 + $0x1e8] sm:$0xf]
    %v7019 = vld [vmem:[#allocation13 + $0x1ec] sm:$0xff]
    %v7020 = vld [vmem:[#allocation13 + $0x1f4] sm:$0xf]
    %v7021 = vld [vmem:[#allocation13 + $0x1f8] sm:$0xff]
    %v7022 = vld [vmem:[#allocation13 + $0x200] sm:$0xf]
    %v7023 = vld [vmem:[#allocation13 + $0x204] sm:$0xff]
    %v7024 = vld [vmem:[#allocation13 + $0x20c] sm:$0xf]
    %v7025 = vld [vmem:[#allocation13 + $0x210] sm:$0xff]
    %v7026 = vld [vmem:[#allocation13 + $0x218] sm:$0xf]
    %v7027 = vld [vmem:[#allocation13 + $0x21c] sm:$0xff]
    %v7028 = vld [vmem:[#allocation13 + $0x224] sm:$0xf]
    %v7029 = vld [vmem:[#allocation13 + $0x228] sm:$0xff]
    %v7030 = vld [vmem:[#allocation13 + $0x230] sm:$0xf]
    %v7031 = vld [vmem:[#allocation13 + $0x234] sm:$0xff]
    %v7032 = vld [vmem:[#allocation13 + $0x23c] sm:$0xf]
    %v7033 = vld [vmem:[#allocation13 + $0x240] sm:$0xff]
    %v7034 = vld [vmem:[#allocation13 + $0x248] sm:$0xf]
    %v7035 = vld [vmem:[#allocation13 + $0x24c] sm:$0xff]
    %v7036 = vld [vmem:[#allocation13 + $0x254] sm:$0xf]
    %v7037 = vld [vmem:[#allocation13 + $0x258] sm:$0xff]
    %v7038 = vld [vmem:[#allocation13 + $0x260] sm:$0xf]
    %v7039 = vld [vmem:[#allocation13 + $0x264] sm:$0xff]
    %v7040 = vld [vmem:[#allocation13 + $0x26c] sm:$0xf]
    %v7041 = vld [vmem:[#allocation13 + $0x270] sm:$0xff]
    %v7042 = vld [vmem:[#allocation13 + $0x278] sm:$0xf]
    %v7043 = vld [vmem:[#allocation13 + $0x27c] sm:$0xff]
    %v7044 = vld [vmem:[#allocation13 + $0x284] sm:$0xf]
    %v7045 = vld [vmem:[#allocation13 + $0x288] sm:$0xff]
    %v7046 = vld [vmem:[#allocation13 + $0x290] sm:$0xf]
    %v7047 = vld [vmem:[#allocation13 + $0x294] sm:$0xff]
    %v7048 = vld [vmem:[#allocation13 + $0x29c] sm:$0xf]
    %v7049 = vld [vmem:[#allocation13 + $0x2a0] sm:$0xff]
    %v7050 = vld [vmem:[#allocation13 + $0x2a8] sm:$0xf]
    %v7051 = vld [vmem:[#allocation13 + $0x2ac] sm:$0xff]
    %v7052 = vld [vmem:[#allocation13 + $0x2b4] sm:$0xf]
    %v7053 = vld [vmem:[#allocation13 + $0x2b8] sm:$0xff]
    %v7054 = vld [vmem:[#allocation13 + $0x2c0] sm:$0xf]
    %v7055 = vld [vmem:[#allocation13 + $0x2c4] sm:$0xff]
    %v7056 = vld [vmem:[#allocation13 + $0x2cc] sm:$0xf]
    %v7057 = vld [vmem:[#allocation13 + $0x2d0] sm:$0xff]
    %v7058 = vld [vmem:[#allocation13 + $0x2d8] sm:$0xf]
    %v7059 = vld [vmem:[#allocation13 + $0x2dc] sm:$0xff]
    %v7060 = vld [vmem:[#allocation13 + $0x2e4] sm:$0xf]
    %v7061 = vld [vmem:[#allocation13 + $0x2e8] sm:$0xff]
    %v7062 = vld [vmem:[#allocation13 + $0x2f0] sm:$0xf]
    %v7063 = vld [vmem:[#allocation13 + $0x2f4] sm:$0xff]
    %v7064 = vld [vmem:[#allocation13 + $0x2fc] sm:$0xf]
    %v7065 = vld [vmem:[#allocation14] sm:$0x7]
    %v7067 = vlaneseq
    %v7068 = vshrl.u32 %v7067, 7
    %v7069 = vsub.s32 0, %v7068
    %v7070 = vrot.slane %v7065, %v7069
    %v7071 = vlaneseq
    %v7072 = vshrl.u32 %v7071, 7
    %v7073 = vsub.s32 1, %v7072
    %v7074 = vrot.slane %v7065, %v7073
    %v7075 = vlaneseq
    %v7076 = vshrl.u32 %v7075, 7
    %v7077 = vsub.s32 2, %v7076
    %v7078 = vrot.slane %v7065, %v7077
    %v7210 = vunpack.c.l.b16 %v6937
    %v7211 = vunpack.c.h.b16 %v6937
    %v7212 = vunpack.c.l.b16 %v6938
    %v7213 = vunpack.c.l.b16 %v6939
    %v7214 = vunpack.c.h.b16 %v6939
    %v7215 = vunpack.c.l.b16 %v6940
    %v7216 = vunpack.c.l.b16 %v6941
    %v7217 = vunpack.c.h.b16 %v6941
    %v7218 = vunpack.c.l.b16 %v6942
    %v7219 = vunpack.c.l.b16 %v6943
    %v7220 = vunpack.c.h.b16 %v6943
    %v7221 = vunpack.c.l.b16 %v6944
    %v7222 = vunpack.c.l.b16 %v6945
    %v7223 = vunpack.c.h.b16 %v6945
    %v7224 = vunpack.c.l.b16 %v6946
    %v7225 = vunpack.c.l.b16 %v6947
    %v7226 = vunpack.c.h.b16 %v6947
    %v7227 = vunpack.c.l.b16 %v6948
    %v7228 = vunpack.c.l.b16 %v6949
    %v7229 = vunpack.c.h.b16 %v6949
    %v7230 = vunpack.c.l.b16 %v6950
    %v7231 = vunpack.c.l.b16 %v6951
    %v7232 = vunpack.c.h.b16 %v6951
    %v7233 = vunpack.c.l.b16 %v6952
    %v7234 = vunpack.c.l.b16 %v6953
    %v7235 = vunpack.c.h.b16 %v6953
    %v7236 = vunpack.c.l.b16 %v6954
    %v7237 = vunpack.c.l.b16 %v6955
    %v7238 = vunpack.c.h.b16 %v6955
    %v7239 = vunpack.c.l.b16 %v6956
    %v7240 = vunpack.c.l.b16 %v6957
    %v7241 = vunpack.c.h.b16 %v6957
    %v7242 = vunpack.c.l.b16 %v6958
    %v7243 = vunpack.c.l.b16 %v6959
    %v7244 = vunpack.c.h.b16 %v6959
    %v7245 = vunpack.c.l.b16 %v6960
    %v7246 = vunpack.c.l.b16 %v6961
    %v7247 = vunpack.c.h.b16 %v6961
    %v7248 = vunpack.c.l.b16 %v6962
    %v7249 = vunpack.c.l.b16 %v6963
    %v7250 = vunpack.c.h.b16 %v6963
    %v7251 = vunpack.c.l.b16 %v6964
    %v7252 = vunpack.c.l.b16 %v6965
    %v7253 = vunpack.c.h.b16 %v6965
    %v7254 = vunpack.c.l.b16 %v6966
    %v7255 = vunpack.c.l.b16 %v6967
    %v7256 = vunpack.c.h.b16 %v6967
    %v7257 = vunpack.c.l.b16 %v6968
    %v7258 = vunpack.c.l.b16 %v6969
    %v7259 = vunpack.c.h.b16 %v6969
    %v7260 = vunpack.c.l.b16 %v6970
    %v7261 = vunpack.c.l.b16 %v6971
    %v7262 = vunpack.c.h.b16 %v6971
    %v7263 = vunpack.c.l.b16 %v6972
    %v7264 = vunpack.c.l.b16 %v6973
    %v7265 = vunpack.c.h.b16 %v6973
    %v7266 = vunpack.c.l.b16 %v6974
    %v7267 = vunpack.c.l.b16 %v6975
    %v7268 = vunpack.c.h.b16 %v6975
    %v7269 = vunpack.c.l.b16 %v6976
    %v7270 = vunpack.c.l.b16 %v6977
    %v7271 = vunpack.c.h.b16 %v6977
    %v7272 = vunpack.c.l.b16 %v6978
    %v7273 = vunpack.c.l.b16 %v6979
    %v7274 = vunpack.c.h.b16 %v6979
    %v7275 = vunpack.c.l.b16 %v6980
    %v7276 = vunpack.c.l.b16 %v6981
    %v7277 = vunpack.c.h.b16 %v6981
    %v7278 = vunpack.c.l.b16 %v6982
    %v7279 = vunpack.c.l.b16 %v6983
    %v7280 = vunpack.c.h.b16 %v6983
    %v7281 = vunpack.c.l.b16 %v6984
    %v7282 = vunpack.c.l.b16 %v6985
    %v7283 = vunpack.c.h.b16 %v6985
    %v7284 = vunpack.c.l.b16 %v6986
    %v7285 = vunpack.c.l.b16 %v6987
    %v7286 = vunpack.c.h.b16 %v6987
    %v7287 = vunpack.c.l.b16 %v6988
    %v7288 = vunpack.c.l.b16 %v6989
    %v7289 = vunpack.c.h.b16 %v6989
    %v7290 = vunpack.c.l.b16 %v6990
    %v7291 = vunpack.c.l.b16 %v6991
    %v7292 = vunpack.c.h.b16 %v6991
    %v7293 = vunpack.c.l.b16 %v6992
    %v7294 = vunpack.c.l.b16 %v6993
    %v7295 = vunpack.c.h.b16 %v6993
    %v7296 = vunpack.c.l.b16 %v6994
    %v7297 = vunpack.c.l.b16 %v6995
    %v7298 = vunpack.c.h.b16 %v6995
    %v7299 = vunpack.c.l.b16 %v6996
    %v7300 = vunpack.c.l.b16 %v6997
    %v7301 = vunpack.c.h.b16 %v6997
    %v7302 = vunpack.c.l.b16 %v6998
    %v7303 = vunpack.c.l.b16 %v6999
    %v7304 = vunpack.c.h.b16 %v6999
    %v7305 = vunpack.c.l.b16 %v7000
    %v7306 = vunpack.c.l.b16 %v7001
    %v7307 = vunpack.c.h.b16 %v7001
    %v7308 = vunpack.c.l.b16 %v7002
    %v7309 = vunpack.c.l.b16 %v7003
    %v7310 = vunpack.c.h.b16 %v7003
    %v7311 = vunpack.c.l.b16 %v7004
    %v7312 = vunpack.c.l.b16 %v7005
    %v7313 = vunpack.c.h.b16 %v7005
    %v7314 = vunpack.c.l.b16 %v7006
    %v7315 = vunpack.c.l.b16 %v7007
    %v7316 = vunpack.c.h.b16 %v7007
    %v7317 = vunpack.c.l.b16 %v7008
    %v7318 = vunpack.c.l.b16 %v7009
    %v7319 = vunpack.c.h.b16 %v7009
    %v7320 = vunpack.c.l.b16 %v7010
    %v7321 = vunpack.c.l.b16 %v7011
    %v7322 = vunpack.c.h.b16 %v7011
    %v7323 = vunpack.c.l.b16 %v7012
    %v7324 = vunpack.c.l.b16 %v7013
    %v7325 = vunpack.c.h.b16 %v7013
    %v7326 = vunpack.c.l.b16 %v7014
    %v7327 = vunpack.c.l.b16 %v7015
    %v7328 = vunpack.c.h.b16 %v7015
    %v7329 = vunpack.c.l.b16 %v7016
    %v7330 = vunpack.c.l.b16 %v7017
    %v7331 = vunpack.c.h.b16 %v7017
    %v7332 = vunpack.c.l.b16 %v7018
    %v7333 = vunpack.c.l.b16 %v7019
    %v7334 = vunpack.c.h.b16 %v7019
    %v7335 = vunpack.c.l.b16 %v7020
    %v7336 = vunpack.c.l.b16 %v7021
    %v7337 = vunpack.c.h.b16 %v7021
    %v7338 = vunpack.c.l.b16 %v7022
    %v7339 = vunpack.c.l.b16 %v7023
    %v7340 = vunpack.c.h.b16 %v7023
    %v7341 = vunpack.c.l.b16 %v7024
    %v7342 = vunpack.c.l.b16 %v7025
    %v7343 = vunpack.c.h.b16 %v7025
    %v7344 = vunpack.c.l.b16 %v7026
    %v7345 = vunpack.c.l.b16 %v7027
    %v7346 = vunpack.c.h.b16 %v7027
    %v7347 = vunpack.c.l.b16 %v7028
    %v7348 = vunpack.c.l.b16 %v7029
    %v7349 = vunpack.c.h.b16 %v7029
    %v7350 = vunpack.c.l.b16 %v7030
    %v7351 = vunpack.c.l.b16 %v7031
    %v7352 = vunpack.c.h.b16 %v7031
    %v7353 = vunpack.c.l.b16 %v7032
    %v7354 = vunpack.c.l.b16 %v7033
    %v7355 = vunpack.c.h.b16 %v7033
    %v7356 = vunpack.c.l.b16 %v7034
    %v7357 = vunpack.c.l.b16 %v7035
    %v7358 = vunpack.c.h.b16 %v7035
    %v7359 = vunpack.c.l.b16 %v7036
    %v7360 = vunpack.c.l.b16 %v7037
    %v7361 = vunpack.c.h.b16 %v7037
    %v7362 = vunpack.c.l.b16 %v7038
    %v7363 = vunpack.c.l.b16 %v7039
    %v7364 = vunpack.c.h.b16 %v7039
    %v7365 = vunpack.c.l.b16 %v7040
    %v7366 = vunpack.c.l.b16 %v7041
    %v7367 = vunpack.c.h.b16 %v7041
    %v7368 = vunpack.c.l.b16 %v7042
    %v7369 = vunpack.c.l.b16 %v7043
    %v7370 = vunpack.c.h.b16 %v7043
    %v7371 = vunpack.c.l.b16 %v7044
    %v7372 = vunpack.c.l.b16 %v7045
    %v7373 = vunpack.c.h.b16 %v7045
    %v7374 = vunpack.c.l.b16 %v7046
    %v7375 = vunpack.c.l.b16 %v7047
    %v7376 = vunpack.c.h.b16 %v7047
    %v7377 = vunpack.c.l.b16 %v7048
    %v7378 = vunpack.c.l.b16 %v7049
    %v7379 = vunpack.c.h.b16 %v7049
    %v7380 = vunpack.c.l.b16 %v7050
    %v7381 = vunpack.c.l.b16 %v7051
    %v7382 = vunpack.c.h.b16 %v7051
    %v7383 = vunpack.c.l.b16 %v7052
    %v7384 = vunpack.c.l.b16 %v7053
    %v7385 = vunpack.c.h.b16 %v7053
    %v7386 = vunpack.c.l.b16 %v7054
    %v7387 = vunpack.c.l.b16 %v7055
    %v7388 = vunpack.c.h.b16 %v7055
    %v7389 = vunpack.c.l.b16 %v7056
    %v7390 = vunpack.c.l.b16 %v7057
    %v7391 = vunpack.c.h.b16 %v7057
    %v7392 = vunpack.c.l.b16 %v7058
    %v7393 = vunpack.c.l.b16 %v7059
    %v7394 = vunpack.c.h.b16 %v7059
    %v7395 = vunpack.c.l.b16 %v7060
    %v7396 = vunpack.c.l.b16 %v7061
    %v7397 = vunpack.c.h.b16 %v7061
    %v7398 = vunpack.c.l.b16 %v7062
    %v7399 = vunpack.c.l.b16 %v7063
    %v7400 = vunpack.c.h.b16 %v7063
    %v7401 = vunpack.c.l.b16 %v7064
    %v7402 = vpack.c.b16 %v7213, %v7210
    %v7403 = vpack.c.b16 %v7214, %v7211
    %v7404 = vpack.c.b16 %v7215, %v7212
    %v7405 = vpack.c.b16 %v7219, %v7216
    %v7406 = vpack.c.b16 %v7220, %v7217
    %v7407 = vpack.c.b16 %v7221, %v7218
    %v7408 = vpack.c.b16 %v7225, %v7222
    %v7409 = vpack.c.b16 %v7226, %v7223
    %v7410 = vpack.c.b16 %v7227, %v7224
    %v7411 = vpack.c.b16 %v7231, %v7228
    %v7412 = vpack.c.b16 %v7232, %v7229
    %v7413 = vpack.c.b16 %v7233, %v7230
    %v7414 = vpack.c.b16 %v7237, %v7234
    %v7415 = vpack.c.b16 %v7238, %v7235
    %v7416 = vpack.c.b16 %v7239, %v7236
    %v7417 = vpack.c.b16 %v7243, %v7240
    %v7418 = vpack.c.b16 %v7244, %v7241
    %v7419 = vpack.c.b16 %v7245, %v7242
    %v7420 = vpack.c.b16 %v7249, %v7246
    %v7421 = vpack.c.b16 %v7250, %v7247
    %v7422 = vpack.c.b16 %v7251, %v7248
    %v7423 = vpack.c.b16 %v7255, %v7252
    %v7424 = vpack.c.b16 %v7256, %v7253
    %v7425 = vpack.c.b16 %v7257, %v7254
    %v7426 = vpack.c.b16 %v7261, %v7258
    %v7427 = vpack.c.b16 %v7262, %v7259
    %v7428 = vpack.c.b16 %v7263, %v7260
    %v7429 = vpack.c.b16 %v7267, %v7264
    %v7430 = vpack.c.b16 %v7268, %v7265
    %v7431 = vpack.c.b16 %v7269, %v7266
    %v7432 = vpack.c.b16 %v7273, %v7270
    %v7433 = vpack.c.b16 %v7274, %v7271
    %v7434 = vpack.c.b16 %v7275, %v7272
    %v7435 = vpack.c.b16 %v7279, %v7276
    %v7436 = vpack.c.b16 %v7280, %v7277
    %v7437 = vpack.c.b16 %v7281, %v7278
    %v7438 = vpack.c.b16 %v7285, %v7282
    %v7439 = vpack.c.b16 %v7286, %v7283
    %v7440 = vpack.c.b16 %v7287, %v7284
    %v7441 = vpack.c.b16 %v7291, %v7288
    %v7442 = vpack.c.b16 %v7292, %v7289
    %v7443 = vpack.c.b16 %v7293, %v7290
    %v7444 = vpack.c.b16 %v7297, %v7294
    %v7445 = vpack.c.b16 %v7298, %v7295
    %v7446 = vpack.c.b16 %v7299, %v7296
    %v7447 = vpack.c.b16 %v7303, %v7300
    %v7448 = vpack.c.b16 %v7304, %v7301
    %v7449 = vpack.c.b16 %v7305, %v7302
    %v7450 = vpack.c.b16 %v7309, %v7306
    %v7451 = vpack.c.b16 %v7310, %v7307
    %v7452 = vpack.c.b16 %v7311, %v7308
    %v7453 = vpack.c.b16 %v7315, %v7312
    %v7454 = vpack.c.b16 %v7316, %v7313
    %v7455 = vpack.c.b16 %v7317, %v7314
    %v7456 = vpack.c.b16 %v7321, %v7318
    %v7457 = vpack.c.b16 %v7322, %v7319
    %v7458 = vpack.c.b16 %v7323, %v7320
    %v7459 = vpack.c.b16 %v7327, %v7324
    %v7460 = vpack.c.b16 %v7328, %v7325
    %v7461 = vpack.c.b16 %v7329, %v7326
    %v7462 = vpack.c.b16 %v7333, %v7330
    %v7463 = vpack.c.b16 %v7334, %v7331
    %v7464 = vpack.c.b16 %v7335, %v7332
    %v7465 = vpack.c.b16 %v7339, %v7336
    %v7466 = vpack.c.b16 %v7340, %v7337
    %v7467 = vpack.c.b16 %v7341, %v7338
    %v7468 = vpack.c.b16 %v7345, %v7342
    %v7469 = vpack.c.b16 %v7346, %v7343
    %v7470 = vpack.c.b16 %v7347, %v7344
    %v7471 = vpack.c.b16 %v7351, %v7348
    %v7472 = vpack.c.b16 %v7352, %v7349
    %v7473 = vpack.c.b16 %v7353, %v7350
    %v7474 = vpack.c.b16 %v7357, %v7354
    %v7475 = vpack.c.b16 %v7358, %v7355
    %v7476 = vpack.c.b16 %v7359, %v7356
    %v7477 = vpack.c.b16 %v7363, %v7360
    %v7478 = vpack.c.b16 %v7364, %v7361
    %v7479 = vpack.c.b16 %v7365, %v7362
    %v7480 = vpack.c.b16 %v7369, %v7366
    %v7481 = vpack.c.b16 %v7370, %v7367
    %v7482 = vpack.c.b16 %v7371, %v7368
    %v7483 = vpack.c.b16 %v7375, %v7372
    %v7484 = vpack.c.b16 %v7376, %v7373
    %v7485 = vpack.c.b16 %v7377, %v7374
    %v7486 = vpack.c.b16 %v7381, %v7378
    %v7487 = vpack.c.b16 %v7382, %v7379
    %v7488 = vpack.c.b16 %v7383, %v7380
    %v7489 = vpack.c.b16 %v7387, %v7384
    %v7490 = vpack.c.b16 %v7388, %v7385
    %v7491 = vpack.c.b16 %v7389, %v7386
    %v7492 = vpack.c.b16 %v7393, %v7390
    %v7493 = vpack.c.b16 %v7394, %v7391
    %v7494 = vpack.c.b16 %v7395, %v7392
    %v7495 = vpack.c.b16 %v7399, %v7396
    %v7496 = vpack.c.b16 %v7400, %v7397
    %v7497 = vpack.c.b16 %v7401, %v7398
    %7594 = vmatprep.subr.bf16.mxu0 %v7424
    %7595 = vmatpush1.bf16.msra.mxu0 %v7423
    %7596 = vmatprep.subr.bf16.mxu0 %v7421
    %7597 = vmatpush1.bf16.msra.mxu0 %v7420
    %7598 = vmatprep.subr.bf16.mxu0 %v7418
    %7599 = vmatpush1.bf16.msra.mxu0 %v7417
    %7600 = vmatprep.subr.bf16.mxu0 %v7415
    %7601 = vmatpush1.bf16.msra.mxu0 %v7414
    %7602 = vmatprep.subr.bf16.mxu0 %v7412
    %7603 = vmatpush1.bf16.msra.mxu0 %v7411
    %7604 = vmatprep.subr.bf16.mxu0 %v7409
    %7605 = vmatpush1.bf16.msra.mxu0 %v7408
    %7606 = vmatprep.subr.bf16.mxu0 %v7406
    %7607 = vmatpush1.bf16.msra.mxu0 %v7405
    %7608 = vmatprep.subr.bf16.mxu0 %v7403
    %7609 = vmatpush1.bf16.msra.mxu0 %v7402
    %7610 = vmatprep.subr.bf16.mxu0 %v7448
    %7611 = vmatpush2.bf16.msra.mxu0 %v7447
    %7612 = vmatprep.subr.bf16.mxu0 %v7445
    %7613 = vmatpush2.bf16.msra.mxu0 %v7444
    %7614 = vmatprep.subr.bf16.mxu0 %v7442
    %7615 = vmatpush2.bf16.msra.mxu0 %v7441
    %7616 = vmatprep.subr.bf16.mxu0 %v7439
    %7617 = vmatpush2.bf16.msra.mxu0 %v7438
    %7618 = vmatprep.subr.bf16.mxu0 %v7436
    %7619 = vmatpush2.bf16.msra.mxu0 %v7435
    %7620 = vmatprep.subr.bf16.mxu0 %v7433
    %7621 = vmatpush2.bf16.msra.mxu0 %v7432
    %7622 = vmatprep.subr.bf16.mxu0 %v7430
    %7623 = vmatpush2.bf16.msra.mxu0 %v7429
    %7624 = vmatprep.subr.bf16.mxu0 %v7427
    %7625 = vmatpush2.bf16.msra.mxu0 %v7426
    %7626 = vmatprep.mubr.bf16.mxu0 %v6934
    %7627 = vmatmul.mubr.bf16.gmra.mxu0 %v6933
    %v7628 = vpop.f32.mrf.mxu0
    %v7629 = vadd.f32 %v7070, %v7628
    %v7630 = vpop.f32.mrf.mxu0
    %v7631 = vadd.f32 %v7074, %v7630
    %v7632 = vpop.f32.mrf.mxu0
    %v7633 = vpop.f32.mrf.mxu0
    %7634 = vdwg.mxu0
    %7635 = vmatprep.subr.bf16.mxu0 %v7472
    %7636 = vmatpush1.bf16.msra.mxu0 %v7471
    %7637 = vmatprep.subr.bf16.mxu0 %v7469
    %7638 = vmatpush1.bf16.msra.mxu0 %v7468
    %7639 = vmatprep.subr.bf16.mxu0 %v7466
    %7640 = vmatpush1.bf16.msra.mxu0 %v7465
    %7641 = vmatprep.subr.bf16.mxu0 %v7463
    %7642 = vmatpush1.bf16.msra.mxu0 %v7462
    %7643 = vmatprep.subr.bf16.mxu0 %v7460
    %7644 = vmatpush1.bf16.msra.mxu0 %v7459
    %7645 = vmatprep.subr.bf16.mxu0 %v7457
    %7646 = vmatpush1.bf16.msra.mxu0 %v7456
    %7647 = vmatprep.subr.bf16.mxu0 %v7454
    %7648 = vmatpush1.bf16.msra.mxu0 %v7453
    %7649 = vmatprep.subr.bf16.mxu0 %v7451
    %7650 = vmatpush1.bf16.msra.mxu0 %v7450
    %7651 = vmatprep.subr.bf16.mxu0 %v7496
    %7652 = vmatpush2.bf16.msra.mxu0 %v7495
    %7653 = vmatprep.subr.bf16.mxu0 %v7493
    %7654 = vmatpush2.bf16.msra.mxu0 %v7492
    %7655 = vmatprep.subr.bf16.mxu0 %v7490
    %7656 = vmatpush2.bf16.msra.mxu0 %v7489
    %7657 = vmatprep.subr.bf16.mxu0 %v7487
    %7658 = vmatpush2.bf16.msra.mxu0 %v7486
    %7659 = vmatprep.subr.bf16.mxu0 %v7484
    %7660 = vmatpush2.bf16.msra.mxu0 %v7483
    %7661 = vmatprep.subr.bf16.mxu0 %v7481
    %7662 = vmatpush2.bf16.msra.mxu0 %v7480
    %7663 = vmatprep.subr.bf16.mxu0 %v7478
    %7664 = vmatpush2.bf16.msra.mxu0 %v7477
    %7665 = vmatprep.subr.bf16.mxu0 %v7475
    %7666 = vmatpush2.bf16.msra.mxu0 %v7474
    %7667 = vmatprep.mubr.bf16.mxu0 %v6936
    %7668 = vmatmul.mubr.bf16.gmra.mxu0 %v6935
    %v7669 = vpop.f32.mrf.mxu0
    %v7670 = vadd.f32 %v7629, %v7669
    %v7671 = vpop.f32.mrf.mxu0
    %v7672 = vadd.f32 %v7631, %v7671
    %v7673 = vpop.f32.mrf.mxu0
    %v7674 = vpop.f32.mrf.mxu0
    %7675 = vdwg.mxu0
    %7676 = vmatprep.subr.bf16.mxu0 0
    %7677 = vmatpush1.bf16.msra.mxu0 %v7425
    %7678 = vmatprep.subr.bf16.mxu0 0
    %7679 = vmatpush1.bf16.msra.mxu0 %v7422
    %7680 = vmatprep.subr.bf16.mxu0 0
    %7681 = vmatpush1.bf16.msra.mxu0 %v7419
    %7682 = vmatprep.subr.bf16.mxu0 0
    %7683 = vmatpush1.bf16.msra.mxu0 %v7416
    %7684 = vmatprep.subr.bf16.mxu0 0
    %7685 = vmatpush1.bf16.msra.mxu0 %v7413
    %7686 = vmatprep.subr.bf16.mxu0 0
    %7687 = vmatpush1.bf16.msra.mxu0 %v7410
    %7688 = vmatprep.subr.bf16.mxu0 0
    %7689 = vmatpush1.bf16.msra.mxu0 %v7407
    %7690 = vmatprep.subr.bf16.mxu0 0
    %7691 = vmatpush1.bf16.msra.mxu0 %v7404
    %7692 = vmatprep.subr.bf16.mxu0 0
    %7693 = vmatpush2.bf16.msra.mxu0 %v7449
    %7694 = vmatprep.subr.bf16.mxu0 0
    %7695 = vmatpush2.bf16.msra.mxu0 %v7446
    %7696 = vmatprep.subr.bf16.mxu0 0
    %7697 = vmatpush2.bf16.msra.mxu0 %v7443
    %7698 = vmatprep.subr.bf16.mxu0 0
    %7699 = vmatpush2.bf16.msra.mxu0 %v7440
    %7700 = vmatprep.subr.bf16.mxu0 0
    %7701 = vmatpush2.bf16.msra.mxu0 %v7437
    %7702 = vmatprep.subr.bf16.mxu0 0
    %7703 = vmatpush2.bf16.msra.mxu0 %v7434
    %7704 = vmatprep.subr.bf16.mxu0 0
    %7705 = vmatpush2.bf16.msra.mxu0 %v7431
    %7706 = vmatprep.subr.bf16.mxu0 0
    %7707 = vmatpush2.bf16.msra.mxu0 %v7428
    %7708 = vmatprep.mubr.bf16.mxu0 %v6934
    %7709 = vmatmul.mubr.bf16.gmra.mxu0 %v6933
    %v7710 = vpop.f32.mrf.mxu0
    %v7711 = vadd.f32 %v7078, %v7710
    %v7712 = vpop.f32.mrf.mxu0
    %v7713 = vpop.f32.mrf.mxu0
    %v7714 = vpop.f32.mrf.mxu0
    %7715 = vdwg.mxu0
    %7716 = vmatprep.subr.bf16.mxu0 0
    %7717 = vmatpush1.bf16.msra.mxu0 %v7473
    %7718 = vmatprep.subr.bf16.mxu0 0
    %7719 = vmatpush1.bf16.msra.mxu0 %v7470
    %7720 = vmatprep.subr.bf16.mxu0 0
    %7721 = vmatpush1.bf16.msra.mxu0 %v7467
    %7722 = vmatprep.subr.bf16.mxu0 0
    %7723 = vmatpush1.bf16.msra.mxu0 %v7464
    %7724 = vmatprep.subr.bf16.mxu0 0
    %7725 = vmatpush1.bf16.msra.mxu0 %v7461
    %7726 = vmatprep.subr.bf16.mxu0 0
    %7727 = vmatpush1.bf16.msra.mxu0 %v7458
    %7728 = vmatprep.subr.bf16.mxu0 0
    %7729 = vmatpush1.bf16.msra.mxu0 %v7455
    %7730 = vmatprep.subr.bf16.mxu0 0
    %7731 = vmatpush1.bf16.msra.mxu0 %v7452
    %7732 = vmatprep.subr.bf16.mxu0 0
    %7733 = vmatpush2.bf16.msra.mxu0 %v7497
    %7734 = vmatprep.subr.bf16.mxu0 0
    %7735 = vmatpush2.bf16.msra.mxu0 %v7494
    %7736 = vmatprep.subr.bf16.mxu0 0
    %7737 = vmatpush2.bf16.msra.mxu0 %v7491
    %7738 = vmatprep.subr.bf16.mxu0 0
    %7739 = vmatpush2.bf16.msra.mxu0 %v7488
    %7740 = vmatprep.subr.bf16.mxu0 0
    %7741 = vmatpush2.bf16.msra.mxu0 %v7485
    %7742 = vmatprep.subr.bf16.mxu0 0
    %7743 = vmatpush2.bf16.msra.mxu0 %v7482
    %7744 = vmatprep.subr.bf16.mxu0 0
    %7745 = vmatpush2.bf16.msra.mxu0 %v7479
    %7746 = vmatprep.subr.bf16.mxu0 0
    %7747 = vmatpush2.bf16.msra.mxu0 %v7476
    %7748 = vmatprep.mubr.bf16.mxu0 %v6936
    %7749 = vmatmul.mubr.bf16.gmra.mxu0 %v6935
    %v7750 = vpop.f32.mrf.mxu0
    %v7751 = vadd.f32 %v7711, %v7750
    %v7752 = vpop.f32.mrf.mxu0
    %v7753 = vpop.f32.mrf.mxu0
    %v7754 = vpop.f32.mrf.mxu0
    %7755 = vdwg.mxu0
    %s7756 = sld [smem:[#allocation25 + $0x3]]
    %vm7757 = vcmp.ge.f32.partialorder %v7670, 0.0
    %vm7758 = vcmp.ge.f32.partialorder %v7672, 0.0
    %vm7759 = vcmp.ge.f32.partialorder %v7751, 0.0
    %v7760 = vstv %s7756
    %v7761 = vmul.f32 %v7760, %v7670
    %v7762 = vmul.f32 %v7760, %v7672
    %v7763 = vmul.f32 %v7760, %v7751
    %v7764 = vsel %vm7757, %v7670, %v7761
    %v7765 = vsel %vm7758, %v7672, %v7762
    %v7766 = vsel %vm7759, %v7751, %v7763
    %v7767 = vpack.c.bf16 %v7764, %v7764
    %v7768 = vpack.c.bf16 %v7765, %v7765
    %v7769 = vpack.c.bf16 %v7766, %v7766
    %v7770 = vld [vmem:[#allocation16] sm:$0xff]
    %v7771 = vld [vmem:[#allocation16 + $0x8] sm:$0xff]
    %v7772 = vld [vmem:[#allocation16 + $0x10] sm:$0xff]
    %v7773 = vld [vmem:[#allocation16 + $0x18] sm:$0xff]
    %v7774 = vld [vmem:[#allocation16 + $0x20] sm:$0xff]
    %v7775 = vld [vmem:[#allocation16 + $0x28] sm:$0xff]
    %v7776 = vld [vmem:[#allocation16 + $0x30] sm:$0xff]
    %v7777 = vld [vmem:[#allocation16 + $0x38] sm:$0xff]
    %v7778 = vld [vmem:[#allocation16 + $0x40] sm:$0xff]
    %v7779 = vld [vmem:[#allocation16 + $0x48] sm:$0xff]
    %v7780 = vld [vmem:[#allocation16 + $0x50] sm:$0xff]
    %v7781 = vld [vmem:[#allocation16 + $0x58] sm:$0xff]
    %v7782 = vld [vmem:[#allocation16 + $0x60] sm:$0xff]
    %v7783 = vld [vmem:[#allocation16 + $0x68] sm:$0xff]
    %v7784 = vld [vmem:[#allocation16 + $0x70] sm:$0xff]
    %v7785 = vld [vmem:[#allocation16 + $0x78] sm:$0xff]
    %v7786 = vld [vmem:[#allocation16 + $0x80] sm:$0xff]
    %v7787 = vld [vmem:[#allocation16 + $0x88] sm:$0xff]
    %v7788 = vld [vmem:[#allocation16 + $0x90] sm:$0xff]
    %v7789 = vld [vmem:[#allocation16 + $0x98] sm:$0xff]
    %v7790 = vld [vmem:[#allocation16 + $0xa0] sm:$0xff]
    %v7791 = vld [vmem:[#allocation16 + $0xa8] sm:$0xff]
    %v7792 = vld [vmem:[#allocation16 + $0xb0] sm:$0xff]
    %v7793 = vld [vmem:[#allocation16 + $0xb8] sm:$0xff]
    %v7794 = vld [vmem:[#allocation16 + $0xc0] sm:$0xff]
    %v7795 = vld [vmem:[#allocation16 + $0xc8] sm:$0xff]
    %v7796 = vld [vmem:[#allocation16 + $0xd0] sm:$0xff]
    %v7797 = vld [vmem:[#allocation16 + $0xd8] sm:$0xff]
    %v7798 = vld [vmem:[#allocation16 + $0xe0] sm:$0xff]
    %v7799 = vld [vmem:[#allocation16 + $0xe8] sm:$0xff]
    %v7800 = vld [vmem:[#allocation16 + $0xf0] sm:$0xff]
    %v7801 = vld [vmem:[#allocation16 + $0xf8] sm:$0xff]
    %v7802 = vld [vmem:[#allocation16 + $0x100] sm:$0xff]
    %v7803 = vld [vmem:[#allocation16 + $0x108] sm:$0xff]
    %v7804 = vld [vmem:[#allocation16 + $0x110] sm:$0xff]
    %v7805 = vld [vmem:[#allocation16 + $0x118] sm:$0xff]
    %v7806 = vld [vmem:[#allocation16 + $0x120] sm:$0xff]
    %v7807 = vld [vmem:[#allocation16 + $0x128] sm:$0xff]
    %v7808 = vld [vmem:[#allocation16 + $0x130] sm:$0xff]
    %v7809 = vld [vmem:[#allocation16 + $0x138] sm:$0xff]
    %v7810 = vld [vmem:[#allocation16 + $0x140] sm:$0xff]
    %v7811 = vld [vmem:[#allocation16 + $0x148] sm:$0xff]
    %v7812 = vld [vmem:[#allocation16 + $0x150] sm:$0xff]
    %v7813 = vld [vmem:[#allocation16 + $0x158] sm:$0xff]
    %v7814 = vld [vmem:[#allocation16 + $0x160] sm:$0xff]
    %v7815 = vld [vmem:[#allocation16 + $0x168] sm:$0xff]
    %v7816 = vld [vmem:[#allocation16 + $0x170] sm:$0xff]
    %v7817 = vld [vmem:[#allocation16 + $0x178] sm:$0xff]
    %v7818 = vld [vmem:[#allocation17] sm:$0x3]
    %v7820 = vlaneseq
    %v7821 = vshrl.u32 %v7820, 7
    %v7822 = vsub.s32 0, %v7821
    %v7823 = vrot.slane %v7818, %v7822
    %v7824 = vlaneseq
    %v7825 = vshrl.u32 %v7824, 7
    %v7826 = vsub.s32 1, %v7825
    %v7827 = vrot.slane %v7818, %v7826
    %v7878 = vunpack.c.l.b16 %v7770
    %v7879 = vunpack.c.h.b16 %v7770
    %v7880 = vunpack.c.l.b16 %v7771
    %v7881 = vunpack.c.h.b16 %v7771
    %v7882 = vunpack.c.l.b16 %v7772
    %v7883 = vunpack.c.h.b16 %v7772
    %v7884 = vunpack.c.l.b16 %v7773
    %v7885 = vunpack.c.h.b16 %v7773
    %v7886 = vunpack.c.l.b16 %v7774
    %v7887 = vunpack.c.h.b16 %v7774
    %v7888 = vunpack.c.l.b16 %v7775
    %v7889 = vunpack.c.h.b16 %v7775
    %v7890 = vunpack.c.l.b16 %v7776
    %v7891 = vunpack.c.h.b16 %v7776
    %v7892 = vunpack.c.l.b16 %v7777
    %v7893 = vunpack.c.h.b16 %v7777
    %v7894 = vunpack.c.l.b16 %v7778
    %v7895 = vunpack.c.h.b16 %v7778
    %v7896 = vunpack.c.l.b16 %v7779
    %v7897 = vunpack.c.h.b16 %v7779
    %v7898 = vunpack.c.l.b16 %v7780
    %v7899 = vunpack.c.h.b16 %v7780
    %v7900 = vunpack.c.l.b16 %v7781
    %v7901 = vunpack.c.h.b16 %v7781
    %v7902 = vunpack.c.l.b16 %v7782
    %v7903 = vunpack.c.h.b16 %v7782
    %v7904 = vunpack.c.l.b16 %v7783
    %v7905 = vunpack.c.h.b16 %v7783
    %v7906 = vunpack.c.l.b16 %v7784
    %v7907 = vunpack.c.h.b16 %v7784
    %v7908 = vunpack.c.l.b16 %v7785
    %v7909 = vunpack.c.h.b16 %v7785
    %v7910 = vunpack.c.l.b16 %v7786
    %v7911 = vunpack.c.h.b16 %v7786
    %v7912 = vunpack.c.l.b16 %v7787
    %v7913 = vunpack.c.h.b16 %v7787
    %v7914 = vunpack.c.l.b16 %v7788
    %v7915 = vunpack.c.h.b16 %v7788
    %v7916 = vunpack.c.l.b16 %v7789
    %v7917 = vunpack.c.h.b16 %v7789
    %v7918 = vunpack.c.l.b16 %v7790
    %v7919 = vunpack.c.h.b16 %v7790
    %v7920 = vunpack.c.l.b16 %v7791
    %v7921 = vunpack.c.h.b16 %v7791
    %v7922 = vunpack.c.l.b16 %v7792
    %v7923 = vunpack.c.h.b16 %v7792
    %v7924 = vunpack.c.l.b16 %v7793
    %v7925 = vunpack.c.h.b16 %v7793
    %v7926 = vunpack.c.l.b16 %v7794
    %v7927 = vunpack.c.h.b16 %v7794
    %v7928 = vunpack.c.l.b16 %v7795
    %v7929 = vunpack.c.h.b16 %v7795
    %v7930 = vunpack.c.l.b16 %v7796
    %v7931 = vunpack.c.h.b16 %v7796
    %v7932 = vunpack.c.l.b16 %v7797
    %v7933 = vunpack.c.h.b16 %v7797
    %v7934 = vunpack.c.l.b16 %v7798
    %v7935 = vunpack.c.h.b16 %v7798
    %v7936 = vunpack.c.l.b16 %v7799
    %v7937 = vunpack.c.h.b16 %v7799
    %v7938 = vunpack.c.l.b16 %v7800
    %v7939 = vunpack.c.h.b16 %v7800
    %v7940 = vunpack.c.l.b16 %v7801
    %v7941 = vunpack.c.h.b16 %v7801
    %v7942 = vunpack.c.l.b16 %v7802
    %v7943 = vunpack.c.h.b16 %v7802
    %v7944 = vunpack.c.l.b16 %v7803
    %v7945 = vunpack.c.h.b16 %v7803
    %v7946 = vunpack.c.l.b16 %v7804
    %v7947 = vunpack.c.h.b16 %v7804
    %v7948 = vunpack.c.l.b16 %v7805
    %v7949 = vunpack.c.h.b16 %v7805
    %v7950 = vunpack.c.l.b16 %v7806
    %v7951 = vunpack.c.h.b16 %v7806
    %v7952 = vunpack.c.l.b16 %v7807
    %v7953 = vunpack.c.h.b16 %v7807
    %v7954 = vunpack.c.l.b16 %v7808
    %v7955 = vunpack.c.h.b16 %v7808
    %v7956 = vunpack.c.l.b16 %v7809
    %v7957 = vunpack.c.h.b16 %v7809
    %v7958 = vunpack.c.l.b16 %v7810
    %v7959 = vunpack.c.h.b16 %v7810
    %v7960 = vunpack.c.l.b16 %v7811
    %v7961 = vunpack.c.h.b16 %v7811
    %v7962 = vunpack.c.l.b16 %v7812
    %v7963 = vunpack.c.h.b16 %v7812
    %v7964 = vunpack.c.l.b16 %v7813
    %v7965 = vunpack.c.h.b16 %v7813
    %v7966 = vunpack.c.l.b16 %v7814
    %v7967 = vunpack.c.h.b16 %v7814
    %v7968 = vunpack.c.l.b16 %v7815
    %v7969 = vunpack.c.h.b16 %v7815
    %v7970 = vunpack.c.l.b16 %v7816
    %v7971 = vunpack.c.h.b16 %v7816
    %v7972 = vunpack.c.l.b16 %v7817
    %v7973 = vunpack.c.h.b16 %v7817
    %v7974 = vpack.c.b16 %v7880, %v7878
    %v7975 = vpack.c.b16 %v7881, %v7879
    %v7976 = vpack.c.b16 %v7884, %v7882
    %v7977 = vpack.c.b16 %v7885, %v7883
    %v7978 = vpack.c.b16 %v7888, %v7886
    %v7979 = vpack.c.b16 %v7889, %v7887
    %v7980 = vpack.c.b16 %v7892, %v7890
    %v7981 = vpack.c.b16 %v7893, %v7891
    %v7982 = vpack.c.b16 %v7896, %v7894
    %v7983 = vpack.c.b16 %v7897, %v7895
    %v7984 = vpack.c.b16 %v7900, %v7898
    %v7985 = vpack.c.b16 %v7901, %v7899
    %v7986 = vpack.c.b16 %v7904, %v7902
    %v7987 = vpack.c.b16 %v7905, %v7903
    %v7988 = vpack.c.b16 %v7908, %v7906
    %v7989 = vpack.c.b16 %v7909, %v7907
    %v7990 = vpack.c.b16 %v7912, %v7910
    %v7991 = vpack.c.b16 %v7913, %v7911
    %v7992 = vpack.c.b16 %v7916, %v7914
    %v7993 = vpack.c.b16 %v7917, %v7915
    %v7994 = vpack.c.b16 %v7920, %v7918
    %v7995 = vpack.c.b16 %v7921, %v7919
    %v7996 = vpack.c.b16 %v7924, %v7922
    %v7997 = vpack.c.b16 %v7925, %v7923
    %v7998 = vpack.c.b16 %v7928, %v7926
    %v7999 = vpack.c.b16 %v7929, %v7927
    %v8000 = vpack.c.b16 %v7932, %v7930
    %v8001 = vpack.c.b16 %v7933, %v7931
    %v8002 = vpack.c.b16 %v7936, %v7934
    %v8003 = vpack.c.b16 %v7937, %v7935
    %v8004 = vpack.c.b16 %v7940, %v7938
    %v8005 = vpack.c.b16 %v7941, %v7939
    %v8006 = vpack.c.b16 %v7944, %v7942
    %v8007 = vpack.c.b16 %v7945, %v7943
    %v8008 = vpack.c.b16 %v7948, %v7946
    %v8009 = vpack.c.b16 %v7949, %v7947
    %v8010 = vpack.c.b16 %v7952, %v7950
    %v8011 = vpack.c.b16 %v7953, %v7951
    %v8012 = vpack.c.b16 %v7956, %v7954
    %v8013 = vpack.c.b16 %v7957, %v7955
    %v8014 = vpack.c.b16 %v7960, %v7958
    %v8015 = vpack.c.b16 %v7961, %v7959
    %v8016 = vpack.c.b16 %v7964, %v7962
    %v8017 = vpack.c.b16 %v7965, %v7963
    %v8018 = vpack.c.b16 %v7968, %v7966
    %v8019 = vpack.c.b16 %v7969, %v7967
    %v8020 = vpack.c.b16 %v7972, %v7970
    %v8021 = vpack.c.b16 %v7973, %v7971
    %8070 = vmatprep.subr.bf16.mxu0 %v7989
    %8071 = vmatpush1.bf16.msra.mxu0 %v7988
    %8072 = vmatprep.subr.bf16.mxu0 %v7987
    %8073 = vmatpush1.bf16.msra.mxu0 %v7986
    %8074 = vmatprep.subr.bf16.mxu0 %v7985
    %8075 = vmatpush1.bf16.msra.mxu0 %v7984
    %8076 = vmatprep.subr.bf16.mxu0 %v7983
    %8077 = vmatpush1.bf16.msra.mxu0 %v7982
    %8078 = vmatprep.subr.bf16.mxu0 %v7981
    %8079 = vmatpush1.bf16.msra.mxu0 %v7980
    %8080 = vmatprep.subr.bf16.mxu0 %v7979
    %8081 = vmatpush1.bf16.msra.mxu0 %v7978
    %8082 = vmatprep.subr.bf16.mxu0 %v7977
    %8083 = vmatpush1.bf16.msra.mxu0 %v7976
    %8084 = vmatprep.subr.bf16.mxu0 %v7975
    %8085 = vmatpush1.bf16.msra.mxu0 %v7974
    %8086 = vmatprep.subr.bf16.mxu0 %v8005
    %8087 = vmatpush2.bf16.msra.mxu0 %v8004
    %8088 = vmatprep.subr.bf16.mxu0 %v8003
    %8089 = vmatpush2.bf16.msra.mxu0 %v8002
    %8090 = vmatprep.subr.bf16.mxu0 %v8001
    %8091 = vmatpush2.bf16.msra.mxu0 %v8000
    %8092 = vmatprep.subr.bf16.mxu0 %v7999
    %8093 = vmatpush2.bf16.msra.mxu0 %v7998
    %8094 = vmatprep.subr.bf16.mxu0 %v7997
    %8095 = vmatpush2.bf16.msra.mxu0 %v7996
    %8096 = vmatprep.subr.bf16.mxu0 %v7995
    %8097 = vmatpush2.bf16.msra.mxu0 %v7994
    %8098 = vmatprep.subr.bf16.mxu0 %v7993
    %8099 = vmatpush2.bf16.msra.mxu0 %v7992
    %8100 = vmatprep.subr.bf16.mxu0 %v7991
    %8101 = vmatpush2.bf16.msra.mxu0 %v7990
    %8102 = vmatprep.mubr.bf16.mxu0 %v7768
    %8103 = vmatmul.mubr.bf16.gmra.mxu0 %v7767
    %v8104 = vpop.f32.mrf.mxu0
    %v8105 = vadd.f32 %v7823, %v8104
    %v8106 = vpop.f32.mrf.mxu0
    %v8107 = vadd.f32 %v7827, %v8106
    %v8108 = vpop.f32.mrf.mxu0
    %v8109 = vpop.f32.mrf.mxu0
    %8110 = vdwg.mxu0
    %8111 = vmatprep.subr.bf16.mxu0 %v8021
    %8112 = vmatpush1.bf16.msra.mxu0 %v8020
    %8113 = vmatprep.subr.bf16.mxu0 %v8019
    %8114 = vmatpush1.bf16.msra.mxu0 %v8018
    %8115 = vmatprep.subr.bf16.mxu0 %v8017
    %8116 = vmatpush1.bf16.msra.mxu0 %v8016
    %8117 = vmatprep.subr.bf16.mxu0 %v8015
    %8118 = vmatpush1.bf16.msra.mxu0 %v8014
    %8119 = vmatprep.subr.bf16.mxu0 %v8013
    %8120 = vmatpush1.bf16.msra.mxu0 %v8012
    %8121 = vmatprep.subr.bf16.mxu0 %v8011
    %8122 = vmatpush1.bf16.msra.mxu0 %v8010
    %8123 = vmatprep.subr.bf16.mxu0 %v8009
    %8124 = vmatpush1.bf16.msra.mxu0 %v8008
    %8125 = vmatprep.subr.bf16.mxu0 %v8007
    %8126 = vmatpush1.bf16.msra.mxu0 %v8006
    %8127 = vmatprep.subr.bf16.mxu0 0
    %8128 = vmatpush2.bf16.msra.mxu0 0
    %8129 = vmatprep.subr.bf16.mxu0 0
    %8130 = vmatpush2.bf16.msra.mxu0 0
    %8131 = vmatprep.subr.bf16.mxu0 0
    %8132 = vmatpush2.bf16.msra.mxu0 0
    %8133 = vmatprep.subr.bf16.mxu0 0
    %8134 = vmatpush2.bf16.msra.mxu0 0
    %8135 = vmatprep.subr.bf16.mxu0 0
    %8136 = vmatpush2.bf16.msra.mxu0 0
    %8137 = vmatprep.subr.bf16.mxu0 0
    %8138 = vmatpush2.bf16.msra.mxu0 0
    %8139 = vmatprep.subr.bf16.mxu0 0
    %8140 = vmatpush2.bf16.msra.mxu0 0
    %8141 = vmatprep.subr.bf16.mxu0 0
    %8142 = vmatpush2.bf16.msra.mxu0 0
    %8143 = vmatprep.mubr.bf16.mxu0 0
    %8144 = vmatmul.mubr.bf16.gmra.mxu0 %v7769
    %v8145 = vpop.f32.mrf.mxu0
    %v8146 = vadd.f32 %v8105, %v8145
    %v8147 = vpop.f32.mrf.mxu0
    %v8148 = vadd.f32 %v8107, %v8147
    %v8149 = vpop.f32.mrf.mxu0
    %v8150 = vpop.f32.mrf.mxu0
    %8151 = vdwg.mxu0
    %s8152 = sld [smem:[#allocation25 + $0x4]]
    %vm8153 = vcmp.ge.f32.partialorder %v8146, 0.0
    %vm8154 = vcmp.ge.f32.partialorder %v8148, 0.0
    %v8155 = vstv %s8152
    %v8156 = vmul.f32 %v8155, %v8146
    %v8157 = vmul.f32 %v8155, %v8148
    %v8158 = vsel %vm8153, %v8146, %v8156
    %v8159 = vsel %vm8154, %v8148, %v8157
    %v8160 = vpack.c.bf16 %v8158, %v8158
    %v8161 = vpack.c.bf16 %v8159, %v8159
    %v8162 = vld [vmem:[#allocation19] sm:$0xf]
    %v8163 = vld [vmem:[#allocation19 + $0x4] sm:$0xf]
    %v8164 = vld [vmem:[#allocation19 + $0x8] sm:$0xf]
    %v8165 = vld [vmem:[#allocation19 + $0xc] sm:$0xf]
    %v8166 = vld [vmem:[#allocation19 + $0x10] sm:$0xf]
    %v8167 = vld [vmem:[#allocation19 + $0x14] sm:$0xf]
    %v8168 = vld [vmem:[#allocation19 + $0x18] sm:$0xf]
    %v8169 = vld [vmem:[#allocation19 + $0x1c] sm:$0xf]
    %v8170 = vld [vmem:[#allocation19 + $0x20] sm:$0xf]
    %v8171 = vld [vmem:[#allocation19 + $0x24] sm:$0xf]
    %v8172 = vld [vmem:[#allocation19 + $0x28] sm:$0xf]
    %v8173 = vld [vmem:[#allocation19 + $0x2c] sm:$0xf]
    %v8174 = vld [vmem:[#allocation19 + $0x30] sm:$0xf]
    %v8175 = vld [vmem:[#allocation19 + $0x34] sm:$0xf]
    %v8176 = vld [vmem:[#allocation19 + $0x38] sm:$0xf]
    %v8177 = vld [vmem:[#allocation19 + $0x3c] sm:$0xf]
    %v8178 = vld [vmem:[#allocation19 + $0x40] sm:$0xf]
    %v8179 = vld [vmem:[#allocation19 + $0x44] sm:$0xf]
    %v8180 = vld [vmem:[#allocation19 + $0x48] sm:$0xf]
    %v8181 = vld [vmem:[#allocation19 + $0x4c] sm:$0xf]
    %v8182 = vld [vmem:[#allocation19 + $0x50] sm:$0xf]
    %v8183 = vld [vmem:[#allocation19 + $0x54] sm:$0xf]
    %v8184 = vld [vmem:[#allocation19 + $0x58] sm:$0xf]
    %v8185 = vld [vmem:[#allocation19 + $0x5c] sm:$0xf]
    %v8186 = vld [vmem:[#allocation19 + $0x60] sm:$0xf]
    %v8187 = vld [vmem:[#allocation19 + $0x64] sm:$0xf]
    %v8188 = vld [vmem:[#allocation19 + $0x68] sm:$0xf]
    %v8189 = vld [vmem:[#allocation19 + $0x6c] sm:$0xf]
    %v8190 = vld [vmem:[#allocation19 + $0x70] sm:$0xf]
    %v8191 = vld [vmem:[#allocation19 + $0x74] sm:$0xf]
    %v8192 = vld [vmem:[#allocation19 + $0x78] sm:$0xf]
    %v8193 = vld [vmem:[#allocation19 + $0x7c] sm:$0xf]
    %v8194 = vld [vmem:[#allocation20] sm:$0x1]
    %v8196 = vlaneseq
    %v8197 = vshrl.u32 %v8196, 7
    %v8198 = vsub.s32 0, %v8197
    %v8199 = vrot.slane %v8194, %v8198
    %v8233 = vunpack.c.l.b16 %v8162
    %v8234 = vunpack.c.l.b16 %v8163
    %v8235 = vunpack.c.l.b16 %v8164
    %v8236 = vunpack.c.l.b16 %v8165
    %v8237 = vunpack.c.l.b16 %v8166
    %v8238 = vunpack.c.l.b16 %v8167
    %v8239 = vunpack.c.l.b16 %v8168
    %v8240 = vunpack.c.l.b16 %v8169
    %v8241 = vunpack.c.l.b16 %v8170
    %v8242 = vunpack.c.l.b16 %v8171
    %v8243 = vunpack.c.l.b16 %v8172
    %v8244 = vunpack.c.l.b16 %v8173
    %v8245 = vunpack.c.l.b16 %v8174
    %v8246 = vunpack.c.l.b16 %v8175
    %v8247 = vunpack.c.l.b16 %v8176
    %v8248 = vunpack.c.l.b16 %v8177
    %v8249 = vunpack.c.l.b16 %v8178
    %v8250 = vunpack.c.l.b16 %v8179
    %v8251 = vunpack.c.l.b16 %v8180
    %v8252 = vunpack.c.l.b16 %v8181
    %v8253 = vunpack.c.l.b16 %v8182
    %v8254 = vunpack.c.l.b16 %v8183
    %v8255 = vunpack.c.l.b16 %v8184
    %v8256 = vunpack.c.l.b16 %v8185
    %v8257 = vunpack.c.l.b16 %v8186
    %v8258 = vunpack.c.l.b16 %v8187
    %v8259 = vunpack.c.l.b16 %v8188
    %v8260 = vunpack.c.l.b16 %v8189
    %v8261 = vunpack.c.l.b16 %v8190
    %v8262 = vunpack.c.l.b16 %v8191
    %v8263 = vunpack.c.l.b16 %v8192
    %v8264 = vunpack.c.l.b16 %v8193
    %v8265 = vpack.c.b16 %v8234, %v8233
    %v8266 = vpack.c.b16 %v8236, %v8235
    %v8267 = vpack.c.b16 %v8238, %v8237
    %v8268 = vpack.c.b16 %v8240, %v8239
    %v8269 = vpack.c.b16 %v8242, %v8241
    %v8270 = vpack.c.b16 %v8244, %v8243
    %v8271 = vpack.c.b16 %v8246, %v8245
    %v8272 = vpack.c.b16 %v8248, %v8247
    %v8273 = vpack.c.b16 %v8250, %v8249
    %v8274 = vpack.c.b16 %v8252, %v8251
    %v8275 = vpack.c.b16 %v8254, %v8253
    %v8276 = vpack.c.b16 %v8256, %v8255
    %v8277 = vpack.c.b16 %v8258, %v8257
    %v8278 = vpack.c.b16 %v8260, %v8259
    %v8279 = vpack.c.b16 %v8262, %v8261
    %v8280 = vpack.c.b16 %v8264, %v8263
    %8297 = vmatprep.subr.bf16.mxu0 0
    %8298 = vmatpush1.bf16.msra.mxu0 %v8272
    %8299 = vmatprep.subr.bf16.mxu0 0
    %8300 = vmatpush1.bf16.msra.mxu0 %v8271
    %8301 = vmatprep.subr.bf16.mxu0 0
    %8302 = vmatpush1.bf16.msra.mxu0 %v8270
    %8303 = vmatprep.subr.bf16.mxu0 0
    %8304 = vmatpush1.bf16.msra.mxu0 %v8269
    %8305 = vmatprep.subr.bf16.mxu0 0
    %8306 = vmatpush1.bf16.msra.mxu0 %v8268
    %8307 = vmatprep.subr.bf16.mxu0 0
    %8308 = vmatpush1.bf16.msra.mxu0 %v8267
    %8309 = vmatprep.subr.bf16.mxu0 0
    %8310 = vmatpush1.bf16.msra.mxu0 %v8266
    %8311 = vmatprep.subr.bf16.mxu0 0
    %8312 = vmatpush1.bf16.msra.mxu0 %v8265
    %8313 = vmatprep.subr.bf16.mxu0 0
    %8314 = vmatpush2.bf16.msra.mxu0 %v8280
    %8315 = vmatprep.subr.bf16.mxu0 0
    %8316 = vmatpush2.bf16.msra.mxu0 %v8279
    %8317 = vmatprep.subr.bf16.mxu0 0
    %8318 = vmatpush2.bf16.msra.mxu0 %v8278
    %8319 = vmatprep.subr.bf16.mxu0 0
    %8320 = vmatpush2.bf16.msra.mxu0 %v8277
    %8321 = vmatprep.subr.bf16.mxu0 0
    %8322 = vmatpush2.bf16.msra.mxu0 %v8276
    %8323 = vmatprep.subr.bf16.mxu0 0
    %8324 = vmatpush2.bf16.msra.mxu0 %v8275
    %8325 = vmatprep.subr.bf16.mxu0 0
    %8326 = vmatpush2.bf16.msra.mxu0 %v8274
    %8327 = vmatprep.subr.bf16.mxu0 0
    %8328 = vmatpush2.bf16.msra.mxu0 %v8273
    %8329 = vmatprep.mubr.bf16.mxu0 %v8161
    %8330 = vmatmul.mubr.bf16.gmra.mxu0 %v8160
    %v8331 = vpop.f32.mrf.mxu0
    %v8332 = vadd.f32 %v8199, %v8331
    %v8333 = vpop.f32.mrf.mxu0
    %v8334 = vpop.f32.mrf.mxu0
    %v8335 = vpop.f32.mrf.mxu0
    %8336 = vdwg.mxu0
    %s8337 = sld [smem:[#allocation25 + $0x5]]
    %vm8338 = vcmp.ge.f32.partialorder %v8332, 0.0
    %v8339 = vstv %s8337
    %v8340 = vmul.f32 %v8339, %v8332
    %v8341 = vsel %vm8338, %v8332, %v8340
    %v8342 = vpack.c.bf16 %v8341, %v8341
    %v8343 = vld [vmem:[%s13] sm:$0xf]
    %v8344 = vld [vmem:[%s13 + $0x4] sm:$0xf]
    %v8345 = vld [vmem:[%s13 + $0x8] sm:$0xf]
    %v8346 = vld [vmem:[%s13 + $0xc] sm:$0xf]
    %v8347 = vld [vmem:[%s13 + $0x10] sm:$0xf]
    %v8348 = vld [vmem:[%s13 + $0x14] sm:$0xf]
    %v8349 = vld [vmem:[%s13 + $0x18] sm:$0xf]
    %v8350 = vld [vmem:[%s13 + $0x1c] sm:$0xf]
    %v8351 = vld [vmem:[%s13 + $0x20] sm:$0xf]
    %v8352 = vld [vmem:[%s13 + $0x24] sm:$0xf]
    %v8353 = vld [vmem:[%s13 + $0x28] sm:$0xf]
    %v8354 = vld [vmem:[%s13 + $0x2c] sm:$0xf]
    %v8355 = vld [vmem:[%s13 + $0x30] sm:$0xf]
    %v8356 = vld [vmem:[%s13 + $0x34] sm:$0xf]
    %v8357 = vld [vmem:[%s13 + $0x38] sm:$0xf]
    %v8358 = vld [vmem:[%s13 + $0x3c] sm:$0xf]
    %v8359 = vld [vmem:[#allocation22] sm:$0x1]
    %v8361 = vlaneseq
    %v8362 = vshrl.u32 %v8361, 7
    %v8363 = vsub.s32 0, %v8362
    %v8364 = vrot.slane %v8359, %v8363
    %v8382 = vunpack.c.l.b16 %v8343
    %v8383 = vunpack.c.l.b16 %v8344
    %v8384 = vunpack.c.l.b16 %v8345
    %v8385 = vunpack.c.l.b16 %v8346
    %v8386 = vunpack.c.l.b16 %v8347
    %v8387 = vunpack.c.l.b16 %v8348
    %v8388 = vunpack.c.l.b16 %v8349
    %v8389 = vunpack.c.l.b16 %v8350
    %v8390 = vunpack.c.l.b16 %v8351
    %v8391 = vunpack.c.l.b16 %v8352
    %v8392 = vunpack.c.l.b16 %v8353
    %v8393 = vunpack.c.l.b16 %v8354
    %v8394 = vunpack.c.l.b16 %v8355
    %v8395 = vunpack.c.l.b16 %v8356
    %v8396 = vunpack.c.l.b16 %v8357
    %v8397 = vunpack.c.l.b16 %v8358
    %v8398 = vpack.c.b16 %v8383, %v8382
    %v8399 = vpack.c.b16 %v8385, %v8384
    %v8400 = vpack.c.b16 %v8387, %v8386
    %v8401 = vpack.c.b16 %v8389, %v8388
    %v8402 = vpack.c.b16 %v8391, %v8390
    %v8403 = vpack.c.b16 %v8393, %v8392
    %v8404 = vpack.c.b16 %v8395, %v8394
    %v8405 = vpack.c.b16 %v8397, %v8396
    %8414 = vmatprep.subr.bf16.mxu0 0
    %8415 = vmatpush1.bf16.msra.mxu0 %v8405
    %8416 = vmatprep.subr.bf16.mxu0 0
    %8417 = vmatpush1.bf16.msra.mxu0 %v8404
    %8418 = vmatprep.subr.bf16.mxu0 0
    %8419 = vmatpush1.bf16.msra.mxu0 %v8403
    %8420 = vmatprep.subr.bf16.mxu0 0
    %8421 = vmatpush1.bf16.msra.mxu0 %v8402
    %8422 = vmatprep.subr.bf16.mxu0 0
    %8423 = vmatpush1.bf16.msra.mxu0 %v8401
    %8424 = vmatprep.subr.bf16.mxu0 0
    %8425 = vmatpush1.bf16.msra.mxu0 %v8400
    %8426 = vmatprep.subr.bf16.mxu0 0
    %8427 = vmatpush1.bf16.msra.mxu0 %v8399
    %8428 = vmatprep.subr.bf16.mxu0 0
    %8429 = vmatpush1.bf16.msra.mxu0 %v8398
    %8430 = vmatprep.subr.bf16.mxu0 0
    %8431 = vmatpush2.bf16.msra.mxu0 0
    %8432 = vmatprep.subr.bf16.mxu0 0
    %8433 = vmatpush2.bf16.msra.mxu0 0
    %8434 = vmatprep.subr.bf16.mxu0 0
    %8435 = vmatpush2.bf16.msra.mxu0 0
    %8436 = vmatprep.subr.bf16.mxu0 0
    %8437 = vmatpush2.bf16.msra.mxu0 0
    %8438 = vmatprep.subr.bf16.mxu0 0
    %8439 = vmatpush2.bf16.msra.mxu0 0
    %8440 = vmatprep.subr.bf16.mxu0 0
    %8441 = vmatpush2.bf16.msra.mxu0 0
    %8442 = vmatprep.subr.bf16.mxu0 0
    %8443 = vmatpush2.bf16.msra.mxu0 0
    %8444 = vmatprep.subr.bf16.mxu0 0
    %8445 = vmatpush2.bf16.msra.mxu0 0
    %8446 = vmatprep.mubr.bf16.mxu0 0
    %8447 = vmatmul.mubr.bf16.gmra.mxu0 %v8342
    %v8448 = vpop.f32.mrf.mxu0
    %v8449 = vadd.f32 %v8364, %v8448
    %v8450 = vpop.f32.mrf.mxu0
    %v8451 = vpop.f32.mrf.mxu0
    %v8452 = vpop.f32.mrf.mxu0
    %8453 = vdwg.mxu0
    %s8454 = sld [smem:[#allocation25 + $0x6]]
    %vm8455 = vcmp.ge.f32.partialorder %v8449, 0.0
    %v8456 = vstv %s8454
    %v8457 = vmul.f32 %v8456, %v8449
    %v8458 = vsel %vm8455, %v8449, %v8457
    %v8459 = vpack.c.bf16 %v8458, %v8458
    %v8460 = vld [vmem:[%s15] sm:$0xf]
    %v8461 = vld [vmem:[%s15 + $0x4] sm:$0xf]
    %v8462 = vld [vmem:[%s15 + $0x8] sm:$0xf]
    %v8463 = vld [vmem:[%s15 + $0xc] sm:$0xf]
    %v8464 = vld [vmem:[%s15 + $0x10] sm:$0xf]
    %v8465 = vld [vmem:[%s15 + $0x14] sm:$0xf]
    %v8466 = vld [vmem:[%s15 + $0x18] sm:$0xf]
    %v8467 = vld [vmem:[%s15 + $0x1c] sm:$0xf]
    %v8468 = vld [vmem:[#allocation23] sm:$0x1]
    %v8470 = vlaneseq
    %v8471 = vshrl.u32 %v8470, 7
    %v8472 = vsub.s32 0, %v8471
    %v8473 = vrot.slane %v8468, %v8472
    %v8483 = vunpack.c.l.b16 %v8460
    %v8484 = vunpack.c.l.b16 %v8461
    %v8485 = vunpack.c.l.b16 %v8462
    %v8486 = vunpack.c.l.b16 %v8463
    %v8487 = vunpack.c.l.b16 %v8464
    %v8488 = vunpack.c.l.b16 %v8465
    %v8489 = vunpack.c.l.b16 %v8466
    %v8490 = vunpack.c.l.b16 %v8467
    %v8491 = vpack.c.b16 %v8484, %v8483
    %v8492 = vpack.c.b16 %v8486, %v8485
    %v8493 = vpack.c.b16 %v8488, %v8487
    %v8494 = vpack.c.b16 %v8490, %v8489
    %v8500 = vsel %vm572, %v8459, 0
    %8502 = vmatprep.subr.bf16.mxu0 0
    %8503 = vmatpush1.bf16.msra.mxu0 0
    %8504 = vmatprep.subr.bf16.mxu0 0
    %8505 = vmatpush1.bf16.msra.mxu0 0
    %8506 = vmatprep.subr.bf16.mxu0 0
    %8507 = vmatpush1.bf16.msra.mxu0 0
    %8508 = vmatprep.subr.bf16.mxu0 0
    %8509 = vmatpush1.bf16.msra.mxu0 0
    %8510 = vmatprep.subr.bf16.mxu0 0
    %8511 = vmatpush1.bf16.msra.mxu0 %v8494
    %8512 = vmatprep.subr.bf16.mxu0 0
    %8513 = vmatpush1.bf16.msra.mxu0 %v8493
    %8514 = vmatprep.subr.bf16.mxu0 0
    %8515 = vmatpush1.bf16.msra.mxu0 %v8492
    %8516 = vmatprep.subr.bf16.mxu0 0
    %8517 = vmatpush1.bf16.msra.mxu0 %v8491
    %8518 = vmatprep.subr.bf16.mxu0 0
    %8519 = vmatpush2.bf16.msra.mxu0 0
    %8520 = vmatprep.subr.bf16.mxu0 0
    %8521 = vmatpush2.bf16.msra.mxu0 0
    %8522 = vmatprep.subr.bf16.mxu0 0
    %8523 = vmatpush2.bf16.msra.mxu0 0
    %8524 = vmatprep.subr.bf16.mxu0 0
    %8525 = vmatpush2.bf16.msra.mxu0 0
    %8526 = vmatprep.subr.bf16.mxu0 0
    %8527 = vmatpush2.bf16.msra.mxu0 0
    %8528 = vmatprep.subr.bf16.mxu0 0
    %8529 = vmatpush2.bf16.msra.mxu0 0
    %8530 = vmatprep.subr.bf16.mxu0 0
    %8531 = vmatpush2.bf16.msra.mxu0 0
    %8532 = vmatprep.subr.bf16.mxu0 0
    %8533 = vmatpush2.bf16.msra.mxu0 0
    %8534 = vmatprep.mubr.bf16.mxu0 0
    %8535 = vmatmul.mubr.bf16.gmra.mxu0 %v8500
    %v8536 = vpop.f32.mrf.mxu0
    %v8537 = vadd.f32 %v8473, %v8536
    %v8538 = vpop.f32.mrf.mxu0
    %v8539 = vpop.f32.mrf.mxu0
    %v8540 = vpop.f32.mrf.mxu0
    %8541 = vdwg.mxu0
    %s8542 = sld [smem:[#allocation25 + $0x7]]
    %vm8543 = vcmp.ge.f32.partialorder %v8537, 0.0
    %v8544 = vstv %s8542
    %v8545 = vmul.f32 %v8544, %v8537
    %v8546 = vsel %vm8543, %v8537, %v8545
    %v8547 = vpack.c.bf16 %v8546, %v8546
    %v8548 = vld [vmem:[#allocation26] sm:$0xf]
    %v8549 = vld [vmem:[#allocation26 + $0x4] sm:$0xf]
    %v8550 = vld [vmem:[#allocation26 + $0x8] sm:$0xf]
    %v8551 = vld [vmem:[#allocation26 + $0xc] sm:$0xf]
    %v8552 = vld [vmem:[#allocation27] sm:$0x1]
    %v8554 = vlaneseq
    %v8555 = vshrl.u32 %v8554, 7
    %v8556 = vsub.s32 0, %v8555
    %v8557 = vrot.slane %v8552, %v8556
    %v8563 = vunpack.c.l.b16 %v8548
    %v8564 = vunpack.c.l.b16 %v8549
    %v8565 = vunpack.c.l.b16 %v8550
    %v8566 = vunpack.c.l.b16 %v8551
    %v8567 = vpack.c.b16 %v8564, %v8563
    %v8568 = vpack.c.b16 %v8566, %v8565
    %vm8571 = vcmask 261120
    %v8573 = vsel %vm8571, %v8547, 0
    %8575 = vmatprep.subr.bf16.mxu0 0
    %8576 = vmatpush1.bf16.msra.mxu0 0
    %8577 = vmatprep.subr.bf16.mxu0 0
    %8578 = vmatpush1.bf16.msra.mxu0 0
    %8579 = vmatprep.subr.bf16.mxu0 0
    %8580 = vmatpush1.bf16.msra.mxu0 0
    %8581 = vmatprep.subr.bf16.mxu0 0
    %8582 = vmatpush1.bf16.msra.mxu0 0
    %8583 = vmatprep.subr.bf16.mxu0 0
    %8584 = vmatpush1.bf16.msra.mxu0 0
    %8585 = vmatprep.subr.bf16.mxu0 0
    %8586 = vmatpush1.bf16.msra.mxu0 0
    %8587 = vmatprep.subr.bf16.mxu0 0
    %8588 = vmatpush1.bf16.msra.mxu0 %v8568
    %8589 = vmatprep.subr.bf16.mxu0 0
    %8590 = vmatpush1.bf16.msra.mxu0 %v8567
    %8591 = vmatprep.subr.bf16.mxu0 0
    %8592 = vmatpush2.bf16.msra.mxu0 0
    %8593 = vmatprep.subr.bf16.mxu0 0
    %8594 = vmatpush2.bf16.msra.mxu0 0
    %8595 = vmatprep.subr.bf16.mxu0 0
    %8596 = vmatpush2.bf16.msra.mxu0 0
    %8597 = vmatprep.subr.bf16.mxu0 0
    %8598 = vmatpush2.bf16.msra.mxu0 0
    %8599 = vmatprep.subr.bf16.mxu0 0
    %8600 = vmatpush2.bf16.msra.mxu0 0
    %8601 = vmatprep.subr.bf16.mxu0 0
    %8602 = vmatpush2.bf16.msra.mxu0 0
    %8603 = vmatprep.subr.bf16.mxu0 0
    %8604 = vmatpush2.bf16.msra.mxu0 0
    %8605 = vmatprep.subr.bf16.mxu0 0
    %8606 = vmatpush2.bf16.msra.mxu0 0
    %8607 = vmatprep.mubr.bf16.mxu0 0
    %8608 = vmatmul.mubr.bf16.gmra.mxu0 %v8573
    %v8609 = vpop.f32.mrf.mxu0
    %v8610 = vadd.f32 %v8557, %v8609
    %v8611 = vpop.f32.mrf.mxu0
    %v8612 = vpop.f32.mrf.mxu0
    %v8613 = vpop.f32.mrf.mxu0
    %8614 = vdwg.mxu0
    %8615 = vst [vmem:[%s20] sm:$0xff] %v8610
    // Predicated region
    $region150: #{mlp_bel_med_forward.1} parent=1 // pred_check
      _
    $region151: #{mlp_bel_med_forward.1} parent=1 // pred_check_branch
      %8617 = sbr.rel (0) target = $region153
    $region152: #{mlp_bel_med_forward.1} parent=1 // pred_region
      _
    $region153: #{mlp_bel_med_forward.1} parent=1 // pred_fallthru
      _
    // Predicated region
    $region154: #{mlp_bel_med_forward.1} parent=1 // pred_check
      _
    $region155: #{mlp_bel_med_forward.1} parent=1 // pred_check_branch
      %8619 = sbr.rel (0) target = $region157
    $region156: #{mlp_bel_med_forward.1} parent=1 // pred_region
      _
    $region157: #{mlp_bel_med_forward.1} parent=1 // pred_fallthru
      _
    %8620 = vsyncpa [#allocation3], 1
    %8621 = vsyncpa [#allocation6], 1
    %8622 = vsyncpa [#allocation9], 1
    %8623 = vsyncpa [#allocation12], 1
    %8624 = vsyncpa [#allocation15], 1
    %8625 = vsyncpa [#allocation18], 1
    %8626 = vsyncpa [#allocation21], 1
    %8627 = vsyncpa [#allocation24], 1
    %8628 = vsyncpa [#allocation28], 1
    %8629 = vsyncpa [#allocation4], 1

</llo_original>
